<compile_context>
chip_gen: v5e
topology: v5e:2x2
jax: 0.10.0
libtpu: 0.0.40
codegen_flags: <defaults>
</compile_context>

<pallas_src>
import jax
import jax.numpy as jnp
from jax.experimental import pallas as pl
from jax.experimental.pallas import tpu as pltpu

BN_EPS = 1e-5
OUT_PAD = 128   # lane-dense output width (real dim_out is sliced outside the kernel)


# ------------------------------- fused kernel ------------------------------- #

def _signnet_fused_kernel(ev_ref, xfeat_ref, a_ref,
                          w00_ref, b00_ref, w01_ref, b01_ref,
                          w10_ref, b10_ref, w11_ref, b11_ref,
                          w20_ref, b20_ref, w21_ref, b21_ref,
                          wr0_ref, br0_ref, wxp_ref, wr1p_ref, bout_ref,
                          o_ref):
    f32 = jnp.float32
    bf16 = jnp.bfloat16
    A = a_ref[...]                                  # [N, N] bf16, A_hat = A + (1+eps)*I

    def conv(x):
        # GINConv aggregation, self term already folded into A_hat on the host.
        return jnp.dot(A, x.astype(bf16), preferred_element_type=f32)

    def update_net(h, w0_ref, b0_ref, w1_ref, b1_ref):
        # per-eigen-channel MLP (Linear -> ReLU -> [folded BN] -> Linear) expressed
        # with block-diagonal bf16 weights: one lane-dense 2-D MXU matmul per Linear,
        # f32 accumulation, f32 elementwise (bias / ReLU).
        y = jnp.dot(h.astype(bf16), w0_ref[...], preferred_element_type=f32) + b0_ref[...]
        y = jnp.maximum(y, 0.0)
        return jnp.dot(y.astype(bf16), w1_ref[...], preferred_element_type=f32) + b1_ref[...]

    # eigenvectors: NaN -> 0 (f32).  Sign expansion [+v | -v] (2K channels) is folded
    # into w00; the sign-invariant sum is folded into wr0.
    ev = ev_ref[...]                                # [N, K] f32
    pe = jnp.where(jnp.isnan(ev), 0.0, ev)

    # GIN layer 0 (Cin = 1 per channel, no pre-BN)
    x = update_net(conv(pe), w00_ref, b00_ref, w01_ref, b01_ref)      # [N, 2K*H]
    # GIN layers 1, 2 (pre-layer BN folded into the previous layer's second Linear)
    x = update_net(conv(x), w10_ref, b10_ref, w11_ref, b11_ref)       # [N, 2K*H]
    x = update_net(conv(x), w20_ref, b20_ref, w21_ref, b21_ref)       # [N, 2K*phi_out]

    # rho MLP: first Linear consumes the sign-summed encoding via the row-stacked
    # weight wr0 (enc(+v)+enc(-v) folded); rho BN folded into wr1p.
    z = jnp.dot(x.astype(bf16), wr0_ref[...], preferred_element_type=f32) + br0_ref[...]
    z = jnp.maximum(z, 0.0)

    # final output [linear_x(x_feat) | rho_out | 0-pad to 128 lanes]:
    # out = x_feat @ [wx | 0 | 0] + z @ [0 | wr1 | 0] + [bx | br1 | 0]
    o_ref[...] = (jnp.dot(xfeat_ref[...].astype(bf16), wxp_ref[...],
                          preferred_element_type=f32)
                  + jnp.dot(z.astype(bf16), wr1p_ref[...], preferred_element_type=f32)
                  + bout_ref[...])


def signnet_forward(x_feat, eigvecs, A_hat, kp):
    """SignNetNodeEncoder forward (expand_x=True, model='MLP'), grid over graphs."""
    B, N, K = eigvecs.shape
    dim_in = x_feat.shape[-1]

    args, specs = [eigvecs, x_feat, A_hat], [
        pl.BlockSpec((None, N, K), lambda b: (b, 0, 0)),
        pl.BlockSpec((None, N, dim_in), lambda b: (b, 0, 0)),
        pl.BlockSpec((None, N, N), lambda b: (b, 0, 0)),
    ]

    def wspec(w):
        # constant index_map -> weight block stays VMEM-resident across grid steps
        return pl.BlockSpec(w.shape, lambda b, _nd=w.ndim: (0,) * _nd)

    for (w0, b0, w1, b1) in kp["layers"]:
        for t in (w0, b0, w1, b1):
            args.append(t)
            specs.append(wspec(t))
    for t in (kp["wr0s"], kp["br0"], kp["wxp"], kp["wr1p"], kp["b_out"]):
        args.append(t)
        specs.append(wspec(t))

    out_padded = pl.pallas_call(
        _signnet_fused_kernel,
        out_shape=jax.ShapeDtypeStruct((B, N, OUT_PAD), jnp.float32),
        grid=(B,),
        in_specs=specs,
        out_specs=pl.BlockSpec((None, N, OUT_PAD), lambda b: (b, 0, 0)),
        compiler_params=pltpu.CompilerParams(
            dimension_semantics=("parallel",),
            vmem_limit_bytes=32 * 1024 * 1024,
        ),
    )(*args)
    return out_padded[:, :, : kp["dim_out"]]


# ----------------------- parameter init & host folding ---------------------- #

def init_linear(key, din, dout):
    # PyTorch nn.Linear default init: U(-1/sqrt(fan_in), 1/sqrt(fan_in))
    kw, kb = jax.random.split(key)
    bound = 1.0 / float(din) ** 0.5
    w = jax.random.uniform(kw, (din, dout), jnp.float32, -bound, bound)
    b = jax.random.uniform(kb, (1, dout), jnp.float32, -bound, bound)
    return w, b


def fresh_bn(c):
    # fresh-init BatchNorm1d evaluated in eval mode: gamma=1, beta=0, mean=0, var=1
    return (jnp.ones((c,), jnp.float32), jnp.zeros((c,), jnp.float32),
            jnp.zeros((c,), jnp.float32), jnp.ones((c,), jnp.float32))


def bn_scale_shift(gamma, beta, mean, var, eps=BN_EPS):
    s = gamma / jnp.sqrt(var + eps)
    return s, beta - mean * s


def fold_bn_into_next_linear(s, t, w, b):
    # BN (y = x*s + t) then Linear(w, b)  ==  x @ (s[:,None]*w) + (t @ w + b)
    return s[:, None] * w, t[None, :] @ w + b


def fold_bn_after_linear(w, b, s, t):
    # Linear(w, b) then BN  ==  x @ (w*s) + (b*s + t)
    return w * s[None, :], b * s[None, :] + t[None, :]


def make_raw_params(key, dim_in, dim_emb, dim_pe, phi_hidden, phi_out, K):
    keys = jax.random.split(key, 9)
    layer_dims = [(1, phi_hidden, phi_hidden),
                  (phi_hidden, phi_hidden, phi_hidden),
                  (phi_hidden, phi_hidden, phi_out)]
    gin, ki = [], 0
    for (cin, hid, cout) in layer_dims:
        w0, b0 = init_linear(keys[ki], cin, hid); ki += 1
        w1, b1 = init_linear(keys[ki], hid, cout); ki += 1
        gin.append((w0, b0, w1, b1, fresh_bn(hid)))      # update-net BN over hidden
    pre_bn = [None, fresh_bn(phi_hidden), fresh_bn(phi_hidden)]   # GIN.bns[0], bns[1]
    wr0, br0 = init_linear(keys[ki], phi_out * K, phi_hidden); ki += 1
    wr1, br1 = init_linear(keys[ki], phi_hidden, dim_pe); ki += 1
    wx, bx = init_linear(keys[ki], dim_in, dim_emb - dim_pe); ki += 1
    return {"gin": gin, "pre_bn": pre_bn,
            "rho": (wr0, br0, fresh_bn(phi_hidden), wr1, br1),
            "linear_x": (wx, bx)}


def make_kernel_params(raw, K):
    bf16 = jnp.bfloat16
    K2 = 2 * K
    eye_k2 = jnp.eye(K2, dtype=jnp.float32)
    sgn = jnp.concatenate([jnp.eye(K, dtype=jnp.float32),
                           -jnp.eye(K, dtype=jnp.float32)], axis=1)    # [K, 2K]

    gin, pre_bn = raw["gin"], raw["pre_bn"]
    layers = []
    for li, (w0, b0, w1, b1, bn_mid) in enumerate(gin):
        s_m, t_m = bn_scale_shift(*bn_mid)
        w1f, b1f = fold_bn_into_next_linear(s_m, t_m, w1, b1)          # update-net BN
        if li + 1 < len(gin):                                          # next pre-layer BN
            s_p, t_p = bn_scale_shift(*pre_bn[li + 1])
            w1f, b1f = fold_bn_after_linear(w1f, b1f, s_p, t_p)
        w0k = jnp.kron(eye_k2, w0)                                     # block-diag weights
        if li == 0:
            w0k = sgn @ w0k                    # fold sign expansion [+v | -v] into layer 0
        layers.append((w0k.astype(bf16), jnp.tile(b0, (1, K2)),
                       jnp.kron(eye_k2, w1f).astype(bf16), jnp.tile(b1f, (1, K2))))

    wr0, br0, rho_bn, wr1, br1 = raw["rho"]
    s_r, t_r = bn_scale_shift(*rho_bn)
    wr1f, br1f = fold_bn_into_next_linear(s_r, t_r, wr1, br1)
    wr0s = jnp.concatenate([wr0, wr0], axis=0).astype(bf16)   # fold sign-invariant sum

    wx, bx = raw["linear_x"]
    dim_h, dim_pe = wx.shape[1], wr1f.shape[1]
    dim_out = dim_h + dim_pe
    assert dim_out <= OUT_PAD
    # zero-padded, lane-dense output weights: [linear_x(x) | rho_out | 0...]
    wxp = jnp.zeros((wx.shape[0], OUT_PAD), jnp.float32).at[:, :dim_h].set(wx)
    wr1p = jnp.zeros((wr1f.shape[0], OUT_PAD), jnp.float32
                     ).at[:, dim_h:dim_out].set(wr1f)
    b_out = jnp.zeros((1, OUT_PAD), jnp.float32)
    b_out = b_out.at[:, :dim_h].set(bx).at[:, dim_h:dim_out].set(br1f)

    return {"layers": layers, "wr0s": wr0s, "br0": br0,
            "wxp": wxp.astype(bf16), "wr1p": wr1p.astype(bf16), "b_out": b_out,
            "dim_out": dim_out}


# ------------------------- pure-JAX reference (check) ----------------------- #

def reference_forward(x_feat, eigvecs, A, raw):
    def bn_eval(x, bn):
        g, b, m, v = bn
        return (x - m) / jnp.sqrt(v + BN_EPS) * g + b

    with jax.default_matmul_precision("highest"):
        pe = jnp.where(jnp.isnan(eigvecs), 0.0, eigvecs)              # [N, K]
        x0 = jnp.transpose(pe)[:, :, None]                            # [K, N, 1]

        def gin_stack(x):
            for li, (w0, b0, w1, b1, bn_mid) in enumerate(raw["gin"]):
                if li > 0:
                    x = bn_eval(x, raw["pre_bn"][li])
                h = x + jnp.einsum("ij,kjc->kic", A, x)
                h = jnp.einsum("knc,ch->knh", h, w0) + b0
                h = jnp.maximum(h, 0.0)
                h = bn_eval(h, bn_mid)
                x = jnp.einsum("knh,ho->kno", h, w1) + b1
            return x

        out = gin_stack(x0) + gin_stack(-x0)                          # [K, N, phi_out]
        N = eigvecs.shape[0]
        enc = jnp.transpose(out, (1, 0, 2)).reshape(N, -1)            # [N, K*phi_out]
        wr0, br0, rho_bn, wr1, br1 = raw["rho"]
        z = bn_eval(jnp.maximum(enc @ wr0 + br0, 0.0), rho_bn)
        pos = z @ wr1 + br1
        wx, bx = raw["linear_x"]
        return jnp.concatenate([x_feat @ wx + bx, pos], axis=1)


# ----------------------------------- main ----------------------------------- #

if __name__ == "__main__":
    # config (posenc_SignNet.* analogues); B graphs of N nodes each
    B, N, K = 4, 64, 8                 # graphs, nodes per graph, max_freqs
    DIM_IN, DIM_EMB, DIM_PE = 16, 32, 8
    PHI_HIDDEN, PHI_OUT = 32, 4        # phi_hidden_dim, phi_out_dim

    key = jax.random.PRNGKey(0)
    kx, kev, kedge, kpar = jax.random.split(key, 4)

    x_feat = jax.random.normal(kx, (B, N, DIM_IN), jnp.float32)
    # Laplacian-eigenvector-like scale (~1/sqrt(N)); exercise NaN masking
    eigvecs = jax.random.normal(kev, (B, N, K), jnp.float32) / float(N) ** 0.5
    eigvecs = eigvecs.at[0, 0, 3].set(jnp.nan).at[1, 5, 7].set(jnp.nan)

    # deterministic graphs: bidirectional ring + 64 random extra edges per graph
    ring = jnp.arange(N)
    ekeys = jax.random.split(kedge, 2 * B)
    A_list = []
    for g in range(B):
        src = jnp.concatenate([ring, (ring + 1) % N,
                               jax.random.randint(ekeys[2 * g], (64,), 0, N)])
        dst = jnp.concatenate([(ring + 1) % N, ring,
                               jax.random.randint(ekeys[2 * g + 1], (64,), 0, N)])
        # dense adjacency for in-kernel aggregation: A[i, j] = #edges j -> i
        A_list.append(jnp.zeros((N, N), jnp.float32).at[dst, src].add(1.0))
    A = jnp.stack(A_list)                                             # [B, N, N]
    # fold GINConv self term (eps=0) into the adjacency; exact in bf16 (small ints)
    A_hat = (A + jnp.eye(N, dtype=jnp.float32)).astype(jnp.bfloat16)

    raw = make_raw_params(kpar, DIM_IN, DIM_EMB, DIM_PE, PHI_HIDDEN, PHI_OUT, K)
    kp = make_kernel_params(raw, K)

    # TODO(synk): dropout (p=0.0) and BN running-stat updates are eval-mode identities;
    # BN is pre-folded into the adjacent Linear weights on the host.
    out = jax.block_until_ready(signnet_forward(x_feat, eigvecs, A_hat, kp))
    assert out.shape == (B, N, DIM_EMB), out.shape
    assert not bool(jnp.any(jnp.isnan(out)))

    ref = jnp.stack([reference_forward(x_feat[g], eigvecs[g], A[g], raw)
                     for g in range(B)])
    ref = jax.block_until_ready(ref)
    max_err = float(jnp.max(jnp.abs(out - ref)))
    # bf16 MXU path -> loosened tolerance vs. the f32 reference
    assert bool(jnp.allclose(out, ref, rtol=5e-2, atol=1e-1)), max_err

    print("KERNEL_OK")
</pallas_src>

<mosaic_0001>
module attributes {stable_mosaic.version = 11 : i64} {
  func.func @_signnet_fused_kernel(%arg0: i32, %arg1: memref<1x64x8xf32, #tpu.memory_space<vmem>>, %arg2: memref<1x64x16xf32, #tpu.memory_space<vmem>>, %arg3: memref<1x64x64xbf16, #tpu.memory_space<vmem>>, %arg4: memref<8x512xbf16, #tpu.memory_space<vmem>>, %arg5: memref<1x512xf32, #tpu.memory_space<vmem>>, %arg6: memref<512x512xbf16, #tpu.memory_space<vmem>>, %arg7: memref<1x512xf32, #tpu.memory_space<vmem>>, %arg8: memref<512x512xbf16, #tpu.memory_space<vmem>>, %arg9: memref<1x512xf32, #tpu.memory_space<vmem>>, %arg10: memref<512x512xbf16, #tpu.memory_space<vmem>>, %arg11: memref<1x512xf32, #tpu.memory_space<vmem>>, %arg12: memref<512x512xbf16, #tpu.memory_space<vmem>>, %arg13: memref<1x512xf32, #tpu.memory_space<vmem>>, %arg14: memref<512x64xbf16, #tpu.memory_space<vmem>>, %arg15: memref<1x64xf32, #tpu.memory_space<vmem>>, %arg16: memref<64x32xbf16, #tpu.memory_space<vmem>>, %arg17: memref<1x32xf32, #tpu.memory_space<vmem>>, %arg18: memref<16x128xbf16, #tpu.memory_space<vmem>>, %arg19: memref<32x128xbf16, #tpu.memory_space<vmem>>, %arg20: memref<1x128xf32, #tpu.memory_space<vmem>>, %arg21: memref<1x64x128xf32, #tpu.memory_space<vmem>>) attributes {dimension_semantics = [#tpu.dimension_semantics<parallel>], iteration_bounds = array<i64: 4>, scalar_prefetch = 0 : i64, scratch_operands = 0 : i64, tpu.core_type = #tpu.core_type<tc>, window_params = [{transform_indices = @transform_0, window_bounds = array<i64: 1, 64, 8>}, {transform_indices = @transform_1, window_bounds = array<i64: 1, 64, 16>}, {transform_indices = @transform_2, window_bounds = array<i64: 1, 64, 64>}, {pipeline_mode = #tpu.pipeline_mode<synchronous>, transform_indices = @transform_3, window_bounds = array<i64: 8, 512>}, {pipeline_mode = #tpu.pipeline_mode<synchronous>, transform_indices = @transform_4, window_bounds = array<i64: 1, 512>}, {pipeline_mode = #tpu.pipeline_mode<synchronous>, transform_indices = @transform_5, window_bounds = array<i64: 512, 512>}, {pipeline_mode = #tpu.pipeline_mode<synchronous>, transform_indices = @transform_6, window_bounds = array<i64: 1, 512>}, {pipeline_mode = #tpu.pipeline_mode<synchronous>, transform_indices = @transform_7, window_bounds = array<i64: 512, 512>}, {pipeline_mode = #tpu.pipeline_mode<synchronous>, transform_indices = @transform_8, window_bounds = array<i64: 1, 512>}, {pipeline_mode = #tpu.pipeline_mode<synchronous>, transform_indices = @transform_9, window_bounds = array<i64: 512, 512>}, {pipeline_mode = #tpu.pipeline_mode<synchronous>, transform_indices = @transform_10, window_bounds = array<i64: 1, 512>}, {pipeline_mode = #tpu.pipeline_mode<synchronous>, transform_indices = @transform_11, window_bounds = array<i64: 512, 512>}, {pipeline_mode = #tpu.pipeline_mode<synchronous>, transform_indices = @transform_12, window_bounds = array<i64: 1, 512>}, {pipeline_mode = #tpu.pipeline_mode<synchronous>, transform_indices = @transform_13, window_bounds = array<i64: 512, 64>}, {pipeline_mode = #tpu.pipeline_mode<synchronous>, transform_indices = @transform_14, window_bounds = array<i64: 1, 64>}, {pipeline_mode = #tpu.pipeline_mode<synchronous>, transform_indices = @transform_15, window_bounds = array<i64: 64, 32>}, {pipeline_mode = #tpu.pipeline_mode<synchronous>, transform_indices = @transform_16, window_bounds = array<i64: 1, 32>}, {pipeline_mode = #tpu.pipeline_mode<synchronous>, transform_indices = @transform_17, window_bounds = array<i64: 16, 128>}, {pipeline_mode = #tpu.pipeline_mode<synchronous>, transform_indices = @transform_18, window_bounds = array<i64: 32, 128>}, {pipeline_mode = #tpu.pipeline_mode<synchronous>, transform_indices = @transform_19, window_bounds = array<i64: 1, 128>}, {transform_indices = @transform_20, window_bounds = array<i64: 1, 64, 128>}]} {
    %c0 = arith.constant 0 : index
    %c0_0 = arith.constant 0 : index
    %c0_1 = arith.constant 0 : index
    %0 = vector.load %arg3[%c0, %c0_0, %c0_1] : memref<1x64x64xbf16, #tpu.memory_space<vmem>>, vector<1x64x64xbf16>
    %1 = vector.shape_cast %0 : vector<1x64x64xbf16> to vector<64x64xbf16>
    %c0_2 = arith.constant 0 : index
    %c0_3 = arith.constant 0 : index
    %c0_4 = arith.constant 0 : index
    %2 = vector.load %arg1[%c0_2, %c0_3, %c0_4] : memref<1x64x8xf32, #tpu.memory_space<vmem>>, vector<1x64x8xf32>
    %3 = vector.shape_cast %2 : vector<1x64x8xf32> to vector<64x8xf32>
    %4 = arith.cmpf one, %3, %3 : vector<64x8xf32>
    %cst = arith.constant 0.000000e+00 : f32
    %5 = vector.broadcast %cst : f32 to vector<64x8xf32>
    %6 = arith.select %4, %5, %3 : vector<64x8xi1>, vector<64x8xf32>
    %7 = arith.truncf %6 : vector<64x8xf32> to vector<64x8xbf16>
    %cst_5 = arith.constant dense<0.000000e+00> : vector<64x8xf32>
    %8 = tpu.matmul %1, %7, %cst_5 {dimension_numbers = #tpu.dot_dimension_numbers<[1], [0], [0], [1], [0, 0, 1, 1], [], []>} : vector<64x64xbf16>, vector<64x8xbf16>, vector<64x8xf32> -> vector<64x8xf32>
    %9 = arith.truncf %8 : vector<64x8xf32> to vector<64x8xbf16>
    %c0_6 = arith.constant 0 : index
    %c0_7 = arith.constant 0 : index
    %10 = vector.load %arg4[%c0_6, %c0_7] : memref<8x512xbf16, #tpu.memory_space<vmem>>, vector<8x512xbf16>
    %cst_8 = arith.constant dense<0.000000e+00> : vector<64x512xf32>
    %11 = tpu.matmul %9, %10, %cst_8 {dimension_numbers = #tpu.dot_dimension_numbers<[1], [0], [0], [1], [0, 0, 1, 1], [], []>} : vector<64x8xbf16>, vector<8x512xbf16>, vector<64x512xf32> -> vector<64x512xf32>
    %c0_9 = arith.constant 0 : index
    %c0_10 = arith.constant 0 : index
    %12 = vector.load %arg5[%c0_9, %c0_10] : memref<1x512xf32, #tpu.memory_space<vmem>>, vector<1x512xf32>
    %13 = vector.broadcast %12 : vector<1x512xf32> to vector<64x512xf32>
    %14 = arith.addf %11, %13 : vector<64x512xf32>
    %cst_11 = arith.constant 0.000000e+00 : f32
    %15 = vector.broadcast %cst_11 : f32 to vector<64x512xf32>
    %16 = arith.maximumf %14, %15 : vector<64x512xf32>
    %17 = arith.truncf %16 : vector<64x512xf32> to vector<64x512xbf16>
    %c0_12 = arith.constant 0 : index
    %c0_13 = arith.constant 0 : index
    %18 = vector.load %arg6[%c0_12, %c0_13] : memref<512x512xbf16, #tpu.memory_space<vmem>>, vector<512x512xbf16>
    %cst_14 = arith.constant dense<0.000000e+00> : vector<64x512xf32>
    %19 = tpu.matmul %17, %18, %cst_14 {dimension_numbers = #tpu.dot_dimension_numbers<[1], [0], [0], [1], [0, 0, 1, 1], [], []>} : vector<64x512xbf16>, vector<512x512xbf16>, vector<64x512xf32> -> vector<64x512xf32>
    %c0_15 = arith.constant 0 : index
    %c0_16 = arith.constant 0 : index
    %20 = vector.load %arg7[%c0_15, %c0_16] : memref<1x512xf32, #tpu.memory_space<vmem>>, vector<1x512xf32>
    %21 = vector.broadcast %20 : vector<1x512xf32> to vector<64x512xf32>
    %22 = arith.addf %19, %21 : vector<64x512xf32>
    %23 = arith.truncf %22 : vector<64x512xf32> to vector<64x512xbf16>
    %cst_17 = arith.constant dense<0.000000e+00> : vector<64x512xf32>
    %24 = tpu.matmul %1, %23, %cst_17 {dimension_numbers = #tpu.dot_dimension_numbers<[1], [0], [0], [1], [0, 0, 1, 1], [], []>} : vector<64x64xbf16>, vector<64x512xbf16>, vector<64x512xf32> -> vector<64x512xf32>
    %25 = arith.truncf %24 : vector<64x512xf32> to vector<64x512xbf16>
    %c0_18 = arith.constant 0 : index
    %c0_19 = arith.constant 0 : index
    %26 = vector.load %arg8[%c0_18, %c0_19] : memref<512x512xbf16, #tpu.memory_space<vmem>>, vector<512x512xbf16>
    %cst_20 = arith.constant dense<0.000000e+00> : vector<64x512xf32>
    %27 = tpu.matmul %25, %26, %cst_20 {dimension_numbers = #tpu.dot_dimension_numbers<[1], [0], [0], [1], [0, 0, 1, 1], [], []>} : vector<64x512xbf16>, vector<512x512xbf16>, vector<64x512xf32> -> vector<64x512xf32>
    %c0_21 = arith.constant 0 : index
    %c0_22 = arith.constant 0 : index
    %28 = vector.load %arg9[%c0_21, %c0_22] : memref<1x512xf32, #tpu.memory_space<vmem>>, vector<1x512xf32>
    %29 = vector.broadcast %28 : vector<1x512xf32> to vector<64x512xf32>
    %30 = arith.addf %27, %29 : vector<64x512xf32>
    %cst_23 = arith.constant 0.000000e+00 : f32
    %31 = vector.broadcast %cst_23 : f32 to vector<64x512xf32>
    %32 = arith.maximumf %30, %31 : vector<64x512xf32>
    %33 = arith.truncf %32 : vector<64x512xf32> to vector<64x512xbf16>
    %c0_24 = arith.constant 0 : index
    %c0_25 = arith.constant 0 : index
    %34 = vector.load %arg10[%c0_24, %c0_25] : memref<512x512xbf16, #tpu.memory_space<vmem>>, vector<512x512xbf16>
    %cst_26 = arith.constant dense<0.000000e+00> : vector<64x512xf32>
    %35 = tpu.matmul %33, %34, %cst_26 {dimension_numbers = #tpu.dot_dimension_numbers<[1], [0], [0], [1], [0, 0, 1, 1], [], []>} : vector<64x512xbf16>, vector<512x512xbf16>, vector<64x512xf32> -> vector<64x512xf32>
    %c0_27 = arith.constant 0 : index
    %c0_28 = arith.constant 0 : index
    %36 = vector.load %arg11[%c0_27, %c0_28] : memref<1x512xf32, #tpu.memory_space<vmem>>, vector<1x512xf32>
    %37 = vector.broadcast %36 : vector<1x512xf32> to vector<64x512xf32>
    %38 = arith.addf %35, %37 : vector<64x512xf32>
    %39 = arith.truncf %38 : vector<64x512xf32> to vector<64x512xbf16>
    %cst_29 = arith.constant dense<0.000000e+00> : vector<64x512xf32>
    %40 = tpu.matmul %1, %39, %cst_29 {dimension_numbers = #tpu.dot_dimension_numbers<[1], [0], [0], [1], [0, 0, 1, 1], [], []>} : vector<64x64xbf16>, vector<64x512xbf16>, vector<64x512xf32> -> vector<64x512xf32>
    %41 = arith.truncf %40 : vector<64x512xf32> to vector<64x512xbf16>
    %c0_30 = arith.constant 0 : index
    %c0_31 = arith.constant 0 : index
    %42 = vector.load %arg12[%c0_30, %c0_31] : memref<512x512xbf16, #tpu.memory_space<vmem>>, vector<512x512xbf16>
    %cst_32 = arith.constant dense<0.000000e+00> : vector<64x512xf32>
    %43 = tpu.matmul %41, %42, %cst_32 {dimension_numbers = #tpu.dot_dimension_numbers<[1], [0], [0], [1], [0, 0, 1, 1], [], []>} : vector<64x512xbf16>, vector<512x512xbf16>, vector<64x512xf32> -> vector<64x512xf32>
    %c0_33 = arith.constant 0 : index
    %c0_34 = arith.constant 0 : index
    %44 = vector.load %arg13[%c0_33, %c0_34] : memref<1x512xf32, #tpu.memory_space<vmem>>, vector<1x512xf32>
    %45 = vector.broadcast %44 : vector<1x512xf32> to vector<64x512xf32>
    %46 = arith.addf %43, %45 : vector<64x512xf32>
    %cst_35 = arith.constant 0.000000e+00 : f32
    %47 = vector.broadcast %cst_35 : f32 to vector<64x512xf32>
    %48 = arith.maximumf %46, %47 : vector<64x512xf32>
    %49 = arith.truncf %48 : vector<64x512xf32> to vector<64x512xbf16>
    %c0_36 = arith.constant 0 : index
    %c0_37 = arith.constant 0 : index
    %50 = vector.load %arg14[%c0_36, %c0_37] : memref<512x64xbf16, #tpu.memory_space<vmem>>, vector<512x64xbf16>
    %cst_38 = arith.constant dense<0.000000e+00> : vector<64x64xf32>
    %51 = tpu.matmul %49, %50, %cst_38 {dimension_numbers = #tpu.dot_dimension_numbers<[1], [0], [0], [1], [0, 0, 1, 1], [], []>} : vector<64x512xbf16>, vector<512x64xbf16>, vector<64x64xf32> -> vector<64x64xf32>
    %c0_39 = arith.constant 0 : index
    %c0_40 = arith.constant 0 : index
    %52 = vector.load %arg15[%c0_39, %c0_40] : memref<1x64xf32, #tpu.memory_space<vmem>>, vector<1x64xf32>
    %53 = vector.broadcast %52 : vector<1x64xf32> to vector<64x64xf32>
    %54 = arith.addf %51, %53 : vector<64x64xf32>
    %55 = arith.truncf %54 : vector<64x64xf32> to vector<64x64xbf16>
    %c0_41 = arith.constant 0 : index
    %c0_42 = arith.constant 0 : index
    %56 = vector.load %arg16[%c0_41, %c0_42] : memref<64x32xbf16, #tpu.memory_space<vmem>>, vector<64x32xbf16>
    %cst_43 = arith.constant dense<0.000000e+00> : vector<64x32xf32>
    %57 = tpu.matmul %55, %56, %cst_43 {dimension_numbers = #tpu.dot_dimension_numbers<[1], [0], [0], [1], [0, 0, 1, 1], [], []>} : vector<64x64xbf16>, vector<64x32xbf16>, vector<64x32xf32> -> vector<64x32xf32>
    %c0_44 = arith.constant 0 : index
    %c0_45 = arith.constant 0 : index
    %58 = vector.load %arg17[%c0_44, %c0_45] : memref<1x32xf32, #tpu.memory_space<vmem>>, vector<1x32xf32>
    %59 = vector.broadcast %58 : vector<1x32xf32> to vector<64x32xf32>
    %60 = arith.addf %57, %59 : vector<64x32xf32>
    %cst_46 = arith.constant 0.000000e+00 : f32
    %61 = vector.broadcast %cst_46 : f32 to vector<64x32xf32>
    %62 = arith.maximumf %60, %61 : vector<64x32xf32>
    %c0_47 = arith.constant 0 : index
    %c0_48 = arith.constant 0 : index
    %c0_49 = arith.constant 0 : index
    %63 = vector.load %arg2[%c0_47, %c0_48, %c0_49] : memref<1x64x16xf32, #tpu.memory_space<vmem>>, vector<1x64x16xf32>
    %64 = vector.shape_cast %63 : vector<1x64x16xf32> to vector<64x16xf32>
    %65 = arith.truncf %64 : vector<64x16xf32> to vector<64x16xbf16>
    %c0_50 = arith.constant 0 : index
    %c0_51 = arith.constant 0 : index
    %66 = vector.load %arg18[%c0_50, %c0_51] : memref<16x128xbf16, #tpu.memory_space<vmem>>, vector<16x128xbf16>
    %cst_52 = arith.constant dense<0.000000e+00> : vector<64x128xf32>
    %67 = tpu.matmul %65, %66, %cst_52 {dimension_numbers = #tpu.dot_dimension_numbers<[1], [0], [0], [1], [0, 0, 1, 1], [], []>} : vector<64x16xbf16>, vector<16x128xbf16>, vector<64x128xf32> -> vector<64x128xf32>
    %68 = arith.truncf %62 : vector<64x32xf32> to vector<64x32xbf16>
    %c0_53 = arith.constant 0 : index
    %c0_54 = arith.constant 0 : index
    %69 = vector.load %arg19[%c0_53, %c0_54] : memref<32x128xbf16, #tpu.memory_space<vmem>>, vector<32x128xbf16>
    %cst_55 = arith.constant dense<0.000000e+00> : vector<64x128xf32>
    %70 = tpu.matmul %68, %69, %cst_55 {dimension_numbers = #tpu.dot_dimension_numbers<[1], [0], [0], [1], [0, 0, 1, 1], [], []>} : vector<64x32xbf16>, vector<32x128xbf16>, vector<64x128xf32> -> vector<64x128xf32>
    %71 = arith.addf %67, %70 : vector<64x128xf32>
    %c0_56 = arith.constant 0 : index
    %c0_57 = arith.constant 0 : index
    %72 = vector.load %arg20[%c0_56, %c0_57] : memref<1x128xf32, #tpu.memory_space<vmem>>, vector<1x128xf32>
    %73 = vector.broadcast %72 : vector<1x128xf32> to vector<64x128xf32>
    %74 = arith.addf %71, %73 : vector<64x128xf32>
    %c0_58 = arith.constant 0 : index
    %c0_59 = arith.constant 0 : index
    %c0_60 = arith.constant 0 : index
    %75 = vector.load %arg21[%c0_58, %c0_59, %c0_60] : memref<1x64x128xf32, #tpu.memory_space<vmem>>, vector<1x64x128xf32>
    %76 = vector.shape_cast %75 : vector<1x64x128xf32> to vector<64x128xf32>
    %77 = vector.shape_cast %74 : vector<64x128xf32> to vector<1x64x128xf32>
    tpu.vector_store %arg21[%c0_58, %c0_59, %c0_60], %77 {strides = array<i32>} : memref<1x64x128xf32, #tpu.memory_space<vmem>>, vector<1x64x128xf32>,
    return
  }
  func.func @transform_0(%arg0: i32) -> (i32, i32, i32) {
    %c0_i32 = arith.constant 0 : i32
    %c0_i32_0 = arith.constant 0 : i32
    %c0_i32_1 = arith.constant 0 : i32
    return %arg0, %c0_i32, %c0_i32_0 : i32, i32, i32
  }
  func.func @transform_1(%arg0: i32) -> (i32, i32, i32) {
    %c0_i32 = arith.constant 0 : i32
    %c0_i32_0 = arith.constant 0 : i32
    %c0_i32_1 = arith.constant 0 : i32
    return %arg0, %c0_i32, %c0_i32_0 : i32, i32, i32
  }
  func.func @transform_2(%arg0: i32) -> (i32, i32, i32) {
    %c0_i32 = arith.constant 0 : i32
    %c0_i32_0 = arith.constant 0 : i32
    %c0_i32_1 = arith.constant 0 : i32
    return %arg0, %c0_i32, %c0_i32_0 : i32, i32, i32
  }
  func.func @transform_3(%arg0: i32) -> (i32, i32) {
    %c0_i32 = arith.constant 0 : i32
    %c0_i32_0 = arith.constant 0 : i32
    %c0_i32_1 = arith.constant 0 : i32
    return %c0_i32, %c0_i32_0 : i32, i32
  }
  func.func @transform_4(%arg0: i32) -> (i32, i32) {
    %c0_i32 = arith.constant 0 : i32
    %c0_i32_0 = arith.constant 0 : i32
    %c0_i32_1 = arith.constant 0 : i32
    return %c0_i32, %c0_i32_0 : i32, i32
  }
  func.func @transform_5(%arg0: i32) -> (i32, i32) {
    %c0_i32 = arith.constant 0 : i32
    %c0_i32_0 = arith.constant 0 : i32
    %c0_i32_1 = arith.constant 0 : i32
    return %c0_i32, %c0_i32_0 : i32, i32
  }
  func.func @transform_6(%arg0: i32) -> (i32, i32) {
    %c0_i32 = arith.constant 0 : i32
    %c0_i32_0 = arith.constant 0 : i32
    %c0_i32_1 = arith.constant 0 : i32
    return %c0_i32, %c0_i32_0 : i32, i32
  }
  func.func @transform_7(%arg0: i32) -> (i32, i32) {
    %c0_i32 = arith.constant 0 : i32
    %c0_i32_0 = arith.constant 0 : i32
    %c0_i32_1 = arith.constant 0 : i32
    return %c0_i32, %c0_i32_0 : i32, i32
  }
  func.func @transform_8(%arg0: i32) -> (i32, i32) {
    %c0_i32 = arith.constant 0 : i32
    %c0_i32_0 = arith.constant 0 : i32
    %c0_i32_1 = arith.constant 0 : i32
    return %c0_i32, %c0_i32_0 : i32, i32
  }
  func.func @transform_9(%arg0: i32) -> (i32, i32) {
    %c0_i32 = arith.constant 0 : i32
    %c0_i32_0 = arith.constant 0 : i32
    %c0_i32_1 = arith.constant 0 : i32
    return %c0_i32, %c0_i32_0 : i32, i32
  }
  func.func @transform_10(%arg0: i32) -> (i32, i32) {
    %c0_i32 = arith.constant 0 : i32
    %c0_i32_0 = arith.constant 0 : i32
    %c0_i32_1 = arith.constant 0 : i32
    return %c0_i32, %c0_i32_0 : i32, i32
  }
  func.func @transform_11(%arg0: i32) -> (i32, i32) {
    %c0_i32 = arith.constant 0 : i32
    %c0_i32_0 = arith.constant 0 : i32
    %c0_i32_1 = arith.constant 0 : i32
    return %c0_i32, %c0_i32_0 : i32, i32
  }
  func.func @transform_12(%arg0: i32) -> (i32, i32) {
    %c0_i32 = arith.constant 0 : i32
    %c0_i32_0 = arith.constant 0 : i32
    %c0_i32_1 = arith.constant 0 : i32
    return %c0_i32, %c0_i32_0 : i32, i32
  }
  func.func @transform_13(%arg0: i32) -> (i32, i32) {
    %c0_i32 = arith.constant 0 : i32
    %c0_i32_0 = arith.constant 0 : i32
    %c0_i32_1 = arith.constant 0 : i32
    return %c0_i32, %c0_i32_0 : i32, i32
  }
  func.func @transform_14(%arg0: i32) -> (i32, i32) {
    %c0_i32 = arith.constant 0 : i32
    %c0_i32_0 = arith.constant 0 : i32
    %c0_i32_1 = arith.constant 0 : i32
    return %c0_i32, %c0_i32_0 : i32, i32
  }
  func.func @transform_15(%arg0: i32) -> (i32, i32) {
    %c0_i32 = arith.constant 0 : i32
    %c0_i32_0 = arith.constant 0 : i32
    %c0_i32_1 = arith.constant 0 : i32
    return %c0_i32, %c0_i32_0 : i32, i32
  }
  func.func @transform_16(%arg0: i32) -> (i32, i32) {
    %c0_i32 = arith.constant 0 : i32
    %c0_i32_0 = arith.constant 0 : i32
    %c0_i32_1 = arith.constant 0 : i32
    return %c0_i32, %c0_i32_0 : i32, i32
  }
  func.func @transform_17(%arg0: i32) -> (i32, i32) {
    %c0_i32 = arith.constant 0 : i32
    %c0_i32_0 = arith.constant 0 : i32
    %c0_i32_1 = arith.constant 0 : i32
    return %c0_i32, %c0_i32_0 : i32, i32
  }
  func.func @transform_18(%arg0: i32) -> (i32, i32) {
    %c0_i32 = arith.constant 0 : i32
    %c0_i32_0 = arith.constant 0 : i32
    %c0_i32_1 = arith.constant 0 : i32
    return %c0_i32, %c0_i32_0 : i32, i32
  }
  func.func @transform_19(%arg0: i32) -> (i32, i32) {
    %c0_i32 = arith.constant 0 : i32
    %c0_i32_0 = arith.constant 0 : i32
    %c0_i32_1 = arith.constant 0 : i32
    return %c0_i32, %c0_i32_0 : i32, i32
  }
  func.func @transform_20(%arg0: i32) -> (i32, i32, i32) {
    %c0_i32 = arith.constant 0 : i32
    %c0_i32_0 = arith.constant 0 : i32
    %c0_i32_1 = arith.constant 0 : i32
    return %arg0, %c0_i32, %c0_i32_0 : i32, i32, i32
  }
}

</mosaic_0001>

<llo_original>
// kernel: tpu_custom_call.1
$region0: #{tpu_custom_call.1}
  #allocation0 [shape = 'u32[]', space=smem, size = 0x4, offset = 0x4, fixed_abs, tag = 'smem constant byte address 0x4 - core index']
  #allocation1 [shape = 'u32[72,128]{1,0:T(1,128)}', space=vmem, size = 0x9000, scoped, tag = 'internal scratch']
  %s0 = inlined_call_operand.vmem [shape: f32[4,64,8], index: 0, kind: input, shape index: {}]
  %s1 = inlined_call_operand.vmem [shape: f32[4,64,16], index: 1, kind: input, shape index: {}]
  %s2 = inlined_call_operand.vmem [shape: bf16[4,64,64], index: 2, kind: input, shape index: {}]
  %s3 = inlined_call_operand.vmem [shape: bf16[8,512], index: 3, kind: input, shape index: {}]
  %s4 = inlined_call_operand.vmem [shape: f32[1,512], index: 4, kind: input, shape index: {}]
  %s5 = inlined_call_operand.hbm [shape: bf16[512,512], index: 5, kind: input, shape index: {}]
  %s6 = inlined_call_operand.vmem [shape: f32[1,512], index: 6, kind: input, shape index: {}]
  %s7 = inlined_call_operand.hbm [shape: bf16[512,512], index: 7, kind: input, shape index: {}]
  %s8 = inlined_call_operand.vmem [shape: f32[1,512], index: 8, kind: input, shape index: {}]
  %s9 = inlined_call_operand.hbm [shape: bf16[512,512], index: 9, kind: input, shape index: {}]
  %s10 = inlined_call_operand.vmem [shape: f32[1,512], index: 10, kind: input, shape index: {}]
  %s11 = inlined_call_operand.hbm [shape: bf16[512,512], index: 11, kind: input, shape index: {}]
  %s12 = inlined_call_operand.vmem [shape: f32[1,512], index: 12, kind: input, shape index: {}]
  %s13 = inlined_call_operand.vmem [shape: bf16[512,64], index: 13, kind: input, shape index: {}]
  %s14 = inlined_call_operand.vmem [shape: f32[1,64], index: 14, kind: input, shape index: {}]
  %s15 = inlined_call_operand.vmem [shape: bf16[64,32], index: 15, kind: input, shape index: {}]
  %s16 = inlined_call_operand.vmem [shape: f32[1,32], index: 16, kind: input, shape index: {}]
  %s17 = inlined_call_operand.vmem [shape: bf16[16,128], index: 17, kind: input, shape index: {}]
  %s18 = inlined_call_operand.vmem [shape: bf16[32,128], index: 18, kind: input, shape index: {}]
  %s19 = inlined_call_operand.vmem [shape: f32[1,128], index: 19, kind: input, shape index: {}]
  %s20 = inlined_call_operand.hbm [shape: f32[4,64,128], index: 20, kind: output, shape index: {}]
  %s21 = sld [smem:[#allocation0]]
  $region129: #{tpu_custom_call.1} parent=0
    _
  %s23 = ssub.s32 1, %s21
  %s24 = scalar_select 0, %s23, %s21
  $region1: #{tpu_custom_call.1} parent=0
    #allocation2 [shape = 'u8[524288]{0}', space=vmem, size = 0x80000, scoped, tag = 'input window, operand 5, single buffered']
    #allocation3 [shape = 's32[2]{0}', space=sflag, size = 0x8, scoped, tag = 'scoped memory for tpu_custom_call.1']
    #allocation4 [shape = 's32[2]{0}', space=sflag, size = 0x8, scoped, tag = 'scoped memory for tpu_custom_call.1']
    #allocation5 [shape = 'u8[524288]{0}', space=vmem, size = 0x80000, scoped, tag = 'input window, operand 7, single buffered']
    #allocation6 [shape = 's32[1]{0}', space=sflag, size = 0x4, scoped, tag = 'scoped memory for tpu_custom_call.1']
    #allocation7 [shape = 'u8[524288]{0}', space=vmem, size = 0x80000, scoped, tag = 'input window, operand 9, single buffered']
    #allocation8 [shape = 'u8[524288]{0}', space=vmem, size = 0x80000, scoped, tag = 'input window, operand 11, single buffered']
    #allocation9 [shape = 's32[1]{0}', space=sflag, size = 0x4, scoped, tag = 'scoped memory for tpu_custom_call.1']
    #allocation10 [shape = 'u8[65536]{0}', space=vmem, size = 0x10000, scoped, tag = 'output window, operand 0']
    %25 = vsyncpa [#allocation3], 0
    %26 = vsyncpa [#allocation6], 0
    %27 = vsyncpa [#allocation9], 0
    %28 = vsyncpa [#allocation4], 0
    %s29 = scalar_lea.sflag [#allocation4], 1
    %30 = vsyncpa %s29, 0
    loop: start=0, step=1, limit=6
    $region2: #{tpu_custom_call.1} parent=1 // loop_pre_header
      _
    $region3: #{tpu_custom_call.1} parent=1 // loop_header
      %s32 = sphi 0, %s36
      %p33 = scmp.ge.s32.totalorder %s32, 6
      %s42 = sphi 0, %s44
      %s45 = sphi 0, %s42
      %s46 = sphi 0, %s45
      %s62 = sphi 0, %s46
      %s68 = sphi 0, %s70
      %s71 = sphi 0, %s68
      %s72 = sphi 0, %s71
      %s88 = sphi 0, %s72
      %s94 = sphi 0, %s96
      %s97 = sphi 0, %s94
      %s98 = sphi 0, %s97
      %s114 = sphi 0, %s98
      %s118 = sphi 0, %s118
      %s120 = sphi 0, %s118
      %s121 = sphi 0, %s120
      %s135 = sphi 0, %s121
      %s139 = sphi 0, %s139
      %s141 = sphi 0, %s139
      %s142 = sphi 0, %s141
      %s156 = sphi 0, %s142
      %s160 = sphi 0, %s160
      %s162 = sphi 0, %s160
      %s163 = sphi 0, %s162
      %s177 = sphi 0, %s163
      %s181 = sphi 0, %s181
      %s183 = sphi 0, %s181
      %s184 = sphi 0, %s183
      %s198 = sphi 0, %s184
      %s202 = sphi 0, %s202
      %s204 = sphi 0, %s202
      %s205 = sphi 0, %s204
      %s219 = sphi 0, %s205
      %s223 = sphi 0, %s223
      %s225 = sphi 0, %s223
      %s226 = sphi 0, %s225
      %s240 = sphi 0, %s226
      %s244 = sphi 0, %s244
      %s246 = sphi 0, %s244
      %s247 = sphi 0, %s246
      %s261 = sphi 0, %s247
      %s265 = sphi 0, %s265
      %s267 = sphi 0, %s265
      %s268 = sphi 0, %s267
      %s282 = sphi 0, %s268
      %s286 = sphi 0, %s286
      %s288 = sphi 0, %s286
      %s289 = sphi 0, %s288
      %s303 = sphi 0, %s289
      %s307 = sphi 0, %s307
      %s309 = sphi 0, %s307
      %s310 = sphi 0, %s309
      %s324 = sphi 0, %s310
      %s328 = sphi 0, %s328
      %s330 = sphi 0, %s328
      %s331 = sphi 0, %s330
      %s345 = sphi 0, %s331
      %s349 = sphi 0, %s349
      %s351 = sphi 0, %s349
      %s352 = sphi 0, %s351
      %s366 = sphi 0, %s352
      %s370 = sphi 0, %s370
      %s372 = sphi 0, %s370
      %s373 = sphi 0, %s372
      %s387 = sphi 0, %s373
      %s391 = sphi 0, %s391
      %s393 = sphi 0, %s391
      %s394 = sphi 0, %s393
      %s408 = sphi 0, %s394
      %s412 = sphi 0, %s412
      %s414 = sphi 0, %s412
      %s415 = sphi 0, %s414
      %s429 = sphi 0, %s415
      %s433 = sphi 0, %s433
      %s435 = sphi 0, %s433
      %s436 = sphi 0, %s435
      %s450 = sphi 0, %s436
      %s454 = sphi 0, %s454
      %s456 = sphi 0, %s454
      %s457 = sphi 0, %s456
      %s471 = sphi 0, %s457
      %s477 = sphi 0, %s479
      %s480 = sphi 0, %s477
      %s481 = sphi 0, %s480
      %s497 = sphi 0, %s481
    $region4: #{tpu_custom_call.1} parent=1 // loop_header_branch
      %35 = sbr.rel (%p33) target = $region8
    $region5: #{tpu_custom_call.1} parent=1 // loop_body
      %s37 = ssub.s32 %s32, 1
      %s38 = ssub.s32 %s32, 2
      %s39 = sadd.s32 %s32, 1
      %s40 = ssub.s32 %s32, %s39
      %p41 = scmp.eq.s32.totalorder %s40, 0
      %s43 = sadd.s32 %s42, 1
      %s44 = scalar_select %p41, %s42, %s43
      %p47 = pneg %p41
      %p48 = scmp.eq.s32.totalorder %s32, 3
      %p49 = por %p47, %p48
      %p50 = scmp.ne.s32.totalorder %s42, %s45
      %p51 = scmp.eq.s32.totalorder %s32, 0
      %p52 = por %p50, %p51
      %p53 = scmp.ne.s32.totalorder %s42, %s45
      %p54 = scmp.eq.s32.totalorder %s37, 3
      %p55 = por %p53, %p54
      %p56 = scmp.ne.s32.totalorder %s45, %s46
      %p57 = scmp.eq.s32.totalorder %s37, 0
      %p58 = por %p56, %p57
      %p59 = scmp.ne.s32.totalorder %s45, %s46
      %p60 = scmp.eq.s32.totalorder %s38, 3
      %p61 = por %p59, %p60
      %p63 = scmp.ne.s32.totalorder %s46, %s62
      %p64 = scmp.eq.s32.totalorder %s38, 0
      %p65 = por %p63, %p64
      %s66 = ssub.s32 %s32, %s39
      %p67 = scmp.eq.s32.totalorder %s66, 0
      %s69 = sadd.s32 %s68, 1
      %s70 = scalar_select %p67, %s68, %s69
      %p73 = pneg %p67
      %p74 = scmp.eq.s32.totalorder %s32, 3
      %p75 = por %p73, %p74
      %p76 = scmp.ne.s32.totalorder %s68, %s71
      %p77 = scmp.eq.s32.totalorder %s32, 0
      %p78 = por %p76, %p77
      %p79 = scmp.ne.s32.totalorder %s68, %s71
      %p80 = scmp.eq.s32.totalorder %s37, 3
      %p81 = por %p79, %p80
      %p82 = scmp.ne.s32.totalorder %s71, %s72
      %p83 = scmp.eq.s32.totalorder %s37, 0
      %p84 = por %p82, %p83
      %p85 = scmp.ne.s32.totalorder %s71, %s72
      %p86 = scmp.eq.s32.totalorder %s38, 3
      %p87 = por %p85, %p86
      %p89 = scmp.ne.s32.totalorder %s72, %s88
      %p90 = scmp.eq.s32.totalorder %s38, 0
      %p91 = por %p89, %p90
      %s92 = ssub.s32 %s32, %s39
      %p93 = scmp.eq.s32.totalorder %s92, 0
      %s95 = sadd.s32 %s94, 1
      %s96 = scalar_select %p93, %s94, %s95
      %p99 = pneg %p93
      %p100 = scmp.eq.s32.totalorder %s32, 3
      %p101 = por %p99, %p100
      %p102 = scmp.ne.s32.totalorder %s94, %s97
      %p103 = scmp.eq.s32.totalorder %s32, 0
      %p104 = por %p102, %p103
      %p105 = scmp.ne.s32.totalorder %s94, %s97
      %p106 = scmp.eq.s32.totalorder %s37, 3
      %p107 = por %p105, %p106
      %p108 = scmp.ne.s32.totalorder %s97, %s98
      %p109 = scmp.eq.s32.totalorder %s37, 0
      %p110 = por %p108, %p109
      %p111 = scmp.ne.s32.totalorder %s97, %s98
      %p112 = scmp.eq.s32.totalorder %s38, 3
      %p113 = por %p111, %p112
      %p115 = scmp.ne.s32.totalorder %s98, %s114
      %p116 = scmp.eq.s32.totalorder %s38, 0
      %p117 = por %p115, %p116
      %s119 = sadd.s32 %s118, 1
      %p122 = scmp.eq.s32.totalorder %s32, 3
      %p123 = scmp.ne.s32.totalorder %s118, %s120
      %p124 = scmp.eq.s32.totalorder %s32, 0
      %p125 = por %p123, %p124
      %p126 = scmp.ne.s32.totalorder %s118, %s120
      %p127 = scmp.eq.s32.totalorder %s37, 3
      %p128 = por %p126, %p127
      %p129 = scmp.ne.s32.totalorder %s120, %s121
      %p130 = scmp.eq.s32.totalorder %s37, 0
      %p131 = por %p129, %p130
      %p132 = scmp.ne.s32.totalorder %s120, %s121
      %p133 = scmp.eq.s32.totalorder %s38, 3
      %p134 = por %p132, %p133
      %p136 = scmp.ne.s32.totalorder %s121, %s135
      %p137 = scmp.eq.s32.totalorder %s38, 0
      %p138 = por %p136, %p137
      %s140 = sadd.s32 %s139, 1
      %p143 = scmp.eq.s32.totalorder %s32, 3
      %p144 = scmp.ne.s32.totalorder %s139, %s141
      %p145 = scmp.eq.s32.totalorder %s32, 0
      %p146 = por %p144, %p145
      %p147 = scmp.ne.s32.totalorder %s139, %s141
      %p148 = scmp.eq.s32.totalorder %s37, 3
      %p149 = por %p147, %p148
      %p150 = scmp.ne.s32.totalorder %s141, %s142
      %p151 = scmp.eq.s32.totalorder %s37, 0
      %p152 = por %p150, %p151
      %p153 = scmp.ne.s32.totalorder %s141, %s142
      %p154 = scmp.eq.s32.totalorder %s38, 3
      %p155 = por %p153, %p154
      %p157 = scmp.ne.s32.totalorder %s142, %s156
      %p158 = scmp.eq.s32.totalorder %s38, 0
      %p159 = por %p157, %p158
      %s161 = sadd.s32 %s160, 1
      %p164 = scmp.eq.s32.totalorder %s32, 3
      %p165 = scmp.ne.s32.totalorder %s160, %s162
      %p166 = scmp.eq.s32.totalorder %s32, 0
      %p167 = por %p165, %p166
      %p168 = scmp.ne.s32.totalorder %s160, %s162
      %p169 = scmp.eq.s32.totalorder %s37, 3
      %p170 = por %p168, %p169
      %p171 = scmp.ne.s32.totalorder %s162, %s163
      %p172 = scmp.eq.s32.totalorder %s37, 0
      %p173 = por %p171, %p172
      %p174 = scmp.ne.s32.totalorder %s162, %s163
      %p175 = scmp.eq.s32.totalorder %s38, 3
      %p176 = por %p174, %p175
      %p178 = scmp.ne.s32.totalorder %s163, %s177
      %p179 = scmp.eq.s32.totalorder %s38, 0
      %p180 = por %p178, %p179
      %s182 = sadd.s32 %s181, 1
      %p185 = scmp.eq.s32.totalorder %s32, 3
      %p186 = scmp.ne.s32.totalorder %s181, %s183
      %p187 = scmp.eq.s32.totalorder %s32, 0
      %p188 = por %p186, %p187
      %p189 = scmp.ne.s32.totalorder %s181, %s183
      %p190 = scmp.eq.s32.totalorder %s37, 3
      %p191 = por %p189, %p190
      %p192 = scmp.ne.s32.totalorder %s183, %s184
      %p193 = scmp.eq.s32.totalorder %s37, 0
      %p194 = por %p192, %p193
      %p195 = scmp.ne.s32.totalorder %s183, %s184
      %p196 = scmp.eq.s32.totalorder %s38, 3
      %p197 = por %p195, %p196
      %p199 = scmp.ne.s32.totalorder %s184, %s198
      %p200 = scmp.eq.s32.totalorder %s38, 0
      %p201 = por %p199, %p200
      %s203 = sadd.s32 %s202, 1
      %p206 = scmp.eq.s32.totalorder %s32, 3
      %p207 = scmp.ne.s32.totalorder %s202, %s204
      %p208 = scmp.eq.s32.totalorder %s32, 0
      %p209 = por %p207, %p208
      %p210 = scmp.ne.s32.totalorder %s202, %s204
      %p211 = scmp.eq.s32.totalorder %s37, 3
      %p212 = por %p210, %p211
      %p213 = scmp.ne.s32.totalorder %s204, %s205
      %p214 = scmp.eq.s32.totalorder %s37, 0
      %p215 = por %p213, %p214
      %p216 = scmp.ne.s32.totalorder %s204, %s205
      %p217 = scmp.eq.s32.totalorder %s38, 3
      %p218 = por %p216, %p217
      %p220 = scmp.ne.s32.totalorder %s205, %s219
      %p221 = scmp.eq.s32.totalorder %s38, 0
      %p222 = por %p220, %p221
      %s224 = sadd.s32 %s223, 1
      %p227 = scmp.eq.s32.totalorder %s32, 3
      %p228 = scmp.ne.s32.totalorder %s223, %s225
      %p229 = scmp.eq.s32.totalorder %s32, 0
      %p230 = por %p228, %p229
      %p231 = scmp.ne.s32.totalorder %s223, %s225
      %p232 = scmp.eq.s32.totalorder %s37, 3
      %p233 = por %p231, %p232
      %p234 = scmp.ne.s32.totalorder %s225, %s226
      %p235 = scmp.eq.s32.totalorder %s37, 0
      %p236 = por %p234, %p235
      %p237 = scmp.ne.s32.totalorder %s225, %s226
      %p238 = scmp.eq.s32.totalorder %s38, 3
      %p239 = por %p237, %p238
      %p241 = scmp.ne.s32.totalorder %s226, %s240
      %p242 = scmp.eq.s32.totalorder %s38, 0
      %p243 = por %p241, %p242
      %s245 = sadd.s32 %s244, 1
      %p248 = scmp.eq.s32.totalorder %s32, 3
      %p249 = scmp.ne.s32.totalorder %s244, %s246
      %p250 = scmp.eq.s32.totalorder %s32, 0
      %p251 = por %p249, %p250
      %p252 = scmp.ne.s32.totalorder %s244, %s246
      %p253 = scmp.eq.s32.totalorder %s37, 3
      %p254 = por %p252, %p253
      %p255 = scmp.ne.s32.totalorder %s246, %s247
      %p256 = scmp.eq.s32.totalorder %s37, 0
      %p257 = por %p255, %p256
      %p258 = scmp.ne.s32.totalorder %s246, %s247
      %p259 = scmp.eq.s32.totalorder %s38, 3
      %p260 = por %p258, %p259
      %p262 = scmp.ne.s32.totalorder %s247, %s261
      %p263 = scmp.eq.s32.totalorder %s38, 0
      %p264 = por %p262, %p263
      %s266 = sadd.s32 %s265, 1
      %p269 = scmp.eq.s32.totalorder %s32, 3
      %p270 = scmp.ne.s32.totalorder %s265, %s267
      %p271 = scmp.eq.s32.totalorder %s32, 0
      %p272 = por %p270, %p271
      %p273 = scmp.ne.s32.totalorder %s265, %s267
      %p274 = scmp.eq.s32.totalorder %s37, 3
      %p275 = por %p273, %p274
      %p276 = scmp.ne.s32.totalorder %s267, %s268
      %p277 = scmp.eq.s32.totalorder %s37, 0
      %p278 = por %p276, %p277
      %p279 = scmp.ne.s32.totalorder %s267, %s268
      %p280 = scmp.eq.s32.totalorder %s38, 3
      %p281 = por %p279, %p280
      %p283 = scmp.ne.s32.totalorder %s268, %s282
      %p284 = scmp.eq.s32.totalorder %s38, 0
      %p285 = por %p283, %p284
      %s287 = sadd.s32 %s286, 1
      %p290 = scmp.eq.s32.totalorder %s32, 3
      %p291 = scmp.ne.s32.totalorder %s286, %s288
      %p292 = scmp.eq.s32.totalorder %s32, 0
      %p293 = por %p291, %p292
      %p294 = scmp.ne.s32.totalorder %s286, %s288
      %p295 = scmp.eq.s32.totalorder %s37, 3
      %p296 = por %p294, %p295
      %p297 = scmp.ne.s32.totalorder %s288, %s289
      %p298 = scmp.eq.s32.totalorder %s37, 0
      %p299 = por %p297, %p298
      %p300 = scmp.ne.s32.totalorder %s288, %s289
      %p301 = scmp.eq.s32.totalorder %s38, 3
      %p302 = por %p300, %p301
      %p304 = scmp.ne.s32.totalorder %s289, %s303
      %p305 = scmp.eq.s32.totalorder %s38, 0
      %p306 = por %p304, %p305
      %s308 = sadd.s32 %s307, 1
      %p311 = scmp.eq.s32.totalorder %s32, 3
      %p312 = scmp.ne.s32.totalorder %s307, %s309
      %p313 = scmp.eq.s32.totalorder %s32, 0
      %p314 = por %p312, %p313
      %p315 = scmp.ne.s32.totalorder %s307, %s309
      %p316 = scmp.eq.s32.totalorder %s37, 3
      %p317 = por %p315, %p316
      %p318 = scmp.ne.s32.totalorder %s309, %s310
      %p319 = scmp.eq.s32.totalorder %s37, 0
      %p320 = por %p318, %p319
      %p321 = scmp.ne.s32.totalorder %s309, %s310
      %p322 = scmp.eq.s32.totalorder %s38, 3
      %p323 = por %p321, %p322
      %p325 = scmp.ne.s32.totalorder %s310, %s324
      %p326 = scmp.eq.s32.totalorder %s38, 0
      %p327 = por %p325, %p326
      %s329 = sadd.s32 %s328, 1
      %p332 = scmp.eq.s32.totalorder %s32, 3
      %p333 = scmp.ne.s32.totalorder %s328, %s330
      %p334 = scmp.eq.s32.totalorder %s32, 0
      %p335 = por %p333, %p334
      %p336 = scmp.ne.s32.totalorder %s328, %s330
      %p337 = scmp.eq.s32.totalorder %s37, 3
      %p338 = por %p336, %p337
      %p339 = scmp.ne.s32.totalorder %s330, %s331
      %p340 = scmp.eq.s32.totalorder %s37, 0
      %p341 = por %p339, %p340
      %p342 = scmp.ne.s32.totalorder %s330, %s331
      %p343 = scmp.eq.s32.totalorder %s38, 3
      %p344 = por %p342, %p343
      %p346 = scmp.ne.s32.totalorder %s331, %s345
      %p347 = scmp.eq.s32.totalorder %s38, 0
      %p348 = por %p346, %p347
      %s350 = sadd.s32 %s349, 1
      %p353 = scmp.eq.s32.totalorder %s32, 3
      %p354 = scmp.ne.s32.totalorder %s349, %s351
      %p355 = scmp.eq.s32.totalorder %s32, 0
      %p356 = por %p354, %p355
      %p357 = scmp.ne.s32.totalorder %s349, %s351
      %p358 = scmp.eq.s32.totalorder %s37, 3
      %p359 = por %p357, %p358
      %p360 = scmp.ne.s32.totalorder %s351, %s352
      %p361 = scmp.eq.s32.totalorder %s37, 0
      %p362 = por %p360, %p361
      %p363 = scmp.ne.s32.totalorder %s351, %s352
      %p364 = scmp.eq.s32.totalorder %s38, 3
      %p365 = por %p363, %p364
      %p367 = scmp.ne.s32.totalorder %s352, %s366
      %p368 = scmp.eq.s32.totalorder %s38, 0
      %p369 = por %p367, %p368
      %s371 = sadd.s32 %s370, 1
      %p374 = scmp.eq.s32.totalorder %s32, 3
      %p375 = scmp.ne.s32.totalorder %s370, %s372
      %p376 = scmp.eq.s32.totalorder %s32, 0
      %p377 = por %p375, %p376
      %p378 = scmp.ne.s32.totalorder %s370, %s372
      %p379 = scmp.eq.s32.totalorder %s37, 3
      %p380 = por %p378, %p379
      %p381 = scmp.ne.s32.totalorder %s372, %s373
      %p382 = scmp.eq.s32.totalorder %s37, 0
      %p383 = por %p381, %p382
      %p384 = scmp.ne.s32.totalorder %s372, %s373
      %p385 = scmp.eq.s32.totalorder %s38, 3
      %p386 = por %p384, %p385
      %p388 = scmp.ne.s32.totalorder %s373, %s387
      %p389 = scmp.eq.s32.totalorder %s38, 0
      %p390 = por %p388, %p389
      %s392 = sadd.s32 %s391, 1
      %p395 = scmp.eq.s32.totalorder %s32, 3
      %p396 = scmp.ne.s32.totalorder %s391, %s393
      %p397 = scmp.eq.s32.totalorder %s32, 0
      %p398 = por %p396, %p397
      %p399 = scmp.ne.s32.totalorder %s391, %s393
      %p400 = scmp.eq.s32.totalorder %s37, 3
      %p401 = por %p399, %p400
      %p402 = scmp.ne.s32.totalorder %s393, %s394
      %p403 = scmp.eq.s32.totalorder %s37, 0
      %p404 = por %p402, %p403
      %p405 = scmp.ne.s32.totalorder %s393, %s394
      %p406 = scmp.eq.s32.totalorder %s38, 3
      %p407 = por %p405, %p406
      %p409 = scmp.ne.s32.totalorder %s394, %s408
      %p410 = scmp.eq.s32.totalorder %s38, 0
      %p411 = por %p409, %p410
      %s413 = sadd.s32 %s412, 1
      %p416 = scmp.eq.s32.totalorder %s32, 3
      %p417 = scmp.ne.s32.totalorder %s412, %s414
      %p418 = scmp.eq.s32.totalorder %s32, 0
      %p419 = por %p417, %p418
      %p420 = scmp.ne.s32.totalorder %s412, %s414
      %p421 = scmp.eq.s32.totalorder %s37, 3
      %p422 = por %p420, %p421
      %p423 = scmp.ne.s32.totalorder %s414, %s415
      %p424 = scmp.eq.s32.totalorder %s37, 0
      %p425 = por %p423, %p424
      %p426 = scmp.ne.s32.totalorder %s414, %s415
      %p427 = scmp.eq.s32.totalorder %s38, 3
      %p428 = por %p426, %p427
      %p430 = scmp.ne.s32.totalorder %s415, %s429
      %p431 = scmp.eq.s32.totalorder %s38, 0
      %p432 = por %p430, %p431
      %s434 = sadd.s32 %s433, 1
      %p437 = scmp.eq.s32.totalorder %s32, 3
      %p438 = scmp.ne.s32.totalorder %s433, %s435
      %p439 = scmp.eq.s32.totalorder %s32, 0
      %p440 = por %p438, %p439
      %p441 = scmp.ne.s32.totalorder %s433, %s435
      %p442 = scmp.eq.s32.totalorder %s37, 3
      %p443 = por %p441, %p442
      %p444 = scmp.ne.s32.totalorder %s435, %s436
      %p445 = scmp.eq.s32.totalorder %s37, 0
      %p446 = por %p444, %p445
      %p447 = scmp.ne.s32.totalorder %s435, %s436
      %p448 = scmp.eq.s32.totalorder %s38, 3
      %p449 = por %p447, %p448
      %p451 = scmp.ne.s32.totalorder %s436, %s450
      %p452 = scmp.eq.s32.totalorder %s38, 0
      %p453 = por %p451, %p452
      %s455 = sadd.s32 %s454, 1
      %p458 = scmp.eq.s32.totalorder %s32, 3
      %p459 = scmp.ne.s32.totalorder %s454, %s456
      %p460 = scmp.eq.s32.totalorder %s32, 0
      %p461 = por %p459, %p460
      %p462 = scmp.ne.s32.totalorder %s454, %s456
      %p463 = scmp.eq.s32.totalorder %s37, 3
      %p464 = por %p462, %p463
      %p465 = scmp.ne.s32.totalorder %s456, %s457
      %p466 = scmp.eq.s32.totalorder %s37, 0
      %p467 = por %p465, %p466
      %p468 = scmp.ne.s32.totalorder %s456, %s457
      %p469 = scmp.eq.s32.totalorder %s38, 3
      %p470 = por %p468, %p469
      %p472 = scmp.ne.s32.totalorder %s457, %s471
      %p473 = scmp.eq.s32.totalorder %s38, 0
      %p474 = por %p472, %p473
      %s475 = ssub.s32 %s32, %s39
      %p476 = scmp.eq.s32.totalorder %s475, 0
      %s478 = sadd.s32 %s477, 1
      %s479 = scalar_select %p476, %s477, %s478
      %p482 = pneg %p476
      %p483 = scmp.eq.s32.totalorder %s32, 3
      %p484 = por %p482, %p483
      %p485 = scmp.ne.s32.totalorder %s477, %s480
      %p486 = scmp.eq.s32.totalorder %s32, 0
      %p487 = por %p485, %p486
      %p488 = scmp.ne.s32.totalorder %s477, %s480
      %p489 = scmp.eq.s32.totalorder %s37, 3
      %p490 = por %p488, %p489
      %p491 = scmp.ne.s32.totalorder %s480, %s481
      %p492 = scmp.eq.s32.totalorder %s37, 0
      %p493 = por %p491, %p492
      %p494 = scmp.ne.s32.totalorder %s480, %s481
      %p495 = scmp.eq.s32.totalorder %s38, 3
      %p496 = por %p494, %p495
      %p498 = scmp.ne.s32.totalorder %s481, %s497
      %p499 = scmp.eq.s32.totalorder %s38, 0
      %p500 = por %p498, %p499
      %p501 = scmp.le.s32.totalorder 1, %s32
      %p502 = scmp.lt.s32.totalorder %s32, 5
      %p503 = pnand %p501, %p502
      %p504 = pneg %p503
      // Predicated region
      $region9: #{tpu_custom_call.1} parent=5 // pred_check
        _
      $region10: #{tpu_custom_call.1} parent=5 // pred_check_branch
        %506 = sbr.rel (%p503) target = $region12
      $region11: #{tpu_custom_call.1} parent=5 // pred_region
        %s507 = ssub.s32 %s32, 1
        // Predicated region
        $region13: #{tpu_custom_call.1} parent=11 // pred_check
          %p508 = pneg %p131
        $region14: #{tpu_custom_call.1} parent=11 // pred_check_branch
          %510 = sbr.rel (%p508) target = $region16
        $region15: #{tpu_custom_call.1} parent=11 // pred_region
          _
        $region16: #{tpu_custom_call.1} parent=11 // pred_fallthru
          _
        // Predicated region
        $region17: #{tpu_custom_call.1} parent=11 // pred_check
          %p511 = pneg %p152
        $region18: #{tpu_custom_call.1} parent=11 // pred_check_branch
          %513 = sbr.rel (%p511) target = $region20
        $region19: #{tpu_custom_call.1} parent=11 // pred_region
          _
        $region20: #{tpu_custom_call.1} parent=11 // pred_fallthru
          _
        // Predicated region
        $region21: #{tpu_custom_call.1} parent=11 // pred_check
          %p514 = pneg %p173
        $region22: #{tpu_custom_call.1} parent=11 // pred_check_branch
          %516 = sbr.rel (%p514) target = $region24
        $region23: #{tpu_custom_call.1} parent=11 // pred_region
          %518 = vsyncadd [#allocation3], 0
          %s519 = sshll.u32 %s5, 4
          %s520 = int_to_ptr.hbm [resolvable:$true] %s519
          %s521 = sshll.u32 [#allocation2], 4
          %s522 = int_to_ptr.vmem [resolvable:$true] %s521
          %527 = dma.hbm_to_vmem [thread:$0]  %s520, 16384, %s522, [#allocation3], 256, 256, 16
        $region24: #{tpu_custom_call.1} parent=11 // pred_fallthru
          _
        // Predicated region
        $region25: #{tpu_custom_call.1} parent=11 // pred_check
          %p528 = pneg %p194
        $region26: #{tpu_custom_call.1} parent=11 // pred_check_branch
          %530 = sbr.rel (%p528) target = $region28
        $region27: #{tpu_custom_call.1} parent=11 // pred_region
          _
        $region28: #{tpu_custom_call.1} parent=11 // pred_fallthru
          _
        // Predicated region
        $region29: #{tpu_custom_call.1} parent=11 // pred_check
          %p531 = pneg %p215
        $region30: #{tpu_custom_call.1} parent=11 // pred_check_branch
          %533 = sbr.rel (%p531) target = $region32
        $region31: #{tpu_custom_call.1} parent=11 // pred_region
          %535 = vsyncadd [#allocation6], 0
          %s536 = sshll.u32 %s7, 4
          %s537 = int_to_ptr.hbm [resolvable:$true] %s536
          %s538 = sshll.u32 [#allocation5], 4
          %s539 = int_to_ptr.vmem [resolvable:$true] %s538
          %544 = dma.hbm_to_vmem [thread:$0]  %s537, 16384, %s539, [#allocation6], 256, 256, 16
        $region32: #{tpu_custom_call.1} parent=11 // pred_fallthru
          _
        // Predicated region
        $region33: #{tpu_custom_call.1} parent=11 // pred_check
          %p545 = pneg %p236
        $region34: #{tpu_custom_call.1} parent=11 // pred_check_branch
          %547 = sbr.rel (%p545) target = $region36
        $region35: #{tpu_custom_call.1} parent=11 // pred_region
          _
        $region36: #{tpu_custom_call.1} parent=11 // pred_fallthru
          _
        // Predicated region
        $region37: #{tpu_custom_call.1} parent=11 // pred_check
          %p548 = pneg %p257
        $region38: #{tpu_custom_call.1} parent=11 // pred_check_branch
          %550 = sbr.rel (%p548) target = $region40
        $region39: #{tpu_custom_call.1} parent=11 // pred_region
          %552 = vsyncadd [#allocation6], 0
          %s553 = sshll.u32 %s9, 4
          %s554 = int_to_ptr.hbm [resolvable:$true] %s553
          %s555 = sshll.u32 [#allocation7], 4
          %s556 = int_to_ptr.vmem [resolvable:$true] %s555
          %561 = dma.hbm_to_vmem [thread:$0]  %s554, 16384, %s556, [#allocation6], 256, 256, 16
        $region40: #{tpu_custom_call.1} parent=11 // pred_fallthru
          _
        // Predicated region
        $region41: #{tpu_custom_call.1} parent=11 // pred_check
          %p562 = pneg %p278
        $region42: #{tpu_custom_call.1} parent=11 // pred_check_branch
          %564 = sbr.rel (%p562) target = $region44
        $region43: #{tpu_custom_call.1} parent=11 // pred_region
          _
        $region44: #{tpu_custom_call.1} parent=11 // pred_fallthru
          _
        // Predicated region
        $region45: #{tpu_custom_call.1} parent=11 // pred_check
          %p565 = pneg %p299
        $region46: #{tpu_custom_call.1} parent=11 // pred_check_branch
          %567 = sbr.rel (%p565) target = $region48
        $region47: #{tpu_custom_call.1} parent=11 // pred_region
          %569 = vsyncadd [#allocation9], 0
          %s570 = sshll.u32 %s11, 4
          %s571 = int_to_ptr.hbm [resolvable:$true] %s570
          %s572 = sshll.u32 [#allocation8], 4
          %s573 = int_to_ptr.vmem [resolvable:$true] %s572
          %578 = dma.hbm_to_vmem [thread:$0]  %s571, 16384, %s573, [#allocation9], 256, 256, 16
        $region48: #{tpu_custom_call.1} parent=11 // pred_fallthru
          _
        // Predicated region
        $region49: #{tpu_custom_call.1} parent=11 // pred_check
          %p579 = pneg %p320
        $region50: #{tpu_custom_call.1} parent=11 // pred_check_branch
          %581 = sbr.rel (%p579) target = $region52
        $region51: #{tpu_custom_call.1} parent=11 // pred_region
          _
        $region52: #{tpu_custom_call.1} parent=11 // pred_fallthru
          _
        // Predicated region
        $region53: #{tpu_custom_call.1} parent=11 // pred_check
          %p582 = pneg %p341
        $region54: #{tpu_custom_call.1} parent=11 // pred_check_branch
          %584 = sbr.rel (%p582) target = $region56
        $region55: #{tpu_custom_call.1} parent=11 // pred_region
          _
        $region56: #{tpu_custom_call.1} parent=11 // pred_fallthru
          _
        // Predicated region
        $region57: #{tpu_custom_call.1} parent=11 // pred_check
          %p585 = pneg %p362
        $region58: #{tpu_custom_call.1} parent=11 // pred_check_branch
          %587 = sbr.rel (%p585) target = $region60
        $region59: #{tpu_custom_call.1} parent=11 // pred_region
          _
        $region60: #{tpu_custom_call.1} parent=11 // pred_fallthru
          _
        // Predicated region
        $region61: #{tpu_custom_call.1} parent=11 // pred_check
          %p588 = pneg %p383
        $region62: #{tpu_custom_call.1} parent=11 // pred_check_branch
          %590 = sbr.rel (%p588) target = $region64
        $region63: #{tpu_custom_call.1} parent=11 // pred_region
          _
        $region64: #{tpu_custom_call.1} parent=11 // pred_fallthru
          _
        // Predicated region
        $region65: #{tpu_custom_call.1} parent=11 // pred_check
          %p591 = pneg %p404
        $region66: #{tpu_custom_call.1} parent=11 // pred_check_branch
          %593 = sbr.rel (%p591) target = $region68
        $region67: #{tpu_custom_call.1} parent=11 // pred_region
          _
        $region68: #{tpu_custom_call.1} parent=11 // pred_fallthru
          _
        // Predicated region
        $region69: #{tpu_custom_call.1} parent=11 // pred_check
          %p594 = pneg %p425
        $region70: #{tpu_custom_call.1} parent=11 // pred_check_branch
          %596 = sbr.rel (%p594) target = $region72
        $region71: #{tpu_custom_call.1} parent=11 // pred_region
          _
        $region72: #{tpu_custom_call.1} parent=11 // pred_fallthru
          _
        // Predicated region
        $region73: #{tpu_custom_call.1} parent=11 // pred_check
          %p597 = pneg %p446
        $region74: #{tpu_custom_call.1} parent=11 // pred_check_branch
          %599 = sbr.rel (%p597) target = $region76
        $region75: #{tpu_custom_call.1} parent=11 // pred_region
          _
        $region76: #{tpu_custom_call.1} parent=11 // pred_fallthru
          _
        // Predicated region
        $region77: #{tpu_custom_call.1} parent=11 // pred_check
          %p600 = pneg %p467
        $region78: #{tpu_custom_call.1} parent=11 // pred_check_branch
          %602 = sbr.rel (%p600) target = $region80
        $region79: #{tpu_custom_call.1} parent=11 // pred_region
          _
        $region80: #{tpu_custom_call.1} parent=11 // pred_fallthru
          _
      $region12: #{tpu_custom_call.1} parent=5 // pred_fallthru
        _
      %p603 = scmp.lt.s32.totalorder %s32, 4
      // Predicated region
      $region81: #{tpu_custom_call.1} parent=5 // pred_check
        %p604 = pneg %p603
      $region82: #{tpu_custom_call.1} parent=5 // pred_check_branch
        %606 = sbr.rel (%p604) target = $region84
      $region83: #{tpu_custom_call.1} parent=5 // pred_region
        // Predicated region
        $region85: #{tpu_custom_call.1} parent=83 // pred_check
          %p607 = pneg %p52
        $region86: #{tpu_custom_call.1} parent=83 // pred_check_branch
          %609 = sbr.rel (%p607) target = $region88
        $region87: #{tpu_custom_call.1} parent=83 // pred_region
          %p610 = scmp.lt.s32.totalorder %s32, 3
          %s611 = scalar_select %p610, %s32, 3
          %s612 = smul.addr %s611, 8
          %s613 = smul.addr %s612, 8
          %s614 = scalar_lea.vmem %s0, %s613
        $region88: #{tpu_custom_call.1} parent=83 // pred_fallthru
          _
        // Predicated region
        $region89: #{tpu_custom_call.1} parent=83 // pred_check
          %p615 = pneg %p78
        $region90: #{tpu_custom_call.1} parent=83 // pred_check_branch
          %617 = sbr.rel (%p615) target = $region92
        $region91: #{tpu_custom_call.1} parent=83 // pred_region
          %p618 = scmp.lt.s32.totalorder %s32, 3
          %s619 = scalar_select %p618, %s32, 3
          %s620 = smul.addr %s619, 8
          %s621 = smul.addr %s620, 8
          %s622 = scalar_lea.vmem %s1, %s621
        $region92: #{tpu_custom_call.1} parent=83 // pred_fallthru
          _
        // Predicated region
        $region93: #{tpu_custom_call.1} parent=83 // pred_check
          %p623 = pneg %p104
        $region94: #{tpu_custom_call.1} parent=83 // pred_check_branch
          %625 = sbr.rel (%p623) target = $region96
        $region95: #{tpu_custom_call.1} parent=83 // pred_region
          %p626 = scmp.lt.s32.totalorder %s32, 3
          %s627 = scalar_select %p626, %s32, 3
          %s628 = smul.addr %s627, 8
          %s629 = smul.addr %s628, 4
          %s630 = scalar_lea.vmem %s2, %s629
        $region96: #{tpu_custom_call.1} parent=83 // pred_fallthru
          _
      $region84: #{tpu_custom_call.1} parent=5 // pred_fallthru
        _
      %p631 = scmp.le.s32.totalorder 1, %s32
      %p632 = scmp.lt.s32.totalorder %s32, 5
      %p633 = pnand %p631, %p632
      %p634 = pneg %p633
      // Predicated region
      $region97: #{tpu_custom_call.1} parent=5 // pred_check
        _
      $region98: #{tpu_custom_call.1} parent=5 // pred_check_branch
        %636 = sbr.rel (%p633) target = $region100
      $region99: #{tpu_custom_call.1} parent=5 // pred_region
        %s637 = ssub.s32 %s32, 1
        // Predicated region
        $region101: #{tpu_custom_call.1} parent=99 // pred_check
          %p638 = pneg %p173
        $region102: #{tpu_custom_call.1} parent=99 // pred_check_branch
          %640 = sbr.rel (%p638) target = $region104
        $region103: #{tpu_custom_call.1} parent=99 // pred_region
          %642 = dma.done [#allocation3], 16384
        $region104: #{tpu_custom_call.1} parent=99 // pred_fallthru
          _
        // Predicated region
        $region105: #{tpu_custom_call.1} parent=99 // pred_check
          %p643 = pneg %p215
        $region106: #{tpu_custom_call.1} parent=99 // pred_check_branch
          %645 = sbr.rel (%p643) target = $region108
        $region107: #{tpu_custom_call.1} parent=99 // pred_region
          %647 = dma.done [#allocation6], 16384
        $region108: #{tpu_custom_call.1} parent=99 // pred_fallthru
          _
        // Predicated region
        $region109: #{tpu_custom_call.1} parent=99 // pred_check
          %p648 = pneg %p257
        $region110: #{tpu_custom_call.1} parent=99 // pred_check_branch
          %650 = sbr.rel (%p648) target = $region112
        $region111: #{tpu_custom_call.1} parent=99 // pred_region
          %652 = dma.done [#allocation6], 16384
        $region112: #{tpu_custom_call.1} parent=99 // pred_fallthru
          _
        // Predicated region
        $region113: #{tpu_custom_call.1} parent=99 // pred_check
          %p653 = pneg %p299
        $region114: #{tpu_custom_call.1} parent=99 // pred_check_branch
          %655 = sbr.rel (%p653) target = $region116
        $region115: #{tpu_custom_call.1} parent=99 // pred_region
          %657 = dma.done [#allocation9], 16384
        $region116: #{tpu_custom_call.1} parent=99 // pred_fallthru
          _
        %p658 = scmp.lt.s32.totalorder %s37, 3
        %s659 = scalar_select %p658, %s37, 3
        %s660 = smul.addr %s659, 8
        %s661 = smul.addr %s660, 8
        %s662 = scalar_lea.vmem %s0, %s661
        %p663 = pneg %p58
        %p664 = pneg %p55
        %p665 = scmp.lt.s32.totalorder %s37, 3
        %s666 = scalar_select %p665, %s37, 3
        %s667 = smul.addr %s666, 8
        %s668 = smul.addr %s667, 8
        %s669 = scalar_lea.vmem %s1, %s668
        %p670 = pneg %p84
        %p671 = pneg %p81
        %p672 = scmp.lt.s32.totalorder %s37, 3
        %s673 = scalar_select %p672, %s37, 3
        %s674 = smul.addr %s673, 8
        %s675 = smul.addr %s674, 4
        %s676 = scalar_lea.vmem %s2, %s675
        %p677 = pneg %p110
        %p678 = pneg %p107
        %p679 = pneg %p131
        %p680 = pneg %p128
        %p681 = pneg %p152
        %p682 = pneg %p149
        %p683 = pneg %p173
        %p684 = pneg %p170
        %p685 = pneg %p194
        %p686 = pneg %p191
        %p687 = pneg %p215
        %p688 = pneg %p212
        %p689 = pneg %p236
        %p690 = pneg %p233
        %p691 = pneg %p257
        %p692 = pneg %p254
        %p693 = pneg %p278
        %p694 = pneg %p275
        %p695 = pneg %p299
        %p696 = pneg %p296
        %p697 = pneg %p320
        %p698 = pneg %p317
        %p699 = pneg %p341
        %p700 = pneg %p338
        %p701 = pneg %p362
        %p702 = pneg %p359
        %p703 = pneg %p383
        %p704 = pneg %p380
        %p705 = pneg %p404
        %p706 = pneg %p401
        %p707 = pneg %p425
        %p708 = pneg %p422
        %p709 = pneg %p446
        %p710 = pneg %p443
        %p711 = pneg %p467
        %p712 = pneg %p464
        %p713 = pneg %p493
        %p714 = pneg %p490
        %s715 = sand.u32 %s480, 1
        %s716 = scalar_lea.sflag [#allocation4], %s715
        %s717 = sand.u32 %s480, 1
        %s718 = smul.addr %s717, 64
        %s719 = scalar_lea.vmem [#allocation10], %s718
        %p720 = scmp.lt.s32.totalorder %s37, 3
        %s721 = scalar_select %p720, %s37, 3
        %s722 = smul.addr %s721, 8
        %s723 = smul.addr %s722, 8
        %s724 = scalar_lea.vmem %s0, %s723
        %p725 = scmp.lt.s32.totalorder %s37, 3
        %s726 = scalar_select %p725, %s37, 3
        %s727 = smul.addr %s726, 8
        %s728 = smul.addr %s727, 8
        %s729 = scalar_lea.vmem %s1, %s728
        %p730 = scmp.lt.s32.totalorder %s37, 3
        %s731 = scalar_select %p730, %s37, 3
        %s732 = smul.addr %s731, 8
        %s733 = smul.addr %s732, 4
        %s734 = scalar_lea.vmem %s2, %s733
        %v736 = vld [vmem:[%s734] sm:$0xf]
        %v737 = vld [vmem:[%s734 + $0x4] sm:$0xf]
        %v738 = vld [vmem:[%s734 + $0x8] sm:$0xf]
        %v739 = vld [vmem:[%s734 + $0xc] sm:$0xf]
        %v740 = vld [vmem:[%s734 + $0x10] sm:$0xf]
        %v741 = vld [vmem:[%s734 + $0x14] sm:$0xf]
        %v742 = vld [vmem:[%s734 + $0x18] sm:$0xf]
        %v743 = vld [vmem:[%s734 + $0x1c] sm:$0xf]
        %v744 = vld [vmem:[%s724] sm:$0xff]
        %v745 = vld [vmem:[%s724 + $0x8] sm:$0xff]
        %v746 = vld [vmem:[%s724 + $0x10] sm:$0xff]
        %v747 = vld [vmem:[%s724 + $0x18] sm:$0xff]
        %v748 = vld [vmem:[%s724 + $0x20] sm:$0xff]
        %v749 = vld [vmem:[%s724 + $0x28] sm:$0xff]
        %v750 = vld [vmem:[%s724 + $0x30] sm:$0xff]
        %v751 = vld [vmem:[%s724 + $0x38] sm:$0xff]
        %vm752 = vcmp.ne.f32.partialorder %v744, %v744
        %vm753 = vcmp.ne.f32.partialorder %v745, %v745
        %vm754 = vcmp.ne.f32.partialorder %v746, %v746
        %vm755 = vcmp.ne.f32.partialorder %v747, %v747
        %vm756 = vcmp.ne.f32.partialorder %v748, %v748
        %vm757 = vcmp.ne.f32.partialorder %v749, %v749
        %vm758 = vcmp.ne.f32.partialorder %v750, %v750
        %vm759 = vcmp.ne.f32.partialorder %v751, %v751
        %v760 = vsel %vm752, 0.0, %v744
        %v761 = vsel %vm753, 0.0, %v745
        %v762 = vsel %vm754, 0.0, %v746
        %v763 = vsel %vm755, 0.0, %v747
        %v764 = vsel %vm756, 0.0, %v748
        %v765 = vsel %vm757, 0.0, %v749
        %v766 = vsel %vm758, 0.0, %v750
        %v767 = vsel %vm759, 0.0, %v751
        %v768 = vpack.c.bf16 %v761, %v760
        %v769 = vpack.c.bf16 %v763, %v762
        %v770 = vpack.c.bf16 %v765, %v764
        %v771 = vpack.c.bf16 %v767, %v766
        %v780 = vunpack.c.l.b16 %v736
        %v781 = vunpack.c.l.b16 %v737
        %v782 = vunpack.c.l.b16 %v738
        %v783 = vunpack.c.l.b16 %v739
        %v784 = vunpack.c.l.b16 %v740
        %v785 = vunpack.c.l.b16 %v741
        %v786 = vunpack.c.l.b16 %v742
        %v787 = vunpack.c.l.b16 %v743
        %v788 = vpack.c.b16 %v781, %v780
        %v789 = vpack.c.b16 %v783, %v782
        %v790 = vpack.c.b16 %v785, %v784
        %v791 = vpack.c.b16 %v787, %v786
        %vm792 = vcmask 523264
        %v794 = vsel %vm792, %v788, 0
        %v797 = vsel %vm792, %v789, 0
        %v800 = vsel %vm792, %v790, 0
        %v803 = vsel %vm792, %v791, 0
        %805 = vmatpush.bf16.msra.mxu0 0
        %806 = vmatpush.bf16.msra.mxu0 0
        %807 = vmatpush.bf16.msra.mxu0 0
        %808 = vmatpush.bf16.msra.mxu0 0
        %809 = vmatpush.bf16.msra.mxu0 %v771
        %810 = vmatpush.bf16.msra.mxu0 %v770
        %811 = vmatpush.bf16.msra.mxu0 %v769
        %812 = vmatpush.bf16.msra.mxu0 %v768
        %813 = vmatmul.bf16.gmra.mxu0 %v794
        %v814 = vpop.f32.mrf.mxu0
        %v815 = vadd.f32 0.0, %v814
        %v816 = vpop.f32.mrf.mxu0
        %v817 = vadd.f32 0.0, %v816
        %818 = vmatmul.bf16.gmra.mxu0 %v797
        %v819 = vpop.f32.mrf.mxu0
        %v820 = vadd.f32 0.0, %v819
        %v821 = vpop.f32.mrf.mxu0
        %v822 = vadd.f32 0.0, %v821
        %823 = vmatmul.bf16.gmra.mxu0 %v800
        %v824 = vpop.f32.mrf.mxu0
        %v825 = vadd.f32 0.0, %v824
        %v826 = vpop.f32.mrf.mxu0
        %v827 = vadd.f32 0.0, %v826
        %828 = vmatmul.bf16.gmra.mxu0 %v803
        %v829 = vpop.f32.mrf.mxu0
        %v830 = vadd.f32 0.0, %v829
        %v831 = vpop.f32.mrf.mxu0
        %v832 = vadd.f32 0.0, %v831
        %833 = vdwg.mxu0
        %v834 = vpack.c.bf16 %v817, %v815
        %v835 = vpack.c.bf16 %v822, %v820
        %v836 = vpack.c.bf16 %v827, %v825
        %v837 = vpack.c.bf16 %v832, %v830
        %v838 = vld [vmem:[%s3] sm:$0xff]
        %v839 = vld [vmem:[%s3 + $0x8] sm:$0xff]
        %v840 = vld [vmem:[%s4] sm:$0xf]
        %v842 = vperm.slane %v840, 0
        %v843 = vperm.slane %v840, 1
        %v844 = vperm.slane %v840, 2
        %v845 = vperm.slane %v840, 3
        %v852 = vunpack.c.l.b16 %v838
        %v853 = vunpack.c.h.b16 %v838
        %v854 = vunpack.c.l.b16 %v839
        %v855 = vunpack.c.h.b16 %v839
        %v856 = vpack.c.b16 %v852, %v852
        %v857 = vpack.c.b16 %v853, %v853
        %v858 = vpack.c.b16 %v854, %v854
        %v859 = vpack.c.b16 %v855, %v855
        %vm860 = vcmask 64512
        %v862 = vsel %vm860, %v834, 0
        %v865 = vsel %vm860, %v835, 0
        %v868 = vsel %vm860, %v836, 0
        %v871 = vsel %vm860, %v837, 0
        %vm873 = vcmask 1043456
        %v875 = vsel %vm873, %v856, 0
        %v878 = vsel %vm873, %v857, 0
        %v881 = vsel %vm873, %v858, 0
        %v884 = vsel %vm873, %v859, 0
        %886 = vmatpush.bf16.msra.mxu0 0
        %887 = vmatpush.bf16.msra.mxu0 0
        %888 = vmatpush.bf16.msra.mxu0 0
        %889 = vmatpush.bf16.msra.mxu0 0
        %890 = vmatpush.bf16.msra.mxu0 0
        %891 = vmatpush.bf16.msra.mxu0 0
        %892 = vmatpush.bf16.msra.mxu0 0
        %893 = vmatpush.bf16.msra.mxu0 %v875
        %894 = vmatmul.bf16.gmra.mxu0 %v862
        %v895 = vpop.f32.mrf.mxu0
        %v896 = vadd.f32 %v842, %v895
        %v897 = vpop.f32.mrf.mxu0
        %v898 = vadd.f32 %v842, %v897
        %899 = vmatmul.bf16.gmra.mxu0 %v865
        %v900 = vpop.f32.mrf.mxu0
        %v901 = vadd.f32 %v842, %v900
        %v902 = vpop.f32.mrf.mxu0
        %v903 = vadd.f32 %v842, %v902
        %904 = vmatmul.bf16.gmra.mxu0 %v868
        %v905 = vpop.f32.mrf.mxu0
        %v906 = vadd.f32 %v842, %v905
        %v907 = vpop.f32.mrf.mxu0
        %v908 = vadd.f32 %v842, %v907
        %909 = vmatmul.bf16.gmra.mxu0 %v871
        %v910 = vpop.f32.mrf.mxu0
        %v911 = vadd.f32 %v842, %v910
        %v912 = vpop.f32.mrf.mxu0
        %v913 = vadd.f32 %v842, %v912
        %914 = vdwg.mxu0
        %915 = vmatpush.bf16.msra.mxu0 0
        %916 = vmatpush.bf16.msra.mxu0 0
        %917 = vmatpush.bf16.msra.mxu0 0
        %918 = vmatpush.bf16.msra.mxu0 0
        %919 = vmatpush.bf16.msra.mxu0 0
        %920 = vmatpush.bf16.msra.mxu0 0
        %921 = vmatpush.bf16.msra.mxu0 0
        %922 = vmatpush.bf16.msra.mxu0 %v878
        %923 = vmatmul.bf16.gmra.mxu0 %v862
        %v924 = vpop.f32.mrf.mxu0
        %v925 = vadd.f32 %v843, %v924
        %v926 = vpop.f32.mrf.mxu0
        %v927 = vadd.f32 %v843, %v926
        %928 = vmatmul.bf16.gmra.mxu0 %v865
        %v929 = vpop.f32.mrf.mxu0
        %v930 = vadd.f32 %v843, %v929
        %v931 = vpop.f32.mrf.mxu0
        %v932 = vadd.f32 %v843, %v931
        %933 = vmatmul.bf16.gmra.mxu0 %v868
        %v934 = vpop.f32.mrf.mxu0
        %v935 = vadd.f32 %v843, %v934
        %v936 = vpop.f32.mrf.mxu0
        %v937 = vadd.f32 %v843, %v936
        %938 = vmatmul.bf16.gmra.mxu0 %v871
        %v939 = vpop.f32.mrf.mxu0
        %v940 = vadd.f32 %v843, %v939
        %v941 = vpop.f32.mrf.mxu0
        %v942 = vadd.f32 %v843, %v941
        %943 = vdwg.mxu0
        %944 = vmatpush.bf16.msra.mxu0 0
        %945 = vmatpush.bf16.msra.mxu0 0
        %946 = vmatpush.bf16.msra.mxu0 0
        %947 = vmatpush.bf16.msra.mxu0 0
        %948 = vmatpush.bf16.msra.mxu0 0
        %949 = vmatpush.bf16.msra.mxu0 0
        %950 = vmatpush.bf16.msra.mxu0 0
        %951 = vmatpush.bf16.msra.mxu0 %v881
        %952 = vmatmul.bf16.gmra.mxu0 %v862
        %v953 = vpop.f32.mrf.mxu0
        %v954 = vadd.f32 %v844, %v953
        %v955 = vpop.f32.mrf.mxu0
        %v956 = vadd.f32 %v844, %v955
        %957 = vmatmul.bf16.gmra.mxu0 %v865
        %v958 = vpop.f32.mrf.mxu0
        %v959 = vadd.f32 %v844, %v958
        %v960 = vpop.f32.mrf.mxu0
        %v961 = vadd.f32 %v844, %v960
        %962 = vmatmul.bf16.gmra.mxu0 %v868
        %v963 = vpop.f32.mrf.mxu0
        %v964 = vadd.f32 %v844, %v963
        %v965 = vpop.f32.mrf.mxu0
        %v966 = vadd.f32 %v844, %v965
        %967 = vmatmul.bf16.gmra.mxu0 %v871
        %v968 = vpop.f32.mrf.mxu0
        %v969 = vadd.f32 %v844, %v968
        %v970 = vpop.f32.mrf.mxu0
        %v971 = vadd.f32 %v844, %v970
        %972 = vdwg.mxu0
        %973 = vmatpush.bf16.msra.mxu0 0
        %974 = vmatpush.bf16.msra.mxu0 0
        %975 = vmatpush.bf16.msra.mxu0 0
        %976 = vmatpush.bf16.msra.mxu0 0
        %977 = vmatpush.bf16.msra.mxu0 0
        %978 = vmatpush.bf16.msra.mxu0 0
        %979 = vmatpush.bf16.msra.mxu0 0
        %980 = vmatpush.bf16.msra.mxu0 %v884
        %981 = vmatmul.bf16.gmra.mxu0 %v862
        %v982 = vpop.f32.mrf.mxu0
        %v983 = vadd.f32 %v845, %v982
        %v984 = vpop.f32.mrf.mxu0
        %v985 = vadd.f32 %v845, %v984
        %986 = vmatmul.bf16.gmra.mxu0 %v865
        %v987 = vpop.f32.mrf.mxu0
        %v988 = vadd.f32 %v845, %v987
        %v989 = vpop.f32.mrf.mxu0
        %v990 = vadd.f32 %v845, %v989
        %991 = vmatmul.bf16.gmra.mxu0 %v868
        %v992 = vpop.f32.mrf.mxu0
        %v993 = vadd.f32 %v845, %v992
        %v994 = vpop.f32.mrf.mxu0
        %v995 = vadd.f32 %v845, %v994
        %996 = vmatmul.bf16.gmra.mxu0 %v871
        %v997 = vpop.f32.mrf.mxu0
        %v998 = vadd.f32 %v845, %v997
        %v999 = vpop.f32.mrf.mxu0
        %v1000 = vadd.f32 %v845, %v999
        %1001 = vdwg.mxu0
        %v1002 = vmax.f32 %v896, 0.0
        %v1003 = vmax.f32 %v925, 0.0
        %v1004 = vmax.f32 %v954, 0.0
        %v1005 = vmax.f32 %v983, 0.0
        %v1006 = vmax.f32 %v898, 0.0
        %v1007 = vmax.f32 %v927, 0.0
        %v1008 = vmax.f32 %v956, 0.0
        %v1009 = vmax.f32 %v985, 0.0
        %v1010 = vmax.f32 %v901, 0.0
        %v1011 = vmax.f32 %v930, 0.0
        %v1012 = vmax.f32 %v959, 0.0
        %v1013 = vmax.f32 %v988, 0.0
        %v1014 = vmax.f32 %v903, 0.0
        %v1015 = vmax.f32 %v932, 0.0
        %v1016 = vmax.f32 %v961, 0.0
        %v1017 = vmax.f32 %v990, 0.0
        %v1018 = vmax.f32 %v906, 0.0
        %v1019 = vmax.f32 %v935, 0.0
        %v1020 = vmax.f32 %v964, 0.0
        %v1021 = vmax.f32 %v993, 0.0
        %v1022 = vmax.f32 %v908, 0.0
        %v1023 = vmax.f32 %v937, 0.0
        %v1024 = vmax.f32 %v966, 0.0
        %v1025 = vmax.f32 %v995, 0.0
        %v1026 = vmax.f32 %v911, 0.0
        %v1027 = vmax.f32 %v940, 0.0
        %v1028 = vmax.f32 %v969, 0.0
        %v1029 = vmax.f32 %v998, 0.0
        %v1030 = vmax.f32 %v913, 0.0
        %v1031 = vmax.f32 %v942, 0.0
        %v1032 = vmax.f32 %v971, 0.0
        %v1033 = vmax.f32 %v1000, 0.0
        %v1034 = vpack.c.bf16 %v1006, %v1002
        %v1035 = vpack.c.bf16 %v1007, %v1003
        %v1036 = vpack.c.bf16 %v1008, %v1004
        %v1037 = vpack.c.bf16 %v1009, %v1005
        %v1038 = vpack.c.bf16 %v1014, %v1010
        %v1039 = vpack.c.bf16 %v1015, %v1011
        %v1040 = vpack.c.bf16 %v1016, %v1012
        %v1041 = vpack.c.bf16 %v1017, %v1013
        %v1042 = vpack.c.bf16 %v1022, %v1018
        %v1043 = vpack.c.bf16 %v1023, %v1019
        %v1044 = vpack.c.bf16 %v1024, %v1020
        %v1045 = vpack.c.bf16 %v1025, %v1021
        %v1046 = vpack.c.bf16 %v1030, %v1026
        %v1047 = vpack.c.bf16 %v1031, %v1027
        %v1048 = vpack.c.bf16 %v1032, %v1028
        %v1049 = vpack.c.bf16 %v1033, %v1029
        %v1050 = vld [vmem:[#allocation2] sm:$0xff]
        %v1051 = vld [vmem:[#allocation2 + $0x8] sm:$0xff]
        %v1052 = vld [vmem:[#allocation2 + $0x10] sm:$0xff]
        %v1053 = vld [vmem:[#allocation2 + $0x18] sm:$0xff]
        %v1054 = vld [vmem:[#allocation2 + $0x20] sm:$0xff]
        %v1055 = vld [vmem:[#allocation2 + $0x28] sm:$0xff]
        %v1056 = vld [vmem:[#allocation2 + $0x30] sm:$0xff]
        %v1057 = vld [vmem:[#allocation2 + $0x38] sm:$0xff]
        %v1058 = vld [vmem:[#allocation2 + $0x40] sm:$0xff]
        %v1059 = vld [vmem:[#allocation2 + $0x48] sm:$0xff]
        %v1060 = vld [vmem:[#allocation2 + $0x50] sm:$0xff]
        %v1061 = vld [vmem:[#allocation2 + $0x58] sm:$0xff]
        %v1062 = vld [vmem:[#allocation2 + $0x60] sm:$0xff]
        %v1063 = vld [vmem:[#allocation2 + $0x68] sm:$0xff]
        %v1064 = vld [vmem:[#allocation2 + $0x70] sm:$0xff]
        %v1065 = vld [vmem:[#allocation2 + $0x78] sm:$0xff]
        %v1066 = vld [vmem:[#allocation2 + $0x80] sm:$0xff]
        %v1067 = vld [vmem:[#allocation2 + $0x88] sm:$0xff]
        %v1068 = vld [vmem:[#allocation2 + $0x90] sm:$0xff]
        %v1069 = vld [vmem:[#allocation2 + $0x98] sm:$0xff]
        %v1070 = vld [vmem:[#allocation2 + $0xa0] sm:$0xff]
        %v1071 = vld [vmem:[#allocation2 + $0xa8] sm:$0xff]
        %v1072 = vld [vmem:[#allocation2 + $0xb0] sm:$0xff]
        %v1073 = vld [vmem:[#allocation2 + $0xb8] sm:$0xff]
        %v1074 = vld [vmem:[#allocation2 + $0xc0] sm:$0xff]
        %v1075 = vld [vmem:[#allocation2 + $0xc8] sm:$0xff]
        %v1076 = vld [vmem:[#allocation2 + $0xd0] sm:$0xff]
        %v1077 = vld [vmem:[#allocation2 + $0xd8] sm:$0xff]
        %v1078 = vld [vmem:[#allocation2 + $0xe0] sm:$0xff]
        %v1079 = vld [vmem:[#allocation2 + $0xe8] sm:$0xff]
        %v1080 = vld [vmem:[#allocation2 + $0xf0] sm:$0xff]
        %v1081 = vld [vmem:[#allocation2 + $0xf8] sm:$0xff]
        %v1082 = vld [vmem:[#allocation2 + $0x100] sm:$0xff]
        %v1083 = vld [vmem:[#allocation2 + $0x108] sm:$0xff]
        %v1084 = vld [vmem:[#allocation2 + $0x110] sm:$0xff]
        %v1085 = vld [vmem:[#allocation2 + $0x118] sm:$0xff]
        %v1086 = vld [vmem:[#allocation2 + $0x120] sm:$0xff]
        %v1087 = vld [vmem:[#allocation2 + $0x128] sm:$0xff]
        %v1088 = vld [vmem:[#allocation2 + $0x130] sm:$0xff]
        %v1089 = vld [vmem:[#allocation2 + $0x138] sm:$0xff]
        %v1090 = vld [vmem:[#allocation2 + $0x140] sm:$0xff]
        %v1091 = vld [vmem:[#allocation2 + $0x148] sm:$0xff]
        %v1092 = vld [vmem:[#allocation2 + $0x150] sm:$0xff]
        %v1093 = vld [vmem:[#allocation2 + $0x158] sm:$0xff]
        %v1094 = vld [vmem:[#allocation2 + $0x160] sm:$0xff]
        %v1095 = vld [vmem:[#allocation2 + $0x168] sm:$0xff]
        %v1096 = vld [vmem:[#allocation2 + $0x170] sm:$0xff]
        %v1097 = vld [vmem:[#allocation2 + $0x178] sm:$0xff]
        %v1098 = vld [vmem:[#allocation2 + $0x180] sm:$0xff]
        %v1099 = vld [vmem:[#allocation2 + $0x188] sm:$0xff]
        %v1100 = vld [vmem:[#allocation2 + $0x190] sm:$0xff]
        %v1101 = vld [vmem:[#allocation2 + $0x198] sm:$0xff]
        %v1102 = vld [vmem:[#allocation2 + $0x1a0] sm:$0xff]
        %v1103 = vld [vmem:[#allocation2 + $0x1a8] sm:$0xff]
        %v1104 = vld [vmem:[#allocation2 + $0x1b0] sm:$0xff]
        %v1105 = vld [vmem:[#allocation2 + $0x1b8] sm:$0xff]
        %v1106 = vld [vmem:[#allocation2 + $0x1c0] sm:$0xff]
        %v1107 = vld [vmem:[#allocation2 + $0x1c8] sm:$0xff]
        %v1108 = vld [vmem:[#allocation2 + $0x1d0] sm:$0xff]
        %v1109 = vld [vmem:[#allocation2 + $0x1d8] sm:$0xff]
        %v1110 = vld [vmem:[#allocation2 + $0x1e0] sm:$0xff]
        %v1111 = vld [vmem:[#allocation2 + $0x1e8] sm:$0xff]
        %v1112 = vld [vmem:[#allocation2 + $0x1f0] sm:$0xff]
        %v1113 = vld [vmem:[#allocation2 + $0x1f8] sm:$0xff]
        %v1114 = vld [vmem:[#allocation2 + $0x200] sm:$0xff]
        %v1115 = vld [vmem:[#allocation2 + $0x208] sm:$0xff]
        %v1116 = vld [vmem:[#allocation2 + $0x210] sm:$0xff]
        %v1117 = vld [vmem:[#allocation2 + $0x218] sm:$0xff]
        %v1118 = vld [vmem:[#allocation2 + $0x220] sm:$0xff]
        %v1119 = vld [vmem:[#allocation2 + $0x228] sm:$0xff]
        %v1120 = vld [vmem:[#allocation2 + $0x230] sm:$0xff]
        %v1121 = vld [vmem:[#allocation2 + $0x238] sm:$0xff]
        %v1122 = vld [vmem:[#allocation2 + $0x240] sm:$0xff]
        %v1123 = vld [vmem:[#allocation2 + $0x248] sm:$0xff]
        %v1124 = vld [vmem:[#allocation2 + $0x250] sm:$0xff]
        %v1125 = vld [vmem:[#allocation2 + $0x258] sm:$0xff]
        %v1126 = vld [vmem:[#allocation2 + $0x260] sm:$0xff]
        %v1127 = vld [vmem:[#allocation2 + $0x268] sm:$0xff]
        %v1128 = vld [vmem:[#allocation2 + $0x270] sm:$0xff]
        %v1129 = vld [vmem:[#allocation2 + $0x278] sm:$0xff]
        %v1130 = vld [vmem:[#allocation2 + $0x280] sm:$0xff]
        %v1131 = vld [vmem:[#allocation2 + $0x288] sm:$0xff]
        %v1132 = vld [vmem:[#allocation2 + $0x290] sm:$0xff]
        %v1133 = vld [vmem:[#allocation2 + $0x298] sm:$0xff]
        %v1134 = vld [vmem:[#allocation2 + $0x2a0] sm:$0xff]
        %v1135 = vld [vmem:[#allocation2 + $0x2a8] sm:$0xff]
        %v1136 = vld [vmem:[#allocation2 + $0x2b0] sm:$0xff]
        %v1137 = vld [vmem:[#allocation2 + $0x2b8] sm:$0xff]
        %v1138 = vld [vmem:[#allocation2 + $0x2c0] sm:$0xff]
        %v1139 = vld [vmem:[#allocation2 + $0x2c8] sm:$0xff]
        %v1140 = vld [vmem:[#allocation2 + $0x2d0] sm:$0xff]
        %v1141 = vld [vmem:[#allocation2 + $0x2d8] sm:$0xff]
        %v1142 = vld [vmem:[#allocation2 + $0x2e0] sm:$0xff]
        %v1143 = vld [vmem:[#allocation2 + $0x2e8] sm:$0xff]
        %v1144 = vld [vmem:[#allocation2 + $0x2f0] sm:$0xff]
        %v1145 = vld [vmem:[#allocation2 + $0x2f8] sm:$0xff]
        %v1146 = vld [vmem:[#allocation2 + $0x300] sm:$0xff]
        %v1147 = vld [vmem:[#allocation2 + $0x308] sm:$0xff]
        %v1148 = vld [vmem:[#allocation2 + $0x310] sm:$0xff]
        %v1149 = vld [vmem:[#allocation2 + $0x318] sm:$0xff]
        %v1150 = vld [vmem:[#allocation2 + $0x320] sm:$0xff]
        %v1151 = vld [vmem:[#allocation2 + $0x328] sm:$0xff]
        %v1152 = vld [vmem:[#allocation2 + $0x330] sm:$0xff]
        %v1153 = vld [vmem:[#allocation2 + $0x338] sm:$0xff]
        %v1154 = vld [vmem:[#allocation2 + $0x340] sm:$0xff]
        %v1155 = vld [vmem:[#allocation2 + $0x348] sm:$0xff]
        %v1156 = vld [vmem:[#allocation2 + $0x350] sm:$0xff]
        %v1157 = vld [vmem:[#allocation2 + $0x358] sm:$0xff]
        %v1158 = vld [vmem:[#allocation2 + $0x360] sm:$0xff]
        %v1159 = vld [vmem:[#allocation2 + $0x368] sm:$0xff]
        %v1160 = vld [vmem:[#allocation2 + $0x370] sm:$0xff]
        %v1161 = vld [vmem:[#allocation2 + $0x378] sm:$0xff]
        %v1162 = vld [vmem:[#allocation2 + $0x380] sm:$0xff]
        %v1163 = vld [vmem:[#allocation2 + $0x388] sm:$0xff]
        %v1164 = vld [vmem:[#allocation2 + $0x390] sm:$0xff]
        %v1165 = vld [vmem:[#allocation2 + $0x398] sm:$0xff]
        %v1166 = vld [vmem:[#allocation2 + $0x3a0] sm:$0xff]
        %v1167 = vld [vmem:[#allocation2 + $0x3a8] sm:$0xff]
        %v1168 = vld [vmem:[#allocation2 + $0x3b0] sm:$0xff]
        %v1169 = vld [vmem:[#allocation2 + $0x3b8] sm:$0xff]
        %v1170 = vld [vmem:[#allocation2 + $0x3c0] sm:$0xff]
        %v1171 = vld [vmem:[#allocation2 + $0x3c8] sm:$0xff]
        %v1172 = vld [vmem:[#allocation2 + $0x3d0] sm:$0xff]
        %v1173 = vld [vmem:[#allocation2 + $0x3d8] sm:$0xff]
        %v1174 = vld [vmem:[#allocation2 + $0x3e0] sm:$0xff]
        %v1175 = vld [vmem:[#allocation2 + $0x3e8] sm:$0xff]
        %v1176 = vld [vmem:[#allocation2 + $0x3f0] sm:$0xff]
        %v1177 = vld [vmem:[#allocation2 + $0x3f8] sm:$0xff]
        %v1178 = vld [vmem:[%s6] sm:$0xf]
        %v1180 = vperm.slane %v1178, 0
        %v1181 = vperm.slane %v1178, 1
        %v1182 = vperm.slane %v1178, 2
        %v1183 = vperm.slane %v1178, 3
        %v1316 = vunpack.c.l.b16 %v1050
        %v1317 = vunpack.c.h.b16 %v1050
        %v1318 = vunpack.c.l.b16 %v1051
        %v1319 = vunpack.c.h.b16 %v1051
        %v1320 = vunpack.c.l.b16 %v1052
        %v1321 = vunpack.c.h.b16 %v1052
        %v1322 = vunpack.c.l.b16 %v1053
        %v1323 = vunpack.c.h.b16 %v1053
        %v1324 = vunpack.c.l.b16 %v1054
        %v1325 = vunpack.c.h.b16 %v1054
        %v1326 = vunpack.c.l.b16 %v1055
        %v1327 = vunpack.c.h.b16 %v1055
        %v1328 = vunpack.c.l.b16 %v1056
        %v1329 = vunpack.c.h.b16 %v1056
        %v1330 = vunpack.c.l.b16 %v1057
        %v1331 = vunpack.c.h.b16 %v1057
        %v1332 = vunpack.c.l.b16 %v1058
        %v1333 = vunpack.c.h.b16 %v1058
        %v1334 = vunpack.c.l.b16 %v1059
        %v1335 = vunpack.c.h.b16 %v1059
        %v1336 = vunpack.c.l.b16 %v1060
        %v1337 = vunpack.c.h.b16 %v1060
        %v1338 = vunpack.c.l.b16 %v1061
        %v1339 = vunpack.c.h.b16 %v1061
        %v1340 = vunpack.c.l.b16 %v1062
        %v1341 = vunpack.c.h.b16 %v1062
        %v1342 = vunpack.c.l.b16 %v1063
        %v1343 = vunpack.c.h.b16 %v1063
        %v1344 = vunpack.c.l.b16 %v1064
        %v1345 = vunpack.c.h.b16 %v1064
        %v1346 = vunpack.c.l.b16 %v1065
        %v1347 = vunpack.c.h.b16 %v1065
        %v1348 = vunpack.c.l.b16 %v1066
        %v1349 = vunpack.c.h.b16 %v1066
        %v1350 = vunpack.c.l.b16 %v1067
        %v1351 = vunpack.c.h.b16 %v1067
        %v1352 = vunpack.c.l.b16 %v1068
        %v1353 = vunpack.c.h.b16 %v1068
        %v1354 = vunpack.c.l.b16 %v1069
        %v1355 = vunpack.c.h.b16 %v1069
        %v1356 = vunpack.c.l.b16 %v1070
        %v1357 = vunpack.c.h.b16 %v1070
        %v1358 = vunpack.c.l.b16 %v1071
        %v1359 = vunpack.c.h.b16 %v1071
        %v1360 = vunpack.c.l.b16 %v1072
        %v1361 = vunpack.c.h.b16 %v1072
        %v1362 = vunpack.c.l.b16 %v1073
        %v1363 = vunpack.c.h.b16 %v1073
        %v1364 = vunpack.c.l.b16 %v1074
        %v1365 = vunpack.c.h.b16 %v1074
        %v1366 = vunpack.c.l.b16 %v1075
        %v1367 = vunpack.c.h.b16 %v1075
        %v1368 = vunpack.c.l.b16 %v1076
        %v1369 = vunpack.c.h.b16 %v1076
        %v1370 = vunpack.c.l.b16 %v1077
        %v1371 = vunpack.c.h.b16 %v1077
        %v1372 = vunpack.c.l.b16 %v1078
        %v1373 = vunpack.c.h.b16 %v1078
        %v1374 = vunpack.c.l.b16 %v1079
        %v1375 = vunpack.c.h.b16 %v1079
        %v1376 = vunpack.c.l.b16 %v1080
        %v1377 = vunpack.c.h.b16 %v1080
        %v1378 = vunpack.c.l.b16 %v1081
        %v1379 = vunpack.c.h.b16 %v1081
        %v1380 = vunpack.c.l.b16 %v1082
        %v1381 = vunpack.c.h.b16 %v1082
        %v1382 = vunpack.c.l.b16 %v1083
        %v1383 = vunpack.c.h.b16 %v1083
        %v1384 = vunpack.c.l.b16 %v1084
        %v1385 = vunpack.c.h.b16 %v1084
        %v1386 = vunpack.c.l.b16 %v1085
        %v1387 = vunpack.c.h.b16 %v1085
        %v1388 = vunpack.c.l.b16 %v1086
        %v1389 = vunpack.c.h.b16 %v1086
        %v1390 = vunpack.c.l.b16 %v1087
        %v1391 = vunpack.c.h.b16 %v1087
        %v1392 = vunpack.c.l.b16 %v1088
        %v1393 = vunpack.c.h.b16 %v1088
        %v1394 = vunpack.c.l.b16 %v1089
        %v1395 = vunpack.c.h.b16 %v1089
        %v1396 = vunpack.c.l.b16 %v1090
        %v1397 = vunpack.c.h.b16 %v1090
        %v1398 = vunpack.c.l.b16 %v1091
        %v1399 = vunpack.c.h.b16 %v1091
        %v1400 = vunpack.c.l.b16 %v1092
        %v1401 = vunpack.c.h.b16 %v1092
        %v1402 = vunpack.c.l.b16 %v1093
        %v1403 = vunpack.c.h.b16 %v1093
        %v1404 = vunpack.c.l.b16 %v1094
        %v1405 = vunpack.c.h.b16 %v1094
        %v1406 = vunpack.c.l.b16 %v1095
        %v1407 = vunpack.c.h.b16 %v1095
        %v1408 = vunpack.c.l.b16 %v1096
        %v1409 = vunpack.c.h.b16 %v1096
        %v1410 = vunpack.c.l.b16 %v1097
        %v1411 = vunpack.c.h.b16 %v1097
        %v1412 = vunpack.c.l.b16 %v1098
        %v1413 = vunpack.c.h.b16 %v1098
        %v1414 = vunpack.c.l.b16 %v1099
        %v1415 = vunpack.c.h.b16 %v1099
        %v1416 = vunpack.c.l.b16 %v1100
        %v1417 = vunpack.c.h.b16 %v1100
        %v1418 = vunpack.c.l.b16 %v1101
        %v1419 = vunpack.c.h.b16 %v1101
        %v1420 = vunpack.c.l.b16 %v1102
        %v1421 = vunpack.c.h.b16 %v1102
        %v1422 = vunpack.c.l.b16 %v1103
        %v1423 = vunpack.c.h.b16 %v1103
        %v1424 = vunpack.c.l.b16 %v1104
        %v1425 = vunpack.c.h.b16 %v1104
        %v1426 = vunpack.c.l.b16 %v1105
        %v1427 = vunpack.c.h.b16 %v1105
        %v1428 = vunpack.c.l.b16 %v1106
        %v1429 = vunpack.c.h.b16 %v1106
        %v1430 = vunpack.c.l.b16 %v1107
        %v1431 = vunpack.c.h.b16 %v1107
        %v1432 = vunpack.c.l.b16 %v1108
        %v1433 = vunpack.c.h.b16 %v1108
        %v1434 = vunpack.c.l.b16 %v1109
        %v1435 = vunpack.c.h.b16 %v1109
        %v1436 = vunpack.c.l.b16 %v1110
        %v1437 = vunpack.c.h.b16 %v1110
        %v1438 = vunpack.c.l.b16 %v1111
        %v1439 = vunpack.c.h.b16 %v1111
        %v1440 = vunpack.c.l.b16 %v1112
        %v1441 = vunpack.c.h.b16 %v1112
        %v1442 = vunpack.c.l.b16 %v1113
        %v1443 = vunpack.c.h.b16 %v1113
        %v1444 = vunpack.c.l.b16 %v1114
        %v1445 = vunpack.c.h.b16 %v1114
        %v1446 = vunpack.c.l.b16 %v1115
        %v1447 = vunpack.c.h.b16 %v1115
        %v1448 = vunpack.c.l.b16 %v1116
        %v1449 = vunpack.c.h.b16 %v1116
        %v1450 = vunpack.c.l.b16 %v1117
        %v1451 = vunpack.c.h.b16 %v1117
        %v1452 = vunpack.c.l.b16 %v1118
        %v1453 = vunpack.c.h.b16 %v1118
        %v1454 = vunpack.c.l.b16 %v1119
        %v1455 = vunpack.c.h.b16 %v1119
        %v1456 = vunpack.c.l.b16 %v1120
        %v1457 = vunpack.c.h.b16 %v1120
        %v1458 = vunpack.c.l.b16 %v1121
        %v1459 = vunpack.c.h.b16 %v1121
        %v1460 = vunpack.c.l.b16 %v1122
        %v1461 = vunpack.c.h.b16 %v1122
        %v1462 = vunpack.c.l.b16 %v1123
        %v1463 = vunpack.c.h.b16 %v1123
        %v1464 = vunpack.c.l.b16 %v1124
        %v1465 = vunpack.c.h.b16 %v1124
        %v1466 = vunpack.c.l.b16 %v1125
        %v1467 = vunpack.c.h.b16 %v1125
        %v1468 = vunpack.c.l.b16 %v1126
        %v1469 = vunpack.c.h.b16 %v1126
        %v1470 = vunpack.c.l.b16 %v1127
        %v1471 = vunpack.c.h.b16 %v1127
        %v1472 = vunpack.c.l.b16 %v1128
        %v1473 = vunpack.c.h.b16 %v1128
        %v1474 = vunpack.c.l.b16 %v1129
        %v1475 = vunpack.c.h.b16 %v1129
        %v1476 = vunpack.c.l.b16 %v1130
        %v1477 = vunpack.c.h.b16 %v1130
        %v1478 = vunpack.c.l.b16 %v1131
        %v1479 = vunpack.c.h.b16 %v1131
        %v1480 = vunpack.c.l.b16 %v1132
        %v1481 = vunpack.c.h.b16 %v1132
        %v1482 = vunpack.c.l.b16 %v1133
        %v1483 = vunpack.c.h.b16 %v1133
        %v1484 = vunpack.c.l.b16 %v1134
        %v1485 = vunpack.c.h.b16 %v1134
        %v1486 = vunpack.c.l.b16 %v1135
        %v1487 = vunpack.c.h.b16 %v1135
        %v1488 = vunpack.c.l.b16 %v1136
        %v1489 = vunpack.c.h.b16 %v1136
        %v1490 = vunpack.c.l.b16 %v1137
        %v1491 = vunpack.c.h.b16 %v1137
        %v1492 = vunpack.c.l.b16 %v1138
        %v1493 = vunpack.c.h.b16 %v1138
        %v1494 = vunpack.c.l.b16 %v1139
        %v1495 = vunpack.c.h.b16 %v1139
        %v1496 = vunpack.c.l.b16 %v1140
        %v1497 = vunpack.c.h.b16 %v1140
        %v1498 = vunpack.c.l.b16 %v1141
        %v1499 = vunpack.c.h.b16 %v1141
        %v1500 = vunpack.c.l.b16 %v1142
        %v1501 = vunpack.c.h.b16 %v1142
        %v1502 = vunpack.c.l.b16 %v1143
        %v1503 = vunpack.c.h.b16 %v1143
        %v1504 = vunpack.c.l.b16 %v1144
        %v1505 = vunpack.c.h.b16 %v1144
        %v1506 = vunpack.c.l.b16 %v1145
        %v1507 = vunpack.c.h.b16 %v1145
        %v1508 = vunpack.c.l.b16 %v1146
        %v1509 = vunpack.c.h.b16 %v1146
        %v1510 = vunpack.c.l.b16 %v1147
        %v1511 = vunpack.c.h.b16 %v1147
        %v1512 = vunpack.c.l.b16 %v1148
        %v1513 = vunpack.c.h.b16 %v1148
        %v1514 = vunpack.c.l.b16 %v1149
        %v1515 = vunpack.c.h.b16 %v1149
        %v1516 = vunpack.c.l.b16 %v1150
        %v1517 = vunpack.c.h.b16 %v1150
        %v1518 = vunpack.c.l.b16 %v1151
        %v1519 = vunpack.c.h.b16 %v1151
        %v1520 = vunpack.c.l.b16 %v1152
        %v1521 = vunpack.c.h.b16 %v1152
        %v1522 = vunpack.c.l.b16 %v1153
        %v1523 = vunpack.c.h.b16 %v1153
        %v1524 = vunpack.c.l.b16 %v1154
        %v1525 = vunpack.c.h.b16 %v1154
        %v1526 = vunpack.c.l.b16 %v1155
        %v1527 = vunpack.c.h.b16 %v1155
        %v1528 = vunpack.c.l.b16 %v1156
        %v1529 = vunpack.c.h.b16 %v1156
        %v1530 = vunpack.c.l.b16 %v1157
        %v1531 = vunpack.c.h.b16 %v1157
        %v1532 = vunpack.c.l.b16 %v1158
        %v1533 = vunpack.c.h.b16 %v1158
        %v1534 = vunpack.c.l.b16 %v1159
        %v1535 = vunpack.c.h.b16 %v1159
        %v1536 = vunpack.c.l.b16 %v1160
        %v1537 = vunpack.c.h.b16 %v1160
        %v1538 = vunpack.c.l.b16 %v1161
        %v1539 = vunpack.c.h.b16 %v1161
        %v1540 = vunpack.c.l.b16 %v1162
        %v1541 = vunpack.c.h.b16 %v1162
        %v1542 = vunpack.c.l.b16 %v1163
        %v1543 = vunpack.c.h.b16 %v1163
        %v1544 = vunpack.c.l.b16 %v1164
        %v1545 = vunpack.c.h.b16 %v1164
        %v1546 = vunpack.c.l.b16 %v1165
        %v1547 = vunpack.c.h.b16 %v1165
        %v1548 = vunpack.c.l.b16 %v1166
        %v1549 = vunpack.c.h.b16 %v1166
        %v1550 = vunpack.c.l.b16 %v1167
        %v1551 = vunpack.c.h.b16 %v1167
        %v1552 = vunpack.c.l.b16 %v1168
        %v1553 = vunpack.c.h.b16 %v1168
        %v1554 = vunpack.c.l.b16 %v1169
        %v1555 = vunpack.c.h.b16 %v1169
        %v1556 = vunpack.c.l.b16 %v1170
        %v1557 = vunpack.c.h.b16 %v1170
        %v1558 = vunpack.c.l.b16 %v1171
        %v1559 = vunpack.c.h.b16 %v1171
        %v1560 = vunpack.c.l.b16 %v1172
        %v1561 = vunpack.c.h.b16 %v1172
        %v1562 = vunpack.c.l.b16 %v1173
        %v1563 = vunpack.c.h.b16 %v1173
        %v1564 = vunpack.c.l.b16 %v1174
        %v1565 = vunpack.c.h.b16 %v1174
        %v1566 = vunpack.c.l.b16 %v1175
        %v1567 = vunpack.c.h.b16 %v1175
        %v1568 = vunpack.c.l.b16 %v1176
        %v1569 = vunpack.c.h.b16 %v1176
        %v1570 = vunpack.c.l.b16 %v1177
        %v1571 = vunpack.c.h.b16 %v1177
        %v1572 = vpack.c.b16 %v1320, %v1316
        %v1573 = vpack.c.b16 %v1321, %v1317
        %v1574 = vpack.c.b16 %v1322, %v1318
        %v1575 = vpack.c.b16 %v1323, %v1319
        %v1576 = vpack.c.b16 %v1328, %v1324
        %v1577 = vpack.c.b16 %v1329, %v1325
        %v1578 = vpack.c.b16 %v1330, %v1326
        %v1579 = vpack.c.b16 %v1331, %v1327
        %v1580 = vpack.c.b16 %v1336, %v1332
        %v1581 = vpack.c.b16 %v1337, %v1333
        %v1582 = vpack.c.b16 %v1338, %v1334
        %v1583 = vpack.c.b16 %v1339, %v1335
        %v1584 = vpack.c.b16 %v1344, %v1340
        %v1585 = vpack.c.b16 %v1345, %v1341
        %v1586 = vpack.c.b16 %v1346, %v1342
        %v1587 = vpack.c.b16 %v1347, %v1343
        %v1588 = vpack.c.b16 %v1352, %v1348
        %v1589 = vpack.c.b16 %v1353, %v1349
        %v1590 = vpack.c.b16 %v1354, %v1350
        %v1591 = vpack.c.b16 %v1355, %v1351
        %v1592 = vpack.c.b16 %v1360, %v1356
        %v1593 = vpack.c.b16 %v1361, %v1357
        %v1594 = vpack.c.b16 %v1362, %v1358
        %v1595 = vpack.c.b16 %v1363, %v1359
        %v1596 = vpack.c.b16 %v1368, %v1364
        %v1597 = vpack.c.b16 %v1369, %v1365
        %v1598 = vpack.c.b16 %v1370, %v1366
        %v1599 = vpack.c.b16 %v1371, %v1367
        %v1600 = vpack.c.b16 %v1376, %v1372
        %v1601 = vpack.c.b16 %v1377, %v1373
        %v1602 = vpack.c.b16 %v1378, %v1374
        %v1603 = vpack.c.b16 %v1379, %v1375
        %v1604 = vpack.c.b16 %v1384, %v1380
        %v1605 = vpack.c.b16 %v1385, %v1381
        %v1606 = vpack.c.b16 %v1386, %v1382
        %v1607 = vpack.c.b16 %v1387, %v1383
        %v1608 = vpack.c.b16 %v1392, %v1388
        %v1609 = vpack.c.b16 %v1393, %v1389
        %v1610 = vpack.c.b16 %v1394, %v1390
        %v1611 = vpack.c.b16 %v1395, %v1391
        %v1612 = vpack.c.b16 %v1400, %v1396
        %v1613 = vpack.c.b16 %v1401, %v1397
        %v1614 = vpack.c.b16 %v1402, %v1398
        %v1615 = vpack.c.b16 %v1403, %v1399
        %v1616 = vpack.c.b16 %v1408, %v1404
        %v1617 = vpack.c.b16 %v1409, %v1405
        %v1618 = vpack.c.b16 %v1410, %v1406
        %v1619 = vpack.c.b16 %v1411, %v1407
        %v1620 = vpack.c.b16 %v1416, %v1412
        %v1621 = vpack.c.b16 %v1417, %v1413
        %v1622 = vpack.c.b16 %v1418, %v1414
        %v1623 = vpack.c.b16 %v1419, %v1415
        %v1624 = vpack.c.b16 %v1424, %v1420
        %v1625 = vpack.c.b16 %v1425, %v1421
        %v1626 = vpack.c.b16 %v1426, %v1422
        %v1627 = vpack.c.b16 %v1427, %v1423
        %v1628 = vpack.c.b16 %v1432, %v1428
        %v1629 = vpack.c.b16 %v1433, %v1429
        %v1630 = vpack.c.b16 %v1434, %v1430
        %v1631 = vpack.c.b16 %v1435, %v1431
        %v1632 = vpack.c.b16 %v1440, %v1436
        %v1633 = vpack.c.b16 %v1441, %v1437
        %v1634 = vpack.c.b16 %v1442, %v1438
        %v1635 = vpack.c.b16 %v1443, %v1439
        %v1636 = vpack.c.b16 %v1448, %v1444
        %v1637 = vpack.c.b16 %v1449, %v1445
        %v1638 = vpack.c.b16 %v1450, %v1446
        %v1639 = vpack.c.b16 %v1451, %v1447
        %v1640 = vpack.c.b16 %v1456, %v1452
        %v1641 = vpack.c.b16 %v1457, %v1453
        %v1642 = vpack.c.b16 %v1458, %v1454
        %v1643 = vpack.c.b16 %v1459, %v1455
        %v1644 = vpack.c.b16 %v1464, %v1460
        %v1645 = vpack.c.b16 %v1465, %v1461
        %v1646 = vpack.c.b16 %v1466, %v1462
        %v1647 = vpack.c.b16 %v1467, %v1463
        %v1648 = vpack.c.b16 %v1472, %v1468
        %v1649 = vpack.c.b16 %v1473, %v1469
        %v1650 = vpack.c.b16 %v1474, %v1470
        %v1651 = vpack.c.b16 %v1475, %v1471
        %v1652 = vpack.c.b16 %v1480, %v1476
        %v1653 = vpack.c.b16 %v1481, %v1477
        %v1654 = vpack.c.b16 %v1482, %v1478
        %v1655 = vpack.c.b16 %v1483, %v1479
        %v1656 = vpack.c.b16 %v1488, %v1484
        %v1657 = vpack.c.b16 %v1489, %v1485
        %v1658 = vpack.c.b16 %v1490, %v1486
        %v1659 = vpack.c.b16 %v1491, %v1487
        %v1660 = vpack.c.b16 %v1496, %v1492
        %v1661 = vpack.c.b16 %v1497, %v1493
        %v1662 = vpack.c.b16 %v1498, %v1494
        %v1663 = vpack.c.b16 %v1499, %v1495
        %v1664 = vpack.c.b16 %v1504, %v1500
        %v1665 = vpack.c.b16 %v1505, %v1501
        %v1666 = vpack.c.b16 %v1506, %v1502
        %v1667 = vpack.c.b16 %v1507, %v1503
        %v1668 = vpack.c.b16 %v1512, %v1508
        %v1669 = vpack.c.b16 %v1513, %v1509
        %v1670 = vpack.c.b16 %v1514, %v1510
        %v1671 = vpack.c.b16 %v1515, %v1511
        %v1672 = vpack.c.b16 %v1520, %v1516
        %v1673 = vpack.c.b16 %v1521, %v1517
        %v1674 = vpack.c.b16 %v1522, %v1518
        %v1675 = vpack.c.b16 %v1523, %v1519
        %v1676 = vpack.c.b16 %v1528, %v1524
        %v1677 = vpack.c.b16 %v1529, %v1525
        %v1678 = vpack.c.b16 %v1530, %v1526
        %v1679 = vpack.c.b16 %v1531, %v1527
        %v1680 = vpack.c.b16 %v1536, %v1532
        %v1681 = vpack.c.b16 %v1537, %v1533
        %v1682 = vpack.c.b16 %v1538, %v1534
        %v1683 = vpack.c.b16 %v1539, %v1535
        %v1684 = vpack.c.b16 %v1544, %v1540
        %v1685 = vpack.c.b16 %v1545, %v1541
        %v1686 = vpack.c.b16 %v1546, %v1542
        %v1687 = vpack.c.b16 %v1547, %v1543
        %v1688 = vpack.c.b16 %v1552, %v1548
        %v1689 = vpack.c.b16 %v1553, %v1549
        %v1690 = vpack.c.b16 %v1554, %v1550
        %v1691 = vpack.c.b16 %v1555, %v1551
        %v1692 = vpack.c.b16 %v1560, %v1556
        %v1693 = vpack.c.b16 %v1561, %v1557
        %v1694 = vpack.c.b16 %v1562, %v1558
        %v1695 = vpack.c.b16 %v1563, %v1559
        %v1696 = vpack.c.b16 %v1568, %v1564
        %v1697 = vpack.c.b16 %v1569, %v1565
        %v1698 = vpack.c.b16 %v1570, %v1566
        %v1699 = vpack.c.b16 %v1571, %v1567
        %1828 = vmatpush.bf16.msra.mxu0 %v1600
        %1829 = vmatpush.bf16.msra.mxu0 %v1596
        %1830 = vmatpush.bf16.msra.mxu0 %v1592
        %1831 = vmatpush.bf16.msra.mxu0 %v1588
        %1832 = vmatpush.bf16.msra.mxu0 %v1584
        %1833 = vmatpush.bf16.msra.mxu0 %v1580
        %1834 = vmatpush.bf16.msra.mxu0 %v1576
        %1835 = vmatpush.bf16.msra.mxu0 %v1572
        %1836 = vmatmul.bf16.gmra.mxu0 %v1034
        %v1837 = vpop.f32.mrf.mxu0
        %v1838 = vadd.f32 %v1180, %v1837
        %v1839 = vpop.f32.mrf.mxu0
        %v1840 = vadd.f32 %v1180, %v1839
        %1841 = vmatmul.bf16.gmra.mxu0 %v1038
        %v1842 = vpop.f32.mrf.mxu0
        %v1843 = vadd.f32 %v1180, %v1842
        %v1844 = vpop.f32.mrf.mxu0
        %v1845 = vadd.f32 %v1180, %v1844
        %1846 = vmatmul.bf16.gmra.mxu0 %v1042
        %v1847 = vpop.f32.mrf.mxu0
        %v1848 = vadd.f32 %v1180, %v1847
        %v1849 = vpop.f32.mrf.mxu0
        %v1850 = vadd.f32 %v1180, %v1849
        %1851 = vmatmul.bf16.gmra.mxu0 %v1046
        %v1852 = vpop.f32.mrf.mxu0
        %v1853 = vadd.f32 %v1180, %v1852
        %v1854 = vpop.f32.mrf.mxu0
        %v1855 = vadd.f32 %v1180, %v1854
        %1856 = vdwg.mxu0
        %1857 = vmatpush.bf16.msra.mxu0 %v1632
        %1858 = vmatpush.bf16.msra.mxu0 %v1628
        %1859 = vmatpush.bf16.msra.mxu0 %v1624
        %1860 = vmatpush.bf16.msra.mxu0 %v1620
        %1861 = vmatpush.bf16.msra.mxu0 %v1616
        %1862 = vmatpush.bf16.msra.mxu0 %v1612
        %1863 = vmatpush.bf16.msra.mxu0 %v1608
        %1864 = vmatpush.bf16.msra.mxu0 %v1604
        %1865 = vmatmul.bf16.gmra.mxu0 %v1035
        %v1866 = vpop.f32.mrf.mxu0
        %v1867 = vadd.f32 %v1838, %v1866
        %v1868 = vpop.f32.mrf.mxu0
        %v1869 = vadd.f32 %v1840, %v1868
        %1870 = vmatmul.bf16.gmra.mxu0 %v1039
        %v1871 = vpop.f32.mrf.mxu0
        %v1872 = vadd.f32 %v1843, %v1871
        %v1873 = vpop.f32.mrf.mxu0
        %v1874 = vadd.f32 %v1845, %v1873
        %1875 = vmatmul.bf16.gmra.mxu0 %v1043
        %v1876 = vpop.f32.mrf.mxu0
        %v1877 = vadd.f32 %v1848, %v1876
        %v1878 = vpop.f32.mrf.mxu0
        %v1879 = vadd.f32 %v1850, %v1878
        %1880 = vmatmul.bf16.gmra.mxu0 %v1047
        %v1881 = vpop.f32.mrf.mxu0
        %v1882 = vadd.f32 %v1853, %v1881
        %v1883 = vpop.f32.mrf.mxu0
        %v1884 = vadd.f32 %v1855, %v1883
        %1885 = vdwg.mxu0
        %1886 = vmatpush.bf16.msra.mxu0 %v1664
        %1887 = vmatpush.bf16.msra.mxu0 %v1660
        %1888 = vmatpush.bf16.msra.mxu0 %v1656
        %1889 = vmatpush.bf16.msra.mxu0 %v1652
        %1890 = vmatpush.bf16.msra.mxu0 %v1648
        %1891 = vmatpush.bf16.msra.mxu0 %v1644
        %1892 = vmatpush.bf16.msra.mxu0 %v1640
        %1893 = vmatpush.bf16.msra.mxu0 %v1636
        %1894 = vmatmul.bf16.gmra.mxu0 %v1036
        %v1895 = vpop.f32.mrf.mxu0
        %v1896 = vadd.f32 %v1867, %v1895
        %v1897 = vpop.f32.mrf.mxu0
        %v1898 = vadd.f32 %v1869, %v1897
        %1899 = vmatmul.bf16.gmra.mxu0 %v1040
        %v1900 = vpop.f32.mrf.mxu0
        %v1901 = vadd.f32 %v1872, %v1900
        %v1902 = vpop.f32.mrf.mxu0
        %v1903 = vadd.f32 %v1874, %v1902
        %1904 = vmatmul.bf16.gmra.mxu0 %v1044
        %v1905 = vpop.f32.mrf.mxu0
        %v1906 = vadd.f32 %v1877, %v1905
        %v1907 = vpop.f32.mrf.mxu0
        %v1908 = vadd.f32 %v1879, %v1907
        %1909 = vmatmul.bf16.gmra.mxu0 %v1048
        %v1910 = vpop.f32.mrf.mxu0
        %v1911 = vadd.f32 %v1882, %v1910
        %v1912 = vpop.f32.mrf.mxu0
        %v1913 = vadd.f32 %v1884, %v1912
        %1914 = vdwg.mxu0
        %1915 = vmatpush.bf16.msra.mxu0 %v1696
        %1916 = vmatpush.bf16.msra.mxu0 %v1692
        %1917 = vmatpush.bf16.msra.mxu0 %v1688
        %1918 = vmatpush.bf16.msra.mxu0 %v1684
        %1919 = vmatpush.bf16.msra.mxu0 %v1680
        %1920 = vmatpush.bf16.msra.mxu0 %v1676
        %1921 = vmatpush.bf16.msra.mxu0 %v1672
        %1922 = vmatpush.bf16.msra.mxu0 %v1668
        %1923 = vmatmul.bf16.gmra.mxu0 %v1037
        %v1924 = vpop.f32.mrf.mxu0
        %v1925 = vadd.f32 %v1896, %v1924
        %v1926 = vpop.f32.mrf.mxu0
        %v1927 = vadd.f32 %v1898, %v1926
        %1928 = vmatmul.bf16.gmra.mxu0 %v1041
        %v1929 = vpop.f32.mrf.mxu0
        %v1930 = vadd.f32 %v1901, %v1929
        %v1931 = vpop.f32.mrf.mxu0
        %v1932 = vadd.f32 %v1903, %v1931
        %1933 = vmatmul.bf16.gmra.mxu0 %v1045
        %v1934 = vpop.f32.mrf.mxu0
        %v1935 = vadd.f32 %v1906, %v1934
        %v1936 = vpop.f32.mrf.mxu0
        %v1937 = vadd.f32 %v1908, %v1936
        %1938 = vmatmul.bf16.gmra.mxu0 %v1049
        %v1939 = vpop.f32.mrf.mxu0
        %v1940 = vadd.f32 %v1911, %v1939
        %v1941 = vpop.f32.mrf.mxu0
        %v1942 = vadd.f32 %v1913, %v1941
        %1943 = vdwg.mxu0
        %1944 = vmatpush.bf16.msra.mxu0 %v1601
        %1945 = vmatpush.bf16.msra.mxu0 %v1597
        %1946 = vmatpush.bf16.msra.mxu0 %v1593
        %1947 = vmatpush.bf16.msra.mxu0 %v1589
        %1948 = vmatpush.bf16.msra.mxu0 %v1585
        %1949 = vmatpush.bf16.msra.mxu0 %v1581
        %1950 = vmatpush.bf16.msra.mxu0 %v1577
        %1951 = vmatpush.bf16.msra.mxu0 %v1573
        %1952 = vmatmul.bf16.gmra.mxu0 %v1034
        %v1953 = vpop.f32.mrf.mxu0
        %v1954 = vadd.f32 %v1181, %v1953
        %v1955 = vpop.f32.mrf.mxu0
        %v1956 = vadd.f32 %v1181, %v1955
        %1957 = vmatmul.bf16.gmra.mxu0 %v1038
        %v1958 = vpop.f32.mrf.mxu0
        %v1959 = vadd.f32 %v1181, %v1958
        %v1960 = vpop.f32.mrf.mxu0
        %v1961 = vadd.f32 %v1181, %v1960
        %1962 = vmatmul.bf16.gmra.mxu0 %v1042
        %v1963 = vpop.f32.mrf.mxu0
        %v1964 = vadd.f32 %v1181, %v1963
        %v1965 = vpop.f32.mrf.mxu0
        %v1966 = vadd.f32 %v1181, %v1965
        %1967 = vmatmul.bf16.gmra.mxu0 %v1046
        %v1968 = vpop.f32.mrf.mxu0
        %v1969 = vadd.f32 %v1181, %v1968
        %v1970 = vpop.f32.mrf.mxu0
        %v1971 = vadd.f32 %v1181, %v1970
        %1972 = vdwg.mxu0
        %1973 = vmatpush.bf16.msra.mxu0 %v1633
        %1974 = vmatpush.bf16.msra.mxu0 %v1629
        %1975 = vmatpush.bf16.msra.mxu0 %v1625
        %1976 = vmatpush.bf16.msra.mxu0 %v1621
        %1977 = vmatpush.bf16.msra.mxu0 %v1617
        %1978 = vmatpush.bf16.msra.mxu0 %v1613
        %1979 = vmatpush.bf16.msra.mxu0 %v1609
        %1980 = vmatpush.bf16.msra.mxu0 %v1605
        %1981 = vmatmul.bf16.gmra.mxu0 %v1035
        %v1982 = vpop.f32.mrf.mxu0
        %v1983 = vadd.f32 %v1954, %v1982
        %v1984 = vpop.f32.mrf.mxu0
        %v1985 = vadd.f32 %v1956, %v1984
        %1986 = vmatmul.bf16.gmra.mxu0 %v1039
        %v1987 = vpop.f32.mrf.mxu0
        %v1988 = vadd.f32 %v1959, %v1987
        %v1989 = vpop.f32.mrf.mxu0
        %v1990 = vadd.f32 %v1961, %v1989
        %1991 = vmatmul.bf16.gmra.mxu0 %v1043
        %v1992 = vpop.f32.mrf.mxu0
        %v1993 = vadd.f32 %v1964, %v1992
        %v1994 = vpop.f32.mrf.mxu0
        %v1995 = vadd.f32 %v1966, %v1994
        %1996 = vmatmul.bf16.gmra.mxu0 %v1047
        %v1997 = vpop.f32.mrf.mxu0
        %v1998 = vadd.f32 %v1969, %v1997
        %v1999 = vpop.f32.mrf.mxu0
        %v2000 = vadd.f32 %v1971, %v1999
        %2001 = vdwg.mxu0
        %2002 = vmatpush.bf16.msra.mxu0 %v1665
        %2003 = vmatpush.bf16.msra.mxu0 %v1661
        %2004 = vmatpush.bf16.msra.mxu0 %v1657
        %2005 = vmatpush.bf16.msra.mxu0 %v1653
        %2006 = vmatpush.bf16.msra.mxu0 %v1649
        %2007 = vmatpush.bf16.msra.mxu0 %v1645
        %2008 = vmatpush.bf16.msra.mxu0 %v1641
        %2009 = vmatpush.bf16.msra.mxu0 %v1637
        %2010 = vmatmul.bf16.gmra.mxu0 %v1036
        %v2011 = vpop.f32.mrf.mxu0
        %v2012 = vadd.f32 %v1983, %v2011
        %v2013 = vpop.f32.mrf.mxu0
        %v2014 = vadd.f32 %v1985, %v2013
        %2015 = vmatmul.bf16.gmra.mxu0 %v1040
        %v2016 = vpop.f32.mrf.mxu0
        %v2017 = vadd.f32 %v1988, %v2016
        %v2018 = vpop.f32.mrf.mxu0
        %v2019 = vadd.f32 %v1990, %v2018
        %2020 = vmatmul.bf16.gmra.mxu0 %v1044
        %v2021 = vpop.f32.mrf.mxu0
        %v2022 = vadd.f32 %v1993, %v2021
        %v2023 = vpop.f32.mrf.mxu0
        %v2024 = vadd.f32 %v1995, %v2023
        %2025 = vmatmul.bf16.gmra.mxu0 %v1048
        %v2026 = vpop.f32.mrf.mxu0
        %v2027 = vadd.f32 %v1998, %v2026
        %v2028 = vpop.f32.mrf.mxu0
        %v2029 = vadd.f32 %v2000, %v2028
        %2030 = vdwg.mxu0
        %2031 = vmatpush.bf16.msra.mxu0 %v1697
        %2032 = vmatpush.bf16.msra.mxu0 %v1693
        %2033 = vmatpush.bf16.msra.mxu0 %v1689
        %2034 = vmatpush.bf16.msra.mxu0 %v1685
        %2035 = vmatpush.bf16.msra.mxu0 %v1681
        %2036 = vmatpush.bf16.msra.mxu0 %v1677
        %2037 = vmatpush.bf16.msra.mxu0 %v1673
        %2038 = vmatpush.bf16.msra.mxu0 %v1669
        %2039 = vmatmul.bf16.gmra.mxu0 %v1037
        %v2040 = vpop.f32.mrf.mxu0
        %v2041 = vadd.f32 %v2012, %v2040
        %v2042 = vpop.f32.mrf.mxu0
        %v2043 = vadd.f32 %v2014, %v2042
        %2044 = vmatmul.bf16.gmra.mxu0 %v1041
        %v2045 = vpop.f32.mrf.mxu0
        %v2046 = vadd.f32 %v2017, %v2045
        %v2047 = vpop.f32.mrf.mxu0
        %v2048 = vadd.f32 %v2019, %v2047
        %2049 = vmatmul.bf16.gmra.mxu0 %v1045
        %v2050 = vpop.f32.mrf.mxu0
        %v2051 = vadd.f32 %v2022, %v2050
        %v2052 = vpop.f32.mrf.mxu0
        %v2053 = vadd.f32 %v2024, %v2052
        %2054 = vmatmul.bf16.gmra.mxu0 %v1049
        %v2055 = vpop.f32.mrf.mxu0
        %v2056 = vadd.f32 %v2027, %v2055
        %v2057 = vpop.f32.mrf.mxu0
        %v2058 = vadd.f32 %v2029, %v2057
        %2059 = vdwg.mxu0
        %2060 = vmatpush.bf16.msra.mxu0 %v1602
        %2061 = vmatpush.bf16.msra.mxu0 %v1598
        %2062 = vmatpush.bf16.msra.mxu0 %v1594
        %2063 = vmatpush.bf16.msra.mxu0 %v1590
        %2064 = vmatpush.bf16.msra.mxu0 %v1586
        %2065 = vmatpush.bf16.msra.mxu0 %v1582
        %2066 = vmatpush.bf16.msra.mxu0 %v1578
        %2067 = vmatpush.bf16.msra.mxu0 %v1574
        %2068 = vmatmul.bf16.gmra.mxu0 %v1034
        %v2069 = vpop.f32.mrf.mxu0
        %v2070 = vadd.f32 %v1182, %v2069
        %v2071 = vpop.f32.mrf.mxu0
        %v2072 = vadd.f32 %v1182, %v2071
        %2073 = vmatmul.bf16.gmra.mxu0 %v1038
        %v2074 = vpop.f32.mrf.mxu0
        %v2075 = vadd.f32 %v1182, %v2074
        %v2076 = vpop.f32.mrf.mxu0
        %v2077 = vadd.f32 %v1182, %v2076
        %2078 = vmatmul.bf16.gmra.mxu0 %v1042
        %v2079 = vpop.f32.mrf.mxu0
        %v2080 = vadd.f32 %v1182, %v2079
        %v2081 = vpop.f32.mrf.mxu0
        %v2082 = vadd.f32 %v1182, %v2081
        %2083 = vmatmul.bf16.gmra.mxu0 %v1046
        %v2084 = vpop.f32.mrf.mxu0
        %v2085 = vadd.f32 %v1182, %v2084
        %v2086 = vpop.f32.mrf.mxu0
        %v2087 = vadd.f32 %v1182, %v2086
        %2088 = vdwg.mxu0
        %2089 = vmatpush.bf16.msra.mxu0 %v1634
        %2090 = vmatpush.bf16.msra.mxu0 %v1630
        %2091 = vmatpush.bf16.msra.mxu0 %v1626
        %2092 = vmatpush.bf16.msra.mxu0 %v1622
        %2093 = vmatpush.bf16.msra.mxu0 %v1618
        %2094 = vmatpush.bf16.msra.mxu0 %v1614
        %2095 = vmatpush.bf16.msra.mxu0 %v1610
        %2096 = vmatpush.bf16.msra.mxu0 %v1606
        %2097 = vmatmul.bf16.gmra.mxu0 %v1035
        %v2098 = vpop.f32.mrf.mxu0
        %v2099 = vadd.f32 %v2070, %v2098
        %v2100 = vpop.f32.mrf.mxu0
        %v2101 = vadd.f32 %v2072, %v2100
        %2102 = vmatmul.bf16.gmra.mxu0 %v1039
        %v2103 = vpop.f32.mrf.mxu0
        %v2104 = vadd.f32 %v2075, %v2103
        %v2105 = vpop.f32.mrf.mxu0
        %v2106 = vadd.f32 %v2077, %v2105
        %2107 = vmatmul.bf16.gmra.mxu0 %v1043
        %v2108 = vpop.f32.mrf.mxu0
        %v2109 = vadd.f32 %v2080, %v2108
        %v2110 = vpop.f32.mrf.mxu0
        %v2111 = vadd.f32 %v2082, %v2110
        %2112 = vmatmul.bf16.gmra.mxu0 %v1047
        %v2113 = vpop.f32.mrf.mxu0
        %v2114 = vadd.f32 %v2085, %v2113
        %v2115 = vpop.f32.mrf.mxu0
        %v2116 = vadd.f32 %v2087, %v2115
        %2117 = vdwg.mxu0
        %2118 = vmatpush.bf16.msra.mxu0 %v1666
        %2119 = vmatpush.bf16.msra.mxu0 %v1662
        %2120 = vmatpush.bf16.msra.mxu0 %v1658
        %2121 = vmatpush.bf16.msra.mxu0 %v1654
        %2122 = vmatpush.bf16.msra.mxu0 %v1650
        %2123 = vmatpush.bf16.msra.mxu0 %v1646
        %2124 = vmatpush.bf16.msra.mxu0 %v1642
        %2125 = vmatpush.bf16.msra.mxu0 %v1638
        %2126 = vmatmul.bf16.gmra.mxu0 %v1036
        %v2127 = vpop.f32.mrf.mxu0
        %v2128 = vadd.f32 %v2099, %v2127
        %v2129 = vpop.f32.mrf.mxu0
        %v2130 = vadd.f32 %v2101, %v2129
        %2131 = vmatmul.bf16.gmra.mxu0 %v1040
        %v2132 = vpop.f32.mrf.mxu0
        %v2133 = vadd.f32 %v2104, %v2132
        %v2134 = vpop.f32.mrf.mxu0
        %v2135 = vadd.f32 %v2106, %v2134
        %2136 = vmatmul.bf16.gmra.mxu0 %v1044
        %v2137 = vpop.f32.mrf.mxu0
        %v2138 = vadd.f32 %v2109, %v2137
        %v2139 = vpop.f32.mrf.mxu0
        %v2140 = vadd.f32 %v2111, %v2139
        %2141 = vmatmul.bf16.gmra.mxu0 %v1048
        %v2142 = vpop.f32.mrf.mxu0
        %v2143 = vadd.f32 %v2114, %v2142
        %v2144 = vpop.f32.mrf.mxu0
        %v2145 = vadd.f32 %v2116, %v2144
        %2146 = vdwg.mxu0
        %2147 = vmatpush.bf16.msra.mxu0 %v1698
        %2148 = vmatpush.bf16.msra.mxu0 %v1694
        %2149 = vmatpush.bf16.msra.mxu0 %v1690
        %2150 = vmatpush.bf16.msra.mxu0 %v1686
        %2151 = vmatpush.bf16.msra.mxu0 %v1682
        %2152 = vmatpush.bf16.msra.mxu0 %v1678
        %2153 = vmatpush.bf16.msra.mxu0 %v1674
        %2154 = vmatpush.bf16.msra.mxu0 %v1670
        %2155 = vmatmul.bf16.gmra.mxu0 %v1037
        %v2156 = vpop.f32.mrf.mxu0
        %v2157 = vadd.f32 %v2128, %v2156
        %v2158 = vpop.f32.mrf.mxu0
        %v2159 = vadd.f32 %v2130, %v2158
        %2160 = vmatmul.bf16.gmra.mxu0 %v1041
        %v2161 = vpop.f32.mrf.mxu0
        %v2162 = vadd.f32 %v2133, %v2161
        %v2163 = vpop.f32.mrf.mxu0
        %v2164 = vadd.f32 %v2135, %v2163
        %2165 = vmatmul.bf16.gmra.mxu0 %v1045
        %v2166 = vpop.f32.mrf.mxu0
        %v2167 = vadd.f32 %v2138, %v2166
        %v2168 = vpop.f32.mrf.mxu0
        %v2169 = vadd.f32 %v2140, %v2168
        %2170 = vmatmul.bf16.gmra.mxu0 %v1049
        %v2171 = vpop.f32.mrf.mxu0
        %v2172 = vadd.f32 %v2143, %v2171
        %v2173 = vpop.f32.mrf.mxu0
        %v2174 = vadd.f32 %v2145, %v2173
        %2175 = vdwg.mxu0
        %2176 = vmatpush.bf16.msra.mxu0 %v1603
        %2177 = vmatpush.bf16.msra.mxu0 %v1599
        %2178 = vmatpush.bf16.msra.mxu0 %v1595
        %2179 = vmatpush.bf16.msra.mxu0 %v1591
        %2180 = vmatpush.bf16.msra.mxu0 %v1587
        %2181 = vmatpush.bf16.msra.mxu0 %v1583
        %2182 = vmatpush.bf16.msra.mxu0 %v1579
        %2183 = vmatpush.bf16.msra.mxu0 %v1575
        %2184 = vmatmul.bf16.gmra.mxu0 %v1034
        %v2185 = vpop.f32.mrf.mxu0
        %v2186 = vadd.f32 %v1183, %v2185
        %v2187 = vpop.f32.mrf.mxu0
        %v2188 = vadd.f32 %v1183, %v2187
        %2189 = vmatmul.bf16.gmra.mxu0 %v1038
        %v2190 = vpop.f32.mrf.mxu0
        %v2191 = vadd.f32 %v1183, %v2190
        %v2192 = vpop.f32.mrf.mxu0
        %v2193 = vadd.f32 %v1183, %v2192
        %2194 = vmatmul.bf16.gmra.mxu0 %v1042
        %v2195 = vpop.f32.mrf.mxu0
        %v2196 = vadd.f32 %v1183, %v2195
        %v2197 = vpop.f32.mrf.mxu0
        %v2198 = vadd.f32 %v1183, %v2197
        %2199 = vmatmul.bf16.gmra.mxu0 %v1046
        %v2200 = vpop.f32.mrf.mxu0
        %v2201 = vadd.f32 %v1183, %v2200
        %v2202 = vpop.f32.mrf.mxu0
        %v2203 = vadd.f32 %v1183, %v2202
        %2204 = vdwg.mxu0
        %2205 = vmatpush.bf16.msra.mxu0 %v1635
        %2206 = vmatpush.bf16.msra.mxu0 %v1631
        %2207 = vmatpush.bf16.msra.mxu0 %v1627
        %2208 = vmatpush.bf16.msra.mxu0 %v1623
        %2209 = vmatpush.bf16.msra.mxu0 %v1619
        %2210 = vmatpush.bf16.msra.mxu0 %v1615
        %2211 = vmatpush.bf16.msra.mxu0 %v1611
        %2212 = vmatpush.bf16.msra.mxu0 %v1607
        %2213 = vmatmul.bf16.gmra.mxu0 %v1035
        %v2214 = vpop.f32.mrf.mxu0
        %v2215 = vadd.f32 %v2186, %v2214
        %v2216 = vpop.f32.mrf.mxu0
        %v2217 = vadd.f32 %v2188, %v2216
        %2218 = vmatmul.bf16.gmra.mxu0 %v1039
        %v2219 = vpop.f32.mrf.mxu0
        %v2220 = vadd.f32 %v2191, %v2219
        %v2221 = vpop.f32.mrf.mxu0
        %v2222 = vadd.f32 %v2193, %v2221
        %2223 = vmatmul.bf16.gmra.mxu0 %v1043
        %v2224 = vpop.f32.mrf.mxu0
        %v2225 = vadd.f32 %v2196, %v2224
        %v2226 = vpop.f32.mrf.mxu0
        %v2227 = vadd.f32 %v2198, %v2226
        %2228 = vmatmul.bf16.gmra.mxu0 %v1047
        %v2229 = vpop.f32.mrf.mxu0
        %v2230 = vadd.f32 %v2201, %v2229
        %v2231 = vpop.f32.mrf.mxu0
        %v2232 = vadd.f32 %v2203, %v2231
        %2233 = vdwg.mxu0
        %2234 = vmatpush.bf16.msra.mxu0 %v1667
        %2235 = vmatpush.bf16.msra.mxu0 %v1663
        %2236 = vmatpush.bf16.msra.mxu0 %v1659
        %2237 = vmatpush.bf16.msra.mxu0 %v1655
        %2238 = vmatpush.bf16.msra.mxu0 %v1651
        %2239 = vmatpush.bf16.msra.mxu0 %v1647
        %2240 = vmatpush.bf16.msra.mxu0 %v1643
        %2241 = vmatpush.bf16.msra.mxu0 %v1639
        %2242 = vmatmul.bf16.gmra.mxu0 %v1036
        %v2243 = vpop.f32.mrf.mxu0
        %v2244 = vadd.f32 %v2215, %v2243
        %v2245 = vpop.f32.mrf.mxu0
        %v2246 = vadd.f32 %v2217, %v2245
        %2247 = vmatmul.bf16.gmra.mxu0 %v1040
        %v2248 = vpop.f32.mrf.mxu0
        %v2249 = vadd.f32 %v2220, %v2248
        %v2250 = vpop.f32.mrf.mxu0
        %v2251 = vadd.f32 %v2222, %v2250
        %2252 = vmatmul.bf16.gmra.mxu0 %v1044
        %v2253 = vpop.f32.mrf.mxu0
        %v2254 = vadd.f32 %v2225, %v2253
        %v2255 = vpop.f32.mrf.mxu0
        %v2256 = vadd.f32 %v2227, %v2255
        %2257 = vmatmul.bf16.gmra.mxu0 %v1048
        %v2258 = vpop.f32.mrf.mxu0
        %v2259 = vadd.f32 %v2230, %v2258
        %v2260 = vpop.f32.mrf.mxu0
        %v2261 = vadd.f32 %v2232, %v2260
        %2262 = vdwg.mxu0
        %2263 = vmatpush.bf16.msra.mxu0 %v1699
        %2264 = vmatpush.bf16.msra.mxu0 %v1695
        %2265 = vmatpush.bf16.msra.mxu0 %v1691
        %2266 = vmatpush.bf16.msra.mxu0 %v1687
        %2267 = vmatpush.bf16.msra.mxu0 %v1683
        %2268 = vmatpush.bf16.msra.mxu0 %v1679
        %2269 = vmatpush.bf16.msra.mxu0 %v1675
        %2270 = vmatpush.bf16.msra.mxu0 %v1671
        %2271 = vmatmul.bf16.gmra.mxu0 %v1037
        %v2272 = vpop.f32.mrf.mxu0
        %v2273 = vadd.f32 %v2244, %v2272
        %v2274 = vpop.f32.mrf.mxu0
        %v2275 = vadd.f32 %v2246, %v2274
        %2276 = vmatmul.bf16.gmra.mxu0 %v1041
        %v2277 = vpop.f32.mrf.mxu0
        %v2278 = vadd.f32 %v2249, %v2277
        %v2279 = vpop.f32.mrf.mxu0
        %v2280 = vadd.f32 %v2251, %v2279
        %2281 = vmatmul.bf16.gmra.mxu0 %v1045
        %v2282 = vpop.f32.mrf.mxu0
        %v2283 = vadd.f32 %v2254, %v2282
        %v2284 = vpop.f32.mrf.mxu0
        %v2285 = vadd.f32 %v2256, %v2284
        %2286 = vmatmul.bf16.gmra.mxu0 %v1049
        %v2287 = vpop.f32.mrf.mxu0
        %v2288 = vadd.f32 %v2259, %v2287
        %v2289 = vpop.f32.mrf.mxu0
        %v2290 = vadd.f32 %v2261, %v2289
        %2291 = vdwg.mxu0
        %v2292 = vpack.c.bf16 %v1927, %v1925
        %v2293 = vpack.c.bf16 %v2043, %v2041
        %v2294 = vpack.c.bf16 %v2159, %v2157
        %v2295 = vpack.c.bf16 %v2275, %v2273
        %v2296 = vpack.c.bf16 %v1932, %v1930
        %v2297 = vpack.c.bf16 %v2048, %v2046
        %v2298 = vpack.c.bf16 %v2164, %v2162
        %v2299 = vpack.c.bf16 %v2280, %v2278
        %v2300 = vpack.c.bf16 %v1937, %v1935
        %v2301 = vpack.c.bf16 %v2053, %v2051
        %v2302 = vpack.c.bf16 %v2169, %v2167
        %v2303 = vpack.c.bf16 %v2285, %v2283
        %v2304 = vpack.c.bf16 %v1942, %v1940
        %v2305 = vpack.c.bf16 %v2058, %v2056
        %v2306 = vpack.c.bf16 %v2174, %v2172
        %v2307 = vpack.c.bf16 %v2290, %v2288
        %2308 = vmatpush.bf16.msra.mxu0 0
        %2309 = vmatpush.bf16.msra.mxu0 0
        %2310 = vmatpush.bf16.msra.mxu0 0
        %2311 = vmatpush.bf16.msra.mxu0 0
        %2312 = vmatpush.bf16.msra.mxu0 %v2304
        %2313 = vmatpush.bf16.msra.mxu0 %v2300
        %2314 = vmatpush.bf16.msra.mxu0 %v2296
        %2315 = vmatpush.bf16.msra.mxu0 %v2292
        %2316 = vmatmul.bf16.gmra.mxu0 %v794
        %v2317 = vpop.f32.mrf.mxu0
        %v2318 = vadd.f32 0.0, %v2317
        %v2319 = vpop.f32.mrf.mxu0
        %v2320 = vadd.f32 0.0, %v2319
        %2321 = vmatmul.bf16.gmra.mxu0 %v797
        %v2322 = vpop.f32.mrf.mxu0
        %v2323 = vadd.f32 0.0, %v2322
        %v2324 = vpop.f32.mrf.mxu0
        %v2325 = vadd.f32 0.0, %v2324
        %2326 = vmatmul.bf16.gmra.mxu0 %v800
        %v2327 = vpop.f32.mrf.mxu0
        %v2328 = vadd.f32 0.0, %v2327
        %v2329 = vpop.f32.mrf.mxu0
        %v2330 = vadd.f32 0.0, %v2329
        %2331 = vmatmul.bf16.gmra.mxu0 %v803
        %v2332 = vpop.f32.mrf.mxu0
        %v2333 = vadd.f32 0.0, %v2332
        %v2334 = vpop.f32.mrf.mxu0
        %v2335 = vadd.f32 0.0, %v2334
        %2336 = vdwg.mxu0
        %2337 = vmatpush.bf16.msra.mxu0 0
        %2338 = vmatpush.bf16.msra.mxu0 0
        %2339 = vmatpush.bf16.msra.mxu0 0
        %2340 = vmatpush.bf16.msra.mxu0 0
        %2341 = vmatpush.bf16.msra.mxu0 %v2305
        %2342 = vmatpush.bf16.msra.mxu0 %v2301
        %2343 = vmatpush.bf16.msra.mxu0 %v2297
        %2344 = vmatpush.bf16.msra.mxu0 %v2293
        %2345 = vmatmul.bf16.gmra.mxu0 %v794
        %v2346 = vpop.f32.mrf.mxu0
        %v2347 = vadd.f32 0.0, %v2346
        %v2348 = vpop.f32.mrf.mxu0
        %v2349 = vadd.f32 0.0, %v2348
        %2350 = vmatmul.bf16.gmra.mxu0 %v797
        %v2351 = vpop.f32.mrf.mxu0
        %v2352 = vadd.f32 0.0, %v2351
        %v2353 = vpop.f32.mrf.mxu0
        %v2354 = vadd.f32 0.0, %v2353
        %2355 = vmatmul.bf16.gmra.mxu0 %v800
        %v2356 = vpop.f32.mrf.mxu0
        %v2357 = vadd.f32 0.0, %v2356
        %v2358 = vpop.f32.mrf.mxu0
        %v2359 = vadd.f32 0.0, %v2358
        %2360 = vmatmul.bf16.gmra.mxu0 %v803
        %v2361 = vpop.f32.mrf.mxu0
        %v2362 = vadd.f32 0.0, %v2361
        %v2363 = vpop.f32.mrf.mxu0
        %v2364 = vadd.f32 0.0, %v2363
        %2365 = vdwg.mxu0
        %2366 = vmatpush.bf16.msra.mxu0 0
        %2367 = vmatpush.bf16.msra.mxu0 0
        %2368 = vmatpush.bf16.msra.mxu0 0
        %2369 = vmatpush.bf16.msra.mxu0 0
        %2370 = vmatpush.bf16.msra.mxu0 %v2306
        %2371 = vmatpush.bf16.msra.mxu0 %v2302
        %2372 = vmatpush.bf16.msra.mxu0 %v2298
        %2373 = vmatpush.bf16.msra.mxu0 %v2294
        %2374 = vmatmul.bf16.gmra.mxu0 %v794
        %v2375 = vpop.f32.mrf.mxu0
        %v2376 = vadd.f32 0.0, %v2375
        %v2377 = vpop.f32.mrf.mxu0
        %v2378 = vadd.f32 0.0, %v2377
        %2379 = vmatmul.bf16.gmra.mxu0 %v797
        %v2380 = vpop.f32.mrf.mxu0
        %v2381 = vadd.f32 0.0, %v2380
        %v2382 = vpop.f32.mrf.mxu0
        %v2383 = vadd.f32 0.0, %v2382
        %2384 = vmatmul.bf16.gmra.mxu0 %v800
        %v2385 = vpop.f32.mrf.mxu0
        %v2386 = vadd.f32 0.0, %v2385
        %v2387 = vpop.f32.mrf.mxu0
        %v2388 = vadd.f32 0.0, %v2387
        %2389 = vmatmul.bf16.gmra.mxu0 %v803
        %v2390 = vpop.f32.mrf.mxu0
        %v2391 = vadd.f32 0.0, %v2390
        %v2392 = vpop.f32.mrf.mxu0
        %v2393 = vadd.f32 0.0, %v2392
        %2394 = vdwg.mxu0
        %2395 = vmatpush.bf16.msra.mxu0 0
        %2396 = vmatpush.bf16.msra.mxu0 0
        %2397 = vmatpush.bf16.msra.mxu0 0
        %2398 = vmatpush.bf16.msra.mxu0 0
        %2399 = vmatpush.bf16.msra.mxu0 %v2307
        %2400 = vmatpush.bf16.msra.mxu0 %v2303
        %2401 = vmatpush.bf16.msra.mxu0 %v2299
        %2402 = vmatpush.bf16.msra.mxu0 %v2295
        %2403 = vmatmul.bf16.gmra.mxu0 %v794
        %v2404 = vpop.f32.mrf.mxu0
        %v2405 = vadd.f32 0.0, %v2404
        %v2406 = vpop.f32.mrf.mxu0
        %v2407 = vadd.f32 0.0, %v2406
        %2408 = vmatmul.bf16.gmra.mxu0 %v797
        %v2409 = vpop.f32.mrf.mxu0
        %v2410 = vadd.f32 0.0, %v2409
        %v2411 = vpop.f32.mrf.mxu0
        %v2412 = vadd.f32 0.0, %v2411
        %2413 = vmatmul.bf16.gmra.mxu0 %v800
        %v2414 = vpop.f32.mrf.mxu0
        %v2415 = vadd.f32 0.0, %v2414
        %v2416 = vpop.f32.mrf.mxu0
        %v2417 = vadd.f32 0.0, %v2416
        %2418 = vmatmul.bf16.gmra.mxu0 %v803
        %v2419 = vpop.f32.mrf.mxu0
        %v2420 = vadd.f32 0.0, %v2419
        %v2421 = vpop.f32.mrf.mxu0
        %v2422 = vadd.f32 0.0, %v2421
        %2423 = vdwg.mxu0
        %v2424 = vpack.c.bf16 %v2320, %v2318
        %v2425 = vpack.c.bf16 %v2349, %v2347
        %v2426 = vpack.c.bf16 %v2378, %v2376
        %v2427 = vpack.c.bf16 %v2407, %v2405
        %v2428 = vpack.c.bf16 %v2325, %v2323
        %v2429 = vpack.c.bf16 %v2354, %v2352
        %v2430 = vpack.c.bf16 %v2383, %v2381
        %v2431 = vpack.c.bf16 %v2412, %v2410
        %v2432 = vpack.c.bf16 %v2330, %v2328
        %v2433 = vpack.c.bf16 %v2359, %v2357
        %v2434 = vpack.c.bf16 %v2388, %v2386
        %v2435 = vpack.c.bf16 %v2417, %v2415
        %v2436 = vpack.c.bf16 %v2335, %v2333
        %v2437 = vpack.c.bf16 %v2364, %v2362
        %v2438 = vpack.c.bf16 %v2393, %v2391
        %v2439 = vpack.c.bf16 %v2422, %v2420
        %v2440 = vld [vmem:[#allocation5] sm:$0xff]
        %v2441 = vld [vmem:[#allocation5 + $0x8] sm:$0xff]
        %v2442 = vld [vmem:[#allocation5 + $0x10] sm:$0xff]
        %v2443 = vld [vmem:[#allocation5 + $0x18] sm:$0xff]
        %v2444 = vld [vmem:[#allocation5 + $0x20] sm:$0xff]
        %v2445 = vld [vmem:[#allocation5 + $0x28] sm:$0xff]
        %v2446 = vld [vmem:[#allocation5 + $0x30] sm:$0xff]
        %v2447 = vld [vmem:[#allocation5 + $0x38] sm:$0xff]
        %v2448 = vld [vmem:[#allocation5 + $0x40] sm:$0xff]
        %v2449 = vld [vmem:[#allocation5 + $0x48] sm:$0xff]
        %v2450 = vld [vmem:[#allocation5 + $0x50] sm:$0xff]
        %v2451 = vld [vmem:[#allocation5 + $0x58] sm:$0xff]
        %v2452 = vld [vmem:[#allocation5 + $0x60] sm:$0xff]
        %v2453 = vld [vmem:[#allocation5 + $0x68] sm:$0xff]
        %v2454 = vld [vmem:[#allocation5 + $0x70] sm:$0xff]
        %v2455 = vld [vmem:[#allocation5 + $0x78] sm:$0xff]
        %v2456 = vld [vmem:[#allocation5 + $0x80] sm:$0xff]
        %v2457 = vld [vmem:[#allocation5 + $0x88] sm:$0xff]
        %v2458 = vld [vmem:[#allocation5 + $0x90] sm:$0xff]
        %v2459 = vld [vmem:[#allocation5 + $0x98] sm:$0xff]
        %v2460 = vld [vmem:[#allocation5 + $0xa0] sm:$0xff]
        %v2461 = vld [vmem:[#allocation5 + $0xa8] sm:$0xff]
        %v2462 = vld [vmem:[#allocation5 + $0xb0] sm:$0xff]
        %v2463 = vld [vmem:[#allocation5 + $0xb8] sm:$0xff]
        %v2464 = vld [vmem:[#allocation5 + $0xc0] sm:$0xff]
        %v2465 = vld [vmem:[#allocation5 + $0xc8] sm:$0xff]
        %v2466 = vld [vmem:[#allocation5 + $0xd0] sm:$0xff]
        %v2467 = vld [vmem:[#allocation5 + $0xd8] sm:$0xff]
        %v2468 = vld [vmem:[#allocation5 + $0xe0] sm:$0xff]
        %v2469 = vld [vmem:[#allocation5 + $0xe8] sm:$0xff]
        %v2470 = vld [vmem:[#allocation5 + $0xf0] sm:$0xff]
        %v2471 = vld [vmem:[#allocation5 + $0xf8] sm:$0xff]
        %v2472 = vld [vmem:[#allocation5 + $0x100] sm:$0xff]
        %v2473 = vld [vmem:[#allocation5 + $0x108] sm:$0xff]
        %v2474 = vld [vmem:[#allocation5 + $0x110] sm:$0xff]
        %v2475 = vld [vmem:[#allocation5 + $0x118] sm:$0xff]
        %v2476 = vld [vmem:[#allocation5 + $0x120] sm:$0xff]
        %v2477 = vld [vmem:[#allocation5 + $0x128] sm:$0xff]
        %v2478 = vld [vmem:[#allocation5 + $0x130] sm:$0xff]
        %v2479 = vld [vmem:[#allocation5 + $0x138] sm:$0xff]
        %v2480 = vld [vmem:[#allocation5 + $0x140] sm:$0xff]
        %v2481 = vld [vmem:[#allocation5 + $0x148] sm:$0xff]
        %v2482 = vld [vmem:[#allocation5 + $0x150] sm:$0xff]
        %v2483 = vld [vmem:[#allocation5 + $0x158] sm:$0xff]
        %v2484 = vld [vmem:[#allocation5 + $0x160] sm:$0xff]
        %v2485 = vld [vmem:[#allocation5 + $0x168] sm:$0xff]
        %v2486 = vld [vmem:[#allocation5 + $0x170] sm:$0xff]
        %v2487 = vld [vmem:[#allocation5 + $0x178] sm:$0xff]
        %v2488 = vld [vmem:[#allocation5 + $0x180] sm:$0xff]
        %v2489 = vld [vmem:[#allocation5 + $0x188] sm:$0xff]
        %v2490 = vld [vmem:[#allocation5 + $0x190] sm:$0xff]
        %v2491 = vld [vmem:[#allocation5 + $0x198] sm:$0xff]
        %v2492 = vld [vmem:[#allocation5 + $0x1a0] sm:$0xff]
        %v2493 = vld [vmem:[#allocation5 + $0x1a8] sm:$0xff]
        %v2494 = vld [vmem:[#allocation5 + $0x1b0] sm:$0xff]
        %v2495 = vld [vmem:[#allocation5 + $0x1b8] sm:$0xff]
        %v2496 = vld [vmem:[#allocation5 + $0x1c0] sm:$0xff]
        %v2497 = vld [vmem:[#allocation5 + $0x1c8] sm:$0xff]
        %v2498 = vld [vmem:[#allocation5 + $0x1d0] sm:$0xff]
        %v2499 = vld [vmem:[#allocation5 + $0x1d8] sm:$0xff]
        %v2500 = vld [vmem:[#allocation5 + $0x1e0] sm:$0xff]
        %v2501 = vld [vmem:[#allocation5 + $0x1e8] sm:$0xff]
        %v2502 = vld [vmem:[#allocation5 + $0x1f0] sm:$0xff]
        %v2503 = vld [vmem:[#allocation5 + $0x1f8] sm:$0xff]
        %v2504 = vld [vmem:[#allocation5 + $0x200] sm:$0xff]
        %v2505 = vld [vmem:[#allocation5 + $0x208] sm:$0xff]
        %v2506 = vld [vmem:[#allocation5 + $0x210] sm:$0xff]
        %v2507 = vld [vmem:[#allocation5 + $0x218] sm:$0xff]
        %v2508 = vld [vmem:[#allocation5 + $0x220] sm:$0xff]
        %v2509 = vld [vmem:[#allocation5 + $0x228] sm:$0xff]
        %v2510 = vld [vmem:[#allocation5 + $0x230] sm:$0xff]
        %v2511 = vld [vmem:[#allocation5 + $0x238] sm:$0xff]
        %v2512 = vld [vmem:[#allocation5 + $0x240] sm:$0xff]
        %v2513 = vld [vmem:[#allocation5 + $0x248] sm:$0xff]
        %v2514 = vld [vmem:[#allocation5 + $0x250] sm:$0xff]
        %v2515 = vld [vmem:[#allocation5 + $0x258] sm:$0xff]
        %v2516 = vld [vmem:[#allocation5 + $0x260] sm:$0xff]
        %v2517 = vld [vmem:[#allocation5 + $0x268] sm:$0xff]
        %v2518 = vld [vmem:[#allocation5 + $0x270] sm:$0xff]
        %v2519 = vld [vmem:[#allocation5 + $0x278] sm:$0xff]
        %v2520 = vld [vmem:[#allocation5 + $0x280] sm:$0xff]
        %v2521 = vld [vmem:[#allocation5 + $0x288] sm:$0xff]
        %v2522 = vld [vmem:[#allocation5 + $0x290] sm:$0xff]
        %v2523 = vld [vmem:[#allocation5 + $0x298] sm:$0xff]
        %v2524 = vld [vmem:[#allocation5 + $0x2a0] sm:$0xff]
        %v2525 = vld [vmem:[#allocation5 + $0x2a8] sm:$0xff]
        %v2526 = vld [vmem:[#allocation5 + $0x2b0] sm:$0xff]
        %v2527 = vld [vmem:[#allocation5 + $0x2b8] sm:$0xff]
        %v2528 = vld [vmem:[#allocation5 + $0x2c0] sm:$0xff]
        %v2529 = vld [vmem:[#allocation5 + $0x2c8] sm:$0xff]
        %v2530 = vld [vmem:[#allocation5 + $0x2d0] sm:$0xff]
        %v2531 = vld [vmem:[#allocation5 + $0x2d8] sm:$0xff]
        %v2532 = vld [vmem:[#allocation5 + $0x2e0] sm:$0xff]
        %v2533 = vld [vmem:[#allocation5 + $0x2e8] sm:$0xff]
        %v2534 = vld [vmem:[#allocation5 + $0x2f0] sm:$0xff]
        %v2535 = vld [vmem:[#allocation5 + $0x2f8] sm:$0xff]
        %v2536 = vld [vmem:[#allocation5 + $0x300] sm:$0xff]
        %v2537 = vld [vmem:[#allocation5 + $0x308] sm:$0xff]
        %v2538 = vld [vmem:[#allocation5 + $0x310] sm:$0xff]
        %v2539 = vld [vmem:[#allocation5 + $0x318] sm:$0xff]
        %v2540 = vld [vmem:[#allocation5 + $0x320] sm:$0xff]
        %v2541 = vld [vmem:[#allocation5 + $0x328] sm:$0xff]
        %v2542 = vld [vmem:[#allocation5 + $0x330] sm:$0xff]
        %v2543 = vld [vmem:[#allocation5 + $0x338] sm:$0xff]
        %v2544 = vld [vmem:[#allocation5 + $0x340] sm:$0xff]
        %v2545 = vld [vmem:[#allocation5 + $0x348] sm:$0xff]
        %v2546 = vld [vmem:[#allocation5 + $0x350] sm:$0xff]
        %v2547 = vld [vmem:[#allocation5 + $0x358] sm:$0xff]
        %v2548 = vld [vmem:[#allocation5 + $0x360] sm:$0xff]
        %v2549 = vld [vmem:[#allocation5 + $0x368] sm:$0xff]
        %v2550 = vld [vmem:[#allocation5 + $0x370] sm:$0xff]
        %v2551 = vld [vmem:[#allocation5 + $0x378] sm:$0xff]
        %v2552 = vld [vmem:[#allocation5 + $0x380] sm:$0xff]
        %v2553 = vld [vmem:[#allocation5 + $0x388] sm:$0xff]
        %v2554 = vld [vmem:[#allocation5 + $0x390] sm:$0xff]
        %v2555 = vld [vmem:[#allocation5 + $0x398] sm:$0xff]
        %v2556 = vld [vmem:[#allocation5 + $0x3a0] sm:$0xff]
        %v2557 = vld [vmem:[#allocation5 + $0x3a8] sm:$0xff]
        %v2558 = vld [vmem:[#allocation5 + $0x3b0] sm:$0xff]
        %v2559 = vld [vmem:[#allocation5 + $0x3b8] sm:$0xff]
        %v2560 = vld [vmem:[#allocation5 + $0x3c0] sm:$0xff]
        %v2561 = vld [vmem:[#allocation5 + $0x3c8] sm:$0xff]
        %v2562 = vld [vmem:[#allocation5 + $0x3d0] sm:$0xff]
        %v2563 = vld [vmem:[#allocation5 + $0x3d8] sm:$0xff]
        %v2564 = vld [vmem:[#allocation5 + $0x3e0] sm:$0xff]
        %v2565 = vld [vmem:[#allocation5 + $0x3e8] sm:$0xff]
        %v2566 = vld [vmem:[#allocation5 + $0x3f0] sm:$0xff]
        %v2567 = vld [vmem:[#allocation5 + $0x3f8] sm:$0xff]
        %v2568 = vld [vmem:[%s8] sm:$0xf]
        %v2570 = vperm.slane %v2568, 0
        %v2571 = vperm.slane %v2568, 1
        %v2572 = vperm.slane %v2568, 2
        %v2573 = vperm.slane %v2568, 3
        %v2706 = vunpack.c.l.b16 %v2440
        %v2707 = vunpack.c.h.b16 %v2440
        %v2708 = vunpack.c.l.b16 %v2441
        %v2709 = vunpack.c.h.b16 %v2441
        %v2710 = vunpack.c.l.b16 %v2442
        %v2711 = vunpack.c.h.b16 %v2442
        %v2712 = vunpack.c.l.b16 %v2443
        %v2713 = vunpack.c.h.b16 %v2443
        %v2714 = vunpack.c.l.b16 %v2444
        %v2715 = vunpack.c.h.b16 %v2444
        %v2716 = vunpack.c.l.b16 %v2445
        %v2717 = vunpack.c.h.b16 %v2445
        %v2718 = vunpack.c.l.b16 %v2446
        %v2719 = vunpack.c.h.b16 %v2446
        %v2720 = vunpack.c.l.b16 %v2447
        %v2721 = vunpack.c.h.b16 %v2447
        %v2722 = vunpack.c.l.b16 %v2448
        %v2723 = vunpack.c.h.b16 %v2448
        %v2724 = vunpack.c.l.b16 %v2449
        %v2725 = vunpack.c.h.b16 %v2449
        %v2726 = vunpack.c.l.b16 %v2450
        %v2727 = vunpack.c.h.b16 %v2450
        %v2728 = vunpack.c.l.b16 %v2451
        %v2729 = vunpack.c.h.b16 %v2451
        %v2730 = vunpack.c.l.b16 %v2452
        %v2731 = vunpack.c.h.b16 %v2452
        %v2732 = vunpack.c.l.b16 %v2453
        %v2733 = vunpack.c.h.b16 %v2453
        %v2734 = vunpack.c.l.b16 %v2454
        %v2735 = vunpack.c.h.b16 %v2454
        %v2736 = vunpack.c.l.b16 %v2455
        %v2737 = vunpack.c.h.b16 %v2455
        %v2738 = vunpack.c.l.b16 %v2456
        %v2739 = vunpack.c.h.b16 %v2456
        %v2740 = vunpack.c.l.b16 %v2457
        %v2741 = vunpack.c.h.b16 %v2457
        %v2742 = vunpack.c.l.b16 %v2458
        %v2743 = vunpack.c.h.b16 %v2458
        %v2744 = vunpack.c.l.b16 %v2459
        %v2745 = vunpack.c.h.b16 %v2459
        %v2746 = vunpack.c.l.b16 %v2460
        %v2747 = vunpack.c.h.b16 %v2460
        %v2748 = vunpack.c.l.b16 %v2461
        %v2749 = vunpack.c.h.b16 %v2461
        %v2750 = vunpack.c.l.b16 %v2462
        %v2751 = vunpack.c.h.b16 %v2462
        %v2752 = vunpack.c.l.b16 %v2463
        %v2753 = vunpack.c.h.b16 %v2463
        %v2754 = vunpack.c.l.b16 %v2464
        %v2755 = vunpack.c.h.b16 %v2464
        %v2756 = vunpack.c.l.b16 %v2465
        %v2757 = vunpack.c.h.b16 %v2465
        %v2758 = vunpack.c.l.b16 %v2466
        %v2759 = vunpack.c.h.b16 %v2466
        %v2760 = vunpack.c.l.b16 %v2467
        %v2761 = vunpack.c.h.b16 %v2467
        %v2762 = vunpack.c.l.b16 %v2468
        %v2763 = vunpack.c.h.b16 %v2468
        %v2764 = vunpack.c.l.b16 %v2469
        %v2765 = vunpack.c.h.b16 %v2469
        %v2766 = vunpack.c.l.b16 %v2470
        %v2767 = vunpack.c.h.b16 %v2470
        %v2768 = vunpack.c.l.b16 %v2471
        %v2769 = vunpack.c.h.b16 %v2471
        %v2770 = vunpack.c.l.b16 %v2472
        %v2771 = vunpack.c.h.b16 %v2472
        %v2772 = vunpack.c.l.b16 %v2473
        %v2773 = vunpack.c.h.b16 %v2473
        %v2774 = vunpack.c.l.b16 %v2474
        %v2775 = vunpack.c.h.b16 %v2474
        %v2776 = vunpack.c.l.b16 %v2475
        %v2777 = vunpack.c.h.b16 %v2475
        %v2778 = vunpack.c.l.b16 %v2476
        %v2779 = vunpack.c.h.b16 %v2476
        %v2780 = vunpack.c.l.b16 %v2477
        %v2781 = vunpack.c.h.b16 %v2477
        %v2782 = vunpack.c.l.b16 %v2478
        %v2783 = vunpack.c.h.b16 %v2478
        %v2784 = vunpack.c.l.b16 %v2479
        %v2785 = vunpack.c.h.b16 %v2479
        %v2786 = vunpack.c.l.b16 %v2480
        %v2787 = vunpack.c.h.b16 %v2480
        %v2788 = vunpack.c.l.b16 %v2481
        %v2789 = vunpack.c.h.b16 %v2481
        %v2790 = vunpack.c.l.b16 %v2482
        %v2791 = vunpack.c.h.b16 %v2482
        %v2792 = vunpack.c.l.b16 %v2483
        %v2793 = vunpack.c.h.b16 %v2483
        %v2794 = vunpack.c.l.b16 %v2484
        %v2795 = vunpack.c.h.b16 %v2484
        %v2796 = vunpack.c.l.b16 %v2485
        %v2797 = vunpack.c.h.b16 %v2485
        %v2798 = vunpack.c.l.b16 %v2486
        %v2799 = vunpack.c.h.b16 %v2486
        %v2800 = vunpack.c.l.b16 %v2487
        %v2801 = vunpack.c.h.b16 %v2487
        %v2802 = vunpack.c.l.b16 %v2488
        %v2803 = vunpack.c.h.b16 %v2488
        %v2804 = vunpack.c.l.b16 %v2489
        %v2805 = vunpack.c.h.b16 %v2489
        %v2806 = vunpack.c.l.b16 %v2490
        %v2807 = vunpack.c.h.b16 %v2490
        %v2808 = vunpack.c.l.b16 %v2491
        %v2809 = vunpack.c.h.b16 %v2491
        %v2810 = vunpack.c.l.b16 %v2492
        %v2811 = vunpack.c.h.b16 %v2492
        %v2812 = vunpack.c.l.b16 %v2493
        %v2813 = vunpack.c.h.b16 %v2493
        %v2814 = vunpack.c.l.b16 %v2494
        %v2815 = vunpack.c.h.b16 %v2494
        %v2816 = vunpack.c.l.b16 %v2495
        %v2817 = vunpack.c.h.b16 %v2495
        %v2818 = vunpack.c.l.b16 %v2496
        %v2819 = vunpack.c.h.b16 %v2496
        %v2820 = vunpack.c.l.b16 %v2497
        %v2821 = vunpack.c.h.b16 %v2497
        %v2822 = vunpack.c.l.b16 %v2498
        %v2823 = vunpack.c.h.b16 %v2498
        %v2824 = vunpack.c.l.b16 %v2499
        %v2825 = vunpack.c.h.b16 %v2499
        %v2826 = vunpack.c.l.b16 %v2500
        %v2827 = vunpack.c.h.b16 %v2500
        %v2828 = vunpack.c.l.b16 %v2501
        %v2829 = vunpack.c.h.b16 %v2501
        %v2830 = vunpack.c.l.b16 %v2502
        %v2831 = vunpack.c.h.b16 %v2502
        %v2832 = vunpack.c.l.b16 %v2503
        %v2833 = vunpack.c.h.b16 %v2503
        %v2834 = vunpack.c.l.b16 %v2504
        %v2835 = vunpack.c.h.b16 %v2504
        %v2836 = vunpack.c.l.b16 %v2505
        %v2837 = vunpack.c.h.b16 %v2505
        %v2838 = vunpack.c.l.b16 %v2506
        %v2839 = vunpack.c.h.b16 %v2506
        %v2840 = vunpack.c.l.b16 %v2507
        %v2841 = vunpack.c.h.b16 %v2507
        %v2842 = vunpack.c.l.b16 %v2508
        %v2843 = vunpack.c.h.b16 %v2508
        %v2844 = vunpack.c.l.b16 %v2509
        %v2845 = vunpack.c.h.b16 %v2509
        %v2846 = vunpack.c.l.b16 %v2510
        %v2847 = vunpack.c.h.b16 %v2510
        %v2848 = vunpack.c.l.b16 %v2511
        %v2849 = vunpack.c.h.b16 %v2511
        %v2850 = vunpack.c.l.b16 %v2512
        %v2851 = vunpack.c.h.b16 %v2512
        %v2852 = vunpack.c.l.b16 %v2513
        %v2853 = vunpack.c.h.b16 %v2513
        %v2854 = vunpack.c.l.b16 %v2514
        %v2855 = vunpack.c.h.b16 %v2514
        %v2856 = vunpack.c.l.b16 %v2515
        %v2857 = vunpack.c.h.b16 %v2515
        %v2858 = vunpack.c.l.b16 %v2516
        %v2859 = vunpack.c.h.b16 %v2516
        %v2860 = vunpack.c.l.b16 %v2517
        %v2861 = vunpack.c.h.b16 %v2517
        %v2862 = vunpack.c.l.b16 %v2518
        %v2863 = vunpack.c.h.b16 %v2518
        %v2864 = vunpack.c.l.b16 %v2519
        %v2865 = vunpack.c.h.b16 %v2519
        %v2866 = vunpack.c.l.b16 %v2520
        %v2867 = vunpack.c.h.b16 %v2520
        %v2868 = vunpack.c.l.b16 %v2521
        %v2869 = vunpack.c.h.b16 %v2521
        %v2870 = vunpack.c.l.b16 %v2522
        %v2871 = vunpack.c.h.b16 %v2522
        %v2872 = vunpack.c.l.b16 %v2523
        %v2873 = vunpack.c.h.b16 %v2523
        %v2874 = vunpack.c.l.b16 %v2524
        %v2875 = vunpack.c.h.b16 %v2524
        %v2876 = vunpack.c.l.b16 %v2525
        %v2877 = vunpack.c.h.b16 %v2525
        %v2878 = vunpack.c.l.b16 %v2526
        %v2879 = vunpack.c.h.b16 %v2526
        %v2880 = vunpack.c.l.b16 %v2527
        %v2881 = vunpack.c.h.b16 %v2527
        %v2882 = vunpack.c.l.b16 %v2528
        %v2883 = vunpack.c.h.b16 %v2528
        %v2884 = vunpack.c.l.b16 %v2529
        %v2885 = vunpack.c.h.b16 %v2529
        %v2886 = vunpack.c.l.b16 %v2530
        %v2887 = vunpack.c.h.b16 %v2530
        %v2888 = vunpack.c.l.b16 %v2531
        %v2889 = vunpack.c.h.b16 %v2531
        %v2890 = vunpack.c.l.b16 %v2532
        %v2891 = vunpack.c.h.b16 %v2532
        %v2892 = vunpack.c.l.b16 %v2533
        %v2893 = vunpack.c.h.b16 %v2533
        %v2894 = vunpack.c.l.b16 %v2534
        %v2895 = vunpack.c.h.b16 %v2534
        %v2896 = vunpack.c.l.b16 %v2535
        %v2897 = vunpack.c.h.b16 %v2535
        %v2898 = vunpack.c.l.b16 %v2536
        %v2899 = vunpack.c.h.b16 %v2536
        %v2900 = vunpack.c.l.b16 %v2537
        %v2901 = vunpack.c.h.b16 %v2537
        %v2902 = vunpack.c.l.b16 %v2538
        %v2903 = vunpack.c.h.b16 %v2538
        %v2904 = vunpack.c.l.b16 %v2539
        %v2905 = vunpack.c.h.b16 %v2539
        %v2906 = vunpack.c.l.b16 %v2540
        %v2907 = vunpack.c.h.b16 %v2540
        %v2908 = vunpack.c.l.b16 %v2541
        %v2909 = vunpack.c.h.b16 %v2541
        %v2910 = vunpack.c.l.b16 %v2542
        %v2911 = vunpack.c.h.b16 %v2542
        %v2912 = vunpack.c.l.b16 %v2543
        %v2913 = vunpack.c.h.b16 %v2543
        %v2914 = vunpack.c.l.b16 %v2544
        %v2915 = vunpack.c.h.b16 %v2544
        %v2916 = vunpack.c.l.b16 %v2545
        %v2917 = vunpack.c.h.b16 %v2545
        %v2918 = vunpack.c.l.b16 %v2546
        %v2919 = vunpack.c.h.b16 %v2546
        %v2920 = vunpack.c.l.b16 %v2547
        %v2921 = vunpack.c.h.b16 %v2547
        %v2922 = vunpack.c.l.b16 %v2548
        %v2923 = vunpack.c.h.b16 %v2548
        %v2924 = vunpack.c.l.b16 %v2549
        %v2925 = vunpack.c.h.b16 %v2549
        %v2926 = vunpack.c.l.b16 %v2550
        %v2927 = vunpack.c.h.b16 %v2550
        %v2928 = vunpack.c.l.b16 %v2551
        %v2929 = vunpack.c.h.b16 %v2551
        %v2930 = vunpack.c.l.b16 %v2552
        %v2931 = vunpack.c.h.b16 %v2552
        %v2932 = vunpack.c.l.b16 %v2553
        %v2933 = vunpack.c.h.b16 %v2553
        %v2934 = vunpack.c.l.b16 %v2554
        %v2935 = vunpack.c.h.b16 %v2554
        %v2936 = vunpack.c.l.b16 %v2555
        %v2937 = vunpack.c.h.b16 %v2555
        %v2938 = vunpack.c.l.b16 %v2556
        %v2939 = vunpack.c.h.b16 %v2556
        %v2940 = vunpack.c.l.b16 %v2557
        %v2941 = vunpack.c.h.b16 %v2557
        %v2942 = vunpack.c.l.b16 %v2558
        %v2943 = vunpack.c.h.b16 %v2558
        %v2944 = vunpack.c.l.b16 %v2559
        %v2945 = vunpack.c.h.b16 %v2559
        %v2946 = vunpack.c.l.b16 %v2560
        %v2947 = vunpack.c.h.b16 %v2560
        %v2948 = vunpack.c.l.b16 %v2561
        %v2949 = vunpack.c.h.b16 %v2561
        %v2950 = vunpack.c.l.b16 %v2562
        %v2951 = vunpack.c.h.b16 %v2562
        %v2952 = vunpack.c.l.b16 %v2563
        %v2953 = vunpack.c.h.b16 %v2563
        %v2954 = vunpack.c.l.b16 %v2564
        %v2955 = vunpack.c.h.b16 %v2564
        %v2956 = vunpack.c.l.b16 %v2565
        %v2957 = vunpack.c.h.b16 %v2565
        %v2958 = vunpack.c.l.b16 %v2566
        %v2959 = vunpack.c.h.b16 %v2566
        %v2960 = vunpack.c.l.b16 %v2567
        %v2961 = vunpack.c.h.b16 %v2567
        %v2962 = vpack.c.b16 %v2710, %v2706
        %v2963 = vpack.c.b16 %v2711, %v2707
        %v2964 = vpack.c.b16 %v2712, %v2708
        %v2965 = vpack.c.b16 %v2713, %v2709
        %v2966 = vpack.c.b16 %v2718, %v2714
        %v2967 = vpack.c.b16 %v2719, %v2715
        %v2968 = vpack.c.b16 %v2720, %v2716
        %v2969 = vpack.c.b16 %v2721, %v2717
        %v2970 = vpack.c.b16 %v2726, %v2722
        %v2971 = vpack.c.b16 %v2727, %v2723
        %v2972 = vpack.c.b16 %v2728, %v2724
        %v2973 = vpack.c.b16 %v2729, %v2725
        %v2974 = vpack.c.b16 %v2734, %v2730
        %v2975 = vpack.c.b16 %v2735, %v2731
        %v2976 = vpack.c.b16 %v2736, %v2732
        %v2977 = vpack.c.b16 %v2737, %v2733
        %v2978 = vpack.c.b16 %v2742, %v2738
        %v2979 = vpack.c.b16 %v2743, %v2739
        %v2980 = vpack.c.b16 %v2744, %v2740
        %v2981 = vpack.c.b16 %v2745, %v2741
        %v2982 = vpack.c.b16 %v2750, %v2746
        %v2983 = vpack.c.b16 %v2751, %v2747
        %v2984 = vpack.c.b16 %v2752, %v2748
        %v2985 = vpack.c.b16 %v2753, %v2749
        %v2986 = vpack.c.b16 %v2758, %v2754
        %v2987 = vpack.c.b16 %v2759, %v2755
        %v2988 = vpack.c.b16 %v2760, %v2756
        %v2989 = vpack.c.b16 %v2761, %v2757
        %v2990 = vpack.c.b16 %v2766, %v2762
        %v2991 = vpack.c.b16 %v2767, %v2763
        %v2992 = vpack.c.b16 %v2768, %v2764
        %v2993 = vpack.c.b16 %v2769, %v2765
        %v2994 = vpack.c.b16 %v2774, %v2770
        %v2995 = vpack.c.b16 %v2775, %v2771
        %v2996 = vpack.c.b16 %v2776, %v2772
        %v2997 = vpack.c.b16 %v2777, %v2773
        %v2998 = vpack.c.b16 %v2782, %v2778
        %v2999 = vpack.c.b16 %v2783, %v2779
        %v3000 = vpack.c.b16 %v2784, %v2780
        %v3001 = vpack.c.b16 %v2785, %v2781
        %v3002 = vpack.c.b16 %v2790, %v2786
        %v3003 = vpack.c.b16 %v2791, %v2787
        %v3004 = vpack.c.b16 %v2792, %v2788
        %v3005 = vpack.c.b16 %v2793, %v2789
        %v3006 = vpack.c.b16 %v2798, %v2794
        %v3007 = vpack.c.b16 %v2799, %v2795
        %v3008 = vpack.c.b16 %v2800, %v2796
        %v3009 = vpack.c.b16 %v2801, %v2797
        %v3010 = vpack.c.b16 %v2806, %v2802
        %v3011 = vpack.c.b16 %v2807, %v2803
        %v3012 = vpack.c.b16 %v2808, %v2804
        %v3013 = vpack.c.b16 %v2809, %v2805
        %v3014 = vpack.c.b16 %v2814, %v2810
        %v3015 = vpack.c.b16 %v2815, %v2811
        %v3016 = vpack.c.b16 %v2816, %v2812
        %v3017 = vpack.c.b16 %v2817, %v2813
        %v3018 = vpack.c.b16 %v2822, %v2818
        %v3019 = vpack.c.b16 %v2823, %v2819
        %v3020 = vpack.c.b16 %v2824, %v2820
        %v3021 = vpack.c.b16 %v2825, %v2821
        %v3022 = vpack.c.b16 %v2830, %v2826
        %v3023 = vpack.c.b16 %v2831, %v2827
        %v3024 = vpack.c.b16 %v2832, %v2828
        %v3025 = vpack.c.b16 %v2833, %v2829
        %v3026 = vpack.c.b16 %v2838, %v2834
        %v3027 = vpack.c.b16 %v2839, %v2835
        %v3028 = vpack.c.b16 %v2840, %v2836
        %v3029 = vpack.c.b16 %v2841, %v2837
        %v3030 = vpack.c.b16 %v2846, %v2842
        %v3031 = vpack.c.b16 %v2847, %v2843
        %v3032 = vpack.c.b16 %v2848, %v2844
        %v3033 = vpack.c.b16 %v2849, %v2845
        %v3034 = vpack.c.b16 %v2854, %v2850
        %v3035 = vpack.c.b16 %v2855, %v2851
        %v3036 = vpack.c.b16 %v2856, %v2852
        %v3037 = vpack.c.b16 %v2857, %v2853
        %v3038 = vpack.c.b16 %v2862, %v2858
        %v3039 = vpack.c.b16 %v2863, %v2859
        %v3040 = vpack.c.b16 %v2864, %v2860
        %v3041 = vpack.c.b16 %v2865, %v2861
        %v3042 = vpack.c.b16 %v2870, %v2866
        %v3043 = vpack.c.b16 %v2871, %v2867
        %v3044 = vpack.c.b16 %v2872, %v2868
        %v3045 = vpack.c.b16 %v2873, %v2869
        %v3046 = vpack.c.b16 %v2878, %v2874
        %v3047 = vpack.c.b16 %v2879, %v2875
        %v3048 = vpack.c.b16 %v2880, %v2876
        %v3049 = vpack.c.b16 %v2881, %v2877
        %v3050 = vpack.c.b16 %v2886, %v2882
        %v3051 = vpack.c.b16 %v2887, %v2883
        %v3052 = vpack.c.b16 %v2888, %v2884
        %v3053 = vpack.c.b16 %v2889, %v2885
        %v3054 = vpack.c.b16 %v2894, %v2890
        %v3055 = vpack.c.b16 %v2895, %v2891
        %v3056 = vpack.c.b16 %v2896, %v2892
        %v3057 = vpack.c.b16 %v2897, %v2893
        %v3058 = vpack.c.b16 %v2902, %v2898
        %v3059 = vpack.c.b16 %v2903, %v2899
        %v3060 = vpack.c.b16 %v2904, %v2900
        %v3061 = vpack.c.b16 %v2905, %v2901
        %v3062 = vpack.c.b16 %v2910, %v2906
        %v3063 = vpack.c.b16 %v2911, %v2907
        %v3064 = vpack.c.b16 %v2912, %v2908
        %v3065 = vpack.c.b16 %v2913, %v2909
        %v3066 = vpack.c.b16 %v2918, %v2914
        %v3067 = vpack.c.b16 %v2919, %v2915
        %v3068 = vpack.c.b16 %v2920, %v2916
        %v3069 = vpack.c.b16 %v2921, %v2917
        %v3070 = vpack.c.b16 %v2926, %v2922
        %v3071 = vpack.c.b16 %v2927, %v2923
        %v3072 = vpack.c.b16 %v2928, %v2924
        %v3073 = vpack.c.b16 %v2929, %v2925
        %v3074 = vpack.c.b16 %v2934, %v2930
        %v3075 = vpack.c.b16 %v2935, %v2931
        %v3076 = vpack.c.b16 %v2936, %v2932
        %v3077 = vpack.c.b16 %v2937, %v2933
        %v3078 = vpack.c.b16 %v2942, %v2938
        %v3079 = vpack.c.b16 %v2943, %v2939
        %v3080 = vpack.c.b16 %v2944, %v2940
        %v3081 = vpack.c.b16 %v2945, %v2941
        %v3082 = vpack.c.b16 %v2950, %v2946
        %v3083 = vpack.c.b16 %v2951, %v2947
        %v3084 = vpack.c.b16 %v2952, %v2948
        %v3085 = vpack.c.b16 %v2953, %v2949
        %v3086 = vpack.c.b16 %v2958, %v2954
        %v3087 = vpack.c.b16 %v2959, %v2955
        %v3088 = vpack.c.b16 %v2960, %v2956
        %v3089 = vpack.c.b16 %v2961, %v2957
        %3218 = vmatpush.bf16.msra.mxu0 %v2990
        %3219 = vmatpush.bf16.msra.mxu0 %v2986
        %3220 = vmatpush.bf16.msra.mxu0 %v2982
        %3221 = vmatpush.bf16.msra.mxu0 %v2978
        %3222 = vmatpush.bf16.msra.mxu0 %v2974
        %3223 = vmatpush.bf16.msra.mxu0 %v2970
        %3224 = vmatpush.bf16.msra.mxu0 %v2966
        %3225 = vmatpush.bf16.msra.mxu0 %v2962
        %3226 = vmatmul.bf16.gmra.mxu0 %v2424
        %v3227 = vpop.f32.mrf.mxu0
        %v3228 = vadd.f32 %v2570, %v3227
        %v3229 = vpop.f32.mrf.mxu0
        %v3230 = vadd.f32 %v2570, %v3229
        %3231 = vmatmul.bf16.gmra.mxu0 %v2428
        %v3232 = vpop.f32.mrf.mxu0
        %v3233 = vadd.f32 %v2570, %v3232
        %v3234 = vpop.f32.mrf.mxu0
        %v3235 = vadd.f32 %v2570, %v3234
        %3236 = vmatmul.bf16.gmra.mxu0 %v2432
        %v3237 = vpop.f32.mrf.mxu0
        %v3238 = vadd.f32 %v2570, %v3237
        %v3239 = vpop.f32.mrf.mxu0
        %v3240 = vadd.f32 %v2570, %v3239
        %3241 = vmatmul.bf16.gmra.mxu0 %v2436
        %v3242 = vpop.f32.mrf.mxu0
        %v3243 = vadd.f32 %v2570, %v3242
        %v3244 = vpop.f32.mrf.mxu0
        %v3245 = vadd.f32 %v2570, %v3244
        %3246 = vdwg.mxu0
        %3247 = vmatpush.bf16.msra.mxu0 %v3022
        %3248 = vmatpush.bf16.msra.mxu0 %v3018
        %3249 = vmatpush.bf16.msra.mxu0 %v3014
        %3250 = vmatpush.bf16.msra.mxu0 %v3010
        %3251 = vmatpush.bf16.msra.mxu0 %v3006
        %3252 = vmatpush.bf16.msra.mxu0 %v3002
        %3253 = vmatpush.bf16.msra.mxu0 %v2998
        %3254 = vmatpush.bf16.msra.mxu0 %v2994
        %3255 = vmatmul.bf16.gmra.mxu0 %v2425
        %v3256 = vpop.f32.mrf.mxu0
        %v3257 = vadd.f32 %v3228, %v3256
        %v3258 = vpop.f32.mrf.mxu0
        %v3259 = vadd.f32 %v3230, %v3258
        %3260 = vmatmul.bf16.gmra.mxu0 %v2429
        %v3261 = vpop.f32.mrf.mxu0
        %v3262 = vadd.f32 %v3233, %v3261
        %v3263 = vpop.f32.mrf.mxu0
        %v3264 = vadd.f32 %v3235, %v3263
        %3265 = vmatmul.bf16.gmra.mxu0 %v2433
        %v3266 = vpop.f32.mrf.mxu0
        %v3267 = vadd.f32 %v3238, %v3266
        %v3268 = vpop.f32.mrf.mxu0
        %v3269 = vadd.f32 %v3240, %v3268
        %3270 = vmatmul.bf16.gmra.mxu0 %v2437
        %v3271 = vpop.f32.mrf.mxu0
        %v3272 = vadd.f32 %v3243, %v3271
        %v3273 = vpop.f32.mrf.mxu0
        %v3274 = vadd.f32 %v3245, %v3273
        %3275 = vdwg.mxu0
        %3276 = vmatpush.bf16.msra.mxu0 %v3054
        %3277 = vmatpush.bf16.msra.mxu0 %v3050
        %3278 = vmatpush.bf16.msra.mxu0 %v3046
        %3279 = vmatpush.bf16.msra.mxu0 %v3042
        %3280 = vmatpush.bf16.msra.mxu0 %v3038
        %3281 = vmatpush.bf16.msra.mxu0 %v3034
        %3282 = vmatpush.bf16.msra.mxu0 %v3030
        %3283 = vmatpush.bf16.msra.mxu0 %v3026
        %3284 = vmatmul.bf16.gmra.mxu0 %v2426
        %v3285 = vpop.f32.mrf.mxu0
        %v3286 = vadd.f32 %v3257, %v3285
        %v3287 = vpop.f32.mrf.mxu0
        %v3288 = vadd.f32 %v3259, %v3287
        %3289 = vmatmul.bf16.gmra.mxu0 %v2430
        %v3290 = vpop.f32.mrf.mxu0
        %v3291 = vadd.f32 %v3262, %v3290
        %v3292 = vpop.f32.mrf.mxu0
        %v3293 = vadd.f32 %v3264, %v3292
        %3294 = vmatmul.bf16.gmra.mxu0 %v2434
        %v3295 = vpop.f32.mrf.mxu0
        %v3296 = vadd.f32 %v3267, %v3295
        %v3297 = vpop.f32.mrf.mxu0
        %v3298 = vadd.f32 %v3269, %v3297
        %3299 = vmatmul.bf16.gmra.mxu0 %v2438
        %v3300 = vpop.f32.mrf.mxu0
        %v3301 = vadd.f32 %v3272, %v3300
        %v3302 = vpop.f32.mrf.mxu0
        %v3303 = vadd.f32 %v3274, %v3302
        %3304 = vdwg.mxu0
        %3305 = vmatpush.bf16.msra.mxu0 %v3086
        %3306 = vmatpush.bf16.msra.mxu0 %v3082
        %3307 = vmatpush.bf16.msra.mxu0 %v3078
        %3308 = vmatpush.bf16.msra.mxu0 %v3074
        %3309 = vmatpush.bf16.msra.mxu0 %v3070
        %3310 = vmatpush.bf16.msra.mxu0 %v3066
        %3311 = vmatpush.bf16.msra.mxu0 %v3062
        %3312 = vmatpush.bf16.msra.mxu0 %v3058
        %3313 = vmatmul.bf16.gmra.mxu0 %v2427
        %v3314 = vpop.f32.mrf.mxu0
        %v3315 = vadd.f32 %v3286, %v3314
        %v3316 = vpop.f32.mrf.mxu0
        %v3317 = vadd.f32 %v3288, %v3316
        %3318 = vmatmul.bf16.gmra.mxu0 %v2431
        %v3319 = vpop.f32.mrf.mxu0
        %v3320 = vadd.f32 %v3291, %v3319
        %v3321 = vpop.f32.mrf.mxu0
        %v3322 = vadd.f32 %v3293, %v3321
        %3323 = vmatmul.bf16.gmra.mxu0 %v2435
        %v3324 = vpop.f32.mrf.mxu0
        %v3325 = vadd.f32 %v3296, %v3324
        %v3326 = vpop.f32.mrf.mxu0
        %v3327 = vadd.f32 %v3298, %v3326
        %3328 = vmatmul.bf16.gmra.mxu0 %v2439
        %v3329 = vpop.f32.mrf.mxu0
        %v3330 = vadd.f32 %v3301, %v3329
        %v3331 = vpop.f32.mrf.mxu0
        %v3332 = vadd.f32 %v3303, %v3331
        %3333 = vdwg.mxu0
        %3334 = vmatpush.bf16.msra.mxu0 %v2991
        %3335 = vmatpush.bf16.msra.mxu0 %v2987
        %3336 = vmatpush.bf16.msra.mxu0 %v2983
        %3337 = vmatpush.bf16.msra.mxu0 %v2979
        %3338 = vmatpush.bf16.msra.mxu0 %v2975
        %3339 = vmatpush.bf16.msra.mxu0 %v2971
        %3340 = vmatpush.bf16.msra.mxu0 %v2967
        %3341 = vmatpush.bf16.msra.mxu0 %v2963
        %3342 = vmatmul.bf16.gmra.mxu0 %v2424
        %v3343 = vpop.f32.mrf.mxu0
        %v3344 = vadd.f32 %v2571, %v3343
        %v3345 = vpop.f32.mrf.mxu0
        %v3346 = vadd.f32 %v2571, %v3345
        %3347 = vmatmul.bf16.gmra.mxu0 %v2428
        %v3348 = vpop.f32.mrf.mxu0
        %v3349 = vadd.f32 %v2571, %v3348
        %v3350 = vpop.f32.mrf.mxu0
        %v3351 = vadd.f32 %v2571, %v3350
        %3352 = vmatmul.bf16.gmra.mxu0 %v2432
        %v3353 = vpop.f32.mrf.mxu0
        %v3354 = vadd.f32 %v2571, %v3353
        %v3355 = vpop.f32.mrf.mxu0
        %v3356 = vadd.f32 %v2571, %v3355
        %3357 = vmatmul.bf16.gmra.mxu0 %v2436
        %v3358 = vpop.f32.mrf.mxu0
        %v3359 = vadd.f32 %v2571, %v3358
        %v3360 = vpop.f32.mrf.mxu0
        %v3361 = vadd.f32 %v2571, %v3360
        %3362 = vdwg.mxu0
        %3363 = vmatpush.bf16.msra.mxu0 %v3023
        %3364 = vmatpush.bf16.msra.mxu0 %v3019
        %3365 = vmatpush.bf16.msra.mxu0 %v3015
        %3366 = vmatpush.bf16.msra.mxu0 %v3011
        %3367 = vmatpush.bf16.msra.mxu0 %v3007
        %3368 = vmatpush.bf16.msra.mxu0 %v3003
        %3369 = vmatpush.bf16.msra.mxu0 %v2999
        %3370 = vmatpush.bf16.msra.mxu0 %v2995
        %3371 = vmatmul.bf16.gmra.mxu0 %v2425
        %v3372 = vpop.f32.mrf.mxu0
        %v3373 = vadd.f32 %v3344, %v3372
        %v3374 = vpop.f32.mrf.mxu0
        %v3375 = vadd.f32 %v3346, %v3374
        %3376 = vmatmul.bf16.gmra.mxu0 %v2429
        %v3377 = vpop.f32.mrf.mxu0
        %v3378 = vadd.f32 %v3349, %v3377
        %v3379 = vpop.f32.mrf.mxu0
        %v3380 = vadd.f32 %v3351, %v3379
        %3381 = vmatmul.bf16.gmra.mxu0 %v2433
        %v3382 = vpop.f32.mrf.mxu0
        %v3383 = vadd.f32 %v3354, %v3382
        %v3384 = vpop.f32.mrf.mxu0
        %v3385 = vadd.f32 %v3356, %v3384
        %3386 = vmatmul.bf16.gmra.mxu0 %v2437
        %v3387 = vpop.f32.mrf.mxu0
        %v3388 = vadd.f32 %v3359, %v3387
        %v3389 = vpop.f32.mrf.mxu0
        %v3390 = vadd.f32 %v3361, %v3389
        %3391 = vdwg.mxu0
        %3392 = vmatpush.bf16.msra.mxu0 %v3055
        %3393 = vmatpush.bf16.msra.mxu0 %v3051
        %3394 = vmatpush.bf16.msra.mxu0 %v3047
        %3395 = vmatpush.bf16.msra.mxu0 %v3043
        %3396 = vmatpush.bf16.msra.mxu0 %v3039
        %3397 = vmatpush.bf16.msra.mxu0 %v3035
        %3398 = vmatpush.bf16.msra.mxu0 %v3031
        %3399 = vmatpush.bf16.msra.mxu0 %v3027
        %3400 = vmatmul.bf16.gmra.mxu0 %v2426
        %v3401 = vpop.f32.mrf.mxu0
        %v3402 = vadd.f32 %v3373, %v3401
        %v3403 = vpop.f32.mrf.mxu0
        %v3404 = vadd.f32 %v3375, %v3403
        %3405 = vmatmul.bf16.gmra.mxu0 %v2430
        %v3406 = vpop.f32.mrf.mxu0
        %v3407 = vadd.f32 %v3378, %v3406
        %v3408 = vpop.f32.mrf.mxu0
        %v3409 = vadd.f32 %v3380, %v3408
        %3410 = vmatmul.bf16.gmra.mxu0 %v2434
        %v3411 = vpop.f32.mrf.mxu0
        %v3412 = vadd.f32 %v3383, %v3411
        %v3413 = vpop.f32.mrf.mxu0
        %v3414 = vadd.f32 %v3385, %v3413
        %3415 = vmatmul.bf16.gmra.mxu0 %v2438
        %v3416 = vpop.f32.mrf.mxu0
        %v3417 = vadd.f32 %v3388, %v3416
        %v3418 = vpop.f32.mrf.mxu0
        %v3419 = vadd.f32 %v3390, %v3418
        %3420 = vdwg.mxu0
        %3421 = vmatpush.bf16.msra.mxu0 %v3087
        %3422 = vmatpush.bf16.msra.mxu0 %v3083
        %3423 = vmatpush.bf16.msra.mxu0 %v3079
        %3424 = vmatpush.bf16.msra.mxu0 %v3075
        %3425 = vmatpush.bf16.msra.mxu0 %v3071
        %3426 = vmatpush.bf16.msra.mxu0 %v3067
        %3427 = vmatpush.bf16.msra.mxu0 %v3063
        %3428 = vmatpush.bf16.msra.mxu0 %v3059
        %3429 = vmatmul.bf16.gmra.mxu0 %v2427
        %v3430 = vpop.f32.mrf.mxu0
        %v3431 = vadd.f32 %v3402, %v3430
        %v3432 = vpop.f32.mrf.mxu0
        %v3433 = vadd.f32 %v3404, %v3432
        %3434 = vmatmul.bf16.gmra.mxu0 %v2431
        %v3435 = vpop.f32.mrf.mxu0
        %v3436 = vadd.f32 %v3407, %v3435
        %v3437 = vpop.f32.mrf.mxu0
        %v3438 = vadd.f32 %v3409, %v3437
        %3439 = vmatmul.bf16.gmra.mxu0 %v2435
        %v3440 = vpop.f32.mrf.mxu0
        %v3441 = vadd.f32 %v3412, %v3440
        %v3442 = vpop.f32.mrf.mxu0
        %v3443 = vadd.f32 %v3414, %v3442
        %3444 = vmatmul.bf16.gmra.mxu0 %v2439
        %v3445 = vpop.f32.mrf.mxu0
        %v3446 = vadd.f32 %v3417, %v3445
        %v3447 = vpop.f32.mrf.mxu0
        %v3448 = vadd.f32 %v3419, %v3447
        %3449 = vdwg.mxu0
        %3450 = vmatpush.bf16.msra.mxu0 %v2992
        %3451 = vmatpush.bf16.msra.mxu0 %v2988
        %3452 = vmatpush.bf16.msra.mxu0 %v2984
        %3453 = vmatpush.bf16.msra.mxu0 %v2980
        %3454 = vmatpush.bf16.msra.mxu0 %v2976
        %3455 = vmatpush.bf16.msra.mxu0 %v2972
        %3456 = vmatpush.bf16.msra.mxu0 %v2968
        %3457 = vmatpush.bf16.msra.mxu0 %v2964
        %3458 = vmatmul.bf16.gmra.mxu0 %v2424
        %v3459 = vpop.f32.mrf.mxu0
        %v3460 = vadd.f32 %v2572, %v3459
        %v3461 = vpop.f32.mrf.mxu0
        %v3462 = vadd.f32 %v2572, %v3461
        %3463 = vmatmul.bf16.gmra.mxu0 %v2428
        %v3464 = vpop.f32.mrf.mxu0
        %v3465 = vadd.f32 %v2572, %v3464
        %v3466 = vpop.f32.mrf.mxu0
        %v3467 = vadd.f32 %v2572, %v3466
        %3468 = vmatmul.bf16.gmra.mxu0 %v2432
        %v3469 = vpop.f32.mrf.mxu0
        %v3470 = vadd.f32 %v2572, %v3469
        %v3471 = vpop.f32.mrf.mxu0
        %v3472 = vadd.f32 %v2572, %v3471
        %3473 = vmatmul.bf16.gmra.mxu0 %v2436
        %v3474 = vpop.f32.mrf.mxu0
        %v3475 = vadd.f32 %v2572, %v3474
        %v3476 = vpop.f32.mrf.mxu0
        %v3477 = vadd.f32 %v2572, %v3476
        %3478 = vdwg.mxu0
        %3479 = vmatpush.bf16.msra.mxu0 %v3024
        %3480 = vmatpush.bf16.msra.mxu0 %v3020
        %3481 = vmatpush.bf16.msra.mxu0 %v3016
        %3482 = vmatpush.bf16.msra.mxu0 %v3012
        %3483 = vmatpush.bf16.msra.mxu0 %v3008
        %3484 = vmatpush.bf16.msra.mxu0 %v3004
        %3485 = vmatpush.bf16.msra.mxu0 %v3000
        %3486 = vmatpush.bf16.msra.mxu0 %v2996
        %3487 = vmatmul.bf16.gmra.mxu0 %v2425
        %v3488 = vpop.f32.mrf.mxu0
        %v3489 = vadd.f32 %v3460, %v3488
        %v3490 = vpop.f32.mrf.mxu0
        %v3491 = vadd.f32 %v3462, %v3490
        %3492 = vmatmul.bf16.gmra.mxu0 %v2429
        %v3493 = vpop.f32.mrf.mxu0
        %v3494 = vadd.f32 %v3465, %v3493
        %v3495 = vpop.f32.mrf.mxu0
        %v3496 = vadd.f32 %v3467, %v3495
        %3497 = vmatmul.bf16.gmra.mxu0 %v2433
        %v3498 = vpop.f32.mrf.mxu0
        %v3499 = vadd.f32 %v3470, %v3498
        %v3500 = vpop.f32.mrf.mxu0
        %v3501 = vadd.f32 %v3472, %v3500
        %3502 = vmatmul.bf16.gmra.mxu0 %v2437
        %v3503 = vpop.f32.mrf.mxu0
        %v3504 = vadd.f32 %v3475, %v3503
        %v3505 = vpop.f32.mrf.mxu0
        %v3506 = vadd.f32 %v3477, %v3505
        %3507 = vdwg.mxu0
        %3508 = vmatpush.bf16.msra.mxu0 %v3056
        %3509 = vmatpush.bf16.msra.mxu0 %v3052
        %3510 = vmatpush.bf16.msra.mxu0 %v3048
        %3511 = vmatpush.bf16.msra.mxu0 %v3044
        %3512 = vmatpush.bf16.msra.mxu0 %v3040
        %3513 = vmatpush.bf16.msra.mxu0 %v3036
        %3514 = vmatpush.bf16.msra.mxu0 %v3032
        %3515 = vmatpush.bf16.msra.mxu0 %v3028
        %3516 = vmatmul.bf16.gmra.mxu0 %v2426
        %v3517 = vpop.f32.mrf.mxu0
        %v3518 = vadd.f32 %v3489, %v3517
        %v3519 = vpop.f32.mrf.mxu0
        %v3520 = vadd.f32 %v3491, %v3519
        %3521 = vmatmul.bf16.gmra.mxu0 %v2430
        %v3522 = vpop.f32.mrf.mxu0
        %v3523 = vadd.f32 %v3494, %v3522
        %v3524 = vpop.f32.mrf.mxu0
        %v3525 = vadd.f32 %v3496, %v3524
        %3526 = vmatmul.bf16.gmra.mxu0 %v2434
        %v3527 = vpop.f32.mrf.mxu0
        %v3528 = vadd.f32 %v3499, %v3527
        %v3529 = vpop.f32.mrf.mxu0
        %v3530 = vadd.f32 %v3501, %v3529
        %3531 = vmatmul.bf16.gmra.mxu0 %v2438
        %v3532 = vpop.f32.mrf.mxu0
        %v3533 = vadd.f32 %v3504, %v3532
        %v3534 = vpop.f32.mrf.mxu0
        %v3535 = vadd.f32 %v3506, %v3534
        %3536 = vdwg.mxu0
        %3537 = vmatpush.bf16.msra.mxu0 %v3088
        %3538 = vmatpush.bf16.msra.mxu0 %v3084
        %3539 = vmatpush.bf16.msra.mxu0 %v3080
        %3540 = vmatpush.bf16.msra.mxu0 %v3076
        %3541 = vmatpush.bf16.msra.mxu0 %v3072
        %3542 = vmatpush.bf16.msra.mxu0 %v3068
        %3543 = vmatpush.bf16.msra.mxu0 %v3064
        %3544 = vmatpush.bf16.msra.mxu0 %v3060
        %3545 = vmatmul.bf16.gmra.mxu0 %v2427
        %v3546 = vpop.f32.mrf.mxu0
        %v3547 = vadd.f32 %v3518, %v3546
        %v3548 = vpop.f32.mrf.mxu0
        %v3549 = vadd.f32 %v3520, %v3548
        %3550 = vmatmul.bf16.gmra.mxu0 %v2431
        %v3551 = vpop.f32.mrf.mxu0
        %v3552 = vadd.f32 %v3523, %v3551
        %v3553 = vpop.f32.mrf.mxu0
        %v3554 = vadd.f32 %v3525, %v3553
        %3555 = vmatmul.bf16.gmra.mxu0 %v2435
        %v3556 = vpop.f32.mrf.mxu0
        %v3557 = vadd.f32 %v3528, %v3556
        %v3558 = vpop.f32.mrf.mxu0
        %v3559 = vadd.f32 %v3530, %v3558
        %3560 = vmatmul.bf16.gmra.mxu0 %v2439
        %v3561 = vpop.f32.mrf.mxu0
        %v3562 = vadd.f32 %v3533, %v3561
        %v3563 = vpop.f32.mrf.mxu0
        %v3564 = vadd.f32 %v3535, %v3563
        %3565 = vdwg.mxu0
        %3566 = vmatpush.bf16.msra.mxu0 %v2993
        %3567 = vmatpush.bf16.msra.mxu0 %v2989
        %3568 = vmatpush.bf16.msra.mxu0 %v2985
        %3569 = vmatpush.bf16.msra.mxu0 %v2981
        %3570 = vmatpush.bf16.msra.mxu0 %v2977
        %3571 = vmatpush.bf16.msra.mxu0 %v2973
        %3572 = vmatpush.bf16.msra.mxu0 %v2969
        %3573 = vmatpush.bf16.msra.mxu0 %v2965
        %3574 = vmatmul.bf16.gmra.mxu0 %v2424
        %v3575 = vpop.f32.mrf.mxu0
        %v3576 = vadd.f32 %v2573, %v3575
        %v3577 = vpop.f32.mrf.mxu0
        %v3578 = vadd.f32 %v2573, %v3577
        %3579 = vmatmul.bf16.gmra.mxu0 %v2428
        %v3580 = vpop.f32.mrf.mxu0
        %v3581 = vadd.f32 %v2573, %v3580
        %v3582 = vpop.f32.mrf.mxu0
        %v3583 = vadd.f32 %v2573, %v3582
        %3584 = vmatmul.bf16.gmra.mxu0 %v2432
        %v3585 = vpop.f32.mrf.mxu0
        %v3586 = vadd.f32 %v2573, %v3585
        %v3587 = vpop.f32.mrf.mxu0
        %v3588 = vadd.f32 %v2573, %v3587
        %3589 = vmatmul.bf16.gmra.mxu0 %v2436
        %v3590 = vpop.f32.mrf.mxu0
        %v3591 = vadd.f32 %v2573, %v3590
        %v3592 = vpop.f32.mrf.mxu0
        %v3593 = vadd.f32 %v2573, %v3592
        %3594 = vdwg.mxu0
        %3595 = vmatpush.bf16.msra.mxu0 %v3025
        %3596 = vmatpush.bf16.msra.mxu0 %v3021
        %3597 = vmatpush.bf16.msra.mxu0 %v3017
        %3598 = vmatpush.bf16.msra.mxu0 %v3013
        %3599 = vmatpush.bf16.msra.mxu0 %v3009
        %3600 = vmatpush.bf16.msra.mxu0 %v3005
        %3601 = vmatpush.bf16.msra.mxu0 %v3001
        %3602 = vmatpush.bf16.msra.mxu0 %v2997
        %3603 = vmatmul.bf16.gmra.mxu0 %v2425
        %v3604 = vpop.f32.mrf.mxu0
        %v3605 = vadd.f32 %v3576, %v3604
        %v3606 = vpop.f32.mrf.mxu0
        %v3607 = vadd.f32 %v3578, %v3606
        %3608 = vmatmul.bf16.gmra.mxu0 %v2429
        %v3609 = vpop.f32.mrf.mxu0
        %v3610 = vadd.f32 %v3581, %v3609
        %v3611 = vpop.f32.mrf.mxu0
        %v3612 = vadd.f32 %v3583, %v3611
        %3613 = vmatmul.bf16.gmra.mxu0 %v2433
        %v3614 = vpop.f32.mrf.mxu0
        %v3615 = vadd.f32 %v3586, %v3614
        %v3616 = vpop.f32.mrf.mxu0
        %v3617 = vadd.f32 %v3588, %v3616
        %3618 = vmatmul.bf16.gmra.mxu0 %v2437
        %v3619 = vpop.f32.mrf.mxu0
        %v3620 = vadd.f32 %v3591, %v3619
        %v3621 = vpop.f32.mrf.mxu0
        %v3622 = vadd.f32 %v3593, %v3621
        %3623 = vdwg.mxu0
        %3624 = vmatpush.bf16.msra.mxu0 %v3057
        %3625 = vmatpush.bf16.msra.mxu0 %v3053
        %3626 = vmatpush.bf16.msra.mxu0 %v3049
        %3627 = vmatpush.bf16.msra.mxu0 %v3045
        %3628 = vmatpush.bf16.msra.mxu0 %v3041
        %3629 = vmatpush.bf16.msra.mxu0 %v3037
        %3630 = vmatpush.bf16.msra.mxu0 %v3033
        %3631 = vmatpush.bf16.msra.mxu0 %v3029
        %3632 = vmatmul.bf16.gmra.mxu0 %v2426
        %v3633 = vpop.f32.mrf.mxu0
        %v3634 = vadd.f32 %v3605, %v3633
        %v3635 = vpop.f32.mrf.mxu0
        %v3636 = vadd.f32 %v3607, %v3635
        %3637 = vmatmul.bf16.gmra.mxu0 %v2430
        %v3638 = vpop.f32.mrf.mxu0
        %v3639 = vadd.f32 %v3610, %v3638
        %v3640 = vpop.f32.mrf.mxu0
        %v3641 = vadd.f32 %v3612, %v3640
        %3642 = vmatmul.bf16.gmra.mxu0 %v2434
        %v3643 = vpop.f32.mrf.mxu0
        %v3644 = vadd.f32 %v3615, %v3643
        %v3645 = vpop.f32.mrf.mxu0
        %v3646 = vadd.f32 %v3617, %v3645
        %3647 = vmatmul.bf16.gmra.mxu0 %v2438
        %v3648 = vpop.f32.mrf.mxu0
        %v3649 = vadd.f32 %v3620, %v3648
        %v3650 = vpop.f32.mrf.mxu0
        %v3651 = vadd.f32 %v3622, %v3650
        %3652 = vdwg.mxu0
        %3653 = vmatpush.bf16.msra.mxu0 %v3089
        %3654 = vmatpush.bf16.msra.mxu0 %v3085
        %3655 = vmatpush.bf16.msra.mxu0 %v3081
        %3656 = vmatpush.bf16.msra.mxu0 %v3077
        %3657 = vmatpush.bf16.msra.mxu0 %v3073
        %3658 = vmatpush.bf16.msra.mxu0 %v3069
        %3659 = vmatpush.bf16.msra.mxu0 %v3065
        %3660 = vmatpush.bf16.msra.mxu0 %v3061
        %3661 = vmatmul.bf16.gmra.mxu0 %v2427
        %v3662 = vpop.f32.mrf.mxu0
        %v3663 = vadd.f32 %v3634, %v3662
        %v3664 = vpop.f32.mrf.mxu0
        %v3665 = vadd.f32 %v3636, %v3664
        %3666 = vmatmul.bf16.gmra.mxu0 %v2431
        %v3667 = vpop.f32.mrf.mxu0
        %v3668 = vadd.f32 %v3639, %v3667
        %v3669 = vpop.f32.mrf.mxu0
        %v3670 = vadd.f32 %v3641, %v3669
        %3671 = vmatmul.bf16.gmra.mxu0 %v2435
        %v3672 = vpop.f32.mrf.mxu0
        %v3673 = vadd.f32 %v3644, %v3672
        %v3674 = vpop.f32.mrf.mxu0
        %v3675 = vadd.f32 %v3646, %v3674
        %3676 = vmatmul.bf16.gmra.mxu0 %v2439
        %v3677 = vpop.f32.mrf.mxu0
        %v3678 = vadd.f32 %v3649, %v3677
        %v3679 = vpop.f32.mrf.mxu0
        %v3680 = vadd.f32 %v3651, %v3679
        %3681 = vdwg.mxu0
        %v3682 = vmax.f32 %v3315, 0.0
        %v3683 = vmax.f32 %v3431, 0.0
        %v3684 = vmax.f32 %v3547, 0.0
        %v3685 = vmax.f32 %v3663, 0.0
        %v3686 = vmax.f32 %v3317, 0.0
        %v3687 = vmax.f32 %v3433, 0.0
        %v3688 = vmax.f32 %v3549, 0.0
        %v3689 = vmax.f32 %v3665, 0.0
        %v3690 = vmax.f32 %v3320, 0.0
        %v3691 = vmax.f32 %v3436, 0.0
        %v3692 = vmax.f32 %v3552, 0.0
        %v3693 = vmax.f32 %v3668, 0.0
        %v3694 = vmax.f32 %v3322, 0.0
        %v3695 = vmax.f32 %v3438, 0.0
        %v3696 = vmax.f32 %v3554, 0.0
        %v3697 = vmax.f32 %v3670, 0.0
        %v3698 = vmax.f32 %v3325, 0.0
        %v3699 = vmax.f32 %v3441, 0.0
        %v3700 = vmax.f32 %v3557, 0.0
        %v3701 = vmax.f32 %v3673, 0.0
        %v3702 = vmax.f32 %v3327, 0.0
        %v3703 = vmax.f32 %v3443, 0.0
        %v3704 = vmax.f32 %v3559, 0.0
        %v3705 = vmax.f32 %v3675, 0.0
        %v3706 = vmax.f32 %v3330, 0.0
        %v3707 = vmax.f32 %v3446, 0.0
        %v3708 = vmax.f32 %v3562, 0.0
        %v3709 = vmax.f32 %v3678, 0.0
        %v3710 = vmax.f32 %v3332, 0.0
        %v3711 = vmax.f32 %v3448, 0.0
        %v3712 = vmax.f32 %v3564, 0.0
        %v3713 = vmax.f32 %v3680, 0.0
        %v3714 = vpack.c.bf16 %v3686, %v3682
        %v3715 = vpack.c.bf16 %v3687, %v3683
        %v3716 = vpack.c.bf16 %v3688, %v3684
        %v3717 = vpack.c.bf16 %v3689, %v3685
        %v3718 = vpack.c.bf16 %v3694, %v3690
        %v3719 = vpack.c.bf16 %v3695, %v3691
        %v3720 = vpack.c.bf16 %v3696, %v3692
        %v3721 = vpack.c.bf16 %v3697, %v3693
        %v3722 = vpack.c.bf16 %v3702, %v3698
        %v3723 = vpack.c.bf16 %v3703, %v3699
        %v3724 = vpack.c.bf16 %v3704, %v3700
        %v3725 = vpack.c.bf16 %v3705, %v3701
        %v3726 = vpack.c.bf16 %v3710, %v3706
        %v3727 = vpack.c.bf16 %v3711, %v3707
        %v3728 = vpack.c.bf16 %v3712, %v3708
        %v3729 = vpack.c.bf16 %v3713, %v3709
        %v3730 = vld [vmem:[#allocation7] sm:$0xff]
        %v3731 = vld [vmem:[#allocation7 + $0x8] sm:$0xff]
        %v3732 = vld [vmem:[#allocation7 + $0x10] sm:$0xff]
        %v3733 = vld [vmem:[#allocation7 + $0x18] sm:$0xff]
        %v3734 = vld [vmem:[#allocation7 + $0x20] sm:$0xff]
        %v3735 = vld [vmem:[#allocation7 + $0x28] sm:$0xff]
        %v3736 = vld [vmem:[#allocation7 + $0x30] sm:$0xff]
        %v3737 = vld [vmem:[#allocation7 + $0x38] sm:$0xff]
        %v3738 = vld [vmem:[#allocation7 + $0x40] sm:$0xff]
        %v3739 = vld [vmem:[#allocation7 + $0x48] sm:$0xff]
        %v3740 = vld [vmem:[#allocation7 + $0x50] sm:$0xff]
        %v3741 = vld [vmem:[#allocation7 + $0x58] sm:$0xff]
        %v3742 = vld [vmem:[#allocation7 + $0x60] sm:$0xff]
        %v3743 = vld [vmem:[#allocation7 + $0x68] sm:$0xff]
        %v3744 = vld [vmem:[#allocation7 + $0x70] sm:$0xff]
        %v3745 = vld [vmem:[#allocation7 + $0x78] sm:$0xff]
        %v3746 = vld [vmem:[#allocation7 + $0x80] sm:$0xff]
        %v3747 = vld [vmem:[#allocation7 + $0x88] sm:$0xff]
        %v3748 = vld [vmem:[#allocation7 + $0x90] sm:$0xff]
        %v3749 = vld [vmem:[#allocation7 + $0x98] sm:$0xff]
        %v3750 = vld [vmem:[#allocation7 + $0xa0] sm:$0xff]
        %v3751 = vld [vmem:[#allocation7 + $0xa8] sm:$0xff]
        %v3752 = vld [vmem:[#allocation7 + $0xb0] sm:$0xff]
        %v3753 = vld [vmem:[#allocation7 + $0xb8] sm:$0xff]
        %v3754 = vld [vmem:[#allocation7 + $0xc0] sm:$0xff]
        %v3755 = vld [vmem:[#allocation7 + $0xc8] sm:$0xff]
        %v3756 = vld [vmem:[#allocation7 + $0xd0] sm:$0xff]
        %v3757 = vld [vmem:[#allocation7 + $0xd8] sm:$0xff]
        %v3758 = vld [vmem:[#allocation7 + $0xe0] sm:$0xff]
        %v3759 = vld [vmem:[#allocation7 + $0xe8] sm:$0xff]
        %v3760 = vld [vmem:[#allocation7 + $0xf0] sm:$0xff]
        %v3761 = vld [vmem:[#allocation7 + $0xf8] sm:$0xff]
        %v3762 = vld [vmem:[#allocation7 + $0x100] sm:$0xff]
        %v3763 = vld [vmem:[#allocation7 + $0x108] sm:$0xff]
        %v3764 = vld [vmem:[#allocation7 + $0x110] sm:$0xff]
        %v3765 = vld [vmem:[#allocation7 + $0x118] sm:$0xff]
        %v3766 = vld [vmem:[#allocation7 + $0x120] sm:$0xff]
        %v3767 = vld [vmem:[#allocation7 + $0x128] sm:$0xff]
        %v3768 = vld [vmem:[#allocation7 + $0x130] sm:$0xff]
        %v3769 = vld [vmem:[#allocation7 + $0x138] sm:$0xff]
        %v3770 = vld [vmem:[#allocation7 + $0x140] sm:$0xff]
        %v3771 = vld [vmem:[#allocation7 + $0x148] sm:$0xff]
        %v3772 = vld [vmem:[#allocation7 + $0x150] sm:$0xff]
        %v3773 = vld [vmem:[#allocation7 + $0x158] sm:$0xff]
        %v3774 = vld [vmem:[#allocation7 + $0x160] sm:$0xff]
        %v3775 = vld [vmem:[#allocation7 + $0x168] sm:$0xff]
        %v3776 = vld [vmem:[#allocation7 + $0x170] sm:$0xff]
        %v3777 = vld [vmem:[#allocation7 + $0x178] sm:$0xff]
        %v3778 = vld [vmem:[#allocation7 + $0x180] sm:$0xff]
        %v3779 = vld [vmem:[#allocation7 + $0x188] sm:$0xff]
        %v3780 = vld [vmem:[#allocation7 + $0x190] sm:$0xff]
        %v3781 = vld [vmem:[#allocation7 + $0x198] sm:$0xff]
        %v3782 = vld [vmem:[#allocation7 + $0x1a0] sm:$0xff]
        %v3783 = vld [vmem:[#allocation7 + $0x1a8] sm:$0xff]
        %v3784 = vld [vmem:[#allocation7 + $0x1b0] sm:$0xff]
        %v3785 = vld [vmem:[#allocation7 + $0x1b8] sm:$0xff]
        %v3786 = vld [vmem:[#allocation7 + $0x1c0] sm:$0xff]
        %v3787 = vld [vmem:[#allocation7 + $0x1c8] sm:$0xff]
        %v3788 = vld [vmem:[#allocation7 + $0x1d0] sm:$0xff]
        %v3789 = vld [vmem:[#allocation7 + $0x1d8] sm:$0xff]
        %v3790 = vld [vmem:[#allocation7 + $0x1e0] sm:$0xff]
        %v3791 = vld [vmem:[#allocation7 + $0x1e8] sm:$0xff]
        %v3792 = vld [vmem:[#allocation7 + $0x1f0] sm:$0xff]
        %v3793 = vld [vmem:[#allocation7 + $0x1f8] sm:$0xff]
        %v3794 = vld [vmem:[#allocation7 + $0x200] sm:$0xff]
        %v3795 = vld [vmem:[#allocation7 + $0x208] sm:$0xff]
        %v3796 = vld [vmem:[#allocation7 + $0x210] sm:$0xff]
        %v3797 = vld [vmem:[#allocation7 + $0x218] sm:$0xff]
        %v3798 = vld [vmem:[#allocation7 + $0x220] sm:$0xff]
        %v3799 = vld [vmem:[#allocation7 + $0x228] sm:$0xff]
        %v3800 = vld [vmem:[#allocation7 + $0x230] sm:$0xff]
        %v3801 = vld [vmem:[#allocation7 + $0x238] sm:$0xff]
        %v3802 = vld [vmem:[#allocation7 + $0x240] sm:$0xff]
        %v3803 = vld [vmem:[#allocation7 + $0x248] sm:$0xff]
        %v3804 = vld [vmem:[#allocation7 + $0x250] sm:$0xff]
        %v3805 = vld [vmem:[#allocation7 + $0x258] sm:$0xff]
        %v3806 = vld [vmem:[#allocation7 + $0x260] sm:$0xff]
        %v3807 = vld [vmem:[#allocation7 + $0x268] sm:$0xff]
        %v3808 = vld [vmem:[#allocation7 + $0x270] sm:$0xff]
        %v3809 = vld [vmem:[#allocation7 + $0x278] sm:$0xff]
        %v3810 = vld [vmem:[#allocation7 + $0x280] sm:$0xff]
        %v3811 = vld [vmem:[#allocation7 + $0x288] sm:$0xff]
        %v3812 = vld [vmem:[#allocation7 + $0x290] sm:$0xff]
        %v3813 = vld [vmem:[#allocation7 + $0x298] sm:$0xff]
        %v3814 = vld [vmem:[#allocation7 + $0x2a0] sm:$0xff]
        %v3815 = vld [vmem:[#allocation7 + $0x2a8] sm:$0xff]
        %v3816 = vld [vmem:[#allocation7 + $0x2b0] sm:$0xff]
        %v3817 = vld [vmem:[#allocation7 + $0x2b8] sm:$0xff]
        %v3818 = vld [vmem:[#allocation7 + $0x2c0] sm:$0xff]
        %v3819 = vld [vmem:[#allocation7 + $0x2c8] sm:$0xff]
        %v3820 = vld [vmem:[#allocation7 + $0x2d0] sm:$0xff]
        %v3821 = vld [vmem:[#allocation7 + $0x2d8] sm:$0xff]
        %v3822 = vld [vmem:[#allocation7 + $0x2e0] sm:$0xff]
        %v3823 = vld [vmem:[#allocation7 + $0x2e8] sm:$0xff]
        %v3824 = vld [vmem:[#allocation7 + $0x2f0] sm:$0xff]
        %v3825 = vld [vmem:[#allocation7 + $0x2f8] sm:$0xff]
        %v3826 = vld [vmem:[#allocation7 + $0x300] sm:$0xff]
        %v3827 = vld [vmem:[#allocation7 + $0x308] sm:$0xff]
        %v3828 = vld [vmem:[#allocation7 + $0x310] sm:$0xff]
        %v3829 = vld [vmem:[#allocation7 + $0x318] sm:$0xff]
        %v3830 = vld [vmem:[#allocation7 + $0x320] sm:$0xff]
        %v3831 = vld [vmem:[#allocation7 + $0x328] sm:$0xff]
        %v3832 = vld [vmem:[#allocation7 + $0x330] sm:$0xff]
        %v3833 = vld [vmem:[#allocation7 + $0x338] sm:$0xff]
        %v3834 = vld [vmem:[#allocation7 + $0x340] sm:$0xff]
        %v3835 = vld [vmem:[#allocation7 + $0x348] sm:$0xff]
        %v3836 = vld [vmem:[#allocation7 + $0x350] sm:$0xff]
        %v3837 = vld [vmem:[#allocation7 + $0x358] sm:$0xff]
        %v3838 = vld [vmem:[#allocation7 + $0x360] sm:$0xff]
        %v3839 = vld [vmem:[#allocation7 + $0x368] sm:$0xff]
        %v3840 = vld [vmem:[#allocation7 + $0x370] sm:$0xff]
        %v3841 = vld [vmem:[#allocation7 + $0x378] sm:$0xff]
        %v3842 = vld [vmem:[#allocation7 + $0x380] sm:$0xff]
        %v3843 = vld [vmem:[#allocation7 + $0x388] sm:$0xff]
        %v3844 = vld [vmem:[#allocation7 + $0x390] sm:$0xff]
        %v3845 = vld [vmem:[#allocation7 + $0x398] sm:$0xff]
        %v3846 = vld [vmem:[#allocation7 + $0x3a0] sm:$0xff]
        %v3847 = vld [vmem:[#allocation7 + $0x3a8] sm:$0xff]
        %v3848 = vld [vmem:[#allocation7 + $0x3b0] sm:$0xff]
        %v3849 = vld [vmem:[#allocation7 + $0x3b8] sm:$0xff]
        %v3850 = vld [vmem:[#allocation7 + $0x3c0] sm:$0xff]
        %v3851 = vld [vmem:[#allocation7 + $0x3c8] sm:$0xff]
        %v3852 = vld [vmem:[#allocation7 + $0x3d0] sm:$0xff]
        %v3853 = vld [vmem:[#allocation7 + $0x3d8] sm:$0xff]
        %v3854 = vld [vmem:[#allocation7 + $0x3e0] sm:$0xff]
        %v3855 = vld [vmem:[#allocation7 + $0x3e8] sm:$0xff]
        %v3856 = vld [vmem:[#allocation7 + $0x3f0] sm:$0xff]
        %v3857 = vld [vmem:[#allocation7 + $0x3f8] sm:$0xff]
        %v3858 = vld [vmem:[%s10] sm:$0xf]
        %v3860 = vperm.slane %v3858, 0
        %v3861 = vperm.slane %v3858, 1
        %v3862 = vperm.slane %v3858, 2
        %v3863 = vperm.slane %v3858, 3
        %v3996 = vunpack.c.l.b16 %v3730
        %v3997 = vunpack.c.h.b16 %v3730
        %v3998 = vunpack.c.l.b16 %v3731
        %v3999 = vunpack.c.h.b16 %v3731
        %v4000 = vunpack.c.l.b16 %v3732
        %v4001 = vunpack.c.h.b16 %v3732
        %v4002 = vunpack.c.l.b16 %v3733
        %v4003 = vunpack.c.h.b16 %v3733
        %v4004 = vunpack.c.l.b16 %v3734
        %v4005 = vunpack.c.h.b16 %v3734
        %v4006 = vunpack.c.l.b16 %v3735
        %v4007 = vunpack.c.h.b16 %v3735
        %v4008 = vunpack.c.l.b16 %v3736
        %v4009 = vunpack.c.h.b16 %v3736
        %v4010 = vunpack.c.l.b16 %v3737
        %v4011 = vunpack.c.h.b16 %v3737
        %v4012 = vunpack.c.l.b16 %v3738
        %v4013 = vunpack.c.h.b16 %v3738
        %v4014 = vunpack.c.l.b16 %v3739
        %v4015 = vunpack.c.h.b16 %v3739
        %v4016 = vunpack.c.l.b16 %v3740
        %v4017 = vunpack.c.h.b16 %v3740
        %v4018 = vunpack.c.l.b16 %v3741
        %v4019 = vunpack.c.h.b16 %v3741
        %v4020 = vunpack.c.l.b16 %v3742
        %v4021 = vunpack.c.h.b16 %v3742
        %v4022 = vunpack.c.l.b16 %v3743
        %v4023 = vunpack.c.h.b16 %v3743
        %v4024 = vunpack.c.l.b16 %v3744
        %v4025 = vunpack.c.h.b16 %v3744
        %v4026 = vunpack.c.l.b16 %v3745
        %v4027 = vunpack.c.h.b16 %v3745
        %v4028 = vunpack.c.l.b16 %v3746
        %v4029 = vunpack.c.h.b16 %v3746
        %v4030 = vunpack.c.l.b16 %v3747
        %v4031 = vunpack.c.h.b16 %v3747
        %v4032 = vunpack.c.l.b16 %v3748
        %v4033 = vunpack.c.h.b16 %v3748
        %v4034 = vunpack.c.l.b16 %v3749
        %v4035 = vunpack.c.h.b16 %v3749
        %v4036 = vunpack.c.l.b16 %v3750
        %v4037 = vunpack.c.h.b16 %v3750
        %v4038 = vunpack.c.l.b16 %v3751
        %v4039 = vunpack.c.h.b16 %v3751
        %v4040 = vunpack.c.l.b16 %v3752
        %v4041 = vunpack.c.h.b16 %v3752
        %v4042 = vunpack.c.l.b16 %v3753
        %v4043 = vunpack.c.h.b16 %v3753
        %v4044 = vunpack.c.l.b16 %v3754
        %v4045 = vunpack.c.h.b16 %v3754
        %v4046 = vunpack.c.l.b16 %v3755
        %v4047 = vunpack.c.h.b16 %v3755
        %v4048 = vunpack.c.l.b16 %v3756
        %v4049 = vunpack.c.h.b16 %v3756
        %v4050 = vunpack.c.l.b16 %v3757
        %v4051 = vunpack.c.h.b16 %v3757
        %v4052 = vunpack.c.l.b16 %v3758
        %v4053 = vunpack.c.h.b16 %v3758
        %v4054 = vunpack.c.l.b16 %v3759
        %v4055 = vunpack.c.h.b16 %v3759
        %v4056 = vunpack.c.l.b16 %v3760
        %v4057 = vunpack.c.h.b16 %v3760
        %v4058 = vunpack.c.l.b16 %v3761
        %v4059 = vunpack.c.h.b16 %v3761
        %v4060 = vunpack.c.l.b16 %v3762
        %v4061 = vunpack.c.h.b16 %v3762
        %v4062 = vunpack.c.l.b16 %v3763
        %v4063 = vunpack.c.h.b16 %v3763
        %v4064 = vunpack.c.l.b16 %v3764
        %v4065 = vunpack.c.h.b16 %v3764
        %v4066 = vunpack.c.l.b16 %v3765
        %v4067 = vunpack.c.h.b16 %v3765
        %v4068 = vunpack.c.l.b16 %v3766
        %v4069 = vunpack.c.h.b16 %v3766
        %v4070 = vunpack.c.l.b16 %v3767
        %v4071 = vunpack.c.h.b16 %v3767
        %v4072 = vunpack.c.l.b16 %v3768
        %v4073 = vunpack.c.h.b16 %v3768
        %v4074 = vunpack.c.l.b16 %v3769
        %v4075 = vunpack.c.h.b16 %v3769
        %v4076 = vunpack.c.l.b16 %v3770
        %v4077 = vunpack.c.h.b16 %v3770
        %v4078 = vunpack.c.l.b16 %v3771
        %v4079 = vunpack.c.h.b16 %v3771
        %v4080 = vunpack.c.l.b16 %v3772
        %v4081 = vunpack.c.h.b16 %v3772
        %v4082 = vunpack.c.l.b16 %v3773
        %v4083 = vunpack.c.h.b16 %v3773
        %v4084 = vunpack.c.l.b16 %v3774
        %v4085 = vunpack.c.h.b16 %v3774
        %v4086 = vunpack.c.l.b16 %v3775
        %v4087 = vunpack.c.h.b16 %v3775
        %v4088 = vunpack.c.l.b16 %v3776
        %v4089 = vunpack.c.h.b16 %v3776
        %v4090 = vunpack.c.l.b16 %v3777
        %v4091 = vunpack.c.h.b16 %v3777
        %v4092 = vunpack.c.l.b16 %v3778
        %v4093 = vunpack.c.h.b16 %v3778
        %v4094 = vunpack.c.l.b16 %v3779
        %v4095 = vunpack.c.h.b16 %v3779
        %v4096 = vunpack.c.l.b16 %v3780
        %v4097 = vunpack.c.h.b16 %v3780
        %v4098 = vunpack.c.l.b16 %v3781
        %v4099 = vunpack.c.h.b16 %v3781
        %v4100 = vunpack.c.l.b16 %v3782
        %v4101 = vunpack.c.h.b16 %v3782
        %v4102 = vunpack.c.l.b16 %v3783
        %v4103 = vunpack.c.h.b16 %v3783
        %v4104 = vunpack.c.l.b16 %v3784
        %v4105 = vunpack.c.h.b16 %v3784
        %v4106 = vunpack.c.l.b16 %v3785
        %v4107 = vunpack.c.h.b16 %v3785
        %v4108 = vunpack.c.l.b16 %v3786
        %v4109 = vunpack.c.h.b16 %v3786
        %v4110 = vunpack.c.l.b16 %v3787
        %v4111 = vunpack.c.h.b16 %v3787
        %v4112 = vunpack.c.l.b16 %v3788
        %v4113 = vunpack.c.h.b16 %v3788
        %v4114 = vunpack.c.l.b16 %v3789
        %v4115 = vunpack.c.h.b16 %v3789
        %v4116 = vunpack.c.l.b16 %v3790
        %v4117 = vunpack.c.h.b16 %v3790
        %v4118 = vunpack.c.l.b16 %v3791
        %v4119 = vunpack.c.h.b16 %v3791
        %v4120 = vunpack.c.l.b16 %v3792
        %v4121 = vunpack.c.h.b16 %v3792
        %v4122 = vunpack.c.l.b16 %v3793
        %v4123 = vunpack.c.h.b16 %v3793
        %v4124 = vunpack.c.l.b16 %v3794
        %v4125 = vunpack.c.h.b16 %v3794
        %v4126 = vunpack.c.l.b16 %v3795
        %v4127 = vunpack.c.h.b16 %v3795
        %v4128 = vunpack.c.l.b16 %v3796
        %v4129 = vunpack.c.h.b16 %v3796
        %v4130 = vunpack.c.l.b16 %v3797
        %v4131 = vunpack.c.h.b16 %v3797
        %v4132 = vunpack.c.l.b16 %v3798
        %v4133 = vunpack.c.h.b16 %v3798
        %v4134 = vunpack.c.l.b16 %v3799
        %v4135 = vunpack.c.h.b16 %v3799
        %v4136 = vunpack.c.l.b16 %v3800
        %v4137 = vunpack.c.h.b16 %v3800
        %v4138 = vunpack.c.l.b16 %v3801
        %v4139 = vunpack.c.h.b16 %v3801
        %v4140 = vunpack.c.l.b16 %v3802
        %v4141 = vunpack.c.h.b16 %v3802
        %v4142 = vunpack.c.l.b16 %v3803
        %v4143 = vunpack.c.h.b16 %v3803
        %v4144 = vunpack.c.l.b16 %v3804
        %v4145 = vunpack.c.h.b16 %v3804
        %v4146 = vunpack.c.l.b16 %v3805
        %v4147 = vunpack.c.h.b16 %v3805
        %v4148 = vunpack.c.l.b16 %v3806
        %v4149 = vunpack.c.h.b16 %v3806
        %v4150 = vunpack.c.l.b16 %v3807
        %v4151 = vunpack.c.h.b16 %v3807
        %v4152 = vunpack.c.l.b16 %v3808
        %v4153 = vunpack.c.h.b16 %v3808
        %v4154 = vunpack.c.l.b16 %v3809
        %v4155 = vunpack.c.h.b16 %v3809
        %v4156 = vunpack.c.l.b16 %v3810
        %v4157 = vunpack.c.h.b16 %v3810
        %v4158 = vunpack.c.l.b16 %v3811
        %v4159 = vunpack.c.h.b16 %v3811
        %v4160 = vunpack.c.l.b16 %v3812
        %v4161 = vunpack.c.h.b16 %v3812
        %v4162 = vunpack.c.l.b16 %v3813
        %v4163 = vunpack.c.h.b16 %v3813
        %v4164 = vunpack.c.l.b16 %v3814
        %v4165 = vunpack.c.h.b16 %v3814
        %v4166 = vunpack.c.l.b16 %v3815
        %v4167 = vunpack.c.h.b16 %v3815
        %v4168 = vunpack.c.l.b16 %v3816
        %v4169 = vunpack.c.h.b16 %v3816
        %v4170 = vunpack.c.l.b16 %v3817
        %v4171 = vunpack.c.h.b16 %v3817
        %v4172 = vunpack.c.l.b16 %v3818
        %v4173 = vunpack.c.h.b16 %v3818
        %v4174 = vunpack.c.l.b16 %v3819
        %v4175 = vunpack.c.h.b16 %v3819
        %v4176 = vunpack.c.l.b16 %v3820
        %v4177 = vunpack.c.h.b16 %v3820
        %v4178 = vunpack.c.l.b16 %v3821
        %v4179 = vunpack.c.h.b16 %v3821
        %v4180 = vunpack.c.l.b16 %v3822
        %v4181 = vunpack.c.h.b16 %v3822
        %v4182 = vunpack.c.l.b16 %v3823
        %v4183 = vunpack.c.h.b16 %v3823
        %v4184 = vunpack.c.l.b16 %v3824
        %v4185 = vunpack.c.h.b16 %v3824
        %v4186 = vunpack.c.l.b16 %v3825
        %v4187 = vunpack.c.h.b16 %v3825
        %v4188 = vunpack.c.l.b16 %v3826
        %v4189 = vunpack.c.h.b16 %v3826
        %v4190 = vunpack.c.l.b16 %v3827
        %v4191 = vunpack.c.h.b16 %v3827
        %v4192 = vunpack.c.l.b16 %v3828
        %v4193 = vunpack.c.h.b16 %v3828
        %v4194 = vunpack.c.l.b16 %v3829
        %v4195 = vunpack.c.h.b16 %v3829
        %v4196 = vunpack.c.l.b16 %v3830
        %v4197 = vunpack.c.h.b16 %v3830
        %v4198 = vunpack.c.l.b16 %v3831
        %v4199 = vunpack.c.h.b16 %v3831
        %v4200 = vunpack.c.l.b16 %v3832
        %v4201 = vunpack.c.h.b16 %v3832
        %v4202 = vunpack.c.l.b16 %v3833
        %v4203 = vunpack.c.h.b16 %v3833
        %v4204 = vunpack.c.l.b16 %v3834
        %v4205 = vunpack.c.h.b16 %v3834
        %v4206 = vunpack.c.l.b16 %v3835
        %v4207 = vunpack.c.h.b16 %v3835
        %v4208 = vunpack.c.l.b16 %v3836
        %v4209 = vunpack.c.h.b16 %v3836
        %v4210 = vunpack.c.l.b16 %v3837
        %v4211 = vunpack.c.h.b16 %v3837
        %v4212 = vunpack.c.l.b16 %v3838
        %v4213 = vunpack.c.h.b16 %v3838
        %v4214 = vunpack.c.l.b16 %v3839
        %v4215 = vunpack.c.h.b16 %v3839
        %v4216 = vunpack.c.l.b16 %v3840
        %v4217 = vunpack.c.h.b16 %v3840
        %v4218 = vunpack.c.l.b16 %v3841
        %v4219 = vunpack.c.h.b16 %v3841
        %v4220 = vunpack.c.l.b16 %v3842
        %v4221 = vunpack.c.h.b16 %v3842
        %v4222 = vunpack.c.l.b16 %v3843
        %v4223 = vunpack.c.h.b16 %v3843
        %v4224 = vunpack.c.l.b16 %v3844
        %v4225 = vunpack.c.h.b16 %v3844
        %v4226 = vunpack.c.l.b16 %v3845
        %v4227 = vunpack.c.h.b16 %v3845
        %v4228 = vunpack.c.l.b16 %v3846
        %v4229 = vunpack.c.h.b16 %v3846
        %v4230 = vunpack.c.l.b16 %v3847
        %v4231 = vunpack.c.h.b16 %v3847
        %v4232 = vunpack.c.l.b16 %v3848
        %v4233 = vunpack.c.h.b16 %v3848
        %v4234 = vunpack.c.l.b16 %v3849
        %v4235 = vunpack.c.h.b16 %v3849
        %v4236 = vunpack.c.l.b16 %v3850
        %v4237 = vunpack.c.h.b16 %v3850
        %v4238 = vunpack.c.l.b16 %v3851
        %v4239 = vunpack.c.h.b16 %v3851
        %v4240 = vunpack.c.l.b16 %v3852
        %v4241 = vunpack.c.h.b16 %v3852
        %v4242 = vunpack.c.l.b16 %v3853
        %v4243 = vunpack.c.h.b16 %v3853
        %v4244 = vunpack.c.l.b16 %v3854
        %v4245 = vunpack.c.h.b16 %v3854
        %v4246 = vunpack.c.l.b16 %v3855
        %v4247 = vunpack.c.h.b16 %v3855
        %v4248 = vunpack.c.l.b16 %v3856
        %v4249 = vunpack.c.h.b16 %v3856
        %v4250 = vunpack.c.l.b16 %v3857
        %v4251 = vunpack.c.h.b16 %v3857
        %v4252 = vpack.c.b16 %v4000, %v3996
        %v4253 = vpack.c.b16 %v4001, %v3997
        %v4254 = vpack.c.b16 %v4002, %v3998
        %v4255 = vpack.c.b16 %v4003, %v3999
        %v4256 = vpack.c.b16 %v4008, %v4004
        %v4257 = vpack.c.b16 %v4009, %v4005
        %v4258 = vpack.c.b16 %v4010, %v4006
        %v4259 = vpack.c.b16 %v4011, %v4007
        %v4260 = vpack.c.b16 %v4016, %v4012
        %v4261 = vpack.c.b16 %v4017, %v4013
        %v4262 = vpack.c.b16 %v4018, %v4014
        %v4263 = vpack.c.b16 %v4019, %v4015
        %v4264 = vpack.c.b16 %v4024, %v4020
        %v4265 = vpack.c.b16 %v4025, %v4021
        %v4266 = vpack.c.b16 %v4026, %v4022
        %v4267 = vpack.c.b16 %v4027, %v4023
        %v4268 = vpack.c.b16 %v4032, %v4028
        %v4269 = vpack.c.b16 %v4033, %v4029
        %v4270 = vpack.c.b16 %v4034, %v4030
        %v4271 = vpack.c.b16 %v4035, %v4031
        %v4272 = vpack.c.b16 %v4040, %v4036
        %v4273 = vpack.c.b16 %v4041, %v4037
        %v4274 = vpack.c.b16 %v4042, %v4038
        %v4275 = vpack.c.b16 %v4043, %v4039
        %v4276 = vpack.c.b16 %v4048, %v4044
        %v4277 = vpack.c.b16 %v4049, %v4045
        %v4278 = vpack.c.b16 %v4050, %v4046
        %v4279 = vpack.c.b16 %v4051, %v4047
        %v4280 = vpack.c.b16 %v4056, %v4052
        %v4281 = vpack.c.b16 %v4057, %v4053
        %v4282 = vpack.c.b16 %v4058, %v4054
        %v4283 = vpack.c.b16 %v4059, %v4055
        %v4284 = vpack.c.b16 %v4064, %v4060
        %v4285 = vpack.c.b16 %v4065, %v4061
        %v4286 = vpack.c.b16 %v4066, %v4062
        %v4287 = vpack.c.b16 %v4067, %v4063
        %v4288 = vpack.c.b16 %v4072, %v4068
        %v4289 = vpack.c.b16 %v4073, %v4069
        %v4290 = vpack.c.b16 %v4074, %v4070
        %v4291 = vpack.c.b16 %v4075, %v4071
        %v4292 = vpack.c.b16 %v4080, %v4076
        %v4293 = vpack.c.b16 %v4081, %v4077
        %v4294 = vpack.c.b16 %v4082, %v4078
        %v4295 = vpack.c.b16 %v4083, %v4079
        %v4296 = vpack.c.b16 %v4088, %v4084
        %v4297 = vpack.c.b16 %v4089, %v4085
        %v4298 = vpack.c.b16 %v4090, %v4086
        %v4299 = vpack.c.b16 %v4091, %v4087
        %v4300 = vpack.c.b16 %v4096, %v4092
        %v4301 = vpack.c.b16 %v4097, %v4093
        %v4302 = vpack.c.b16 %v4098, %v4094
        %v4303 = vpack.c.b16 %v4099, %v4095
        %v4304 = vpack.c.b16 %v4104, %v4100
        %v4305 = vpack.c.b16 %v4105, %v4101
        %v4306 = vpack.c.b16 %v4106, %v4102
        %v4307 = vpack.c.b16 %v4107, %v4103
        %v4308 = vpack.c.b16 %v4112, %v4108
        %v4309 = vpack.c.b16 %v4113, %v4109
        %v4310 = vpack.c.b16 %v4114, %v4110
        %v4311 = vpack.c.b16 %v4115, %v4111
        %v4312 = vpack.c.b16 %v4120, %v4116
        %v4313 = vpack.c.b16 %v4121, %v4117
        %v4314 = vpack.c.b16 %v4122, %v4118
        %v4315 = vpack.c.b16 %v4123, %v4119
        %v4316 = vpack.c.b16 %v4128, %v4124
        %v4317 = vpack.c.b16 %v4129, %v4125
        %v4318 = vpack.c.b16 %v4130, %v4126
        %v4319 = vpack.c.b16 %v4131, %v4127
        %v4320 = vpack.c.b16 %v4136, %v4132
        %v4321 = vpack.c.b16 %v4137, %v4133
        %v4322 = vpack.c.b16 %v4138, %v4134
        %v4323 = vpack.c.b16 %v4139, %v4135
        %v4324 = vpack.c.b16 %v4144, %v4140
        %v4325 = vpack.c.b16 %v4145, %v4141
        %v4326 = vpack.c.b16 %v4146, %v4142
        %v4327 = vpack.c.b16 %v4147, %v4143
        %v4328 = vpack.c.b16 %v4152, %v4148
        %v4329 = vpack.c.b16 %v4153, %v4149
        %v4330 = vpack.c.b16 %v4154, %v4150
        %v4331 = vpack.c.b16 %v4155, %v4151
        %v4332 = vpack.c.b16 %v4160, %v4156
        %v4333 = vpack.c.b16 %v4161, %v4157
        %v4334 = vpack.c.b16 %v4162, %v4158
        %v4335 = vpack.c.b16 %v4163, %v4159
        %v4336 = vpack.c.b16 %v4168, %v4164
        %v4337 = vpack.c.b16 %v4169, %v4165
        %v4338 = vpack.c.b16 %v4170, %v4166
        %v4339 = vpack.c.b16 %v4171, %v4167
        %v4340 = vpack.c.b16 %v4176, %v4172
        %v4341 = vpack.c.b16 %v4177, %v4173
        %v4342 = vpack.c.b16 %v4178, %v4174
        %v4343 = vpack.c.b16 %v4179, %v4175
        %v4344 = vpack.c.b16 %v4184, %v4180
        %v4345 = vpack.c.b16 %v4185, %v4181
        %v4346 = vpack.c.b16 %v4186, %v4182
        %v4347 = vpack.c.b16 %v4187, %v4183
        %v4348 = vpack.c.b16 %v4192, %v4188
        %v4349 = vpack.c.b16 %v4193, %v4189
        %v4350 = vpack.c.b16 %v4194, %v4190
        %v4351 = vpack.c.b16 %v4195, %v4191
        %v4352 = vpack.c.b16 %v4200, %v4196
        %v4353 = vpack.c.b16 %v4201, %v4197
        %v4354 = vpack.c.b16 %v4202, %v4198
        %v4355 = vpack.c.b16 %v4203, %v4199
        %v4356 = vpack.c.b16 %v4208, %v4204
        %v4357 = vpack.c.b16 %v4209, %v4205
        %v4358 = vpack.c.b16 %v4210, %v4206
        %v4359 = vpack.c.b16 %v4211, %v4207
        %v4360 = vpack.c.b16 %v4216, %v4212
        %v4361 = vpack.c.b16 %v4217, %v4213
        %v4362 = vpack.c.b16 %v4218, %v4214
        %v4363 = vpack.c.b16 %v4219, %v4215
        %v4364 = vpack.c.b16 %v4224, %v4220
        %v4365 = vpack.c.b16 %v4225, %v4221
        %v4366 = vpack.c.b16 %v4226, %v4222
        %v4367 = vpack.c.b16 %v4227, %v4223
        %v4368 = vpack.c.b16 %v4232, %v4228
        %v4369 = vpack.c.b16 %v4233, %v4229
        %v4370 = vpack.c.b16 %v4234, %v4230
        %v4371 = vpack.c.b16 %v4235, %v4231
        %v4372 = vpack.c.b16 %v4240, %v4236
        %v4373 = vpack.c.b16 %v4241, %v4237
        %v4374 = vpack.c.b16 %v4242, %v4238
        %v4375 = vpack.c.b16 %v4243, %v4239
        %v4376 = vpack.c.b16 %v4248, %v4244
        %v4377 = vpack.c.b16 %v4249, %v4245
        %v4378 = vpack.c.b16 %v4250, %v4246
        %v4379 = vpack.c.b16 %v4251, %v4247
        %4508 = vmatpush.bf16.msra.mxu0 %v4280
        %4509 = vmatpush.bf16.msra.mxu0 %v4276
        %4510 = vmatpush.bf16.msra.mxu0 %v4272
        %4511 = vmatpush.bf16.msra.mxu0 %v4268
        %4512 = vmatpush.bf16.msra.mxu0 %v4264
        %4513 = vmatpush.bf16.msra.mxu0 %v4260
        %4514 = vmatpush.bf16.msra.mxu0 %v4256
        %4515 = vmatpush.bf16.msra.mxu0 %v4252
        %4516 = vmatmul.bf16.gmra.mxu0 %v3714
        %v4517 = vpop.f32.mrf.mxu0
        %v4518 = vadd.f32 %v3860, %v4517
        %v4519 = vpop.f32.mrf.mxu0
        %v4520 = vadd.f32 %v3860, %v4519
        %4521 = vmatmul.bf16.gmra.mxu0 %v3718
        %v4522 = vpop.f32.mrf.mxu0
        %v4523 = vadd.f32 %v3860, %v4522
        %v4524 = vpop.f32.mrf.mxu0
        %v4525 = vadd.f32 %v3860, %v4524
        %4526 = vmatmul.bf16.gmra.mxu0 %v3722
        %v4527 = vpop.f32.mrf.mxu0
        %v4528 = vadd.f32 %v3860, %v4527
        %v4529 = vpop.f32.mrf.mxu0
        %v4530 = vadd.f32 %v3860, %v4529
        %4531 = vmatmul.bf16.gmra.mxu0 %v3726
        %v4532 = vpop.f32.mrf.mxu0
        %v4533 = vadd.f32 %v3860, %v4532
        %v4534 = vpop.f32.mrf.mxu0
        %v4535 = vadd.f32 %v3860, %v4534
        %4536 = vdwg.mxu0
        %4537 = vmatpush.bf16.msra.mxu0 %v4312
        %4538 = vmatpush.bf16.msra.mxu0 %v4308
        %4539 = vmatpush.bf16.msra.mxu0 %v4304
        %4540 = vmatpush.bf16.msra.mxu0 %v4300
        %4541 = vmatpush.bf16.msra.mxu0 %v4296
        %4542 = vmatpush.bf16.msra.mxu0 %v4292
        %4543 = vmatpush.bf16.msra.mxu0 %v4288
        %4544 = vmatpush.bf16.msra.mxu0 %v4284
        %4545 = vmatmul.bf16.gmra.mxu0 %v3715
        %v4546 = vpop.f32.mrf.mxu0
        %v4547 = vadd.f32 %v4518, %v4546
        %v4548 = vpop.f32.mrf.mxu0
        %v4549 = vadd.f32 %v4520, %v4548
        %4550 = vmatmul.bf16.gmra.mxu0 %v3719
        %v4551 = vpop.f32.mrf.mxu0
        %v4552 = vadd.f32 %v4523, %v4551
        %v4553 = vpop.f32.mrf.mxu0
        %v4554 = vadd.f32 %v4525, %v4553
        %4555 = vmatmul.bf16.gmra.mxu0 %v3723
        %v4556 = vpop.f32.mrf.mxu0
        %v4557 = vadd.f32 %v4528, %v4556
        %v4558 = vpop.f32.mrf.mxu0
        %v4559 = vadd.f32 %v4530, %v4558
        %4560 = vmatmul.bf16.gmra.mxu0 %v3727
        %v4561 = vpop.f32.mrf.mxu0
        %v4562 = vadd.f32 %v4533, %v4561
        %v4563 = vpop.f32.mrf.mxu0
        %v4564 = vadd.f32 %v4535, %v4563
        %4565 = vdwg.mxu0
        %4566 = vmatpush.bf16.msra.mxu0 %v4344
        %4567 = vmatpush.bf16.msra.mxu0 %v4340
        %4568 = vmatpush.bf16.msra.mxu0 %v4336
        %4569 = vmatpush.bf16.msra.mxu0 %v4332
        %4570 = vmatpush.bf16.msra.mxu0 %v4328
        %4571 = vmatpush.bf16.msra.mxu0 %v4324
        %4572 = vmatpush.bf16.msra.mxu0 %v4320
        %4573 = vmatpush.bf16.msra.mxu0 %v4316
        %4574 = vmatmul.bf16.gmra.mxu0 %v3716
        %v4575 = vpop.f32.mrf.mxu0
        %v4576 = vadd.f32 %v4547, %v4575
        %v4577 = vpop.f32.mrf.mxu0
        %v4578 = vadd.f32 %v4549, %v4577
        %4579 = vmatmul.bf16.gmra.mxu0 %v3720
        %v4580 = vpop.f32.mrf.mxu0
        %v4581 = vadd.f32 %v4552, %v4580
        %v4582 = vpop.f32.mrf.mxu0
        %v4583 = vadd.f32 %v4554, %v4582
        %4584 = vmatmul.bf16.gmra.mxu0 %v3724
        %v4585 = vpop.f32.mrf.mxu0
        %v4586 = vadd.f32 %v4557, %v4585
        %v4587 = vpop.f32.mrf.mxu0
        %v4588 = vadd.f32 %v4559, %v4587
        %4589 = vmatmul.bf16.gmra.mxu0 %v3728
        %v4590 = vpop.f32.mrf.mxu0
        %v4591 = vadd.f32 %v4562, %v4590
        %v4592 = vpop.f32.mrf.mxu0
        %v4593 = vadd.f32 %v4564, %v4592
        %4594 = vdwg.mxu0
        %4595 = vmatpush.bf16.msra.mxu0 %v4376
        %4596 = vmatpush.bf16.msra.mxu0 %v4372
        %4597 = vmatpush.bf16.msra.mxu0 %v4368
        %4598 = vmatpush.bf16.msra.mxu0 %v4364
        %4599 = vmatpush.bf16.msra.mxu0 %v4360
        %4600 = vmatpush.bf16.msra.mxu0 %v4356
        %4601 = vmatpush.bf16.msra.mxu0 %v4352
        %4602 = vmatpush.bf16.msra.mxu0 %v4348
        %4603 = vmatmul.bf16.gmra.mxu0 %v3717
        %v4604 = vpop.f32.mrf.mxu0
        %v4605 = vadd.f32 %v4576, %v4604
        %v4606 = vpop.f32.mrf.mxu0
        %v4607 = vadd.f32 %v4578, %v4606
        %4608 = vmatmul.bf16.gmra.mxu0 %v3721
        %v4609 = vpop.f32.mrf.mxu0
        %v4610 = vadd.f32 %v4581, %v4609
        %v4611 = vpop.f32.mrf.mxu0
        %v4612 = vadd.f32 %v4583, %v4611
        %4613 = vmatmul.bf16.gmra.mxu0 %v3725
        %v4614 = vpop.f32.mrf.mxu0
        %v4615 = vadd.f32 %v4586, %v4614
        %v4616 = vpop.f32.mrf.mxu0
        %v4617 = vadd.f32 %v4588, %v4616
        %4618 = vmatmul.bf16.gmra.mxu0 %v3729
        %v4619 = vpop.f32.mrf.mxu0
        %v4620 = vadd.f32 %v4591, %v4619
        %v4621 = vpop.f32.mrf.mxu0
        %v4622 = vadd.f32 %v4593, %v4621
        %4623 = vdwg.mxu0
        %4624 = vmatpush.bf16.msra.mxu0 %v4281
        %4625 = vmatpush.bf16.msra.mxu0 %v4277
        %4626 = vmatpush.bf16.msra.mxu0 %v4273
        %4627 = vmatpush.bf16.msra.mxu0 %v4269
        %4628 = vmatpush.bf16.msra.mxu0 %v4265
        %4629 = vmatpush.bf16.msra.mxu0 %v4261
        %4630 = vmatpush.bf16.msra.mxu0 %v4257
        %4631 = vmatpush.bf16.msra.mxu0 %v4253
        %4632 = vmatmul.bf16.gmra.mxu0 %v3714
        %v4633 = vpop.f32.mrf.mxu0
        %v4634 = vadd.f32 %v3861, %v4633
        %v4635 = vpop.f32.mrf.mxu0
        %v4636 = vadd.f32 %v3861, %v4635
        %4637 = vmatmul.bf16.gmra.mxu0 %v3718
        %v4638 = vpop.f32.mrf.mxu0
        %v4639 = vadd.f32 %v3861, %v4638
        %v4640 = vpop.f32.mrf.mxu0
        %v4641 = vadd.f32 %v3861, %v4640
        %4642 = vmatmul.bf16.gmra.mxu0 %v3722
        %v4643 = vpop.f32.mrf.mxu0
        %v4644 = vadd.f32 %v3861, %v4643
        %v4645 = vpop.f32.mrf.mxu0
        %v4646 = vadd.f32 %v3861, %v4645
        %4647 = vmatmul.bf16.gmra.mxu0 %v3726
        %v4648 = vpop.f32.mrf.mxu0
        %v4649 = vadd.f32 %v3861, %v4648
        %v4650 = vpop.f32.mrf.mxu0
        %v4651 = vadd.f32 %v3861, %v4650
        %4652 = vdwg.mxu0
        %4653 = vmatpush.bf16.msra.mxu0 %v4313
        %4654 = vmatpush.bf16.msra.mxu0 %v4309
        %4655 = vmatpush.bf16.msra.mxu0 %v4305
        %4656 = vmatpush.bf16.msra.mxu0 %v4301
        %4657 = vmatpush.bf16.msra.mxu0 %v4297
        %4658 = vmatpush.bf16.msra.mxu0 %v4293
        %4659 = vmatpush.bf16.msra.mxu0 %v4289
        %4660 = vmatpush.bf16.msra.mxu0 %v4285
        %4661 = vmatmul.bf16.gmra.mxu0 %v3715
        %v4662 = vpop.f32.mrf.mxu0
        %v4663 = vadd.f32 %v4634, %v4662
        %v4664 = vpop.f32.mrf.mxu0
        %v4665 = vadd.f32 %v4636, %v4664
        %4666 = vmatmul.bf16.gmra.mxu0 %v3719
        %v4667 = vpop.f32.mrf.mxu0
        %v4668 = vadd.f32 %v4639, %v4667
        %v4669 = vpop.f32.mrf.mxu0
        %v4670 = vadd.f32 %v4641, %v4669
        %4671 = vmatmul.bf16.gmra.mxu0 %v3723
        %v4672 = vpop.f32.mrf.mxu0
        %v4673 = vadd.f32 %v4644, %v4672
        %v4674 = vpop.f32.mrf.mxu0
        %v4675 = vadd.f32 %v4646, %v4674
        %4676 = vmatmul.bf16.gmra.mxu0 %v3727
        %v4677 = vpop.f32.mrf.mxu0
        %v4678 = vadd.f32 %v4649, %v4677
        %v4679 = vpop.f32.mrf.mxu0
        %v4680 = vadd.f32 %v4651, %v4679
        %4681 = vdwg.mxu0
        %4682 = vmatpush.bf16.msra.mxu0 %v4345
        %4683 = vmatpush.bf16.msra.mxu0 %v4341
        %4684 = vmatpush.bf16.msra.mxu0 %v4337
        %4685 = vmatpush.bf16.msra.mxu0 %v4333
        %4686 = vmatpush.bf16.msra.mxu0 %v4329
        %4687 = vmatpush.bf16.msra.mxu0 %v4325
        %4688 = vmatpush.bf16.msra.mxu0 %v4321
        %4689 = vmatpush.bf16.msra.mxu0 %v4317
        %4690 = vmatmul.bf16.gmra.mxu0 %v3716
        %v4691 = vpop.f32.mrf.mxu0
        %v4692 = vadd.f32 %v4663, %v4691
        %v4693 = vpop.f32.mrf.mxu0
        %v4694 = vadd.f32 %v4665, %v4693
        %4695 = vmatmul.bf16.gmra.mxu0 %v3720
        %v4696 = vpop.f32.mrf.mxu0
        %v4697 = vadd.f32 %v4668, %v4696
        %v4698 = vpop.f32.mrf.mxu0
        %v4699 = vadd.f32 %v4670, %v4698
        %4700 = vmatmul.bf16.gmra.mxu0 %v3724
        %v4701 = vpop.f32.mrf.mxu0
        %v4702 = vadd.f32 %v4673, %v4701
        %v4703 = vpop.f32.mrf.mxu0
        %v4704 = vadd.f32 %v4675, %v4703
        %4705 = vmatmul.bf16.gmra.mxu0 %v3728
        %v4706 = vpop.f32.mrf.mxu0
        %v4707 = vadd.f32 %v4678, %v4706
        %v4708 = vpop.f32.mrf.mxu0
        %v4709 = vadd.f32 %v4680, %v4708
        %4710 = vdwg.mxu0
        %4711 = vmatpush.bf16.msra.mxu0 %v4377
        %4712 = vmatpush.bf16.msra.mxu0 %v4373
        %4713 = vmatpush.bf16.msra.mxu0 %v4369
        %4714 = vmatpush.bf16.msra.mxu0 %v4365
        %4715 = vmatpush.bf16.msra.mxu0 %v4361
        %4716 = vmatpush.bf16.msra.mxu0 %v4357
        %4717 = vmatpush.bf16.msra.mxu0 %v4353
        %4718 = vmatpush.bf16.msra.mxu0 %v4349
        %4719 = vmatmul.bf16.gmra.mxu0 %v3717
        %v4720 = vpop.f32.mrf.mxu0
        %v4721 = vadd.f32 %v4692, %v4720
        %v4722 = vpop.f32.mrf.mxu0
        %v4723 = vadd.f32 %v4694, %v4722
        %4724 = vmatmul.bf16.gmra.mxu0 %v3721
        %v4725 = vpop.f32.mrf.mxu0
        %v4726 = vadd.f32 %v4697, %v4725
        %v4727 = vpop.f32.mrf.mxu0
        %v4728 = vadd.f32 %v4699, %v4727
        %4729 = vmatmul.bf16.gmra.mxu0 %v3725
        %v4730 = vpop.f32.mrf.mxu0
        %v4731 = vadd.f32 %v4702, %v4730
        %v4732 = vpop.f32.mrf.mxu0
        %v4733 = vadd.f32 %v4704, %v4732
        %4734 = vmatmul.bf16.gmra.mxu0 %v3729
        %v4735 = vpop.f32.mrf.mxu0
        %v4736 = vadd.f32 %v4707, %v4735
        %v4737 = vpop.f32.mrf.mxu0
        %v4738 = vadd.f32 %v4709, %v4737
        %4739 = vdwg.mxu0
        %4740 = vmatpush.bf16.msra.mxu0 %v4282
        %4741 = vmatpush.bf16.msra.mxu0 %v4278
        %4742 = vmatpush.bf16.msra.mxu0 %v4274
        %4743 = vmatpush.bf16.msra.mxu0 %v4270
        %4744 = vmatpush.bf16.msra.mxu0 %v4266
        %4745 = vmatpush.bf16.msra.mxu0 %v4262
        %4746 = vmatpush.bf16.msra.mxu0 %v4258
        %4747 = vmatpush.bf16.msra.mxu0 %v4254
        %4748 = vmatmul.bf16.gmra.mxu0 %v3714
        %v4749 = vpop.f32.mrf.mxu0
        %v4750 = vadd.f32 %v3862, %v4749
        %v4751 = vpop.f32.mrf.mxu0
        %v4752 = vadd.f32 %v3862, %v4751
        %4753 = vmatmul.bf16.gmra.mxu0 %v3718
        %v4754 = vpop.f32.mrf.mxu0
        %v4755 = vadd.f32 %v3862, %v4754
        %v4756 = vpop.f32.mrf.mxu0
        %v4757 = vadd.f32 %v3862, %v4756
        %4758 = vmatmul.bf16.gmra.mxu0 %v3722
        %v4759 = vpop.f32.mrf.mxu0
        %v4760 = vadd.f32 %v3862, %v4759
        %v4761 = vpop.f32.mrf.mxu0
        %v4762 = vadd.f32 %v3862, %v4761
        %4763 = vmatmul.bf16.gmra.mxu0 %v3726
        %v4764 = vpop.f32.mrf.mxu0
        %v4765 = vadd.f32 %v3862, %v4764
        %v4766 = vpop.f32.mrf.mxu0
        %v4767 = vadd.f32 %v3862, %v4766
        %4768 = vdwg.mxu0
        %4769 = vmatpush.bf16.msra.mxu0 %v4314
        %4770 = vmatpush.bf16.msra.mxu0 %v4310
        %4771 = vmatpush.bf16.msra.mxu0 %v4306
        %4772 = vmatpush.bf16.msra.mxu0 %v4302
        %4773 = vmatpush.bf16.msra.mxu0 %v4298
        %4774 = vmatpush.bf16.msra.mxu0 %v4294
        %4775 = vmatpush.bf16.msra.mxu0 %v4290
        %4776 = vmatpush.bf16.msra.mxu0 %v4286
        %4777 = vmatmul.bf16.gmra.mxu0 %v3715
        %v4778 = vpop.f32.mrf.mxu0
        %v4779 = vadd.f32 %v4750, %v4778
        %v4780 = vpop.f32.mrf.mxu0
        %v4781 = vadd.f32 %v4752, %v4780
        %4782 = vmatmul.bf16.gmra.mxu0 %v3719
        %v4783 = vpop.f32.mrf.mxu0
        %v4784 = vadd.f32 %v4755, %v4783
        %v4785 = vpop.f32.mrf.mxu0
        %v4786 = vadd.f32 %v4757, %v4785
        %4787 = vmatmul.bf16.gmra.mxu0 %v3723
        %v4788 = vpop.f32.mrf.mxu0
        %v4789 = vadd.f32 %v4760, %v4788
        %v4790 = vpop.f32.mrf.mxu0
        %v4791 = vadd.f32 %v4762, %v4790
        %4792 = vmatmul.bf16.gmra.mxu0 %v3727
        %v4793 = vpop.f32.mrf.mxu0
        %v4794 = vadd.f32 %v4765, %v4793
        %v4795 = vpop.f32.mrf.mxu0
        %v4796 = vadd.f32 %v4767, %v4795
        %4797 = vdwg.mxu0
        %4798 = vmatpush.bf16.msra.mxu0 %v4346
        %4799 = vmatpush.bf16.msra.mxu0 %v4342
        %4800 = vmatpush.bf16.msra.mxu0 %v4338
        %4801 = vmatpush.bf16.msra.mxu0 %v4334
        %4802 = vmatpush.bf16.msra.mxu0 %v4330
        %4803 = vmatpush.bf16.msra.mxu0 %v4326
        %4804 = vmatpush.bf16.msra.mxu0 %v4322
        %4805 = vmatpush.bf16.msra.mxu0 %v4318
        %4806 = vmatmul.bf16.gmra.mxu0 %v3716
        %v4807 = vpop.f32.mrf.mxu0
        %v4808 = vadd.f32 %v4779, %v4807
        %v4809 = vpop.f32.mrf.mxu0
        %v4810 = vadd.f32 %v4781, %v4809
        %4811 = vmatmul.bf16.gmra.mxu0 %v3720
        %v4812 = vpop.f32.mrf.mxu0
        %v4813 = vadd.f32 %v4784, %v4812
        %v4814 = vpop.f32.mrf.mxu0
        %v4815 = vadd.f32 %v4786, %v4814
        %4816 = vmatmul.bf16.gmra.mxu0 %v3724
        %v4817 = vpop.f32.mrf.mxu0
        %v4818 = vadd.f32 %v4789, %v4817
        %v4819 = vpop.f32.mrf.mxu0
        %v4820 = vadd.f32 %v4791, %v4819
        %4821 = vmatmul.bf16.gmra.mxu0 %v3728
        %v4822 = vpop.f32.mrf.mxu0
        %v4823 = vadd.f32 %v4794, %v4822
        %v4824 = vpop.f32.mrf.mxu0
        %v4825 = vadd.f32 %v4796, %v4824
        %4826 = vdwg.mxu0
        %4827 = vmatpush.bf16.msra.mxu0 %v4378
        %4828 = vmatpush.bf16.msra.mxu0 %v4374
        %4829 = vmatpush.bf16.msra.mxu0 %v4370
        %4830 = vmatpush.bf16.msra.mxu0 %v4366
        %4831 = vmatpush.bf16.msra.mxu0 %v4362
        %4832 = vmatpush.bf16.msra.mxu0 %v4358
        %4833 = vmatpush.bf16.msra.mxu0 %v4354
        %4834 = vmatpush.bf16.msra.mxu0 %v4350
        %4835 = vmatmul.bf16.gmra.mxu0 %v3717
        %v4836 = vpop.f32.mrf.mxu0
        %v4837 = vadd.f32 %v4808, %v4836
        %v4838 = vpop.f32.mrf.mxu0
        %v4839 = vadd.f32 %v4810, %v4838
        %4840 = vmatmul.bf16.gmra.mxu0 %v3721
        %v4841 = vpop.f32.mrf.mxu0
        %v4842 = vadd.f32 %v4813, %v4841
        %v4843 = vpop.f32.mrf.mxu0
        %v4844 = vadd.f32 %v4815, %v4843
        %4845 = vmatmul.bf16.gmra.mxu0 %v3725
        %v4846 = vpop.f32.mrf.mxu0
        %v4847 = vadd.f32 %v4818, %v4846
        %v4848 = vpop.f32.mrf.mxu0
        %v4849 = vadd.f32 %v4820, %v4848
        %4850 = vmatmul.bf16.gmra.mxu0 %v3729
        %v4851 = vpop.f32.mrf.mxu0
        %v4852 = vadd.f32 %v4823, %v4851
        %v4853 = vpop.f32.mrf.mxu0
        %v4854 = vadd.f32 %v4825, %v4853
        %4855 = vdwg.mxu0
        %4856 = vmatpush.bf16.msra.mxu0 %v4283
        %4857 = vmatpush.bf16.msra.mxu0 %v4279
        %4858 = vmatpush.bf16.msra.mxu0 %v4275
        %4859 = vmatpush.bf16.msra.mxu0 %v4271
        %4860 = vmatpush.bf16.msra.mxu0 %v4267
        %4861 = vmatpush.bf16.msra.mxu0 %v4263
        %4862 = vmatpush.bf16.msra.mxu0 %v4259
        %4863 = vmatpush.bf16.msra.mxu0 %v4255
        %4864 = vmatmul.bf16.gmra.mxu0 %v3714
        %v4865 = vpop.f32.mrf.mxu0
        %v4866 = vadd.f32 %v3863, %v4865
        %v4867 = vpop.f32.mrf.mxu0
        %v4868 = vadd.f32 %v3863, %v4867
        %4869 = vmatmul.bf16.gmra.mxu0 %v3718
        %v4870 = vpop.f32.mrf.mxu0
        %v4871 = vadd.f32 %v3863, %v4870
        %v4872 = vpop.f32.mrf.mxu0
        %v4873 = vadd.f32 %v3863, %v4872
        %4874 = vmatmul.bf16.gmra.mxu0 %v3722
        %v4875 = vpop.f32.mrf.mxu0
        %v4876 = vadd.f32 %v3863, %v4875
        %v4877 = vpop.f32.mrf.mxu0
        %v4878 = vadd.f32 %v3863, %v4877
        %4879 = vmatmul.bf16.gmra.mxu0 %v3726
        %v4880 = vpop.f32.mrf.mxu0
        %v4881 = vadd.f32 %v3863, %v4880
        %v4882 = vpop.f32.mrf.mxu0
        %v4883 = vadd.f32 %v3863, %v4882
        %4884 = vdwg.mxu0
        %4885 = vmatpush.bf16.msra.mxu0 %v4315
        %4886 = vmatpush.bf16.msra.mxu0 %v4311
        %4887 = vmatpush.bf16.msra.mxu0 %v4307
        %4888 = vmatpush.bf16.msra.mxu0 %v4303
        %4889 = vmatpush.bf16.msra.mxu0 %v4299
        %4890 = vmatpush.bf16.msra.mxu0 %v4295
        %4891 = vmatpush.bf16.msra.mxu0 %v4291
        %4892 = vmatpush.bf16.msra.mxu0 %v4287
        %4893 = vmatmul.bf16.gmra.mxu0 %v3715
        %v4894 = vpop.f32.mrf.mxu0
        %v4895 = vadd.f32 %v4866, %v4894
        %v4896 = vpop.f32.mrf.mxu0
        %v4897 = vadd.f32 %v4868, %v4896
        %4898 = vmatmul.bf16.gmra.mxu0 %v3719
        %v4899 = vpop.f32.mrf.mxu0
        %v4900 = vadd.f32 %v4871, %v4899
        %v4901 = vpop.f32.mrf.mxu0
        %v4902 = vadd.f32 %v4873, %v4901
        %4903 = vmatmul.bf16.gmra.mxu0 %v3723
        %v4904 = vpop.f32.mrf.mxu0
        %v4905 = vadd.f32 %v4876, %v4904
        %v4906 = vpop.f32.mrf.mxu0
        %v4907 = vadd.f32 %v4878, %v4906
        %4908 = vmatmul.bf16.gmra.mxu0 %v3727
        %v4909 = vpop.f32.mrf.mxu0
        %v4910 = vadd.f32 %v4881, %v4909
        %v4911 = vpop.f32.mrf.mxu0
        %v4912 = vadd.f32 %v4883, %v4911
        %4913 = vdwg.mxu0
        %4914 = vmatpush.bf16.msra.mxu0 %v4347
        %4915 = vmatpush.bf16.msra.mxu0 %v4343
        %4916 = vmatpush.bf16.msra.mxu0 %v4339
        %4917 = vmatpush.bf16.msra.mxu0 %v4335
        %4918 = vmatpush.bf16.msra.mxu0 %v4331
        %4919 = vmatpush.bf16.msra.mxu0 %v4327
        %4920 = vmatpush.bf16.msra.mxu0 %v4323
        %4921 = vmatpush.bf16.msra.mxu0 %v4319
        %4922 = vmatmul.bf16.gmra.mxu0 %v3716
        %v4923 = vpop.f32.mrf.mxu0
        %v4924 = vadd.f32 %v4895, %v4923
        %v4925 = vpop.f32.mrf.mxu0
        %v4926 = vadd.f32 %v4897, %v4925
        %4927 = vmatmul.bf16.gmra.mxu0 %v3720
        %v4928 = vpop.f32.mrf.mxu0
        %v4929 = vadd.f32 %v4900, %v4928
        %v4930 = vpop.f32.mrf.mxu0
        %v4931 = vadd.f32 %v4902, %v4930
        %4932 = vmatmul.bf16.gmra.mxu0 %v3724
        %v4933 = vpop.f32.mrf.mxu0
        %v4934 = vadd.f32 %v4905, %v4933
        %v4935 = vpop.f32.mrf.mxu0
        %v4936 = vadd.f32 %v4907, %v4935
        %4937 = vmatmul.bf16.gmra.mxu0 %v3728
        %v4938 = vpop.f32.mrf.mxu0
        %v4939 = vadd.f32 %v4910, %v4938
        %v4940 = vpop.f32.mrf.mxu0
        %v4941 = vadd.f32 %v4912, %v4940
        %4942 = vdwg.mxu0
        %4943 = vmatpush.bf16.msra.mxu0 %v4379
        %4944 = vmatpush.bf16.msra.mxu0 %v4375
        %4945 = vmatpush.bf16.msra.mxu0 %v4371
        %4946 = vmatpush.bf16.msra.mxu0 %v4367
        %4947 = vmatpush.bf16.msra.mxu0 %v4363
        %4948 = vmatpush.bf16.msra.mxu0 %v4359
        %4949 = vmatpush.bf16.msra.mxu0 %v4355
        %4950 = vmatpush.bf16.msra.mxu0 %v4351
        %4951 = vmatmul.bf16.gmra.mxu0 %v3717
        %v4952 = vpop.f32.mrf.mxu0
        %v4953 = vadd.f32 %v4924, %v4952
        %v4954 = vpop.f32.mrf.mxu0
        %v4955 = vadd.f32 %v4926, %v4954
        %4956 = vmatmul.bf16.gmra.mxu0 %v3721
        %v4957 = vpop.f32.mrf.mxu0
        %v4958 = vadd.f32 %v4929, %v4957
        %v4959 = vpop.f32.mrf.mxu0
        %v4960 = vadd.f32 %v4931, %v4959
        %4961 = vmatmul.bf16.gmra.mxu0 %v3725
        %v4962 = vpop.f32.mrf.mxu0
        %v4963 = vadd.f32 %v4934, %v4962
        %v4964 = vpop.f32.mrf.mxu0
        %v4965 = vadd.f32 %v4936, %v4964
        %4966 = vmatmul.bf16.gmra.mxu0 %v3729
        %v4967 = vpop.f32.mrf.mxu0
        %v4968 = vadd.f32 %v4939, %v4967
        %v4969 = vpop.f32.mrf.mxu0
        %v4970 = vadd.f32 %v4941, %v4969
        %4971 = vdwg.mxu0
        %v4972 = vpack.c.bf16 %v4607, %v4605
        %v4973 = vpack.c.bf16 %v4723, %v4721
        %v4974 = vpack.c.bf16 %v4839, %v4837
        %v4975 = vpack.c.bf16 %v4955, %v4953
        %v4976 = vpack.c.bf16 %v4612, %v4610
        %v4977 = vpack.c.bf16 %v4728, %v4726
        %v4978 = vpack.c.bf16 %v4844, %v4842
        %v4979 = vpack.c.bf16 %v4960, %v4958
        %v4980 = vpack.c.bf16 %v4617, %v4615
        %v4981 = vpack.c.bf16 %v4733, %v4731
        %v4982 = vpack.c.bf16 %v4849, %v4847
        %v4983 = vpack.c.bf16 %v4965, %v4963
        %v4984 = vpack.c.bf16 %v4622, %v4620
        %v4985 = vpack.c.bf16 %v4738, %v4736
        %v4986 = vpack.c.bf16 %v4854, %v4852
        %v4987 = vpack.c.bf16 %v4970, %v4968
        %4988 = vmatpush.bf16.msra.mxu0 0
        %4989 = vmatpush.bf16.msra.mxu0 0
        %4990 = vmatpush.bf16.msra.mxu0 0
        %4991 = vmatpush.bf16.msra.mxu0 0
        %4992 = vmatpush.bf16.msra.mxu0 %v4984
        %4993 = vmatpush.bf16.msra.mxu0 %v4980
        %4994 = vmatpush.bf16.msra.mxu0 %v4976
        %4995 = vmatpush.bf16.msra.mxu0 %v4972
        %4996 = vmatmul.bf16.gmra.mxu0 %v794
        %v4997 = vpop.f32.mrf.mxu0
        %v4998 = vadd.f32 0.0, %v4997
        %v4999 = vpop.f32.mrf.mxu0
        %v5000 = vadd.f32 0.0, %v4999
        %5001 = vmatmul.bf16.gmra.mxu0 %v797
        %v5002 = vpop.f32.mrf.mxu0
        %v5003 = vadd.f32 0.0, %v5002
        %v5004 = vpop.f32.mrf.mxu0
        %v5005 = vadd.f32 0.0, %v5004
        %5006 = vmatmul.bf16.gmra.mxu0 %v800
        %v5007 = vpop.f32.mrf.mxu0
        %v5008 = vadd.f32 0.0, %v5007
        %v5009 = vpop.f32.mrf.mxu0
        %v5010 = vadd.f32 0.0, %v5009
        %5011 = vmatmul.bf16.gmra.mxu0 %v803
        %v5012 = vpop.f32.mrf.mxu0
        %v5013 = vadd.f32 0.0, %v5012
        %v5014 = vpop.f32.mrf.mxu0
        %v5015 = vadd.f32 0.0, %v5014
        %5016 = vdwg.mxu0
        %5017 = vmatpush.bf16.msra.mxu0 0
        %5018 = vmatpush.bf16.msra.mxu0 0
        %5019 = vmatpush.bf16.msra.mxu0 0
        %5020 = vmatpush.bf16.msra.mxu0 0
        %5021 = vmatpush.bf16.msra.mxu0 %v4985
        %5022 = vmatpush.bf16.msra.mxu0 %v4981
        %5023 = vmatpush.bf16.msra.mxu0 %v4977
        %5024 = vmatpush.bf16.msra.mxu0 %v4973
        %5025 = vmatmul.bf16.gmra.mxu0 %v794
        %v5026 = vpop.f32.mrf.mxu0
        %v5027 = vadd.f32 0.0, %v5026
        %v5028 = vpop.f32.mrf.mxu0
        %v5029 = vadd.f32 0.0, %v5028
        %5030 = vmatmul.bf16.gmra.mxu0 %v797
        %v5031 = vpop.f32.mrf.mxu0
        %v5032 = vadd.f32 0.0, %v5031
        %v5033 = vpop.f32.mrf.mxu0
        %v5034 = vadd.f32 0.0, %v5033
        %5035 = vmatmul.bf16.gmra.mxu0 %v800
        %v5036 = vpop.f32.mrf.mxu0
        %v5037 = vadd.f32 0.0, %v5036
        %v5038 = vpop.f32.mrf.mxu0
        %v5039 = vadd.f32 0.0, %v5038
        %5040 = vmatmul.bf16.gmra.mxu0 %v803
        %v5041 = vpop.f32.mrf.mxu0
        %v5042 = vadd.f32 0.0, %v5041
        %v5043 = vpop.f32.mrf.mxu0
        %v5044 = vadd.f32 0.0, %v5043
        %5045 = vdwg.mxu0
        %5046 = vmatpush.bf16.msra.mxu0 0
        %5047 = vmatpush.bf16.msra.mxu0 0
        %5048 = vmatpush.bf16.msra.mxu0 0
        %5049 = vmatpush.bf16.msra.mxu0 0
        %5050 = vmatpush.bf16.msra.mxu0 %v4986
        %5051 = vmatpush.bf16.msra.mxu0 %v4982
        %5052 = vmatpush.bf16.msra.mxu0 %v4978
        %5053 = vmatpush.bf16.msra.mxu0 %v4974
        %5054 = vmatmul.bf16.gmra.mxu0 %v794
        %v5055 = vpop.f32.mrf.mxu0
        %v5056 = vadd.f32 0.0, %v5055
        %v5057 = vpop.f32.mrf.mxu0
        %v5058 = vadd.f32 0.0, %v5057
        %5059 = vmatmul.bf16.gmra.mxu0 %v797
        %v5060 = vpop.f32.mrf.mxu0
        %v5061 = vadd.f32 0.0, %v5060
        %v5062 = vpop.f32.mrf.mxu0
        %v5063 = vadd.f32 0.0, %v5062
        %5064 = vmatmul.bf16.gmra.mxu0 %v800
        %v5065 = vpop.f32.mrf.mxu0
        %v5066 = vadd.f32 0.0, %v5065
        %v5067 = vpop.f32.mrf.mxu0
        %v5068 = vadd.f32 0.0, %v5067
        %5069 = vmatmul.bf16.gmra.mxu0 %v803
        %v5070 = vpop.f32.mrf.mxu0
        %v5071 = vadd.f32 0.0, %v5070
        %v5072 = vpop.f32.mrf.mxu0
        %v5073 = vadd.f32 0.0, %v5072
        %5074 = vdwg.mxu0
        %5075 = vmatpush.bf16.msra.mxu0 0
        %5076 = vmatpush.bf16.msra.mxu0 0
        %5077 = vmatpush.bf16.msra.mxu0 0
        %5078 = vmatpush.bf16.msra.mxu0 0
        %5079 = vmatpush.bf16.msra.mxu0 %v4987
        %5080 = vmatpush.bf16.msra.mxu0 %v4983
        %5081 = vmatpush.bf16.msra.mxu0 %v4979
        %5082 = vmatpush.bf16.msra.mxu0 %v4975
        %5083 = vmatmul.bf16.gmra.mxu0 %v794
        %v5084 = vpop.f32.mrf.mxu0
        %v5085 = vadd.f32 0.0, %v5084
        %v5086 = vpop.f32.mrf.mxu0
        %v5087 = vadd.f32 0.0, %v5086
        %5088 = vmatmul.bf16.gmra.mxu0 %v797
        %v5089 = vpop.f32.mrf.mxu0
        %v5090 = vadd.f32 0.0, %v5089
        %v5091 = vpop.f32.mrf.mxu0
        %v5092 = vadd.f32 0.0, %v5091
        %5093 = vmatmul.bf16.gmra.mxu0 %v800
        %v5094 = vpop.f32.mrf.mxu0
        %v5095 = vadd.f32 0.0, %v5094
        %v5096 = vpop.f32.mrf.mxu0
        %v5097 = vadd.f32 0.0, %v5096
        %5098 = vmatmul.bf16.gmra.mxu0 %v803
        %v5099 = vpop.f32.mrf.mxu0
        %v5100 = vadd.f32 0.0, %v5099
        %v5101 = vpop.f32.mrf.mxu0
        %v5102 = vadd.f32 0.0, %v5101
        %5103 = vdwg.mxu0
        %v5104 = vpack.c.bf16 %v5000, %v4998
        %v5105 = vpack.c.bf16 %v5029, %v5027
        %v5106 = vpack.c.bf16 %v5058, %v5056
        %v5107 = vpack.c.bf16 %v5087, %v5085
        %v5108 = vpack.c.bf16 %v5005, %v5003
        %v5109 = vpack.c.bf16 %v5034, %v5032
        %v5110 = vpack.c.bf16 %v5063, %v5061
        %v5111 = vpack.c.bf16 %v5092, %v5090
        %v5112 = vpack.c.bf16 %v5010, %v5008
        %v5113 = vpack.c.bf16 %v5039, %v5037
        %v5114 = vpack.c.bf16 %v5068, %v5066
        %v5115 = vpack.c.bf16 %v5097, %v5095
        %v5116 = vpack.c.bf16 %v5015, %v5013
        %v5117 = vpack.c.bf16 %v5044, %v5042
        %v5118 = vpack.c.bf16 %v5073, %v5071
        %v5119 = vpack.c.bf16 %v5102, %v5100
        %v5120 = vld [vmem:[#allocation8] sm:$0xff]
        %v5121 = vld [vmem:[#allocation8 + $0x8] sm:$0xff]
        %v5122 = vld [vmem:[#allocation8 + $0x10] sm:$0xff]
        %v5123 = vld [vmem:[#allocation8 + $0x18] sm:$0xff]
        %v5124 = vld [vmem:[#allocation8 + $0x20] sm:$0xff]
        %v5125 = vld [vmem:[#allocation8 + $0x28] sm:$0xff]
        %v5126 = vld [vmem:[#allocation8 + $0x30] sm:$0xff]
        %v5127 = vld [vmem:[#allocation8 + $0x38] sm:$0xff]
        %v5128 = vld [vmem:[#allocation8 + $0x40] sm:$0xff]
        %v5129 = vld [vmem:[#allocation8 + $0x48] sm:$0xff]
        %v5130 = vld [vmem:[#allocation8 + $0x50] sm:$0xff]
        %v5131 = vld [vmem:[#allocation8 + $0x58] sm:$0xff]
        %v5132 = vld [vmem:[#allocation8 + $0x60] sm:$0xff]
        %v5133 = vld [vmem:[#allocation8 + $0x68] sm:$0xff]
        %v5134 = vld [vmem:[#allocation8 + $0x70] sm:$0xff]
        %v5135 = vld [vmem:[#allocation8 + $0x78] sm:$0xff]
        %v5136 = vld [vmem:[#allocation8 + $0x80] sm:$0xff]
        %v5137 = vld [vmem:[#allocation8 + $0x88] sm:$0xff]
        %v5138 = vld [vmem:[#allocation8 + $0x90] sm:$0xff]
        %v5139 = vld [vmem:[#allocation8 + $0x98] sm:$0xff]
        %v5140 = vld [vmem:[#allocation8 + $0xa0] sm:$0xff]
        %v5141 = vld [vmem:[#allocation8 + $0xa8] sm:$0xff]
        %v5142 = vld [vmem:[#allocation8 + $0xb0] sm:$0xff]
        %v5143 = vld [vmem:[#allocation8 + $0xb8] sm:$0xff]
        %v5144 = vld [vmem:[#allocation8 + $0xc0] sm:$0xff]
        %v5145 = vld [vmem:[#allocation8 + $0xc8] sm:$0xff]
        %v5146 = vld [vmem:[#allocation8 + $0xd0] sm:$0xff]
        %v5147 = vld [vmem:[#allocation8 + $0xd8] sm:$0xff]
        %v5148 = vld [vmem:[#allocation8 + $0xe0] sm:$0xff]
        %v5149 = vld [vmem:[#allocation8 + $0xe8] sm:$0xff]
        %v5150 = vld [vmem:[#allocation8 + $0xf0] sm:$0xff]
        %v5151 = vld [vmem:[#allocation8 + $0xf8] sm:$0xff]
        %v5152 = vld [vmem:[#allocation8 + $0x100] sm:$0xff]
        %v5153 = vld [vmem:[#allocation8 + $0x108] sm:$0xff]
        %v5154 = vld [vmem:[#allocation8 + $0x110] sm:$0xff]
        %v5155 = vld [vmem:[#allocation8 + $0x118] sm:$0xff]
        %v5156 = vld [vmem:[#allocation8 + $0x120] sm:$0xff]
        %v5157 = vld [vmem:[#allocation8 + $0x128] sm:$0xff]
        %v5158 = vld [vmem:[#allocation8 + $0x130] sm:$0xff]
        %v5159 = vld [vmem:[#allocation8 + $0x138] sm:$0xff]
        %v5160 = vld [vmem:[#allocation8 + $0x140] sm:$0xff]
        %v5161 = vld [vmem:[#allocation8 + $0x148] sm:$0xff]
        %v5162 = vld [vmem:[#allocation8 + $0x150] sm:$0xff]
        %v5163 = vld [vmem:[#allocation8 + $0x158] sm:$0xff]
        %v5164 = vld [vmem:[#allocation8 + $0x160] sm:$0xff]
        %v5165 = vld [vmem:[#allocation8 + $0x168] sm:$0xff]
        %v5166 = vld [vmem:[#allocation8 + $0x170] sm:$0xff]
        %v5167 = vld [vmem:[#allocation8 + $0x178] sm:$0xff]
        %v5168 = vld [vmem:[#allocation8 + $0x180] sm:$0xff]
        %v5169 = vld [vmem:[#allocation8 + $0x188] sm:$0xff]
        %v5170 = vld [vmem:[#allocation8 + $0x190] sm:$0xff]
        %v5171 = vld [vmem:[#allocation8 + $0x198] sm:$0xff]
        %v5172 = vld [vmem:[#allocation8 + $0x1a0] sm:$0xff]
        %v5173 = vld [vmem:[#allocation8 + $0x1a8] sm:$0xff]
        %v5174 = vld [vmem:[#allocation8 + $0x1b0] sm:$0xff]
        %v5175 = vld [vmem:[#allocation8 + $0x1b8] sm:$0xff]
        %v5176 = vld [vmem:[#allocation8 + $0x1c0] sm:$0xff]
        %v5177 = vld [vmem:[#allocation8 + $0x1c8] sm:$0xff]
        %v5178 = vld [vmem:[#allocation8 + $0x1d0] sm:$0xff]
        %v5179 = vld [vmem:[#allocation8 + $0x1d8] sm:$0xff]
        %v5180 = vld [vmem:[#allocation8 + $0x1e0] sm:$0xff]
        %v5181 = vld [vmem:[#allocation8 + $0x1e8] sm:$0xff]
        %v5182 = vld [vmem:[#allocation8 + $0x1f0] sm:$0xff]
        %v5183 = vld [vmem:[#allocation8 + $0x1f8] sm:$0xff]
        %v5184 = vld [vmem:[#allocation8 + $0x200] sm:$0xff]
        %v5185 = vld [vmem:[#allocation8 + $0x208] sm:$0xff]
        %v5186 = vld [vmem:[#allocation8 + $0x210] sm:$0xff]
        %v5187 = vld [vmem:[#allocation8 + $0x218] sm:$0xff]
        %v5188 = vld [vmem:[#allocation8 + $0x220] sm:$0xff]
        %v5189 = vld [vmem:[#allocation8 + $0x228] sm:$0xff]
        %v5190 = vld [vmem:[#allocation8 + $0x230] sm:$0xff]
        %v5191 = vld [vmem:[#allocation8 + $0x238] sm:$0xff]
        %v5192 = vld [vmem:[#allocation8 + $0x240] sm:$0xff]
        %v5193 = vld [vmem:[#allocation8 + $0x248] sm:$0xff]
        %v5194 = vld [vmem:[#allocation8 + $0x250] sm:$0xff]
        %v5195 = vld [vmem:[#allocation8 + $0x258] sm:$0xff]
        %v5196 = vld [vmem:[#allocation8 + $0x260] sm:$0xff]
        %v5197 = vld [vmem:[#allocation8 + $0x268] sm:$0xff]
        %v5198 = vld [vmem:[#allocation8 + $0x270] sm:$0xff]
        %v5199 = vld [vmem:[#allocation8 + $0x278] sm:$0xff]
        %v5200 = vld [vmem:[#allocation8 + $0x280] sm:$0xff]
        %v5201 = vld [vmem:[#allocation8 + $0x288] sm:$0xff]
        %v5202 = vld [vmem:[#allocation8 + $0x290] sm:$0xff]
        %v5203 = vld [vmem:[#allocation8 + $0x298] sm:$0xff]
        %v5204 = vld [vmem:[#allocation8 + $0x2a0] sm:$0xff]
        %v5205 = vld [vmem:[#allocation8 + $0x2a8] sm:$0xff]
        %v5206 = vld [vmem:[#allocation8 + $0x2b0] sm:$0xff]
        %v5207 = vld [vmem:[#allocation8 + $0x2b8] sm:$0xff]
        %v5208 = vld [vmem:[#allocation8 + $0x2c0] sm:$0xff]
        %v5209 = vld [vmem:[#allocation8 + $0x2c8] sm:$0xff]
        %v5210 = vld [vmem:[#allocation8 + $0x2d0] sm:$0xff]
        %v5211 = vld [vmem:[#allocation8 + $0x2d8] sm:$0xff]
        %v5212 = vld [vmem:[#allocation8 + $0x2e0] sm:$0xff]
        %v5213 = vld [vmem:[#allocation8 + $0x2e8] sm:$0xff]
        %v5214 = vld [vmem:[#allocation8 + $0x2f0] sm:$0xff]
        %v5215 = vld [vmem:[#allocation8 + $0x2f8] sm:$0xff]
        %v5216 = vld [vmem:[#allocation8 + $0x300] sm:$0xff]
        %v5217 = vld [vmem:[#allocation8 + $0x308] sm:$0xff]
        %v5218 = vld [vmem:[#allocation8 + $0x310] sm:$0xff]
        %v5219 = vld [vmem:[#allocation8 + $0x318] sm:$0xff]
        %v5220 = vld [vmem:[#allocation8 + $0x320] sm:$0xff]
        %v5221 = vld [vmem:[#allocation8 + $0x328] sm:$0xff]
        %v5222 = vld [vmem:[#allocation8 + $0x330] sm:$0xff]
        %v5223 = vld [vmem:[#allocation8 + $0x338] sm:$0xff]
        %v5224 = vld [vmem:[#allocation8 + $0x340] sm:$0xff]
        %v5225 = vld [vmem:[#allocation8 + $0x348] sm:$0xff]
        %v5226 = vld [vmem:[#allocation8 + $0x350] sm:$0xff]
        %v5227 = vld [vmem:[#allocation8 + $0x358] sm:$0xff]
        %v5228 = vld [vmem:[#allocation8 + $0x360] sm:$0xff]
        %v5229 = vld [vmem:[#allocation8 + $0x368] sm:$0xff]
        %v5230 = vld [vmem:[#allocation8 + $0x370] sm:$0xff]
        %v5231 = vld [vmem:[#allocation8 + $0x378] sm:$0xff]
        %v5232 = vld [vmem:[#allocation8 + $0x380] sm:$0xff]
        %v5233 = vld [vmem:[#allocation8 + $0x388] sm:$0xff]
        %v5234 = vld [vmem:[#allocation8 + $0x390] sm:$0xff]
        %v5235 = vld [vmem:[#allocation8 + $0x398] sm:$0xff]
        %v5236 = vld [vmem:[#allocation8 + $0x3a0] sm:$0xff]
        %v5237 = vld [vmem:[#allocation8 + $0x3a8] sm:$0xff]
        %v5238 = vld [vmem:[#allocation8 + $0x3b0] sm:$0xff]
        %v5239 = vld [vmem:[#allocation8 + $0x3b8] sm:$0xff]
        %v5240 = vld [vmem:[#allocation8 + $0x3c0] sm:$0xff]
        %v5241 = vld [vmem:[#allocation8 + $0x3c8] sm:$0xff]
        %v5242 = vld [vmem:[#allocation8 + $0x3d0] sm:$0xff]
        %v5243 = vld [vmem:[#allocation8 + $0x3d8] sm:$0xff]
        %v5244 = vld [vmem:[#allocation8 + $0x3e0] sm:$0xff]
        %v5245 = vld [vmem:[#allocation8 + $0x3e8] sm:$0xff]
        %v5246 = vld [vmem:[#allocation8 + $0x3f0] sm:$0xff]
        %v5247 = vld [vmem:[#allocation8 + $0x3f8] sm:$0xff]
        %v5248 = vld [vmem:[%s12] sm:$0xf]
        %v5250 = vperm.slane %v5248, 0
        %v5251 = vperm.slane %v5248, 1
        %v5252 = vperm.slane %v5248, 2
        %v5253 = vperm.slane %v5248, 3
        %v5386 = vunpack.c.l.b16 %v5120
        %v5387 = vunpack.c.h.b16 %v5120
        %v5388 = vunpack.c.l.b16 %v5121
        %v5389 = vunpack.c.h.b16 %v5121
        %v5390 = vunpack.c.l.b16 %v5122
        %v5391 = vunpack.c.h.b16 %v5122
        %v5392 = vunpack.c.l.b16 %v5123
        %v5393 = vunpack.c.h.b16 %v5123
        %v5394 = vunpack.c.l.b16 %v5124
        %v5395 = vunpack.c.h.b16 %v5124
        %v5396 = vunpack.c.l.b16 %v5125
        %v5397 = vunpack.c.h.b16 %v5125
        %v5398 = vunpack.c.l.b16 %v5126
        %v5399 = vunpack.c.h.b16 %v5126
        %v5400 = vunpack.c.l.b16 %v5127
        %v5401 = vunpack.c.h.b16 %v5127
        %v5402 = vunpack.c.l.b16 %v5128
        %v5403 = vunpack.c.h.b16 %v5128
        %v5404 = vunpack.c.l.b16 %v5129
        %v5405 = vunpack.c.h.b16 %v5129
        %v5406 = vunpack.c.l.b16 %v5130
        %v5407 = vunpack.c.h.b16 %v5130
        %v5408 = vunpack.c.l.b16 %v5131
        %v5409 = vunpack.c.h.b16 %v5131
        %v5410 = vunpack.c.l.b16 %v5132
        %v5411 = vunpack.c.h.b16 %v5132
        %v5412 = vunpack.c.l.b16 %v5133
        %v5413 = vunpack.c.h.b16 %v5133
        %v5414 = vunpack.c.l.b16 %v5134
        %v5415 = vunpack.c.h.b16 %v5134
        %v5416 = vunpack.c.l.b16 %v5135
        %v5417 = vunpack.c.h.b16 %v5135
        %v5418 = vunpack.c.l.b16 %v5136
        %v5419 = vunpack.c.h.b16 %v5136
        %v5420 = vunpack.c.l.b16 %v5137
        %v5421 = vunpack.c.h.b16 %v5137
        %v5422 = vunpack.c.l.b16 %v5138
        %v5423 = vunpack.c.h.b16 %v5138
        %v5424 = vunpack.c.l.b16 %v5139
        %v5425 = vunpack.c.h.b16 %v5139
        %v5426 = vunpack.c.l.b16 %v5140
        %v5427 = vunpack.c.h.b16 %v5140
        %v5428 = vunpack.c.l.b16 %v5141
        %v5429 = vunpack.c.h.b16 %v5141
        %v5430 = vunpack.c.l.b16 %v5142
        %v5431 = vunpack.c.h.b16 %v5142
        %v5432 = vunpack.c.l.b16 %v5143
        %v5433 = vunpack.c.h.b16 %v5143
        %v5434 = vunpack.c.l.b16 %v5144
        %v5435 = vunpack.c.h.b16 %v5144
        %v5436 = vunpack.c.l.b16 %v5145
        %v5437 = vunpack.c.h.b16 %v5145
        %v5438 = vunpack.c.l.b16 %v5146
        %v5439 = vunpack.c.h.b16 %v5146
        %v5440 = vunpack.c.l.b16 %v5147
        %v5441 = vunpack.c.h.b16 %v5147
        %v5442 = vunpack.c.l.b16 %v5148
        %v5443 = vunpack.c.h.b16 %v5148
        %v5444 = vunpack.c.l.b16 %v5149
        %v5445 = vunpack.c.h.b16 %v5149
        %v5446 = vunpack.c.l.b16 %v5150
        %v5447 = vunpack.c.h.b16 %v5150
        %v5448 = vunpack.c.l.b16 %v5151
        %v5449 = vunpack.c.h.b16 %v5151
        %v5450 = vunpack.c.l.b16 %v5152
        %v5451 = vunpack.c.h.b16 %v5152
        %v5452 = vunpack.c.l.b16 %v5153
        %v5453 = vunpack.c.h.b16 %v5153
        %v5454 = vunpack.c.l.b16 %v5154
        %v5455 = vunpack.c.h.b16 %v5154
        %v5456 = vunpack.c.l.b16 %v5155
        %v5457 = vunpack.c.h.b16 %v5155
        %v5458 = vunpack.c.l.b16 %v5156
        %v5459 = vunpack.c.h.b16 %v5156
        %v5460 = vunpack.c.l.b16 %v5157
        %v5461 = vunpack.c.h.b16 %v5157
        %v5462 = vunpack.c.l.b16 %v5158
        %v5463 = vunpack.c.h.b16 %v5158
        %v5464 = vunpack.c.l.b16 %v5159
        %v5465 = vunpack.c.h.b16 %v5159
        %v5466 = vunpack.c.l.b16 %v5160
        %v5467 = vunpack.c.h.b16 %v5160
        %v5468 = vunpack.c.l.b16 %v5161
        %v5469 = vunpack.c.h.b16 %v5161
        %v5470 = vunpack.c.l.b16 %v5162
        %v5471 = vunpack.c.h.b16 %v5162
        %v5472 = vunpack.c.l.b16 %v5163
        %v5473 = vunpack.c.h.b16 %v5163
        %v5474 = vunpack.c.l.b16 %v5164
        %v5475 = vunpack.c.h.b16 %v5164
        %v5476 = vunpack.c.l.b16 %v5165
        %v5477 = vunpack.c.h.b16 %v5165
        %v5478 = vunpack.c.l.b16 %v5166
        %v5479 = vunpack.c.h.b16 %v5166
        %v5480 = vunpack.c.l.b16 %v5167
        %v5481 = vunpack.c.h.b16 %v5167
        %v5482 = vunpack.c.l.b16 %v5168
        %v5483 = vunpack.c.h.b16 %v5168
        %v5484 = vunpack.c.l.b16 %v5169
        %v5485 = vunpack.c.h.b16 %v5169
        %v5486 = vunpack.c.l.b16 %v5170
        %v5487 = vunpack.c.h.b16 %v5170
        %v5488 = vunpack.c.l.b16 %v5171
        %v5489 = vunpack.c.h.b16 %v5171
        %v5490 = vunpack.c.l.b16 %v5172
        %v5491 = vunpack.c.h.b16 %v5172
        %v5492 = vunpack.c.l.b16 %v5173
        %v5493 = vunpack.c.h.b16 %v5173
        %v5494 = vunpack.c.l.b16 %v5174
        %v5495 = vunpack.c.h.b16 %v5174
        %v5496 = vunpack.c.l.b16 %v5175
        %v5497 = vunpack.c.h.b16 %v5175
        %v5498 = vunpack.c.l.b16 %v5176
        %v5499 = vunpack.c.h.b16 %v5176
        %v5500 = vunpack.c.l.b16 %v5177
        %v5501 = vunpack.c.h.b16 %v5177
        %v5502 = vunpack.c.l.b16 %v5178
        %v5503 = vunpack.c.h.b16 %v5178
        %v5504 = vunpack.c.l.b16 %v5179
        %v5505 = vunpack.c.h.b16 %v5179
        %v5506 = vunpack.c.l.b16 %v5180
        %v5507 = vunpack.c.h.b16 %v5180
        %v5508 = vunpack.c.l.b16 %v5181
        %v5509 = vunpack.c.h.b16 %v5181
        %v5510 = vunpack.c.l.b16 %v5182
        %v5511 = vunpack.c.h.b16 %v5182
        %v5512 = vunpack.c.l.b16 %v5183
        %v5513 = vunpack.c.h.b16 %v5183
        %v5514 = vunpack.c.l.b16 %v5184
        %v5515 = vunpack.c.h.b16 %v5184
        %v5516 = vunpack.c.l.b16 %v5185
        %v5517 = vunpack.c.h.b16 %v5185
        %v5518 = vunpack.c.l.b16 %v5186
        %v5519 = vunpack.c.h.b16 %v5186
        %v5520 = vunpack.c.l.b16 %v5187
        %v5521 = vunpack.c.h.b16 %v5187
        %v5522 = vunpack.c.l.b16 %v5188
        %v5523 = vunpack.c.h.b16 %v5188
        %v5524 = vunpack.c.l.b16 %v5189
        %v5525 = vunpack.c.h.b16 %v5189
        %v5526 = vunpack.c.l.b16 %v5190
        %v5527 = vunpack.c.h.b16 %v5190
        %v5528 = vunpack.c.l.b16 %v5191
        %v5529 = vunpack.c.h.b16 %v5191
        %v5530 = vunpack.c.l.b16 %v5192
        %v5531 = vunpack.c.h.b16 %v5192
        %v5532 = vunpack.c.l.b16 %v5193
        %v5533 = vunpack.c.h.b16 %v5193
        %v5534 = vunpack.c.l.b16 %v5194
        %v5535 = vunpack.c.h.b16 %v5194
        %v5536 = vunpack.c.l.b16 %v5195
        %v5537 = vunpack.c.h.b16 %v5195
        %v5538 = vunpack.c.l.b16 %v5196
        %v5539 = vunpack.c.h.b16 %v5196
        %v5540 = vunpack.c.l.b16 %v5197
        %v5541 = vunpack.c.h.b16 %v5197
        %v5542 = vunpack.c.l.b16 %v5198
        %v5543 = vunpack.c.h.b16 %v5198
        %v5544 = vunpack.c.l.b16 %v5199
        %v5545 = vunpack.c.h.b16 %v5199
        %v5546 = vunpack.c.l.b16 %v5200
        %v5547 = vunpack.c.h.b16 %v5200
        %v5548 = vunpack.c.l.b16 %v5201
        %v5549 = vunpack.c.h.b16 %v5201
        %v5550 = vunpack.c.l.b16 %v5202
        %v5551 = vunpack.c.h.b16 %v5202
        %v5552 = vunpack.c.l.b16 %v5203
        %v5553 = vunpack.c.h.b16 %v5203
        %v5554 = vunpack.c.l.b16 %v5204
        %v5555 = vunpack.c.h.b16 %v5204
        %v5556 = vunpack.c.l.b16 %v5205
        %v5557 = vunpack.c.h.b16 %v5205
        %v5558 = vunpack.c.l.b16 %v5206
        %v5559 = vunpack.c.h.b16 %v5206
        %v5560 = vunpack.c.l.b16 %v5207
        %v5561 = vunpack.c.h.b16 %v5207
        %v5562 = vunpack.c.l.b16 %v5208
        %v5563 = vunpack.c.h.b16 %v5208
        %v5564 = vunpack.c.l.b16 %v5209
        %v5565 = vunpack.c.h.b16 %v5209
        %v5566 = vunpack.c.l.b16 %v5210
        %v5567 = vunpack.c.h.b16 %v5210
        %v5568 = vunpack.c.l.b16 %v5211
        %v5569 = vunpack.c.h.b16 %v5211
        %v5570 = vunpack.c.l.b16 %v5212
        %v5571 = vunpack.c.h.b16 %v5212
        %v5572 = vunpack.c.l.b16 %v5213
        %v5573 = vunpack.c.h.b16 %v5213
        %v5574 = vunpack.c.l.b16 %v5214
        %v5575 = vunpack.c.h.b16 %v5214
        %v5576 = vunpack.c.l.b16 %v5215
        %v5577 = vunpack.c.h.b16 %v5215
        %v5578 = vunpack.c.l.b16 %v5216
        %v5579 = vunpack.c.h.b16 %v5216
        %v5580 = vunpack.c.l.b16 %v5217
        %v5581 = vunpack.c.h.b16 %v5217
        %v5582 = vunpack.c.l.b16 %v5218
        %v5583 = vunpack.c.h.b16 %v5218
        %v5584 = vunpack.c.l.b16 %v5219
        %v5585 = vunpack.c.h.b16 %v5219
        %v5586 = vunpack.c.l.b16 %v5220
        %v5587 = vunpack.c.h.b16 %v5220
        %v5588 = vunpack.c.l.b16 %v5221
        %v5589 = vunpack.c.h.b16 %v5221
        %v5590 = vunpack.c.l.b16 %v5222
        %v5591 = vunpack.c.h.b16 %v5222
        %v5592 = vunpack.c.l.b16 %v5223
        %v5593 = vunpack.c.h.b16 %v5223
        %v5594 = vunpack.c.l.b16 %v5224
        %v5595 = vunpack.c.h.b16 %v5224
        %v5596 = vunpack.c.l.b16 %v5225
        %v5597 = vunpack.c.h.b16 %v5225
        %v5598 = vunpack.c.l.b16 %v5226
        %v5599 = vunpack.c.h.b16 %v5226
        %v5600 = vunpack.c.l.b16 %v5227
        %v5601 = vunpack.c.h.b16 %v5227
        %v5602 = vunpack.c.l.b16 %v5228
        %v5603 = vunpack.c.h.b16 %v5228
        %v5604 = vunpack.c.l.b16 %v5229
        %v5605 = vunpack.c.h.b16 %v5229
        %v5606 = vunpack.c.l.b16 %v5230
        %v5607 = vunpack.c.h.b16 %v5230
        %v5608 = vunpack.c.l.b16 %v5231
        %v5609 = vunpack.c.h.b16 %v5231
        %v5610 = vunpack.c.l.b16 %v5232
        %v5611 = vunpack.c.h.b16 %v5232
        %v5612 = vunpack.c.l.b16 %v5233
        %v5613 = vunpack.c.h.b16 %v5233
        %v5614 = vunpack.c.l.b16 %v5234
        %v5615 = vunpack.c.h.b16 %v5234
        %v5616 = vunpack.c.l.b16 %v5235
        %v5617 = vunpack.c.h.b16 %v5235
        %v5618 = vunpack.c.l.b16 %v5236
        %v5619 = vunpack.c.h.b16 %v5236
        %v5620 = vunpack.c.l.b16 %v5237
        %v5621 = vunpack.c.h.b16 %v5237
        %v5622 = vunpack.c.l.b16 %v5238
        %v5623 = vunpack.c.h.b16 %v5238
        %v5624 = vunpack.c.l.b16 %v5239
        %v5625 = vunpack.c.h.b16 %v5239
        %v5626 = vunpack.c.l.b16 %v5240
        %v5627 = vunpack.c.h.b16 %v5240
        %v5628 = vunpack.c.l.b16 %v5241
        %v5629 = vunpack.c.h.b16 %v5241
        %v5630 = vunpack.c.l.b16 %v5242
        %v5631 = vunpack.c.h.b16 %v5242
        %v5632 = vunpack.c.l.b16 %v5243
        %v5633 = vunpack.c.h.b16 %v5243
        %v5634 = vunpack.c.l.b16 %v5244
        %v5635 = vunpack.c.h.b16 %v5244
        %v5636 = vunpack.c.l.b16 %v5245
        %v5637 = vunpack.c.h.b16 %v5245
        %v5638 = vunpack.c.l.b16 %v5246
        %v5639 = vunpack.c.h.b16 %v5246
        %v5640 = vunpack.c.l.b16 %v5247
        %v5641 = vunpack.c.h.b16 %v5247
        %v5642 = vpack.c.b16 %v5390, %v5386
        %v5643 = vpack.c.b16 %v5391, %v5387
        %v5644 = vpack.c.b16 %v5392, %v5388
        %v5645 = vpack.c.b16 %v5393, %v5389
        %v5646 = vpack.c.b16 %v5398, %v5394
        %v5647 = vpack.c.b16 %v5399, %v5395
        %v5648 = vpack.c.b16 %v5400, %v5396
        %v5649 = vpack.c.b16 %v5401, %v5397
        %v5650 = vpack.c.b16 %v5406, %v5402
        %v5651 = vpack.c.b16 %v5407, %v5403
        %v5652 = vpack.c.b16 %v5408, %v5404
        %v5653 = vpack.c.b16 %v5409, %v5405
        %v5654 = vpack.c.b16 %v5414, %v5410
        %v5655 = vpack.c.b16 %v5415, %v5411
        %v5656 = vpack.c.b16 %v5416, %v5412
        %v5657 = vpack.c.b16 %v5417, %v5413
        %v5658 = vpack.c.b16 %v5422, %v5418
        %v5659 = vpack.c.b16 %v5423, %v5419
        %v5660 = vpack.c.b16 %v5424, %v5420
        %v5661 = vpack.c.b16 %v5425, %v5421
        %v5662 = vpack.c.b16 %v5430, %v5426
        %v5663 = vpack.c.b16 %v5431, %v5427
        %v5664 = vpack.c.b16 %v5432, %v5428
        %v5665 = vpack.c.b16 %v5433, %v5429
        %v5666 = vpack.c.b16 %v5438, %v5434
        %v5667 = vpack.c.b16 %v5439, %v5435
        %v5668 = vpack.c.b16 %v5440, %v5436
        %v5669 = vpack.c.b16 %v5441, %v5437
        %v5670 = vpack.c.b16 %v5446, %v5442
        %v5671 = vpack.c.b16 %v5447, %v5443
        %v5672 = vpack.c.b16 %v5448, %v5444
        %v5673 = vpack.c.b16 %v5449, %v5445
        %v5674 = vpack.c.b16 %v5454, %v5450
        %v5675 = vpack.c.b16 %v5455, %v5451
        %v5676 = vpack.c.b16 %v5456, %v5452
        %v5677 = vpack.c.b16 %v5457, %v5453
        %v5678 = vpack.c.b16 %v5462, %v5458
        %v5679 = vpack.c.b16 %v5463, %v5459
        %v5680 = vpack.c.b16 %v5464, %v5460
        %v5681 = vpack.c.b16 %v5465, %v5461
        %v5682 = vpack.c.b16 %v5470, %v5466
        %v5683 = vpack.c.b16 %v5471, %v5467
        %v5684 = vpack.c.b16 %v5472, %v5468
        %v5685 = vpack.c.b16 %v5473, %v5469
        %v5686 = vpack.c.b16 %v5478, %v5474
        %v5687 = vpack.c.b16 %v5479, %v5475
        %v5688 = vpack.c.b16 %v5480, %v5476
        %v5689 = vpack.c.b16 %v5481, %v5477
        %v5690 = vpack.c.b16 %v5486, %v5482
        %v5691 = vpack.c.b16 %v5487, %v5483
        %v5692 = vpack.c.b16 %v5488, %v5484
        %v5693 = vpack.c.b16 %v5489, %v5485
        %v5694 = vpack.c.b16 %v5494, %v5490
        %v5695 = vpack.c.b16 %v5495, %v5491
        %v5696 = vpack.c.b16 %v5496, %v5492
        %v5697 = vpack.c.b16 %v5497, %v5493
        %v5698 = vpack.c.b16 %v5502, %v5498
        %v5699 = vpack.c.b16 %v5503, %v5499
        %v5700 = vpack.c.b16 %v5504, %v5500
        %v5701 = vpack.c.b16 %v5505, %v5501
        %v5702 = vpack.c.b16 %v5510, %v5506
        %v5703 = vpack.c.b16 %v5511, %v5507
        %v5704 = vpack.c.b16 %v5512, %v5508
        %v5705 = vpack.c.b16 %v5513, %v5509
        %v5706 = vpack.c.b16 %v5518, %v5514
        %v5707 = vpack.c.b16 %v5519, %v5515
        %v5708 = vpack.c.b16 %v5520, %v5516
        %v5709 = vpack.c.b16 %v5521, %v5517
        %v5710 = vpack.c.b16 %v5526, %v5522
        %v5711 = vpack.c.b16 %v5527, %v5523
        %v5712 = vpack.c.b16 %v5528, %v5524
        %v5713 = vpack.c.b16 %v5529, %v5525
        %v5714 = vpack.c.b16 %v5534, %v5530
        %v5715 = vpack.c.b16 %v5535, %v5531
        %v5716 = vpack.c.b16 %v5536, %v5532
        %v5717 = vpack.c.b16 %v5537, %v5533
        %v5718 = vpack.c.b16 %v5542, %v5538
        %v5719 = vpack.c.b16 %v5543, %v5539
        %v5720 = vpack.c.b16 %v5544, %v5540
        %v5721 = vpack.c.b16 %v5545, %v5541
        %v5722 = vpack.c.b16 %v5550, %v5546
        %v5723 = vpack.c.b16 %v5551, %v5547
        %v5724 = vpack.c.b16 %v5552, %v5548
        %v5725 = vpack.c.b16 %v5553, %v5549
        %v5726 = vpack.c.b16 %v5558, %v5554
        %v5727 = vpack.c.b16 %v5559, %v5555
        %v5728 = vpack.c.b16 %v5560, %v5556
        %v5729 = vpack.c.b16 %v5561, %v5557
        %v5730 = vpack.c.b16 %v5566, %v5562
        %v5731 = vpack.c.b16 %v5567, %v5563
        %v5732 = vpack.c.b16 %v5568, %v5564
        %v5733 = vpack.c.b16 %v5569, %v5565
        %v5734 = vpack.c.b16 %v5574, %v5570
        %v5735 = vpack.c.b16 %v5575, %v5571
        %v5736 = vpack.c.b16 %v5576, %v5572
        %v5737 = vpack.c.b16 %v5577, %v5573
        %v5738 = vpack.c.b16 %v5582, %v5578
        %v5739 = vpack.c.b16 %v5583, %v5579
        %v5740 = vpack.c.b16 %v5584, %v5580
        %v5741 = vpack.c.b16 %v5585, %v5581
        %v5742 = vpack.c.b16 %v5590, %v5586
        %v5743 = vpack.c.b16 %v5591, %v5587
        %v5744 = vpack.c.b16 %v5592, %v5588
        %v5745 = vpack.c.b16 %v5593, %v5589
        %v5746 = vpack.c.b16 %v5598, %v5594
        %v5747 = vpack.c.b16 %v5599, %v5595
        %v5748 = vpack.c.b16 %v5600, %v5596
        %v5749 = vpack.c.b16 %v5601, %v5597
        %v5750 = vpack.c.b16 %v5606, %v5602
        %v5751 = vpack.c.b16 %v5607, %v5603
        %v5752 = vpack.c.b16 %v5608, %v5604
        %v5753 = vpack.c.b16 %v5609, %v5605
        %v5754 = vpack.c.b16 %v5614, %v5610
        %v5755 = vpack.c.b16 %v5615, %v5611
        %v5756 = vpack.c.b16 %v5616, %v5612
        %v5757 = vpack.c.b16 %v5617, %v5613
        %v5758 = vpack.c.b16 %v5622, %v5618
        %v5759 = vpack.c.b16 %v5623, %v5619
        %v5760 = vpack.c.b16 %v5624, %v5620
        %v5761 = vpack.c.b16 %v5625, %v5621
        %v5762 = vpack.c.b16 %v5630, %v5626
        %v5763 = vpack.c.b16 %v5631, %v5627
        %v5764 = vpack.c.b16 %v5632, %v5628
        %v5765 = vpack.c.b16 %v5633, %v5629
        %v5766 = vpack.c.b16 %v5638, %v5634
        %v5767 = vpack.c.b16 %v5639, %v5635
        %v5768 = vpack.c.b16 %v5640, %v5636
        %v5769 = vpack.c.b16 %v5641, %v5637
        %5898 = vmatpush.bf16.msra.mxu0 %v5670
        %5899 = vmatpush.bf16.msra.mxu0 %v5666
        %5900 = vmatpush.bf16.msra.mxu0 %v5662
        %5901 = vmatpush.bf16.msra.mxu0 %v5658
        %5902 = vmatpush.bf16.msra.mxu0 %v5654
        %5903 = vmatpush.bf16.msra.mxu0 %v5650
        %5904 = vmatpush.bf16.msra.mxu0 %v5646
        %5905 = vmatpush.bf16.msra.mxu0 %v5642
        %5906 = vmatmul.bf16.gmra.mxu0 %v5104
        %v5907 = vpop.f32.mrf.mxu0
        %v5908 = vadd.f32 %v5250, %v5907
        %v5909 = vpop.f32.mrf.mxu0
        %v5910 = vadd.f32 %v5250, %v5909
        %5911 = vmatmul.bf16.gmra.mxu0 %v5108
        %v5912 = vpop.f32.mrf.mxu0
        %v5913 = vadd.f32 %v5250, %v5912
        %v5914 = vpop.f32.mrf.mxu0
        %v5915 = vadd.f32 %v5250, %v5914
        %5916 = vmatmul.bf16.gmra.mxu0 %v5112
        %v5917 = vpop.f32.mrf.mxu0
        %v5918 = vadd.f32 %v5250, %v5917
        %v5919 = vpop.f32.mrf.mxu0
        %v5920 = vadd.f32 %v5250, %v5919
        %5921 = vmatmul.bf16.gmra.mxu0 %v5116
        %v5922 = vpop.f32.mrf.mxu0
        %v5923 = vadd.f32 %v5250, %v5922
        %v5924 = vpop.f32.mrf.mxu0
        %v5925 = vadd.f32 %v5250, %v5924
        %5926 = vdwg.mxu0
        %5927 = vmatpush.bf16.msra.mxu0 %v5702
        %5928 = vmatpush.bf16.msra.mxu0 %v5698
        %5929 = vmatpush.bf16.msra.mxu0 %v5694
        %5930 = vmatpush.bf16.msra.mxu0 %v5690
        %5931 = vmatpush.bf16.msra.mxu0 %v5686
        %5932 = vmatpush.bf16.msra.mxu0 %v5682
        %5933 = vmatpush.bf16.msra.mxu0 %v5678
        %5934 = vmatpush.bf16.msra.mxu0 %v5674
        %5935 = vmatmul.bf16.gmra.mxu0 %v5105
        %v5936 = vpop.f32.mrf.mxu0
        %v5937 = vadd.f32 %v5908, %v5936
        %v5938 = vpop.f32.mrf.mxu0
        %v5939 = vadd.f32 %v5910, %v5938
        %5940 = vmatmul.bf16.gmra.mxu0 %v5109
        %v5941 = vpop.f32.mrf.mxu0
        %v5942 = vadd.f32 %v5913, %v5941
        %v5943 = vpop.f32.mrf.mxu0
        %v5944 = vadd.f32 %v5915, %v5943
        %5945 = vmatmul.bf16.gmra.mxu0 %v5113
        %v5946 = vpop.f32.mrf.mxu0
        %v5947 = vadd.f32 %v5918, %v5946
        %v5948 = vpop.f32.mrf.mxu0
        %v5949 = vadd.f32 %v5920, %v5948
        %5950 = vmatmul.bf16.gmra.mxu0 %v5117
        %v5951 = vpop.f32.mrf.mxu0
        %v5952 = vadd.f32 %v5923, %v5951
        %v5953 = vpop.f32.mrf.mxu0
        %v5954 = vadd.f32 %v5925, %v5953
        %5955 = vdwg.mxu0
        %5956 = vmatpush.bf16.msra.mxu0 %v5734
        %5957 = vmatpush.bf16.msra.mxu0 %v5730
        %5958 = vmatpush.bf16.msra.mxu0 %v5726
        %5959 = vmatpush.bf16.msra.mxu0 %v5722
        %5960 = vmatpush.bf16.msra.mxu0 %v5718
        %5961 = vmatpush.bf16.msra.mxu0 %v5714
        %5962 = vmatpush.bf16.msra.mxu0 %v5710
        %5963 = vmatpush.bf16.msra.mxu0 %v5706
        %5964 = vmatmul.bf16.gmra.mxu0 %v5106
        %v5965 = vpop.f32.mrf.mxu0
        %v5966 = vadd.f32 %v5937, %v5965
        %v5967 = vpop.f32.mrf.mxu0
        %v5968 = vadd.f32 %v5939, %v5967
        %5969 = vmatmul.bf16.gmra.mxu0 %v5110
        %v5970 = vpop.f32.mrf.mxu0
        %v5971 = vadd.f32 %v5942, %v5970
        %v5972 = vpop.f32.mrf.mxu0
        %v5973 = vadd.f32 %v5944, %v5972
        %5974 = vmatmul.bf16.gmra.mxu0 %v5114
        %v5975 = vpop.f32.mrf.mxu0
        %v5976 = vadd.f32 %v5947, %v5975
        %v5977 = vpop.f32.mrf.mxu0
        %v5978 = vadd.f32 %v5949, %v5977
        %5979 = vmatmul.bf16.gmra.mxu0 %v5118
        %v5980 = vpop.f32.mrf.mxu0
        %v5981 = vadd.f32 %v5952, %v5980
        %v5982 = vpop.f32.mrf.mxu0
        %v5983 = vadd.f32 %v5954, %v5982
        %5984 = vdwg.mxu0
        %5985 = vmatpush.bf16.msra.mxu0 %v5766
        %5986 = vmatpush.bf16.msra.mxu0 %v5762
        %5987 = vmatpush.bf16.msra.mxu0 %v5758
        %5988 = vmatpush.bf16.msra.mxu0 %v5754
        %5989 = vmatpush.bf16.msra.mxu0 %v5750
        %5990 = vmatpush.bf16.msra.mxu0 %v5746
        %5991 = vmatpush.bf16.msra.mxu0 %v5742
        %5992 = vmatpush.bf16.msra.mxu0 %v5738
        %5993 = vmatmul.bf16.gmra.mxu0 %v5107
        %v5994 = vpop.f32.mrf.mxu0
        %v5995 = vadd.f32 %v5966, %v5994
        %v5996 = vpop.f32.mrf.mxu0
        %v5997 = vadd.f32 %v5968, %v5996
        %5998 = vmatmul.bf16.gmra.mxu0 %v5111
        %v5999 = vpop.f32.mrf.mxu0
        %v6000 = vadd.f32 %v5971, %v5999
        %v6001 = vpop.f32.mrf.mxu0
        %v6002 = vadd.f32 %v5973, %v6001
        %6003 = vmatmul.bf16.gmra.mxu0 %v5115
        %v6004 = vpop.f32.mrf.mxu0
        %v6005 = vadd.f32 %v5976, %v6004
        %v6006 = vpop.f32.mrf.mxu0
        %v6007 = vadd.f32 %v5978, %v6006
        %6008 = vmatmul.bf16.gmra.mxu0 %v5119
        %v6009 = vpop.f32.mrf.mxu0
        %v6010 = vadd.f32 %v5981, %v6009
        %v6011 = vpop.f32.mrf.mxu0
        %v6012 = vadd.f32 %v5983, %v6011
        %6013 = vdwg.mxu0
        %6014 = vmatpush.bf16.msra.mxu0 %v5671
        %6015 = vmatpush.bf16.msra.mxu0 %v5667
        %6016 = vmatpush.bf16.msra.mxu0 %v5663
        %6017 = vmatpush.bf16.msra.mxu0 %v5659
        %6018 = vmatpush.bf16.msra.mxu0 %v5655
        %6019 = vmatpush.bf16.msra.mxu0 %v5651
        %6020 = vmatpush.bf16.msra.mxu0 %v5647
        %6021 = vmatpush.bf16.msra.mxu0 %v5643
        %6022 = vmatmul.bf16.gmra.mxu0 %v5104
        %v6023 = vpop.f32.mrf.mxu0
        %v6024 = vadd.f32 %v5251, %v6023
        %v6025 = vpop.f32.mrf.mxu0
        %v6026 = vadd.f32 %v5251, %v6025
        %6027 = vmatmul.bf16.gmra.mxu0 %v5108
        %v6028 = vpop.f32.mrf.mxu0
        %v6029 = vadd.f32 %v5251, %v6028
        %v6030 = vpop.f32.mrf.mxu0
        %v6031 = vadd.f32 %v5251, %v6030
        %6032 = vmatmul.bf16.gmra.mxu0 %v5112
        %v6033 = vpop.f32.mrf.mxu0
        %v6034 = vadd.f32 %v5251, %v6033
        %v6035 = vpop.f32.mrf.mxu0
        %v6036 = vadd.f32 %v5251, %v6035
        %6037 = vmatmul.bf16.gmra.mxu0 %v5116
        %v6038 = vpop.f32.mrf.mxu0
        %v6039 = vadd.f32 %v5251, %v6038
        %v6040 = vpop.f32.mrf.mxu0
        %v6041 = vadd.f32 %v5251, %v6040
        %6042 = vdwg.mxu0
        %6043 = vmatpush.bf16.msra.mxu0 %v5703
        %6044 = vmatpush.bf16.msra.mxu0 %v5699
        %6045 = vmatpush.bf16.msra.mxu0 %v5695
        %6046 = vmatpush.bf16.msra.mxu0 %v5691
        %6047 = vmatpush.bf16.msra.mxu0 %v5687
        %6048 = vmatpush.bf16.msra.mxu0 %v5683
        %6049 = vmatpush.bf16.msra.mxu0 %v5679
        %6050 = vmatpush.bf16.msra.mxu0 %v5675
        %6051 = vmatmul.bf16.gmra.mxu0 %v5105
        %v6052 = vpop.f32.mrf.mxu0
        %v6053 = vadd.f32 %v6024, %v6052
        %v6054 = vpop.f32.mrf.mxu0
        %v6055 = vadd.f32 %v6026, %v6054
        %6056 = vmatmul.bf16.gmra.mxu0 %v5109
        %v6057 = vpop.f32.mrf.mxu0
        %v6058 = vadd.f32 %v6029, %v6057
        %v6059 = vpop.f32.mrf.mxu0
        %v6060 = vadd.f32 %v6031, %v6059
        %6061 = vmatmul.bf16.gmra.mxu0 %v5113
        %v6062 = vpop.f32.mrf.mxu0
        %v6063 = vadd.f32 %v6034, %v6062
        %v6064 = vpop.f32.mrf.mxu0
        %v6065 = vadd.f32 %v6036, %v6064
        %6066 = vmatmul.bf16.gmra.mxu0 %v5117
        %v6067 = vpop.f32.mrf.mxu0
        %v6068 = vadd.f32 %v6039, %v6067
        %v6069 = vpop.f32.mrf.mxu0
        %v6070 = vadd.f32 %v6041, %v6069
        %6071 = vdwg.mxu0
        %6072 = vmatpush.bf16.msra.mxu0 %v5735
        %6073 = vmatpush.bf16.msra.mxu0 %v5731
        %6074 = vmatpush.bf16.msra.mxu0 %v5727
        %6075 = vmatpush.bf16.msra.mxu0 %v5723
        %6076 = vmatpush.bf16.msra.mxu0 %v5719
        %6077 = vmatpush.bf16.msra.mxu0 %v5715
        %6078 = vmatpush.bf16.msra.mxu0 %v5711
        %6079 = vmatpush.bf16.msra.mxu0 %v5707
        %6080 = vmatmul.bf16.gmra.mxu0 %v5106
        %v6081 = vpop.f32.mrf.mxu0
        %v6082 = vadd.f32 %v6053, %v6081
        %v6083 = vpop.f32.mrf.mxu0
        %v6084 = vadd.f32 %v6055, %v6083
        %6085 = vmatmul.bf16.gmra.mxu0 %v5110
        %v6086 = vpop.f32.mrf.mxu0
        %v6087 = vadd.f32 %v6058, %v6086
        %v6088 = vpop.f32.mrf.mxu0
        %v6089 = vadd.f32 %v6060, %v6088
        %6090 = vmatmul.bf16.gmra.mxu0 %v5114
        %v6091 = vpop.f32.mrf.mxu0
        %v6092 = vadd.f32 %v6063, %v6091
        %v6093 = vpop.f32.mrf.mxu0
        %v6094 = vadd.f32 %v6065, %v6093
        %6095 = vmatmul.bf16.gmra.mxu0 %v5118
        %v6096 = vpop.f32.mrf.mxu0
        %v6097 = vadd.f32 %v6068, %v6096
        %v6098 = vpop.f32.mrf.mxu0
        %v6099 = vadd.f32 %v6070, %v6098
        %6100 = vdwg.mxu0
        %6101 = vmatpush.bf16.msra.mxu0 %v5767
        %6102 = vmatpush.bf16.msra.mxu0 %v5763
        %6103 = vmatpush.bf16.msra.mxu0 %v5759
        %6104 = vmatpush.bf16.msra.mxu0 %v5755
        %6105 = vmatpush.bf16.msra.mxu0 %v5751
        %6106 = vmatpush.bf16.msra.mxu0 %v5747
        %6107 = vmatpush.bf16.msra.mxu0 %v5743
        %6108 = vmatpush.bf16.msra.mxu0 %v5739
        %6109 = vmatmul.bf16.gmra.mxu0 %v5107
        %v6110 = vpop.f32.mrf.mxu0
        %v6111 = vadd.f32 %v6082, %v6110
        %v6112 = vpop.f32.mrf.mxu0
        %v6113 = vadd.f32 %v6084, %v6112
        %6114 = vmatmul.bf16.gmra.mxu0 %v5111
        %v6115 = vpop.f32.mrf.mxu0
        %v6116 = vadd.f32 %v6087, %v6115
        %v6117 = vpop.f32.mrf.mxu0
        %v6118 = vadd.f32 %v6089, %v6117
        %6119 = vmatmul.bf16.gmra.mxu0 %v5115
        %v6120 = vpop.f32.mrf.mxu0
        %v6121 = vadd.f32 %v6092, %v6120
        %v6122 = vpop.f32.mrf.mxu0
        %v6123 = vadd.f32 %v6094, %v6122
        %6124 = vmatmul.bf16.gmra.mxu0 %v5119
        %v6125 = vpop.f32.mrf.mxu0
        %v6126 = vadd.f32 %v6097, %v6125
        %v6127 = vpop.f32.mrf.mxu0
        %v6128 = vadd.f32 %v6099, %v6127
        %6129 = vdwg.mxu0
        %6130 = vmatpush.bf16.msra.mxu0 %v5672
        %6131 = vmatpush.bf16.msra.mxu0 %v5668
        %6132 = vmatpush.bf16.msra.mxu0 %v5664
        %6133 = vmatpush.bf16.msra.mxu0 %v5660
        %6134 = vmatpush.bf16.msra.mxu0 %v5656
        %6135 = vmatpush.bf16.msra.mxu0 %v5652
        %6136 = vmatpush.bf16.msra.mxu0 %v5648
        %6137 = vmatpush.bf16.msra.mxu0 %v5644
        %6138 = vmatmul.bf16.gmra.mxu0 %v5104
        %v6139 = vpop.f32.mrf.mxu0
        %v6140 = vadd.f32 %v5252, %v6139
        %v6141 = vpop.f32.mrf.mxu0
        %v6142 = vadd.f32 %v5252, %v6141
        %6143 = vmatmul.bf16.gmra.mxu0 %v5108
        %v6144 = vpop.f32.mrf.mxu0
        %v6145 = vadd.f32 %v5252, %v6144
        %v6146 = vpop.f32.mrf.mxu0
        %v6147 = vadd.f32 %v5252, %v6146
        %6148 = vmatmul.bf16.gmra.mxu0 %v5112
        %v6149 = vpop.f32.mrf.mxu0
        %v6150 = vadd.f32 %v5252, %v6149
        %v6151 = vpop.f32.mrf.mxu0
        %v6152 = vadd.f32 %v5252, %v6151
        %6153 = vmatmul.bf16.gmra.mxu0 %v5116
        %v6154 = vpop.f32.mrf.mxu0
        %v6155 = vadd.f32 %v5252, %v6154
        %v6156 = vpop.f32.mrf.mxu0
        %v6157 = vadd.f32 %v5252, %v6156
        %6158 = vdwg.mxu0
        %6159 = vmatpush.bf16.msra.mxu0 %v5704
        %6160 = vmatpush.bf16.msra.mxu0 %v5700
        %6161 = vmatpush.bf16.msra.mxu0 %v5696
        %6162 = vmatpush.bf16.msra.mxu0 %v5692
        %6163 = vmatpush.bf16.msra.mxu0 %v5688
        %6164 = vmatpush.bf16.msra.mxu0 %v5684
        %6165 = vmatpush.bf16.msra.mxu0 %v5680
        %6166 = vmatpush.bf16.msra.mxu0 %v5676
        %6167 = vmatmul.bf16.gmra.mxu0 %v5105
        %v6168 = vpop.f32.mrf.mxu0
        %v6169 = vadd.f32 %v6140, %v6168
        %v6170 = vpop.f32.mrf.mxu0
        %v6171 = vadd.f32 %v6142, %v6170
        %6172 = vmatmul.bf16.gmra.mxu0 %v5109
        %v6173 = vpop.f32.mrf.mxu0
        %v6174 = vadd.f32 %v6145, %v6173
        %v6175 = vpop.f32.mrf.mxu0
        %v6176 = vadd.f32 %v6147, %v6175
        %6177 = vmatmul.bf16.gmra.mxu0 %v5113
        %v6178 = vpop.f32.mrf.mxu0
        %v6179 = vadd.f32 %v6150, %v6178
        %v6180 = vpop.f32.mrf.mxu0
        %v6181 = vadd.f32 %v6152, %v6180
        %6182 = vmatmul.bf16.gmra.mxu0 %v5117
        %v6183 = vpop.f32.mrf.mxu0
        %v6184 = vadd.f32 %v6155, %v6183
        %v6185 = vpop.f32.mrf.mxu0
        %v6186 = vadd.f32 %v6157, %v6185
        %6187 = vdwg.mxu0
        %6188 = vmatpush.bf16.msra.mxu0 %v5736
        %6189 = vmatpush.bf16.msra.mxu0 %v5732
        %6190 = vmatpush.bf16.msra.mxu0 %v5728
        %6191 = vmatpush.bf16.msra.mxu0 %v5724
        %6192 = vmatpush.bf16.msra.mxu0 %v5720
        %6193 = vmatpush.bf16.msra.mxu0 %v5716
        %6194 = vmatpush.bf16.msra.mxu0 %v5712
        %6195 = vmatpush.bf16.msra.mxu0 %v5708
        %6196 = vmatmul.bf16.gmra.mxu0 %v5106
        %v6197 = vpop.f32.mrf.mxu0
        %v6198 = vadd.f32 %v6169, %v6197
        %v6199 = vpop.f32.mrf.mxu0
        %v6200 = vadd.f32 %v6171, %v6199
        %6201 = vmatmul.bf16.gmra.mxu0 %v5110
        %v6202 = vpop.f32.mrf.mxu0
        %v6203 = vadd.f32 %v6174, %v6202
        %v6204 = vpop.f32.mrf.mxu0
        %v6205 = vadd.f32 %v6176, %v6204
        %6206 = vmatmul.bf16.gmra.mxu0 %v5114
        %v6207 = vpop.f32.mrf.mxu0
        %v6208 = vadd.f32 %v6179, %v6207
        %v6209 = vpop.f32.mrf.mxu0
        %v6210 = vadd.f32 %v6181, %v6209
        %6211 = vmatmul.bf16.gmra.mxu0 %v5118
        %v6212 = vpop.f32.mrf.mxu0
        %v6213 = vadd.f32 %v6184, %v6212
        %v6214 = vpop.f32.mrf.mxu0
        %v6215 = vadd.f32 %v6186, %v6214
        %6216 = vdwg.mxu0
        %6217 = vmatpush.bf16.msra.mxu0 %v5768
        %6218 = vmatpush.bf16.msra.mxu0 %v5764
        %6219 = vmatpush.bf16.msra.mxu0 %v5760
        %6220 = vmatpush.bf16.msra.mxu0 %v5756
        %6221 = vmatpush.bf16.msra.mxu0 %v5752
        %6222 = vmatpush.bf16.msra.mxu0 %v5748
        %6223 = vmatpush.bf16.msra.mxu0 %v5744
        %6224 = vmatpush.bf16.msra.mxu0 %v5740
        %6225 = vmatmul.bf16.gmra.mxu0 %v5107
        %v6226 = vpop.f32.mrf.mxu0
        %v6227 = vadd.f32 %v6198, %v6226
        %v6228 = vpop.f32.mrf.mxu0
        %v6229 = vadd.f32 %v6200, %v6228
        %6230 = vmatmul.bf16.gmra.mxu0 %v5111
        %v6231 = vpop.f32.mrf.mxu0
        %v6232 = vadd.f32 %v6203, %v6231
        %v6233 = vpop.f32.mrf.mxu0
        %v6234 = vadd.f32 %v6205, %v6233
        %6235 = vmatmul.bf16.gmra.mxu0 %v5115
        %v6236 = vpop.f32.mrf.mxu0
        %v6237 = vadd.f32 %v6208, %v6236
        %v6238 = vpop.f32.mrf.mxu0
        %v6239 = vadd.f32 %v6210, %v6238
        %6240 = vmatmul.bf16.gmra.mxu0 %v5119
        %v6241 = vpop.f32.mrf.mxu0
        %v6242 = vadd.f32 %v6213, %v6241
        %v6243 = vpop.f32.mrf.mxu0
        %v6244 = vadd.f32 %v6215, %v6243
        %6245 = vdwg.mxu0
        %6246 = vmatpush.bf16.msra.mxu0 %v5673
        %6247 = vmatpush.bf16.msra.mxu0 %v5669
        %6248 = vmatpush.bf16.msra.mxu0 %v5665
        %6249 = vmatpush.bf16.msra.mxu0 %v5661
        %6250 = vmatpush.bf16.msra.mxu0 %v5657
        %6251 = vmatpush.bf16.msra.mxu0 %v5653
        %6252 = vmatpush.bf16.msra.mxu0 %v5649
        %6253 = vmatpush.bf16.msra.mxu0 %v5645
        %6254 = vmatmul.bf16.gmra.mxu0 %v5104
        %v6255 = vpop.f32.mrf.mxu0
        %v6256 = vadd.f32 %v5253, %v6255
        %v6257 = vpop.f32.mrf.mxu0
        %v6258 = vadd.f32 %v5253, %v6257
        %6259 = vmatmul.bf16.gmra.mxu0 %v5108
        %v6260 = vpop.f32.mrf.mxu0
        %v6261 = vadd.f32 %v5253, %v6260
        %v6262 = vpop.f32.mrf.mxu0
        %v6263 = vadd.f32 %v5253, %v6262
        %6264 = vmatmul.bf16.gmra.mxu0 %v5112
        %v6265 = vpop.f32.mrf.mxu0
        %v6266 = vadd.f32 %v5253, %v6265
        %v6267 = vpop.f32.mrf.mxu0
        %v6268 = vadd.f32 %v5253, %v6267
        %6269 = vmatmul.bf16.gmra.mxu0 %v5116
        %v6270 = vpop.f32.mrf.mxu0
        %v6271 = vadd.f32 %v5253, %v6270
        %v6272 = vpop.f32.mrf.mxu0
        %v6273 = vadd.f32 %v5253, %v6272
        %6274 = vdwg.mxu0
        %6275 = vmatpush.bf16.msra.mxu0 %v5705
        %6276 = vmatpush.bf16.msra.mxu0 %v5701
        %6277 = vmatpush.bf16.msra.mxu0 %v5697
        %6278 = vmatpush.bf16.msra.mxu0 %v5693
        %6279 = vmatpush.bf16.msra.mxu0 %v5689
        %6280 = vmatpush.bf16.msra.mxu0 %v5685
        %6281 = vmatpush.bf16.msra.mxu0 %v5681
        %6282 = vmatpush.bf16.msra.mxu0 %v5677
        %6283 = vmatmul.bf16.gmra.mxu0 %v5105
        %v6284 = vpop.f32.mrf.mxu0
        %v6285 = vadd.f32 %v6256, %v6284
        %v6286 = vpop.f32.mrf.mxu0
        %v6287 = vadd.f32 %v6258, %v6286
        %6288 = vmatmul.bf16.gmra.mxu0 %v5109
        %v6289 = vpop.f32.mrf.mxu0
        %v6290 = vadd.f32 %v6261, %v6289
        %v6291 = vpop.f32.mrf.mxu0
        %v6292 = vadd.f32 %v6263, %v6291
        %6293 = vmatmul.bf16.gmra.mxu0 %v5113
        %v6294 = vpop.f32.mrf.mxu0
        %v6295 = vadd.f32 %v6266, %v6294
        %v6296 = vpop.f32.mrf.mxu0
        %v6297 = vadd.f32 %v6268, %v6296
        %6298 = vmatmul.bf16.gmra.mxu0 %v5117
        %v6299 = vpop.f32.mrf.mxu0
        %v6300 = vadd.f32 %v6271, %v6299
        %v6301 = vpop.f32.mrf.mxu0
        %v6302 = vadd.f32 %v6273, %v6301
        %6303 = vdwg.mxu0
        %6304 = vmatpush.bf16.msra.mxu0 %v5737
        %6305 = vmatpush.bf16.msra.mxu0 %v5733
        %6306 = vmatpush.bf16.msra.mxu0 %v5729
        %6307 = vmatpush.bf16.msra.mxu0 %v5725
        %6308 = vmatpush.bf16.msra.mxu0 %v5721
        %6309 = vmatpush.bf16.msra.mxu0 %v5717
        %6310 = vmatpush.bf16.msra.mxu0 %v5713
        %6311 = vmatpush.bf16.msra.mxu0 %v5709
        %6312 = vmatmul.bf16.gmra.mxu0 %v5106
        %v6313 = vpop.f32.mrf.mxu0
        %v6314 = vadd.f32 %v6285, %v6313
        %v6315 = vpop.f32.mrf.mxu0
        %v6316 = vadd.f32 %v6287, %v6315
        %6317 = vmatmul.bf16.gmra.mxu0 %v5110
        %v6318 = vpop.f32.mrf.mxu0
        %v6319 = vadd.f32 %v6290, %v6318
        %v6320 = vpop.f32.mrf.mxu0
        %v6321 = vadd.f32 %v6292, %v6320
        %6322 = vmatmul.bf16.gmra.mxu0 %v5114
        %v6323 = vpop.f32.mrf.mxu0
        %v6324 = vadd.f32 %v6295, %v6323
        %v6325 = vpop.f32.mrf.mxu0
        %v6326 = vadd.f32 %v6297, %v6325
        %6327 = vmatmul.bf16.gmra.mxu0 %v5118
        %v6328 = vpop.f32.mrf.mxu0
        %v6329 = vadd.f32 %v6300, %v6328
        %v6330 = vpop.f32.mrf.mxu0
        %v6331 = vadd.f32 %v6302, %v6330
        %6332 = vdwg.mxu0
        %6333 = vmatpush.bf16.msra.mxu0 %v5769
        %6334 = vmatpush.bf16.msra.mxu0 %v5765
        %6335 = vmatpush.bf16.msra.mxu0 %v5761
        %6336 = vmatpush.bf16.msra.mxu0 %v5757
        %6337 = vmatpush.bf16.msra.mxu0 %v5753
        %6338 = vmatpush.bf16.msra.mxu0 %v5749
        %6339 = vmatpush.bf16.msra.mxu0 %v5745
        %6340 = vmatpush.bf16.msra.mxu0 %v5741
        %6341 = vmatmul.bf16.gmra.mxu0 %v5107
        %v6342 = vpop.f32.mrf.mxu0
        %v6343 = vadd.f32 %v6314, %v6342
        %v6344 = vpop.f32.mrf.mxu0
        %v6345 = vadd.f32 %v6316, %v6344
        %6346 = vmatmul.bf16.gmra.mxu0 %v5111
        %v6347 = vpop.f32.mrf.mxu0
        %v6348 = vadd.f32 %v6319, %v6347
        %v6349 = vpop.f32.mrf.mxu0
        %v6350 = vadd.f32 %v6321, %v6349
        %6351 = vmatmul.bf16.gmra.mxu0 %v5115
        %v6352 = vpop.f32.mrf.mxu0
        %v6353 = vadd.f32 %v6324, %v6352
        %v6354 = vpop.f32.mrf.mxu0
        %v6355 = vadd.f32 %v6326, %v6354
        %6356 = vmatmul.bf16.gmra.mxu0 %v5119
        %v6357 = vpop.f32.mrf.mxu0
        %v6358 = vadd.f32 %v6329, %v6357
        %v6359 = vpop.f32.mrf.mxu0
        %v6360 = vadd.f32 %v6331, %v6359
        %6361 = vdwg.mxu0
        %v6362 = vmax.f32 %v5995, 0.0
        %v6363 = vmax.f32 %v6111, 0.0
        %v6364 = vmax.f32 %v6227, 0.0
        %v6365 = vmax.f32 %v6343, 0.0
        %v6366 = vmax.f32 %v5997, 0.0
        %v6367 = vmax.f32 %v6113, 0.0
        %v6368 = vmax.f32 %v6229, 0.0
        %v6369 = vmax.f32 %v6345, 0.0
        %v6370 = vmax.f32 %v6000, 0.0
        %v6371 = vmax.f32 %v6116, 0.0
        %v6372 = vmax.f32 %v6232, 0.0
        %v6373 = vmax.f32 %v6348, 0.0
        %v6374 = vmax.f32 %v6002, 0.0
        %v6375 = vmax.f32 %v6118, 0.0
        %v6376 = vmax.f32 %v6234, 0.0
        %v6377 = vmax.f32 %v6350, 0.0
        %v6378 = vmax.f32 %v6005, 0.0
        %v6379 = vmax.f32 %v6121, 0.0
        %v6380 = vmax.f32 %v6237, 0.0
        %v6381 = vmax.f32 %v6353, 0.0
        %v6382 = vmax.f32 %v6007, 0.0
        %v6383 = vmax.f32 %v6123, 0.0
        %v6384 = vmax.f32 %v6239, 0.0
        %v6385 = vmax.f32 %v6355, 0.0
        %v6386 = vmax.f32 %v6010, 0.0
        %v6387 = vmax.f32 %v6126, 0.0
        %v6388 = vmax.f32 %v6242, 0.0
        %v6389 = vmax.f32 %v6358, 0.0
        %v6390 = vmax.f32 %v6012, 0.0
        %v6391 = vmax.f32 %v6128, 0.0
        %v6392 = vmax.f32 %v6244, 0.0
        %v6393 = vmax.f32 %v6360, 0.0
        %v6394 = vpack.c.bf16 %v6366, %v6362
        %v6395 = vpack.c.bf16 %v6367, %v6363
        %v6396 = vpack.c.bf16 %v6368, %v6364
        %v6397 = vpack.c.bf16 %v6369, %v6365
        %v6398 = vpack.c.bf16 %v6374, %v6370
        %v6399 = vpack.c.bf16 %v6375, %v6371
        %v6400 = vpack.c.bf16 %v6376, %v6372
        %v6401 = vpack.c.bf16 %v6377, %v6373
        %v6402 = vpack.c.bf16 %v6382, %v6378
        %v6403 = vpack.c.bf16 %v6383, %v6379
        %v6404 = vpack.c.bf16 %v6384, %v6380
        %v6405 = vpack.c.bf16 %v6385, %v6381
        %v6406 = vpack.c.bf16 %v6390, %v6386
        %v6407 = vpack.c.bf16 %v6391, %v6387
        %v6408 = vpack.c.bf16 %v6392, %v6388
        %v6409 = vpack.c.bf16 %v6393, %v6389
        %v6410 = vld [vmem:[%s13] sm:$0xf]
        %v6411 = vld [vmem:[%s13 + $0x4] sm:$0xf]
        %v6412 = vld [vmem:[%s13 + $0x8] sm:$0xf]
        %v6413 = vld [vmem:[%s13 + $0xc] sm:$0xf]
        %v6414 = vld [vmem:[%s13 + $0x10] sm:$0xf]
        %v6415 = vld [vmem:[%s13 + $0x14] sm:$0xf]
        %v6416 = vld [vmem:[%s13 + $0x18] sm:$0xf]
        %v6417 = vld [vmem:[%s13 + $0x1c] sm:$0xf]
        %v6418 = vld [vmem:[%s13 + $0x20] sm:$0xf]
        %v6419 = vld [vmem:[%s13 + $0x24] sm:$0xf]
        %v6420 = vld [vmem:[%s13 + $0x28] sm:$0xf]
        %v6421 = vld [vmem:[%s13 + $0x2c] sm:$0xf]
        %v6422 = vld [vmem:[%s13 + $0x30] sm:$0xf]
        %v6423 = vld [vmem:[%s13 + $0x34] sm:$0xf]
        %v6424 = vld [vmem:[%s13 + $0x38] sm:$0xf]
        %v6425 = vld [vmem:[%s13 + $0x3c] sm:$0xf]
        %v6426 = vld [vmem:[%s13 + $0x40] sm:$0xf]
        %v6427 = vld [vmem:[%s13 + $0x44] sm:$0xf]
        %v6428 = vld [vmem:[%s13 + $0x48] sm:$0xf]
        %v6429 = vld [vmem:[%s13 + $0x4c] sm:$0xf]
        %v6430 = vld [vmem:[%s13 + $0x50] sm:$0xf]
        %v6431 = vld [vmem:[%s13 + $0x54] sm:$0xf]
        %v6432 = vld [vmem:[%s13 + $0x58] sm:$0xf]
        %v6433 = vld [vmem:[%s13 + $0x5c] sm:$0xf]
        %v6434 = vld [vmem:[%s13 + $0x60] sm:$0xf]
        %v6435 = vld [vmem:[%s13 + $0x64] sm:$0xf]
        %v6436 = vld [vmem:[%s13 + $0x68] sm:$0xf]
        %v6437 = vld [vmem:[%s13 + $0x6c] sm:$0xf]
        %v6438 = vld [vmem:[%s13 + $0x70] sm:$0xf]
        %v6439 = vld [vmem:[%s13 + $0x74] sm:$0xf]
        %v6440 = vld [vmem:[%s13 + $0x78] sm:$0xf]
        %v6441 = vld [vmem:[%s13 + $0x7c] sm:$0xf]
        %v6442 = vld [vmem:[%s13 + $0x80] sm:$0xf]
        %v6443 = vld [vmem:[%s13 + $0x84] sm:$0xf]
        %v6444 = vld [vmem:[%s13 + $0x88] sm:$0xf]
        %v6445 = vld [vmem:[%s13 + $0x8c] sm:$0xf]
        %v6446 = vld [vmem:[%s13 + $0x90] sm:$0xf]
        %v6447 = vld [vmem:[%s13 + $0x94] sm:$0xf]
        %v6448 = vld [vmem:[%s13 + $0x98] sm:$0xf]
        %v6449 = vld [vmem:[%s13 + $0x9c] sm:$0xf]
        %v6450 = vld [vmem:[%s13 + $0xa0] sm:$0xf]
        %v6451 = vld [vmem:[%s13 + $0xa4] sm:$0xf]
        %v6452 = vld [vmem:[%s13 + $0xa8] sm:$0xf]
        %v6453 = vld [vmem:[%s13 + $0xac] sm:$0xf]
        %v6454 = vld [vmem:[%s13 + $0xb0] sm:$0xf]
        %v6455 = vld [vmem:[%s13 + $0xb4] sm:$0xf]
        %v6456 = vld [vmem:[%s13 + $0xb8] sm:$0xf]
        %v6457 = vld [vmem:[%s13 + $0xbc] sm:$0xf]
        %v6458 = vld [vmem:[%s13 + $0xc0] sm:$0xf]
        %v6459 = vld [vmem:[%s13 + $0xc4] sm:$0xf]
        %v6460 = vld [vmem:[%s13 + $0xc8] sm:$0xf]
        %v6461 = vld [vmem:[%s13 + $0xcc] sm:$0xf]
        %v6462 = vld [vmem:[%s13 + $0xd0] sm:$0xf]
        %v6463 = vld [vmem:[%s13 + $0xd4] sm:$0xf]
        %v6464 = vld [vmem:[%s13 + $0xd8] sm:$0xf]
        %v6465 = vld [vmem:[%s13 + $0xdc] sm:$0xf]
        %v6466 = vld [vmem:[%s13 + $0xe0] sm:$0xf]
        %v6467 = vld [vmem:[%s13 + $0xe4] sm:$0xf]
        %v6468 = vld [vmem:[%s13 + $0xe8] sm:$0xf]
        %v6469 = vld [vmem:[%s13 + $0xec] sm:$0xf]
        %v6470 = vld [vmem:[%s13 + $0xf0] sm:$0xf]
        %v6471 = vld [vmem:[%s13 + $0xf4] sm:$0xf]
        %v6472 = vld [vmem:[%s13 + $0xf8] sm:$0xf]
        %v6473 = vld [vmem:[%s13 + $0xfc] sm:$0xf]
        %v6474 = vld [vmem:[%s14] sm:$0x1]
        %v6476 = vperm.slane %v6474, 0
        %v6542 = vunpack.c.l.b16 %v6410
        %v6543 = vunpack.c.l.b16 %v6411
        %v6544 = vunpack.c.l.b16 %v6412
        %v6545 = vunpack.c.l.b16 %v6413
        %v6546 = vunpack.c.l.b16 %v6414
        %v6547 = vunpack.c.l.b16 %v6415
        %v6548 = vunpack.c.l.b16 %v6416
        %v6549 = vunpack.c.l.b16 %v6417
        %v6550 = vunpack.c.l.b16 %v6418
        %v6551 = vunpack.c.l.b16 %v6419
        %v6552 = vunpack.c.l.b16 %v6420
        %v6553 = vunpack.c.l.b16 %v6421
        %v6554 = vunpack.c.l.b16 %v6422
        %v6555 = vunpack.c.l.b16 %v6423
        %v6556 = vunpack.c.l.b16 %v6424
        %v6557 = vunpack.c.l.b16 %v6425
        %v6558 = vunpack.c.l.b16 %v6426
        %v6559 = vunpack.c.l.b16 %v6427
        %v6560 = vunpack.c.l.b16 %v6428
        %v6561 = vunpack.c.l.b16 %v6429
        %v6562 = vunpack.c.l.b16 %v6430
        %v6563 = vunpack.c.l.b16 %v6431
        %v6564 = vunpack.c.l.b16 %v6432
        %v6565 = vunpack.c.l.b16 %v6433
        %v6566 = vunpack.c.l.b16 %v6434
        %v6567 = vunpack.c.l.b16 %v6435
        %v6568 = vunpack.c.l.b16 %v6436
        %v6569 = vunpack.c.l.b16 %v6437
        %v6570 = vunpack.c.l.b16 %v6438
        %v6571 = vunpack.c.l.b16 %v6439
        %v6572 = vunpack.c.l.b16 %v6440
        %v6573 = vunpack.c.l.b16 %v6441
        %v6574 = vunpack.c.l.b16 %v6442
        %v6575 = vunpack.c.l.b16 %v6443
        %v6576 = vunpack.c.l.b16 %v6444
        %v6577 = vunpack.c.l.b16 %v6445
        %v6578 = vunpack.c.l.b16 %v6446
        %v6579 = vunpack.c.l.b16 %v6447
        %v6580 = vunpack.c.l.b16 %v6448
        %v6581 = vunpack.c.l.b16 %v6449
        %v6582 = vunpack.c.l.b16 %v6450
        %v6583 = vunpack.c.l.b16 %v6451
        %v6584 = vunpack.c.l.b16 %v6452
        %v6585 = vunpack.c.l.b16 %v6453
        %v6586 = vunpack.c.l.b16 %v6454
        %v6587 = vunpack.c.l.b16 %v6455
        %v6588 = vunpack.c.l.b16 %v6456
        %v6589 = vunpack.c.l.b16 %v6457
        %v6590 = vunpack.c.l.b16 %v6458
        %v6591 = vunpack.c.l.b16 %v6459
        %v6592 = vunpack.c.l.b16 %v6460
        %v6593 = vunpack.c.l.b16 %v6461
        %v6594 = vunpack.c.l.b16 %v6462
        %v6595 = vunpack.c.l.b16 %v6463
        %v6596 = vunpack.c.l.b16 %v6464
        %v6597 = vunpack.c.l.b16 %v6465
        %v6598 = vunpack.c.l.b16 %v6466
        %v6599 = vunpack.c.l.b16 %v6467
        %v6600 = vunpack.c.l.b16 %v6468
        %v6601 = vunpack.c.l.b16 %v6469
        %v6602 = vunpack.c.l.b16 %v6470
        %v6603 = vunpack.c.l.b16 %v6471
        %v6604 = vunpack.c.l.b16 %v6472
        %v6605 = vunpack.c.l.b16 %v6473
        %v6606 = vpack.c.b16 %v6543, %v6542
        %v6607 = vpack.c.b16 %v6545, %v6544
        %v6608 = vpack.c.b16 %v6547, %v6546
        %v6609 = vpack.c.b16 %v6549, %v6548
        %v6610 = vpack.c.b16 %v6551, %v6550
        %v6611 = vpack.c.b16 %v6553, %v6552
        %v6612 = vpack.c.b16 %v6555, %v6554
        %v6613 = vpack.c.b16 %v6557, %v6556
        %v6614 = vpack.c.b16 %v6559, %v6558
        %v6615 = vpack.c.b16 %v6561, %v6560
        %v6616 = vpack.c.b16 %v6563, %v6562
        %v6617 = vpack.c.b16 %v6565, %v6564
        %v6618 = vpack.c.b16 %v6567, %v6566
        %v6619 = vpack.c.b16 %v6569, %v6568
        %v6620 = vpack.c.b16 %v6571, %v6570
        %v6621 = vpack.c.b16 %v6573, %v6572
        %v6622 = vpack.c.b16 %v6575, %v6574
        %v6623 = vpack.c.b16 %v6577, %v6576
        %v6624 = vpack.c.b16 %v6579, %v6578
        %v6625 = vpack.c.b16 %v6581, %v6580
        %v6626 = vpack.c.b16 %v6583, %v6582
        %v6627 = vpack.c.b16 %v6585, %v6584
        %v6628 = vpack.c.b16 %v6587, %v6586
        %v6629 = vpack.c.b16 %v6589, %v6588
        %v6630 = vpack.c.b16 %v6591, %v6590
        %v6631 = vpack.c.b16 %v6593, %v6592
        %v6632 = vpack.c.b16 %v6595, %v6594
        %v6633 = vpack.c.b16 %v6597, %v6596
        %v6634 = vpack.c.b16 %v6599, %v6598
        %v6635 = vpack.c.b16 %v6601, %v6600
        %v6636 = vpack.c.b16 %v6603, %v6602
        %v6637 = vpack.c.b16 %v6605, %v6604
        %6670 = vmatpush.bf16.msra.mxu0 %v6613
        %6671 = vmatpush.bf16.msra.mxu0 %v6612
        %6672 = vmatpush.bf16.msra.mxu0 %v6611
        %6673 = vmatpush.bf16.msra.mxu0 %v6610
        %6674 = vmatpush.bf16.msra.mxu0 %v6609
        %6675 = vmatpush.bf16.msra.mxu0 %v6608
        %6676 = vmatpush.bf16.msra.mxu0 %v6607
        %6677 = vmatpush.bf16.msra.mxu0 %v6606
        %6678 = vmatmul.bf16.gmra.mxu0 %v6394
        %v6679 = vpop.f32.mrf.mxu0
        %v6680 = vadd.f32 %v6476, %v6679
        %v6681 = vpop.f32.mrf.mxu0
        %v6682 = vadd.f32 %v6476, %v6681
        %6683 = vmatmul.bf16.gmra.mxu0 %v6398
        %v6684 = vpop.f32.mrf.mxu0
        %v6685 = vadd.f32 %v6476, %v6684
        %v6686 = vpop.f32.mrf.mxu0
        %v6687 = vadd.f32 %v6476, %v6686
        %6688 = vmatmul.bf16.gmra.mxu0 %v6402
        %v6689 = vpop.f32.mrf.mxu0
        %v6690 = vadd.f32 %v6476, %v6689
        %v6691 = vpop.f32.mrf.mxu0
        %v6692 = vadd.f32 %v6476, %v6691
        %6693 = vmatmul.bf16.gmra.mxu0 %v6406
        %v6694 = vpop.f32.mrf.mxu0
        %v6695 = vadd.f32 %v6476, %v6694
        %v6696 = vpop.f32.mrf.mxu0
        %v6697 = vadd.f32 %v6476, %v6696
        %6698 = vdwg.mxu0
        %6699 = vmatpush.bf16.msra.mxu0 %v6621
        %6700 = vmatpush.bf16.msra.mxu0 %v6620
        %6701 = vmatpush.bf16.msra.mxu0 %v6619
        %6702 = vmatpush.bf16.msra.mxu0 %v6618
        %6703 = vmatpush.bf16.msra.mxu0 %v6617
        %6704 = vmatpush.bf16.msra.mxu0 %v6616
        %6705 = vmatpush.bf16.msra.mxu0 %v6615
        %6706 = vmatpush.bf16.msra.mxu0 %v6614
        %6707 = vmatmul.bf16.gmra.mxu0 %v6395
        %v6708 = vpop.f32.mrf.mxu0
        %v6709 = vadd.f32 %v6680, %v6708
        %v6710 = vpop.f32.mrf.mxu0
        %v6711 = vadd.f32 %v6682, %v6710
        %6712 = vmatmul.bf16.gmra.mxu0 %v6399
        %v6713 = vpop.f32.mrf.mxu0
        %v6714 = vadd.f32 %v6685, %v6713
        %v6715 = vpop.f32.mrf.mxu0
        %v6716 = vadd.f32 %v6687, %v6715
        %6717 = vmatmul.bf16.gmra.mxu0 %v6403
        %v6718 = vpop.f32.mrf.mxu0
        %v6719 = vadd.f32 %v6690, %v6718
        %v6720 = vpop.f32.mrf.mxu0
        %v6721 = vadd.f32 %v6692, %v6720
        %6722 = vmatmul.bf16.gmra.mxu0 %v6407
        %v6723 = vpop.f32.mrf.mxu0
        %v6724 = vadd.f32 %v6695, %v6723
        %v6725 = vpop.f32.mrf.mxu0
        %v6726 = vadd.f32 %v6697, %v6725
        %6727 = vdwg.mxu0
        %6728 = vmatpush.bf16.msra.mxu0 %v6629
        %6729 = vmatpush.bf16.msra.mxu0 %v6628
        %6730 = vmatpush.bf16.msra.mxu0 %v6627
        %6731 = vmatpush.bf16.msra.mxu0 %v6626
        %6732 = vmatpush.bf16.msra.mxu0 %v6625
        %6733 = vmatpush.bf16.msra.mxu0 %v6624
        %6734 = vmatpush.bf16.msra.mxu0 %v6623
        %6735 = vmatpush.bf16.msra.mxu0 %v6622
        %6736 = vmatmul.bf16.gmra.mxu0 %v6396
        %v6737 = vpop.f32.mrf.mxu0
        %v6738 = vadd.f32 %v6709, %v6737
        %v6739 = vpop.f32.mrf.mxu0
        %v6740 = vadd.f32 %v6711, %v6739
        %6741 = vmatmul.bf16.gmra.mxu0 %v6400
        %v6742 = vpop.f32.mrf.mxu0
        %v6743 = vadd.f32 %v6714, %v6742
        %v6744 = vpop.f32.mrf.mxu0
        %v6745 = vadd.f32 %v6716, %v6744
        %6746 = vmatmul.bf16.gmra.mxu0 %v6404
        %v6747 = vpop.f32.mrf.mxu0
        %v6748 = vadd.f32 %v6719, %v6747
        %v6749 = vpop.f32.mrf.mxu0
        %v6750 = vadd.f32 %v6721, %v6749
        %6751 = vmatmul.bf16.gmra.mxu0 %v6408
        %v6752 = vpop.f32.mrf.mxu0
        %v6753 = vadd.f32 %v6724, %v6752
        %v6754 = vpop.f32.mrf.mxu0
        %v6755 = vadd.f32 %v6726, %v6754
        %6756 = vdwg.mxu0
        %6757 = vmatpush.bf16.msra.mxu0 %v6637
        %6758 = vmatpush.bf16.msra.mxu0 %v6636
        %6759 = vmatpush.bf16.msra.mxu0 %v6635
        %6760 = vmatpush.bf16.msra.mxu0 %v6634
        %6761 = vmatpush.bf16.msra.mxu0 %v6633
        %6762 = vmatpush.bf16.msra.mxu0 %v6632
        %6763 = vmatpush.bf16.msra.mxu0 %v6631
        %6764 = vmatpush.bf16.msra.mxu0 %v6630
        %6765 = vmatmul.bf16.gmra.mxu0 %v6397
        %v6766 = vpop.f32.mrf.mxu0
        %v6767 = vadd.f32 %v6738, %v6766
        %v6768 = vpop.f32.mrf.mxu0
        %v6769 = vadd.f32 %v6740, %v6768
        %6770 = vmatmul.bf16.gmra.mxu0 %v6401
        %v6771 = vpop.f32.mrf.mxu0
        %v6772 = vadd.f32 %v6743, %v6771
        %v6773 = vpop.f32.mrf.mxu0
        %v6774 = vadd.f32 %v6745, %v6773
        %6775 = vmatmul.bf16.gmra.mxu0 %v6405
        %v6776 = vpop.f32.mrf.mxu0
        %v6777 = vadd.f32 %v6748, %v6776
        %v6778 = vpop.f32.mrf.mxu0
        %v6779 = vadd.f32 %v6750, %v6778
        %6780 = vmatmul.bf16.gmra.mxu0 %v6409
        %v6781 = vpop.f32.mrf.mxu0
        %v6782 = vadd.f32 %v6753, %v6781
        %v6783 = vpop.f32.mrf.mxu0
        %v6784 = vadd.f32 %v6755, %v6783
        %6785 = vdwg.mxu0
        %v6786 = vpack.c.bf16 %v6769, %v6767
        %v6787 = vpack.c.bf16 %v6774, %v6772
        %v6788 = vpack.c.bf16 %v6779, %v6777
        %v6789 = vpack.c.bf16 %v6784, %v6782
        %v6790 = vld [vmem:[%s15] sm:$0xf]
        %v6791 = vld [vmem:[%s15 + $0x4] sm:$0xf]
        %v6792 = vld [vmem:[%s15 + $0x8] sm:$0xf]
        %v6793 = vld [vmem:[%s15 + $0xc] sm:$0xf]
        %v6794 = vld [vmem:[%s15 + $0x10] sm:$0xf]
        %v6795 = vld [vmem:[%s15 + $0x14] sm:$0xf]
        %v6796 = vld [vmem:[%s15 + $0x18] sm:$0xf]
        %v6797 = vld [vmem:[%s15 + $0x1c] sm:$0xf]
        %v6798 = vld [vmem:[%s16] sm:$0x1]
        %v6800 = vperm.slane %v6798, 0
        %v6810 = vunpack.c.l.b16 %v6790
        %v6811 = vunpack.c.l.b16 %v6791
        %v6812 = vunpack.c.l.b16 %v6792
        %v6813 = vunpack.c.l.b16 %v6793
        %v6814 = vunpack.c.l.b16 %v6794
        %v6815 = vunpack.c.l.b16 %v6795
        %v6816 = vunpack.c.l.b16 %v6796
        %v6817 = vunpack.c.l.b16 %v6797
        %v6818 = vpack.c.b16 %v6811, %v6810
        %v6819 = vpack.c.b16 %v6813, %v6812
        %v6820 = vpack.c.b16 %v6815, %v6814
        %v6821 = vpack.c.b16 %v6817, %v6816
        %v6827 = vsel %vm792, %v6786, 0
        %v6830 = vsel %vm792, %v6787, 0
        %v6833 = vsel %vm792, %v6788, 0
        %v6836 = vsel %vm792, %v6789, 0
        %6838 = vmatpush.bf16.msra.mxu0 0
        %6839 = vmatpush.bf16.msra.mxu0 0
        %6840 = vmatpush.bf16.msra.mxu0 0
        %6841 = vmatpush.bf16.msra.mxu0 0
        %6842 = vmatpush.bf16.msra.mxu0 %v6821
        %6843 = vmatpush.bf16.msra.mxu0 %v6820
        %6844 = vmatpush.bf16.msra.mxu0 %v6819
        %6845 = vmatpush.bf16.msra.mxu0 %v6818
        %6846 = vmatmul.bf16.gmra.mxu0 %v6827
        %v6847 = vpop.f32.mrf.mxu0
        %v6848 = vadd.f32 %v6800, %v6847
        %v6849 = vpop.f32.mrf.mxu0
        %v6850 = vadd.f32 %v6800, %v6849
        %6851 = vmatmul.bf16.gmra.mxu0 %v6830
        %v6852 = vpop.f32.mrf.mxu0
        %v6853 = vadd.f32 %v6800, %v6852
        %v6854 = vpop.f32.mrf.mxu0
        %v6855 = vadd.f32 %v6800, %v6854
        %6856 = vmatmul.bf16.gmra.mxu0 %v6833
        %v6857 = vpop.f32.mrf.mxu0
        %v6858 = vadd.f32 %v6800, %v6857
        %v6859 = vpop.f32.mrf.mxu0
        %v6860 = vadd.f32 %v6800, %v6859
        %6861 = vmatmul.bf16.gmra.mxu0 %v6836
        %v6862 = vpop.f32.mrf.mxu0
        %v6863 = vadd.f32 %v6800, %v6862
        %v6864 = vpop.f32.mrf.mxu0
        %v6865 = vadd.f32 %v6800, %v6864
        %6866 = vdwg.mxu0
        %v6867 = vmax.f32 %v6848, 0.0
        %v6868 = vmax.f32 %v6850, 0.0
        %v6869 = vmax.f32 %v6853, 0.0
        %v6870 = vmax.f32 %v6855, 0.0
        %v6871 = vmax.f32 %v6858, 0.0
        %v6872 = vmax.f32 %v6860, 0.0
        %v6873 = vmax.f32 %v6863, 0.0
        %v6874 = vmax.f32 %v6865, 0.0
        %v6875 = vld [vmem:[%s729] sm:$0xff]
        %v6876 = vld [vmem:[%s729 + $0x8] sm:$0xff]
        %v6877 = vld [vmem:[%s729 + $0x10] sm:$0xff]
        %v6878 = vld [vmem:[%s729 + $0x18] sm:$0xff]
        %v6879 = vld [vmem:[%s729 + $0x20] sm:$0xff]
        %v6880 = vld [vmem:[%s729 + $0x28] sm:$0xff]
        %v6881 = vld [vmem:[%s729 + $0x30] sm:$0xff]
        %v6882 = vld [vmem:[%s729 + $0x38] sm:$0xff]
        %v6883 = vpack.c.bf16 %v6876, %v6875
        %v6884 = vpack.c.bf16 %v6878, %v6877
        %v6885 = vpack.c.bf16 %v6880, %v6879
        %v6886 = vpack.c.bf16 %v6882, %v6881
        %v6887 = vld [vmem:[%s17] sm:$0xf]
        %v6888 = vld [vmem:[%s17 + $0x4] sm:$0xf]
        %v6889 = vpack.c.bf16 %v6868, %v6867
        %v6890 = vpack.c.bf16 %v6870, %v6869
        %v6891 = vpack.c.bf16 %v6872, %v6871
        %v6892 = vpack.c.bf16 %v6874, %v6873
        %v6893 = vld [vmem:[%s18] sm:$0xf]
        %v6894 = vld [vmem:[%s18 + $0x4] sm:$0xf]
        %v6895 = vld [vmem:[%s18 + $0x8] sm:$0xf]
        %v6896 = vld [vmem:[%s18 + $0xc] sm:$0xf]
        %v6901 = vunpack.c.l.b16 %v6893
        %v6902 = vunpack.c.l.b16 %v6894
        %v6903 = vunpack.c.l.b16 %v6895
        %v6904 = vunpack.c.l.b16 %v6896
        %v6905 = vpack.c.b16 %v6902, %v6901
        %v6906 = vpack.c.b16 %v6904, %v6903
        %vm6909 = vcmask 261120
        %v6911 = vsel %vm6909, %v6889, 0
        %v6914 = vsel %vm6909, %v6890, 0
        %v6917 = vsel %vm6909, %v6891, 0
        %v6920 = vsel %vm6909, %v6892, 0
        %6922 = vmatpush.bf16.msra.mxu0 0
        %6923 = vmatpush.bf16.msra.mxu0 0
        %6924 = vmatpush.bf16.msra.mxu0 0
        %6925 = vmatpush.bf16.msra.mxu0 0
        %6926 = vmatpush.bf16.msra.mxu0 0
        %6927 = vmatpush.bf16.msra.mxu0 0
        %6928 = vmatpush.bf16.msra.mxu0 %v6906
        %6929 = vmatpush.bf16.msra.mxu0 %v6905
        %6930 = vmatmul.bf16.gmra.mxu0 %v6911
        %v6931 = vpop.f32.mrf.mxu0
        %v6932 = vadd.f32 0.0, %v6931
        %v6933 = vpop.f32.mrf.mxu0
        %v6934 = vadd.f32 0.0, %v6933
        %6935 = vmatmul.bf16.gmra.mxu0 %v6914
        %v6936 = vpop.f32.mrf.mxu0
        %v6937 = vadd.f32 0.0, %v6936
        %v6938 = vpop.f32.mrf.mxu0
        %v6939 = vadd.f32 0.0, %v6938
        %6940 = vmatmul.bf16.gmra.mxu0 %v6917
        %v6941 = vpop.f32.mrf.mxu0
        %v6942 = vadd.f32 0.0, %v6941
        %v6943 = vpop.f32.mrf.mxu0
        %v6944 = vadd.f32 0.0, %v6943
        %6945 = vmatmul.bf16.gmra.mxu0 %v6920
        %v6946 = vpop.f32.mrf.mxu0
        %v6947 = vadd.f32 0.0, %v6946
        %v6948 = vpop.f32.mrf.mxu0
        %v6949 = vadd.f32 0.0, %v6948
        %6950 = vdwg.mxu0
        %v6953 = vunpack.c.l.b16 %v6887
        %v6954 = vunpack.c.l.b16 %v6888
        %v6955 = vpack.c.b16 %v6954, %v6953
        %vm6957 = vcmask 130048
        %v6959 = vsel %vm6957, %v6883, 0
        %v6962 = vsel %vm6957, %v6884, 0
        %v6965 = vsel %vm6957, %v6885, 0
        %v6968 = vsel %vm6957, %v6886, 0
        %6970 = vmatpush.bf16.msra.mxu0 0
        %6971 = vmatpush.bf16.msra.mxu0 0
        %6972 = vmatpush.bf16.msra.mxu0 0
        %6973 = vmatpush.bf16.msra.mxu0 0
        %6974 = vmatpush.bf16.msra.mxu0 0
        %6975 = vmatpush.bf16.msra.mxu0 0
        %6976 = vmatpush.bf16.msra.mxu0 0
        %6977 = vmatpush.bf16.msra.mxu0 %v6955
        %6978 = vmatmul.bf16.gmra.mxu0 %v6959
        %v6979 = vpop.f32.mrf.mxu0
        %v6980 = vadd.f32 %v6932, %v6979
        %v6981 = vpop.f32.mrf.mxu0
        %v6982 = vadd.f32 %v6934, %v6981
        %6983 = vmatmul.bf16.gmra.mxu0 %v6962
        %v6984 = vpop.f32.mrf.mxu0
        %v6985 = vadd.f32 %v6937, %v6984
        %v6986 = vpop.f32.mrf.mxu0
        %v6987 = vadd.f32 %v6939, %v6986
        %6988 = vmatmul.bf16.gmra.mxu0 %v6965
        %v6989 = vpop.f32.mrf.mxu0
        %v6990 = vadd.f32 %v6942, %v6989
        %v6991 = vpop.f32.mrf.mxu0
        %v6992 = vadd.f32 %v6944, %v6991
        %6993 = vmatmul.bf16.gmra.mxu0 %v6968
        %v6994 = vpop.f32.mrf.mxu0
        %v6995 = vadd.f32 %v6947, %v6994
        %v6996 = vpop.f32.mrf.mxu0
        %v6997 = vadd.f32 %v6949, %v6996
        %6998 = vdwg.mxu0
        %v6999 = vld [vmem:[%s19] sm:$0x1]
        %v7001 = vperm.slane %v6999, 0
        %v7003 = vadd.f32 %v6980, %v7001
        %v7004 = vadd.f32 %v6982, %v7001
        %v7005 = vadd.f32 %v6985, %v7001
        %v7006 = vadd.f32 %v6987, %v7001
        %v7007 = vadd.f32 %v6990, %v7001
        %v7008 = vadd.f32 %v6992, %v7001
        %v7009 = vadd.f32 %v6995, %v7001
        %v7010 = vadd.f32 %v6997, %v7001
        %7011 = vst [vmem:[%s719] sm:$0xff] %v7003
        %7012 = vst [vmem:[%s719 + $0x8] sm:$0xff] %v7004
        %7013 = vst [vmem:[%s719 + $0x10] sm:$0xff] %v7005
        %7014 = vst [vmem:[%s719 + $0x18] sm:$0xff] %v7006
        %7015 = vst [vmem:[%s719 + $0x20] sm:$0xff] %v7007
        %7016 = vst [vmem:[%s719 + $0x28] sm:$0xff] %v7008
        %7017 = vst [vmem:[%s719 + $0x30] sm:$0xff] %v7009
        %7018 = vst [vmem:[%s719 + $0x38] sm:$0xff] %v7010
        %s7019 = sand.u32 %s480, 1
        %s7020 = scalar_lea.sflag [#allocation4], %s7019
        %s7021 = sand.u32 %s480, 1
        %s7022 = smul.addr %s7021, 64
        %s7023 = scalar_lea.vmem [#allocation10], %s7022
        // Predicated region
        $region117: #{tpu_custom_call.1} parent=99 // pred_check
          %p7024 = pneg %p490
        $region118: #{tpu_custom_call.1} parent=99 // pred_check_branch
          %7026 = sbr.rel (%p7024) target = $region120
        $region119: #{tpu_custom_call.1} parent=99 // pred_region
          %7028 = vsyncadd %s7020, 0
          %s7029 = smul.addr %s37, 8
          %s7030 = smul.addr %s7029, 8
          %s7031 = scalar_lea.hbm %s20, %s7030
          %s7032 = sshll.u32 %s7023, 4
          %s7033 = int_to_ptr.vmem [resolvable:$true] %s7032
          %s7034 = sshll.u32 %s7031, 4
          %s7035 = int_to_ptr.hbm [resolvable:$true] %s7034
          %7040 = dma.vmem_to_hbm [thread:$0]  %s7033, 1024, %s7035, %s7020, 128, 128, 8
        $region120: #{tpu_custom_call.1} parent=99 // pred_fallthru
          _
      $region100: #{tpu_custom_call.1} parent=5 // pred_fallthru
        _
      %p7041 = scmp.le.s32.totalorder 2, %s32
      // Predicated region
      $region121: #{tpu_custom_call.1} parent=5 // pred_check
        %p7042 = pneg %p7041
      $region122: #{tpu_custom_call.1} parent=5 // pred_check_branch
        %7044 = sbr.rel (%p7042) target = $region124
      $region123: #{tpu_custom_call.1} parent=5 // pred_region
        %s7045 = ssub.s32 %s32, 2
        // Predicated region
        $region125: #{tpu_custom_call.1} parent=123 // pred_check
          %p7046 = pneg %p496
        $region126: #{tpu_custom_call.1} parent=123 // pred_check_branch
          %7048 = sbr.rel (%p7046) target = $region128
        $region127: #{tpu_custom_call.1} parent=123 // pred_region
          %s7049 = sand.u32 %s481, 1
          %s7050 = scalar_lea.sflag [#allocation4], %s7049
          %s7051 = sand.u32 %s481, 1
          %s7052 = smul.addr %s7051, 64
          %s7053 = scalar_lea.vmem [#allocation10], %s7052
          %7055 = dma.done %s7050, 1024
        $region128: #{tpu_custom_call.1} parent=123 // pred_fallthru
          _
      $region124: #{tpu_custom_call.1} parent=5 // pred_fallthru
        _
    $region6: #{tpu_custom_call.1} parent=1 // loop_footer
      %s36 = sadd.s32 1, %s32
    $region7: #{tpu_custom_call.1} parent=1 // loop_footer_branch
      %31 = sbr.rel target = $region3
    $region8: #{tpu_custom_call.1} parent=1 // loop_exit
      _
    %7056 = vsyncpa [#allocation3], 1
    %s7057 = scalar_lea.sflag [#allocation3], 1
    %7058 = vsyncpa %s7057, 1
    %7059 = vsyncpa [#allocation6], 1
    %7060 = vsyncpa [#allocation9], 1
    %7061 = vsyncpa [#allocation4], 1
    %s7062 = scalar_lea.sflag [#allocation4], 1
    %7063 = vsyncpa %s7062, 1

</llo_original>
